<compile_context>
chip_gen: v7x
topology: tpu7x:2x2x1
jax: 0.10.0
libtpu: 0.0.40
codegen_flags: <defaults>
</compile_context>

<pallas_src>
import functools
import math

import jax
import jax.numpy as jnp
from jax.experimental import pallas as pl
from jax.experimental.pallas import tpu as pltpu

BN_EPS = 1e-5  # nn.BatchNorm2d default


# ---------------------------------------------------------------------------
# In-kernel helpers (all shapes static at trace time).
# ---------------------------------------------------------------------------
def _bn_train(x2d):
    """BatchNorm2d, training-mode batch statistics over (N,H,W), with the
    PyTorch-default affine parameters (weight=1, bias=0).  x2d: (N*H*W, C)."""
    mean = jnp.mean(x2d, axis=0, keepdims=True)
    var = jnp.mean(jnp.square(x2d - mean), axis=0, keepdims=True)
    return (x2d - mean) * jax.lax.rsqrt(var + BN_EPS)


def _relu6(x):
    return jnp.clip(x, 0.0, 6.0)


def _mxu(a_f32, w_bf16):
    """bf16 x bf16 MXU matmul with f32 accumulation."""
    return jnp.dot(a_f32.astype(jnp.bfloat16), w_bf16,
                   preferred_element_type=jnp.float32)


def _pad_hw8(x4d):
    """Zero-pad an NHWC tensor for a 3x3 / padding=1 conv.
    H (a leading, untiled dim) is padded by 1 row each side; W (the sublane
    dim) is padded by a full 8-sublane tile each side so the concatenation
    along the tiled dim stays tile-aligned."""
    n, h, w, c = x4d.shape
    zr = jnp.zeros((n, 1, w, c), x4d.dtype)
    x4d = jnp.concatenate([zr, x4d, zr], axis=1)          # pad H by 1
    zc = jnp.zeros((n, h + 2, 8, c), x4d.dtype)
    return jnp.concatenate([zc, x4d, zc], axis=2)          # pad W by 8


def _taps(xp):
    """Yield the 9 shifted 3x3 windows of a padded NHWC tensor, each flattened
    to (N*H*W, C).  With W a multiple of 8 the flatten is a layout no-op."""
    n, hp, wp, c = xp.shape
    h, w = hp - 2, wp - 16
    for dy in range(3):
        for dx in range(3):
            win = xp[:, dy:dy + h, 7 + dx:7 + dx + w, :]
            yield win.reshape(n * h * w, c)


def _depthwise3x3(xp, w_ref):
    """Depthwise 3x3 conv (padding=1, bias=False) as 9 VPU taps.
    xp: padded NHWC (f32); w_ref: (9, 1, C) f32."""
    out = None
    for k, tap in enumerate(_taps(xp)):
        term = tap * w_ref[k]                              # (NHW, C) * (1, C)
        out = term if out is None else out + term
    return out


def _dense3x3_acc(xp, w_ref, acc):
    """Accumulate one input-channel group of the dense 3x3 conv:
    9 shifted-window bf16 MXU matmuls with f32 accumulation (no im2col).
    xp: padded NHWC (f32); w_ref: (9, Cin_group, Cout) bf16."""
    for k, tap in enumerate(_taps(xp)):
        acc = acc + _mxu(tap, w_ref[k])
    return acc


# ---------------------------------------------------------------------------
# Fused block kernel.
# ---------------------------------------------------------------------------
def _down_block_kernel(x_ref, w11_ref, w12_ref, w21a_ref, w21b_ref,
                       w22a_ref, w22b_ref, w3a_ref, w3b_ref, w3c_ref,
                       b3_ref, o_ref):
    n, h, w, cin = x_ref.shape
    nhw = n * h * w
    cout = o_ref.shape[-1]

    xp_x = _pad_hw8(x_ref[...])             # padded x, reused by conv11/conv21/conv3

    # conv11 = depthwise3x3(Cin) -> BN -> ReLU6
    t1 = _relu6(_bn_train(_depthwise3x3(xp_x, w11_ref)))
    # conv12 = pointwise 1x1 (Cin -> Cin+Cout) -> BN -> ReLU6
    x12 = _relu6(_bn_train(_mxu(t1, w12_ref[...])))
    xp_12 = _pad_hw8(x12.reshape(n, h, w, x12.shape[-1]))

    # conv21/conv22 act on the *virtual* concat x21 = [x | x12]:
    # depthwise, BN and ReLU6 are per-channel and the 1x1 conv is
    # row-splittable, so the concatenated activation is never materialised.
    t2a = _relu6(_bn_train(_depthwise3x3(xp_x, w21a_ref)))
    t2b = _relu6(_bn_train(_depthwise3x3(xp_12, w21b_ref)))
    x22 = _relu6(_bn_train(_mxu(t2a, w22a_ref[...]) + _mxu(t2b, w22b_ref[...])))
    xp_22 = _pad_hw8(x22.reshape(n, h, w, cout))

    # conv3 = dense 3x3 conv (bias=True) over the virtual concat
    # x31 = [x | x12 | x22], as 27 small matmuls accumulated in f32.
    acc = jnp.zeros((nhw, cout), jnp.float32)
    acc = _dense3x3_acc(xp_x, w3a_ref, acc)
    acc = _dense3x3_acc(xp_12, w3b_ref, acc)
    acc = _dense3x3_acc(xp_22, w3c_ref, acc)
    out = acc + b3_ref[...]

    # The block's final BatchNorm (no activation).
    o_ref[...] = _bn_train(out).astype(o_ref.dtype)


# ---------------------------------------------------------------------------
# Host-side wrapper: NCHW <-> NHWC boundary, AvgPool2d, pallas_call.
# ---------------------------------------------------------------------------
def dense_down_block_mobile(params, x_nchw, down_size=(2, 2)):
    """Forward pass of DenseNet2D_down_block_mobile (dropout=False path).
    x_nchw: (N, Cin, H, W) f32 -> (N, Cout, H', W') f32."""
    x = jnp.transpose(x_nchw, (0, 2, 3, 1))                # NCHW -> NHWC
    if down_size is not None:
        kh, kw = ((down_size, down_size) if isinstance(down_size, int)
                  else tuple(down_size))
        n, h, w, c = x.shape
        # nn.AvgPool2d(kernel_size=down_size): stride == kernel size,
        # H and W assumed divisible (true for the reference shapes).
        x = x.reshape(n, h // kh, kh, w // kw, kw, c).mean(axis=(2, 4))

    n, h, w, cin = x.shape
    nhw = n * h * w
    cout = params["w3c"].shape[-1]
    c12 = params["w12"].shape[-1]
    c21 = cin + c12
    c31 = cin + c12 + cout

    flops = 2 * nhw * (9 * (cin + c21)        # depthwise taps (VPU)
                       + cin * c12            # conv12 pointwise
                       + c21 * cout           # conv22 pointwise
                       + 9 * c31 * cout)      # dense 3x3 taps (MXU)
    bytes_accessed = int(4 * (x.size + nhw * cout)
                         + sum(int(v.size) * v.dtype.itemsize
                               for v in params.values()))

    out2d = pl.pallas_call(
        _down_block_kernel,
        out_shape=jax.ShapeDtypeStruct((nhw, cout), jnp.float32),
        in_specs=[pl.BlockSpec(memory_space=pltpu.MemorySpace.VMEM)] * 11,
        out_specs=pl.BlockSpec(memory_space=pltpu.MemorySpace.VMEM),
        cost_estimate=pl.CostEstimate(flops=int(flops), transcendentals=0,
                                      bytes_accessed=bytes_accessed),
    )(x, params["w11"], params["w12"], params["w21a"], params["w21b"],
      params["w22a"], params["w22b"], params["w3a"], params["w3b"],
      params["w3c"], params["b3"])

    out = out2d.reshape(n, h, w, cout)
    return jnp.transpose(out, (0, 3, 1, 2))                # NHWC -> NCHW


# ---------------------------------------------------------------------------
# Deterministic parameter init (kernel-friendly layouts, weights pre-split
# per input-channel group so the concats stay virtual inside the kernel).
# ---------------------------------------------------------------------------
def init_params(key, input_channels, output_channels):
    cin, cout = input_channels, output_channels
    c12 = cin + cout            # conv12 output channels
    c21 = 2 * cin + cout        # conv21/conv22 input channels (= cin + c12)
    c31 = 2 * cin + 2 * cout    # conv3 input channels (= cin + c12 + cout)
    k = jax.random.split(key, 6)

    def he(rng, shape, fan_in):
        return math.sqrt(2.0 / fan_in) * jax.random.normal(rng, shape, jnp.float32)

    # PyTorch layouts -> kernel layouts:
    #   depthwise 3x3 (C,1,3,3)   -> (9, 1, C)        f32 (VPU)
    #   pointwise 1x1 (Co,Ci,1,1) -> (Ci, Co)         bf16 (MXU)
    #   dense 3x3     (Co,Ci,3,3) -> (9, Ci, Co)      bf16 (MXU), bias (1, Co)
    w11 = he(k[0], (9, 1, cin), 9)
    w12 = he(k[1], (cin, c12), cin)
    w21 = he(k[2], (9, 1, c21), 9)
    w22 = he(k[3], (c21, cout), c21)
    w3 = he(k[4], (9, c31, cout), 9 * c31)
    b3 = 0.01 * jax.random.normal(k[5], (1, cout), jnp.float32)

    return {
        "w11": w11,
        "w12": w12.astype(jnp.bfloat16),
        "w21a": w21[:, :, :cin],                       # group: x
        "w21b": w21[:, :, cin:],                       # group: x12
        "w22a": w22[:cin, :].astype(jnp.bfloat16),     # group: x
        "w22b": w22[cin:, :].astype(jnp.bfloat16),     # group: x12
        "w3a": w3[:, :cin, :].astype(jnp.bfloat16),    # group: x
        "w3b": w3[:, cin:cin + c12, :].astype(jnp.bfloat16),   # group: x12
        "w3c": w3[:, cin + c12:, :].astype(jnp.bfloat16),      # group: x22
        "b3": b3,
    }


if __name__ == "__main__":
    key = jax.random.PRNGKey(0)
    pkey, xkey = jax.random.split(key)

    IN_CH, OUT_CH = 4, 16
    params = init_params(pkey, IN_CH, OUT_CH)
    # Small NCHW input; AvgPool2d(2) inside the block brings 16x16 -> 8x8.
    x = jax.random.normal(xkey, (2, IN_CH, 16, 16), jnp.float32)

    fwd = jax.jit(functools.partial(dense_down_block_mobile, down_size=(2, 2)))
    out = fwd(params, x)
    jax.block_until_ready(out)

    assert out.shape == (2, OUT_CH, 8, 8), out.shape
    assert bool(jnp.all(jnp.isfinite(out)))
    print("KERNEL_OK")
</pallas_src>

<mosaic_0001>
module attributes {stable_mosaic.version = 11 : i64} {
  func.func @_down_block_kernel(%arg0: memref<2x8x8x4xf32, #tpu.memory_space<vmem>>, %arg1: memref<9x1x4xf32, #tpu.memory_space<vmem>>, %arg2: memref<4x20xbf16, #tpu.memory_space<vmem>>, %arg3: memref<9x1x4xf32, #tpu.memory_space<vmem>>, %arg4: memref<9x1x20xf32, #tpu.memory_space<vmem>>, %arg5: memref<4x16xbf16, #tpu.memory_space<vmem>>, %arg6: memref<20x16xbf16, #tpu.memory_space<vmem>>, %arg7: memref<9x4x16xbf16, #tpu.memory_space<vmem>>, %arg8: memref<9x20x16xbf16, #tpu.memory_space<vmem>>, %arg9: memref<9x16x16xbf16, #tpu.memory_space<vmem>>, %arg10: memref<1x16xf32, #tpu.memory_space<vmem>>, %arg11: memref<128x16xf32, #tpu.memory_space<vmem>>) attributes {dimension_semantics = [], scalar_prefetch = 0 : i64, scratch_operands = 0 : i64, tpu.core_type = #tpu.core_type<tc>} {
    %c0 = arith.constant 0 : index
    %c0_0 = arith.constant 0 : index
    %c0_1 = arith.constant 0 : index
    %c0_2 = arith.constant 0 : index
    %0 = vector.load %arg0[%c0, %c0_0, %c0_1, %c0_2] : memref<2x8x8x4xf32, #tpu.memory_space<vmem>>, vector<2x8x8x4xf32>
    %cst = arith.constant 0.000000e+00 : f32
    %1 = vector.broadcast %cst : f32 to vector<2x1x8x4xf32>
    %2 = tpu.concatenate %1, %0, %1 in 1 : vector<2x1x8x4xf32>, vector<2x8x8x4xf32>, vector<2x1x8x4xf32> -> vector<2x10x8x4xf32>
    %cst_3 = arith.constant 0.000000e+00 : f32
    %3 = vector.broadcast %cst_3 : f32 to vector<2x10x8x4xf32>
    %4 = tpu.concatenate %3, %2, %3 in 2 : vector<2x10x8x4xf32>, vector<2x10x8x4xf32>, vector<2x10x8x4xf32> -> vector<2x10x24x4xf32>
    %5 = vector.extract_strided_slice %4 {offsets = [0, 0, 7, 0], sizes = [2, 8, 8, 4], strides = [1, 1, 1, 1]} : vector<2x10x24x4xf32> to vector<2x8x8x4xf32>
    %6 = vector.shape_cast %5 : vector<2x8x8x4xf32> to vector<128x4xf32>
    %c0_4 = arith.constant 0 : index
    %c0_5 = arith.constant 0 : index
    %c0_6 = arith.constant 0 : index
    %7 = vector.load %arg1[%c0_4, %c0_5, %c0_6] : memref<9x1x4xf32, #tpu.memory_space<vmem>>, vector<1x1x4xf32>
    %8 = vector.shape_cast %7 : vector<1x1x4xf32> to vector<1x4xf32>
    %9 = vector.broadcast %8 : vector<1x4xf32> to vector<128x4xf32>
    %10 = arith.mulf %6, %9 : vector<128x4xf32>
    %11 = vector.extract_strided_slice %4 {offsets = [0, 0, 8, 0], sizes = [2, 8, 8, 4], strides = [1, 1, 1, 1]} : vector<2x10x24x4xf32> to vector<2x8x8x4xf32>
    %12 = vector.shape_cast %11 : vector<2x8x8x4xf32> to vector<128x4xf32>
    %c1 = arith.constant 1 : index
    %c0_7 = arith.constant 0 : index
    %c0_8 = arith.constant 0 : index
    %13 = vector.load %arg1[%c1, %c0_7, %c0_8] : memref<9x1x4xf32, #tpu.memory_space<vmem>>, vector<1x1x4xf32>
    %14 = vector.shape_cast %13 : vector<1x1x4xf32> to vector<1x4xf32>
    %15 = vector.broadcast %14 : vector<1x4xf32> to vector<128x4xf32>
    %16 = arith.mulf %12, %15 : vector<128x4xf32>
    %17 = arith.addf %10, %16 : vector<128x4xf32>
    %18 = vector.extract_strided_slice %4 {offsets = [0, 0, 9, 0], sizes = [2, 8, 8, 4], strides = [1, 1, 1, 1]} : vector<2x10x24x4xf32> to vector<2x8x8x4xf32>
    %19 = vector.shape_cast %18 : vector<2x8x8x4xf32> to vector<128x4xf32>
    %c2 = arith.constant 2 : index
    %c0_9 = arith.constant 0 : index
    %c0_10 = arith.constant 0 : index
    %20 = vector.load %arg1[%c2, %c0_9, %c0_10] : memref<9x1x4xf32, #tpu.memory_space<vmem>>, vector<1x1x4xf32>
    %21 = vector.shape_cast %20 : vector<1x1x4xf32> to vector<1x4xf32>
    %22 = vector.broadcast %21 : vector<1x4xf32> to vector<128x4xf32>
    %23 = arith.mulf %19, %22 : vector<128x4xf32>
    %24 = arith.addf %17, %23 : vector<128x4xf32>
    %25 = vector.extract_strided_slice %4 {offsets = [0, 1, 7, 0], sizes = [2, 8, 8, 4], strides = [1, 1, 1, 1]} : vector<2x10x24x4xf32> to vector<2x8x8x4xf32>
    %26 = vector.shape_cast %25 : vector<2x8x8x4xf32> to vector<128x4xf32>
    %c3 = arith.constant 3 : index
    %c0_11 = arith.constant 0 : index
    %c0_12 = arith.constant 0 : index
    %27 = vector.load %arg1[%c3, %c0_11, %c0_12] : memref<9x1x4xf32, #tpu.memory_space<vmem>>, vector<1x1x4xf32>
    %28 = vector.shape_cast %27 : vector<1x1x4xf32> to vector<1x4xf32>
    %29 = vector.broadcast %28 : vector<1x4xf32> to vector<128x4xf32>
    %30 = arith.mulf %26, %29 : vector<128x4xf32>
    %31 = arith.addf %24, %30 : vector<128x4xf32>
    %32 = vector.extract_strided_slice %4 {offsets = [0, 1, 8, 0], sizes = [2, 8, 8, 4], strides = [1, 1, 1, 1]} : vector<2x10x24x4xf32> to vector<2x8x8x4xf32>
    %33 = vector.shape_cast %32 : vector<2x8x8x4xf32> to vector<128x4xf32>
    %c4 = arith.constant 4 : index
    %c0_13 = arith.constant 0 : index
    %c0_14 = arith.constant 0 : index
    %34 = vector.load %arg1[%c4, %c0_13, %c0_14] : memref<9x1x4xf32, #tpu.memory_space<vmem>>, vector<1x1x4xf32>
    %35 = vector.shape_cast %34 : vector<1x1x4xf32> to vector<1x4xf32>
    %36 = vector.broadcast %35 : vector<1x4xf32> to vector<128x4xf32>
    %37 = arith.mulf %33, %36 : vector<128x4xf32>
    %38 = arith.addf %31, %37 : vector<128x4xf32>
    %39 = vector.extract_strided_slice %4 {offsets = [0, 1, 9, 0], sizes = [2, 8, 8, 4], strides = [1, 1, 1, 1]} : vector<2x10x24x4xf32> to vector<2x8x8x4xf32>
    %40 = vector.shape_cast %39 : vector<2x8x8x4xf32> to vector<128x4xf32>
    %c5 = arith.constant 5 : index
    %c0_15 = arith.constant 0 : index
    %c0_16 = arith.constant 0 : index
    %41 = vector.load %arg1[%c5, %c0_15, %c0_16] : memref<9x1x4xf32, #tpu.memory_space<vmem>>, vector<1x1x4xf32>
    %42 = vector.shape_cast %41 : vector<1x1x4xf32> to vector<1x4xf32>
    %43 = vector.broadcast %42 : vector<1x4xf32> to vector<128x4xf32>
    %44 = arith.mulf %40, %43 : vector<128x4xf32>
    %45 = arith.addf %38, %44 : vector<128x4xf32>
    %46 = vector.extract_strided_slice %4 {offsets = [0, 2, 7, 0], sizes = [2, 8, 8, 4], strides = [1, 1, 1, 1]} : vector<2x10x24x4xf32> to vector<2x8x8x4xf32>
    %47 = vector.shape_cast %46 : vector<2x8x8x4xf32> to vector<128x4xf32>
    %c6 = arith.constant 6 : index
    %c0_17 = arith.constant 0 : index
    %c0_18 = arith.constant 0 : index
    %48 = vector.load %arg1[%c6, %c0_17, %c0_18] : memref<9x1x4xf32, #tpu.memory_space<vmem>>, vector<1x1x4xf32>
    %49 = vector.shape_cast %48 : vector<1x1x4xf32> to vector<1x4xf32>
    %50 = vector.broadcast %49 : vector<1x4xf32> to vector<128x4xf32>
    %51 = arith.mulf %47, %50 : vector<128x4xf32>
    %52 = arith.addf %45, %51 : vector<128x4xf32>
    %53 = vector.extract_strided_slice %4 {offsets = [0, 2, 8, 0], sizes = [2, 8, 8, 4], strides = [1, 1, 1, 1]} : vector<2x10x24x4xf32> to vector<2x8x8x4xf32>
    %54 = vector.shape_cast %53 : vector<2x8x8x4xf32> to vector<128x4xf32>
    %c7 = arith.constant 7 : index
    %c0_19 = arith.constant 0 : index
    %c0_20 = arith.constant 0 : index
    %55 = vector.load %arg1[%c7, %c0_19, %c0_20] : memref<9x1x4xf32, #tpu.memory_space<vmem>>, vector<1x1x4xf32>
    %56 = vector.shape_cast %55 : vector<1x1x4xf32> to vector<1x4xf32>
    %57 = vector.broadcast %56 : vector<1x4xf32> to vector<128x4xf32>
    %58 = arith.mulf %54, %57 : vector<128x4xf32>
    %59 = arith.addf %52, %58 : vector<128x4xf32>
    %60 = vector.extract_strided_slice %4 {offsets = [0, 2, 9, 0], sizes = [2, 8, 8, 4], strides = [1, 1, 1, 1]} : vector<2x10x24x4xf32> to vector<2x8x8x4xf32>
    %61 = vector.shape_cast %60 : vector<2x8x8x4xf32> to vector<128x4xf32>
    %c8 = arith.constant 8 : index
    %c0_21 = arith.constant 0 : index
    %c0_22 = arith.constant 0 : index
    %62 = vector.load %arg1[%c8, %c0_21, %c0_22] : memref<9x1x4xf32, #tpu.memory_space<vmem>>, vector<1x1x4xf32>
    %63 = vector.shape_cast %62 : vector<1x1x4xf32> to vector<1x4xf32>
    %64 = vector.broadcast %63 : vector<1x4xf32> to vector<128x4xf32>
    %65 = arith.mulf %61, %64 : vector<128x4xf32>
    %66 = arith.addf %59, %65 : vector<128x4xf32>
    %cst_23 = arith.constant dense<0.000000e+00> : vector<4xf32>
    %67 = vector.multi_reduction <add>, %66, %cst_23 [0] : vector<128x4xf32> to vector<4xf32>
    %68 = vector.shape_cast %67 : vector<4xf32> to vector<1x4xf32>
    %cst_24 = arith.constant 1.280000e+02 : f32
    %69 = vector.broadcast %cst_24 : f32 to vector<1x4xf32>
    %70 = arith.divf %68, %69 : vector<1x4xf32>
    %71 = vector.broadcast %70 : vector<1x4xf32> to vector<128x4xf32>
    %72 = arith.subf %66, %71 : vector<128x4xf32>
    %73 = arith.mulf %72, %72 : vector<128x4xf32>
    %cst_25 = arith.constant dense<0.000000e+00> : vector<4xf32>
    %74 = vector.multi_reduction <add>, %73, %cst_25 [0] : vector<128x4xf32> to vector<4xf32>
    %75 = vector.shape_cast %74 : vector<4xf32> to vector<1x4xf32>
    %cst_26 = arith.constant 1.280000e+02 : f32
    %76 = vector.broadcast %cst_26 : f32 to vector<1x4xf32>
    %77 = arith.divf %75, %76 : vector<1x4xf32>
    %78 = vector.broadcast %70 : vector<1x4xf32> to vector<128x4xf32>
    %79 = arith.subf %66, %78 : vector<128x4xf32>
    %cst_27 = arith.constant 9.99999974E-6 : f32
    %80 = vector.broadcast %cst_27 : f32 to vector<1x4xf32>
    %81 = arith.addf %77, %80 : vector<1x4xf32>
    %82 = math.rsqrt %81 : vector<1x4xf32>
    %83 = vector.broadcast %82 : vector<1x4xf32> to vector<128x4xf32>
    %84 = arith.mulf %79, %83 : vector<128x4xf32>
    %cst_28 = arith.constant 0.000000e+00 : f32
    %cst_29 = arith.constant 6.000000e+00 : f32
    %85 = vector.broadcast %cst_28 : f32 to vector<128x4xf32>
    %86 = arith.maximumf %85, %84 : vector<128x4xf32>
    %87 = vector.broadcast %cst_29 : f32 to vector<128x4xf32>
    %88 = arith.minimumf %87, %86 : vector<128x4xf32>
    %c0_30 = arith.constant 0 : index
    %c0_31 = arith.constant 0 : index
    %89 = vector.load %arg2[%c0_30, %c0_31] : memref<4x20xbf16, #tpu.memory_space<vmem>>, vector<4x20xbf16>
    %90 = arith.truncf %88 : vector<128x4xf32> to vector<128x4xbf16>
    %cst_32 = arith.constant dense<0.000000e+00> : vector<128x20xf32>
    %91 = tpu.matmul %90, %89, %cst_32 {dimension_numbers = #tpu.dot_dimension_numbers<[1], [0], [0], [1], [0, 0, 1, 1], [], []>} : vector<128x4xbf16>, vector<4x20xbf16>, vector<128x20xf32> -> vector<128x20xf32>
    %cst_33 = arith.constant dense<0.000000e+00> : vector<20xf32>
    %92 = vector.multi_reduction <add>, %91, %cst_33 [0] : vector<128x20xf32> to vector<20xf32>
    %93 = vector.shape_cast %92 : vector<20xf32> to vector<1x20xf32>
    %cst_34 = arith.constant 1.280000e+02 : f32
    %94 = vector.broadcast %cst_34 : f32 to vector<1x20xf32>
    %95 = arith.divf %93, %94 : vector<1x20xf32>
    %96 = vector.broadcast %95 : vector<1x20xf32> to vector<128x20xf32>
    %97 = arith.subf %91, %96 : vector<128x20xf32>
    %98 = arith.mulf %97, %97 : vector<128x20xf32>
    %cst_35 = arith.constant dense<0.000000e+00> : vector<20xf32>
    %99 = vector.multi_reduction <add>, %98, %cst_35 [0] : vector<128x20xf32> to vector<20xf32>
    %100 = vector.shape_cast %99 : vector<20xf32> to vector<1x20xf32>
    %cst_36 = arith.constant 1.280000e+02 : f32
    %101 = vector.broadcast %cst_36 : f32 to vector<1x20xf32>
    %102 = arith.divf %100, %101 : vector<1x20xf32>
    %103 = vector.broadcast %95 : vector<1x20xf32> to vector<128x20xf32>
    %104 = arith.subf %91, %103 : vector<128x20xf32>
    %cst_37 = arith.constant 9.99999974E-6 : f32
    %105 = vector.broadcast %cst_37 : f32 to vector<1x20xf32>
    %106 = arith.addf %102, %105 : vector<1x20xf32>
    %107 = math.rsqrt %106 : vector<1x20xf32>
    %108 = vector.broadcast %107 : vector<1x20xf32> to vector<128x20xf32>
    %109 = arith.mulf %104, %108 : vector<128x20xf32>
    %cst_38 = arith.constant 0.000000e+00 : f32
    %cst_39 = arith.constant 6.000000e+00 : f32
    %110 = vector.broadcast %cst_38 : f32 to vector<128x20xf32>
    %111 = arith.maximumf %110, %109 : vector<128x20xf32>
    %112 = vector.broadcast %cst_39 : f32 to vector<128x20xf32>
    %113 = arith.minimumf %112, %111 : vector<128x20xf32>
    %114 = vector.shape_cast %113 : vector<128x20xf32> to vector<2x8x8x20xf32>
    %cst_40 = arith.constant 0.000000e+00 : f32
    %115 = vector.broadcast %cst_40 : f32 to vector<2x1x8x20xf32>
    %116 = tpu.concatenate %115, %114, %115 in 1 : vector<2x1x8x20xf32>, vector<2x8x8x20xf32>, vector<2x1x8x20xf32> -> vector<2x10x8x20xf32>
    %cst_41 = arith.constant 0.000000e+00 : f32
    %117 = vector.broadcast %cst_41 : f32 to vector<2x10x8x20xf32>
    %118 = tpu.concatenate %117, %116, %117 in 2 : vector<2x10x8x20xf32>, vector<2x10x8x20xf32>, vector<2x10x8x20xf32> -> vector<2x10x24x20xf32>
    %119 = vector.extract_strided_slice %4 {offsets = [0, 0, 7, 0], sizes = [2, 8, 8, 4], strides = [1, 1, 1, 1]} : vector<2x10x24x4xf32> to vector<2x8x8x4xf32>
    %120 = vector.shape_cast %119 : vector<2x8x8x4xf32> to vector<128x4xf32>
    %c0_42 = arith.constant 0 : index
    %c0_43 = arith.constant 0 : index
    %c0_44 = arith.constant 0 : index
    %121 = vector.load %arg3[%c0_42, %c0_43, %c0_44] : memref<9x1x4xf32, #tpu.memory_space<vmem>>, vector<1x1x4xf32>
    %122 = vector.shape_cast %121 : vector<1x1x4xf32> to vector<1x4xf32>
    %123 = vector.broadcast %122 : vector<1x4xf32> to vector<128x4xf32>
    %124 = arith.mulf %120, %123 : vector<128x4xf32>
    %125 = vector.extract_strided_slice %4 {offsets = [0, 0, 8, 0], sizes = [2, 8, 8, 4], strides = [1, 1, 1, 1]} : vector<2x10x24x4xf32> to vector<2x8x8x4xf32>
    %126 = vector.shape_cast %125 : vector<2x8x8x4xf32> to vector<128x4xf32>
    %c1_45 = arith.constant 1 : index
    %c0_46 = arith.constant 0 : index
    %c0_47 = arith.constant 0 : index
    %127 = vector.load %arg3[%c1_45, %c0_46, %c0_47] : memref<9x1x4xf32, #tpu.memory_space<vmem>>, vector<1x1x4xf32>
    %128 = vector.shape_cast %127 : vector<1x1x4xf32> to vector<1x4xf32>
    %129 = vector.broadcast %128 : vector<1x4xf32> to vector<128x4xf32>
    %130 = arith.mulf %126, %129 : vector<128x4xf32>
    %131 = arith.addf %124, %130 : vector<128x4xf32>
    %132 = vector.extract_strided_slice %4 {offsets = [0, 0, 9, 0], sizes = [2, 8, 8, 4], strides = [1, 1, 1, 1]} : vector<2x10x24x4xf32> to vector<2x8x8x4xf32>
    %133 = vector.shape_cast %132 : vector<2x8x8x4xf32> to vector<128x4xf32>
    %c2_48 = arith.constant 2 : index
    %c0_49 = arith.constant 0 : index
    %c0_50 = arith.constant 0 : index
    %134 = vector.load %arg3[%c2_48, %c0_49, %c0_50] : memref<9x1x4xf32, #tpu.memory_space<vmem>>, vector<1x1x4xf32>
    %135 = vector.shape_cast %134 : vector<1x1x4xf32> to vector<1x4xf32>
    %136 = vector.broadcast %135 : vector<1x4xf32> to vector<128x4xf32>
    %137 = arith.mulf %133, %136 : vector<128x4xf32>
    %138 = arith.addf %131, %137 : vector<128x4xf32>
    %139 = vector.extract_strided_slice %4 {offsets = [0, 1, 7, 0], sizes = [2, 8, 8, 4], strides = [1, 1, 1, 1]} : vector<2x10x24x4xf32> to vector<2x8x8x4xf32>
    %140 = vector.shape_cast %139 : vector<2x8x8x4xf32> to vector<128x4xf32>
    %c3_51 = arith.constant 3 : index
    %c0_52 = arith.constant 0 : index
    %c0_53 = arith.constant 0 : index
    %141 = vector.load %arg3[%c3_51, %c0_52, %c0_53] : memref<9x1x4xf32, #tpu.memory_space<vmem>>, vector<1x1x4xf32>
    %142 = vector.shape_cast %141 : vector<1x1x4xf32> to vector<1x4xf32>
    %143 = vector.broadcast %142 : vector<1x4xf32> to vector<128x4xf32>
    %144 = arith.mulf %140, %143 : vector<128x4xf32>
    %145 = arith.addf %138, %144 : vector<128x4xf32>
    %146 = vector.extract_strided_slice %4 {offsets = [0, 1, 8, 0], sizes = [2, 8, 8, 4], strides = [1, 1, 1, 1]} : vector<2x10x24x4xf32> to vector<2x8x8x4xf32>
    %147 = vector.shape_cast %146 : vector<2x8x8x4xf32> to vector<128x4xf32>
    %c4_54 = arith.constant 4 : index
    %c0_55 = arith.constant 0 : index
    %c0_56 = arith.constant 0 : index
    %148 = vector.load %arg3[%c4_54, %c0_55, %c0_56] : memref<9x1x4xf32, #tpu.memory_space<vmem>>, vector<1x1x4xf32>
    %149 = vector.shape_cast %148 : vector<1x1x4xf32> to vector<1x4xf32>
    %150 = vector.broadcast %149 : vector<1x4xf32> to vector<128x4xf32>
    %151 = arith.mulf %147, %150 : vector<128x4xf32>
    %152 = arith.addf %145, %151 : vector<128x4xf32>
    %153 = vector.extract_strided_slice %4 {offsets = [0, 1, 9, 0], sizes = [2, 8, 8, 4], strides = [1, 1, 1, 1]} : vector<2x10x24x4xf32> to vector<2x8x8x4xf32>
    %154 = vector.shape_cast %153 : vector<2x8x8x4xf32> to vector<128x4xf32>
    %c5_57 = arith.constant 5 : index
    %c0_58 = arith.constant 0 : index
    %c0_59 = arith.constant 0 : index
    %155 = vector.load %arg3[%c5_57, %c0_58, %c0_59] : memref<9x1x4xf32, #tpu.memory_space<vmem>>, vector<1x1x4xf32>
    %156 = vector.shape_cast %155 : vector<1x1x4xf32> to vector<1x4xf32>
    %157 = vector.broadcast %156 : vector<1x4xf32> to vector<128x4xf32>
    %158 = arith.mulf %154, %157 : vector<128x4xf32>
    %159 = arith.addf %152, %158 : vector<128x4xf32>
    %160 = vector.extract_strided_slice %4 {offsets = [0, 2, 7, 0], sizes = [2, 8, 8, 4], strides = [1, 1, 1, 1]} : vector<2x10x24x4xf32> to vector<2x8x8x4xf32>
    %161 = vector.shape_cast %160 : vector<2x8x8x4xf32> to vector<128x4xf32>
    %c6_60 = arith.constant 6 : index
    %c0_61 = arith.constant 0 : index
    %c0_62 = arith.constant 0 : index
    %162 = vector.load %arg3[%c6_60, %c0_61, %c0_62] : memref<9x1x4xf32, #tpu.memory_space<vmem>>, vector<1x1x4xf32>
    %163 = vector.shape_cast %162 : vector<1x1x4xf32> to vector<1x4xf32>
    %164 = vector.broadcast %163 : vector<1x4xf32> to vector<128x4xf32>
    %165 = arith.mulf %161, %164 : vector<128x4xf32>
    %166 = arith.addf %159, %165 : vector<128x4xf32>
    %167 = vector.extract_strided_slice %4 {offsets = [0, 2, 8, 0], sizes = [2, 8, 8, 4], strides = [1, 1, 1, 1]} : vector<2x10x24x4xf32> to vector<2x8x8x4xf32>
    %168 = vector.shape_cast %167 : vector<2x8x8x4xf32> to vector<128x4xf32>
    %c7_63 = arith.constant 7 : index
    %c0_64 = arith.constant 0 : index
    %c0_65 = arith.constant 0 : index
    %169 = vector.load %arg3[%c7_63, %c0_64, %c0_65] : memref<9x1x4xf32, #tpu.memory_space<vmem>>, vector<1x1x4xf32>
    %170 = vector.shape_cast %169 : vector<1x1x4xf32> to vector<1x4xf32>
    %171 = vector.broadcast %170 : vector<1x4xf32> to vector<128x4xf32>
    %172 = arith.mulf %168, %171 : vector<128x4xf32>
    %173 = arith.addf %166, %172 : vector<128x4xf32>
    %174 = vector.extract_strided_slice %4 {offsets = [0, 2, 9, 0], sizes = [2, 8, 8, 4], strides = [1, 1, 1, 1]} : vector<2x10x24x4xf32> to vector<2x8x8x4xf32>
    %175 = vector.shape_cast %174 : vector<2x8x8x4xf32> to vector<128x4xf32>
    %c8_66 = arith.constant 8 : index
    %c0_67 = arith.constant 0 : index
    %c0_68 = arith.constant 0 : index
    %176 = vector.load %arg3[%c8_66, %c0_67, %c0_68] : memref<9x1x4xf32, #tpu.memory_space<vmem>>, vector<1x1x4xf32>
    %177 = vector.shape_cast %176 : vector<1x1x4xf32> to vector<1x4xf32>
    %178 = vector.broadcast %177 : vector<1x4xf32> to vector<128x4xf32>
    %179 = arith.mulf %175, %178 : vector<128x4xf32>
    %180 = arith.addf %173, %179 : vector<128x4xf32>
    %cst_69 = arith.constant dense<0.000000e+00> : vector<4xf32>
    %181 = vector.multi_reduction <add>, %180, %cst_69 [0] : vector<128x4xf32> to vector<4xf32>
    %182 = vector.shape_cast %181 : vector<4xf32> to vector<1x4xf32>
    %cst_70 = arith.constant 1.280000e+02 : f32
    %183 = vector.broadcast %cst_70 : f32 to vector<1x4xf32>
    %184 = arith.divf %182, %183 : vector<1x4xf32>
    %185 = vector.broadcast %184 : vector<1x4xf32> to vector<128x4xf32>
    %186 = arith.subf %180, %185 : vector<128x4xf32>
    %187 = arith.mulf %186, %186 : vector<128x4xf32>
    %cst_71 = arith.constant dense<0.000000e+00> : vector<4xf32>
    %188 = vector.multi_reduction <add>, %187, %cst_71 [0] : vector<128x4xf32> to vector<4xf32>
    %189 = vector.shape_cast %188 : vector<4xf32> to vector<1x4xf32>
    %cst_72 = arith.constant 1.280000e+02 : f32
    %190 = vector.broadcast %cst_72 : f32 to vector<1x4xf32>
    %191 = arith.divf %189, %190 : vector<1x4xf32>
    %192 = vector.broadcast %184 : vector<1x4xf32> to vector<128x4xf32>
    %193 = arith.subf %180, %192 : vector<128x4xf32>
    %cst_73 = arith.constant 9.99999974E-6 : f32
    %194 = vector.broadcast %cst_73 : f32 to vector<1x4xf32>
    %195 = arith.addf %191, %194 : vector<1x4xf32>
    %196 = math.rsqrt %195 : vector<1x4xf32>
    %197 = vector.broadcast %196 : vector<1x4xf32> to vector<128x4xf32>
    %198 = arith.mulf %193, %197 : vector<128x4xf32>
    %cst_74 = arith.constant 0.000000e+00 : f32
    %cst_75 = arith.constant 6.000000e+00 : f32
    %199 = vector.broadcast %cst_74 : f32 to vector<128x4xf32>
    %200 = arith.maximumf %199, %198 : vector<128x4xf32>
    %201 = vector.broadcast %cst_75 : f32 to vector<128x4xf32>
    %202 = arith.minimumf %201, %200 : vector<128x4xf32>
    %203 = vector.extract_strided_slice %118 {offsets = [0, 0, 7, 0], sizes = [2, 8, 8, 20], strides = [1, 1, 1, 1]} : vector<2x10x24x20xf32> to vector<2x8x8x20xf32>
    %204 = vector.shape_cast %203 : vector<2x8x8x20xf32> to vector<128x20xf32>
    %c0_76 = arith.constant 0 : index
    %c0_77 = arith.constant 0 : index
    %c0_78 = arith.constant 0 : index
    %205 = vector.load %arg4[%c0_76, %c0_77, %c0_78] : memref<9x1x20xf32, #tpu.memory_space<vmem>>, vector<1x1x20xf32>
    %206 = vector.shape_cast %205 : vector<1x1x20xf32> to vector<1x20xf32>
    %207 = vector.broadcast %206 : vector<1x20xf32> to vector<128x20xf32>
    %208 = arith.mulf %204, %207 : vector<128x20xf32>
    %209 = vector.extract_strided_slice %118 {offsets = [0, 0, 8, 0], sizes = [2, 8, 8, 20], strides = [1, 1, 1, 1]} : vector<2x10x24x20xf32> to vector<2x8x8x20xf32>
    %210 = vector.shape_cast %209 : vector<2x8x8x20xf32> to vector<128x20xf32>
    %c1_79 = arith.constant 1 : index
    %c0_80 = arith.constant 0 : index
    %c0_81 = arith.constant 0 : index
    %211 = vector.load %arg4[%c1_79, %c0_80, %c0_81] : memref<9x1x20xf32, #tpu.memory_space<vmem>>, vector<1x1x20xf32>
    %212 = vector.shape_cast %211 : vector<1x1x20xf32> to vector<1x20xf32>
    %213 = vector.broadcast %212 : vector<1x20xf32> to vector<128x20xf32>
    %214 = arith.mulf %210, %213 : vector<128x20xf32>
    %215 = arith.addf %208, %214 : vector<128x20xf32>
    %216 = vector.extract_strided_slice %118 {offsets = [0, 0, 9, 0], sizes = [2, 8, 8, 20], strides = [1, 1, 1, 1]} : vector<2x10x24x20xf32> to vector<2x8x8x20xf32>
    %217 = vector.shape_cast %216 : vector<2x8x8x20xf32> to vector<128x20xf32>
    %c2_82 = arith.constant 2 : index
    %c0_83 = arith.constant 0 : index
    %c0_84 = arith.constant 0 : index
    %218 = vector.load %arg4[%c2_82, %c0_83, %c0_84] : memref<9x1x20xf32, #tpu.memory_space<vmem>>, vector<1x1x20xf32>
    %219 = vector.shape_cast %218 : vector<1x1x20xf32> to vector<1x20xf32>
    %220 = vector.broadcast %219 : vector<1x20xf32> to vector<128x20xf32>
    %221 = arith.mulf %217, %220 : vector<128x20xf32>
    %222 = arith.addf %215, %221 : vector<128x20xf32>
    %223 = vector.extract_strided_slice %118 {offsets = [0, 1, 7, 0], sizes = [2, 8, 8, 20], strides = [1, 1, 1, 1]} : vector<2x10x24x20xf32> to vector<2x8x8x20xf32>
    %224 = vector.shape_cast %223 : vector<2x8x8x20xf32> to vector<128x20xf32>
    %c3_85 = arith.constant 3 : index
    %c0_86 = arith.constant 0 : index
    %c0_87 = arith.constant 0 : index
    %225 = vector.load %arg4[%c3_85, %c0_86, %c0_87] : memref<9x1x20xf32, #tpu.memory_space<vmem>>, vector<1x1x20xf32>
    %226 = vector.shape_cast %225 : vector<1x1x20xf32> to vector<1x20xf32>
    %227 = vector.broadcast %226 : vector<1x20xf32> to vector<128x20xf32>
    %228 = arith.mulf %224, %227 : vector<128x20xf32>
    %229 = arith.addf %222, %228 : vector<128x20xf32>
    %230 = vector.extract_strided_slice %118 {offsets = [0, 1, 8, 0], sizes = [2, 8, 8, 20], strides = [1, 1, 1, 1]} : vector<2x10x24x20xf32> to vector<2x8x8x20xf32>
    %231 = vector.shape_cast %230 : vector<2x8x8x20xf32> to vector<128x20xf32>
    %c4_88 = arith.constant 4 : index
    %c0_89 = arith.constant 0 : index
    %c0_90 = arith.constant 0 : index
    %232 = vector.load %arg4[%c4_88, %c0_89, %c0_90] : memref<9x1x20xf32, #tpu.memory_space<vmem>>, vector<1x1x20xf32>
    %233 = vector.shape_cast %232 : vector<1x1x20xf32> to vector<1x20xf32>
    %234 = vector.broadcast %233 : vector<1x20xf32> to vector<128x20xf32>
    %235 = arith.mulf %231, %234 : vector<128x20xf32>
    %236 = arith.addf %229, %235 : vector<128x20xf32>
    %237 = vector.extract_strided_slice %118 {offsets = [0, 1, 9, 0], sizes = [2, 8, 8, 20], strides = [1, 1, 1, 1]} : vector<2x10x24x20xf32> to vector<2x8x8x20xf32>
    %238 = vector.shape_cast %237 : vector<2x8x8x20xf32> to vector<128x20xf32>
    %c5_91 = arith.constant 5 : index
    %c0_92 = arith.constant 0 : index
    %c0_93 = arith.constant 0 : index
    %239 = vector.load %arg4[%c5_91, %c0_92, %c0_93] : memref<9x1x20xf32, #tpu.memory_space<vmem>>, vector<1x1x20xf32>
    %240 = vector.shape_cast %239 : vector<1x1x20xf32> to vector<1x20xf32>
    %241 = vector.broadcast %240 : vector<1x20xf32> to vector<128x20xf32>
    %242 = arith.mulf %238, %241 : vector<128x20xf32>
    %243 = arith.addf %236, %242 : vector<128x20xf32>
    %244 = vector.extract_strided_slice %118 {offsets = [0, 2, 7, 0], sizes = [2, 8, 8, 20], strides = [1, 1, 1, 1]} : vector<2x10x24x20xf32> to vector<2x8x8x20xf32>
    %245 = vector.shape_cast %244 : vector<2x8x8x20xf32> to vector<128x20xf32>
    %c6_94 = arith.constant 6 : index
    %c0_95 = arith.constant 0 : index
    %c0_96 = arith.constant 0 : index
    %246 = vector.load %arg4[%c6_94, %c0_95, %c0_96] : memref<9x1x20xf32, #tpu.memory_space<vmem>>, vector<1x1x20xf32>
    %247 = vector.shape_cast %246 : vector<1x1x20xf32> to vector<1x20xf32>
    %248 = vector.broadcast %247 : vector<1x20xf32> to vector<128x20xf32>
    %249 = arith.mulf %245, %248 : vector<128x20xf32>
    %250 = arith.addf %243, %249 : vector<128x20xf32>
    %251 = vector.extract_strided_slice %118 {offsets = [0, 2, 8, 0], sizes = [2, 8, 8, 20], strides = [1, 1, 1, 1]} : vector<2x10x24x20xf32> to vector<2x8x8x20xf32>
    %252 = vector.shape_cast %251 : vector<2x8x8x20xf32> to vector<128x20xf32>
    %c7_97 = arith.constant 7 : index
    %c0_98 = arith.constant 0 : index
    %c0_99 = arith.constant 0 : index
    %253 = vector.load %arg4[%c7_97, %c0_98, %c0_99] : memref<9x1x20xf32, #tpu.memory_space<vmem>>, vector<1x1x20xf32>
    %254 = vector.shape_cast %253 : vector<1x1x20xf32> to vector<1x20xf32>
    %255 = vector.broadcast %254 : vector<1x20xf32> to vector<128x20xf32>
    %256 = arith.mulf %252, %255 : vector<128x20xf32>
    %257 = arith.addf %250, %256 : vector<128x20xf32>
    %258 = vector.extract_strided_slice %118 {offsets = [0, 2, 9, 0], sizes = [2, 8, 8, 20], strides = [1, 1, 1, 1]} : vector<2x10x24x20xf32> to vector<2x8x8x20xf32>
    %259 = vector.shape_cast %258 : vector<2x8x8x20xf32> to vector<128x20xf32>
    %c8_100 = arith.constant 8 : index
    %c0_101 = arith.constant 0 : index
    %c0_102 = arith.constant 0 : index
    %260 = vector.load %arg4[%c8_100, %c0_101, %c0_102] : memref<9x1x20xf32, #tpu.memory_space<vmem>>, vector<1x1x20xf32>
    %261 = vector.shape_cast %260 : vector<1x1x20xf32> to vector<1x20xf32>
    %262 = vector.broadcast %261 : vector<1x20xf32> to vector<128x20xf32>
    %263 = arith.mulf %259, %262 : vector<128x20xf32>
    %264 = arith.addf %257, %263 : vector<128x20xf32>
    %cst_103 = arith.constant dense<0.000000e+00> : vector<20xf32>
    %265 = vector.multi_reduction <add>, %264, %cst_103 [0] : vector<128x20xf32> to vector<20xf32>
    %266 = vector.shape_cast %265 : vector<20xf32> to vector<1x20xf32>
    %cst_104 = arith.constant 1.280000e+02 : f32
    %267 = vector.broadcast %cst_104 : f32 to vector<1x20xf32>
    %268 = arith.divf %266, %267 : vector<1x20xf32>
    %269 = vector.broadcast %268 : vector<1x20xf32> to vector<128x20xf32>
    %270 = arith.subf %264, %269 : vector<128x20xf32>
    %271 = arith.mulf %270, %270 : vector<128x20xf32>
    %cst_105 = arith.constant dense<0.000000e+00> : vector<20xf32>
    %272 = vector.multi_reduction <add>, %271, %cst_105 [0] : vector<128x20xf32> to vector<20xf32>
    %273 = vector.shape_cast %272 : vector<20xf32> to vector<1x20xf32>
    %cst_106 = arith.constant 1.280000e+02 : f32
    %274 = vector.broadcast %cst_106 : f32 to vector<1x20xf32>
    %275 = arith.divf %273, %274 : vector<1x20xf32>
    %276 = vector.broadcast %268 : vector<1x20xf32> to vector<128x20xf32>
    %277 = arith.subf %264, %276 : vector<128x20xf32>
    %cst_107 = arith.constant 9.99999974E-6 : f32
    %278 = vector.broadcast %cst_107 : f32 to vector<1x20xf32>
    %279 = arith.addf %275, %278 : vector<1x20xf32>
    %280 = math.rsqrt %279 : vector<1x20xf32>
    %281 = vector.broadcast %280 : vector<1x20xf32> to vector<128x20xf32>
    %282 = arith.mulf %277, %281 : vector<128x20xf32>
    %cst_108 = arith.constant 0.000000e+00 : f32
    %cst_109 = arith.constant 6.000000e+00 : f32
    %283 = vector.broadcast %cst_108 : f32 to vector<128x20xf32>
    %284 = arith.maximumf %283, %282 : vector<128x20xf32>
    %285 = vector.broadcast %cst_109 : f32 to vector<128x20xf32>
    %286 = arith.minimumf %285, %284 : vector<128x20xf32>
    %c0_110 = arith.constant 0 : index
    %c0_111 = arith.constant 0 : index
    %287 = vector.load %arg5[%c0_110, %c0_111] : memref<4x16xbf16, #tpu.memory_space<vmem>>, vector<4x16xbf16>
    %288 = arith.truncf %202 : vector<128x4xf32> to vector<128x4xbf16>
    %cst_112 = arith.constant dense<0.000000e+00> : vector<128x16xf32>
    %289 = tpu.matmul %288, %287, %cst_112 {dimension_numbers = #tpu.dot_dimension_numbers<[1], [0], [0], [1], [0, 0, 1, 1], [], []>} : vector<128x4xbf16>, vector<4x16xbf16>, vector<128x16xf32> -> vector<128x16xf32>
    %c0_113 = arith.constant 0 : index
    %c0_114 = arith.constant 0 : index
    %290 = vector.load %arg6[%c0_113, %c0_114] : memref<20x16xbf16, #tpu.memory_space<vmem>>, vector<20x16xbf16>
    %291 = arith.truncf %286 : vector<128x20xf32> to vector<128x20xbf16>
    %cst_115 = arith.constant dense<0.000000e+00> : vector<128x16xf32>
    %292 = tpu.matmul %291, %290, %cst_115 {dimension_numbers = #tpu.dot_dimension_numbers<[1], [0], [0], [1], [0, 0, 1, 1], [], []>} : vector<128x20xbf16>, vector<20x16xbf16>, vector<128x16xf32> -> vector<128x16xf32>
    %293 = arith.addf %289, %292 : vector<128x16xf32>
    %cst_116 = arith.constant dense<0.000000e+00> : vector<16xf32>
    %294 = vector.multi_reduction <add>, %293, %cst_116 [0] : vector<128x16xf32> to vector<16xf32>
    %295 = vector.shape_cast %294 : vector<16xf32> to vector<1x16xf32>
    %cst_117 = arith.constant 1.280000e+02 : f32
    %296 = vector.broadcast %cst_117 : f32 to vector<1x16xf32>
    %297 = arith.divf %295, %296 : vector<1x16xf32>
    %298 = vector.broadcast %297 : vector<1x16xf32> to vector<128x16xf32>
    %299 = arith.subf %293, %298 : vector<128x16xf32>
    %300 = arith.mulf %299, %299 : vector<128x16xf32>
    %cst_118 = arith.constant dense<0.000000e+00> : vector<16xf32>
    %301 = vector.multi_reduction <add>, %300, %cst_118 [0] : vector<128x16xf32> to vector<16xf32>
    %302 = vector.shape_cast %301 : vector<16xf32> to vector<1x16xf32>
    %cst_119 = arith.constant 1.280000e+02 : f32
    %303 = vector.broadcast %cst_119 : f32 to vector<1x16xf32>
    %304 = arith.divf %302, %303 : vector<1x16xf32>
    %305 = vector.broadcast %297 : vector<1x16xf32> to vector<128x16xf32>
    %306 = arith.subf %293, %305 : vector<128x16xf32>
    %cst_120 = arith.constant 9.99999974E-6 : f32
    %307 = vector.broadcast %cst_120 : f32 to vector<1x16xf32>
    %308 = arith.addf %304, %307 : vector<1x16xf32>
    %309 = math.rsqrt %308 : vector<1x16xf32>
    %310 = vector.broadcast %309 : vector<1x16xf32> to vector<128x16xf32>
    %311 = arith.mulf %306, %310 : vector<128x16xf32>
    %cst_121 = arith.constant 0.000000e+00 : f32
    %cst_122 = arith.constant 6.000000e+00 : f32
    %312 = vector.broadcast %cst_121 : f32 to vector<128x16xf32>
    %313 = arith.maximumf %312, %311 : vector<128x16xf32>
    %314 = vector.broadcast %cst_122 : f32 to vector<128x16xf32>
    %315 = arith.minimumf %314, %313 : vector<128x16xf32>
    %316 = vector.shape_cast %315 : vector<128x16xf32> to vector<2x8x8x16xf32>
    %cst_123 = arith.constant 0.000000e+00 : f32
    %317 = vector.broadcast %cst_123 : f32 to vector<2x1x8x16xf32>
    %318 = tpu.concatenate %317, %316, %317 in 1 : vector<2x1x8x16xf32>, vector<2x8x8x16xf32>, vector<2x1x8x16xf32> -> vector<2x10x8x16xf32>
    %cst_124 = arith.constant 0.000000e+00 : f32
    %319 = vector.broadcast %cst_124 : f32 to vector<2x10x8x16xf32>
    %320 = tpu.concatenate %319, %318, %319 in 2 : vector<2x10x8x16xf32>, vector<2x10x8x16xf32>, vector<2x10x8x16xf32> -> vector<2x10x24x16xf32>
    %cst_125 = arith.constant 0.000000e+00 : f32
    %321 = vector.broadcast %cst_125 : f32 to vector<128x16xf32>
    %322 = vector.extract_strided_slice %4 {offsets = [0, 0, 7, 0], sizes = [2, 8, 8, 4], strides = [1, 1, 1, 1]} : vector<2x10x24x4xf32> to vector<2x8x8x4xf32>
    %323 = vector.shape_cast %322 : vector<2x8x8x4xf32> to vector<128x4xf32>
    %c0_126 = arith.constant 0 : index
    %c0_127 = arith.constant 0 : index
    %c0_128 = arith.constant 0 : index
    %324 = vector.load %arg7[%c0_126, %c0_127, %c0_128] : memref<9x4x16xbf16, #tpu.memory_space<vmem>>, vector<1x4x16xbf16>
    %325 = vector.shape_cast %324 : vector<1x4x16xbf16> to vector<4x16xbf16>
    %326 = arith.truncf %323 : vector<128x4xf32> to vector<128x4xbf16>
    %cst_129 = arith.constant dense<0.000000e+00> : vector<128x16xf32>
    %327 = tpu.matmul %326, %325, %cst_129 {dimension_numbers = #tpu.dot_dimension_numbers<[1], [0], [0], [1], [0, 0, 1, 1], [], []>} : vector<128x4xbf16>, vector<4x16xbf16>, vector<128x16xf32> -> vector<128x16xf32>
    %328 = arith.addf %321, %327 : vector<128x16xf32>
    %329 = vector.extract_strided_slice %4 {offsets = [0, 0, 8, 0], sizes = [2, 8, 8, 4], strides = [1, 1, 1, 1]} : vector<2x10x24x4xf32> to vector<2x8x8x4xf32>
    %330 = vector.shape_cast %329 : vector<2x8x8x4xf32> to vector<128x4xf32>
    %c1_130 = arith.constant 1 : index
    %c0_131 = arith.constant 0 : index
    %c0_132 = arith.constant 0 : index
    %331 = vector.load %arg7[%c1_130, %c0_131, %c0_132] : memref<9x4x16xbf16, #tpu.memory_space<vmem>>, vector<1x4x16xbf16>
    %332 = vector.shape_cast %331 : vector<1x4x16xbf16> to vector<4x16xbf16>
    %333 = arith.truncf %330 : vector<128x4xf32> to vector<128x4xbf16>
    %cst_133 = arith.constant dense<0.000000e+00> : vector<128x16xf32>
    %334 = tpu.matmul %333, %332, %cst_133 {dimension_numbers = #tpu.dot_dimension_numbers<[1], [0], [0], [1], [0, 0, 1, 1], [], []>} : vector<128x4xbf16>, vector<4x16xbf16>, vector<128x16xf32> -> vector<128x16xf32>
    %335 = arith.addf %328, %334 : vector<128x16xf32>
    %336 = vector.extract_strided_slice %4 {offsets = [0, 0, 9, 0], sizes = [2, 8, 8, 4], strides = [1, 1, 1, 1]} : vector<2x10x24x4xf32> to vector<2x8x8x4xf32>
    %337 = vector.shape_cast %336 : vector<2x8x8x4xf32> to vector<128x4xf32>
    %c2_134 = arith.constant 2 : index
    %c0_135 = arith.constant 0 : index
    %c0_136 = arith.constant 0 : index
    %338 = vector.load %arg7[%c2_134, %c0_135, %c0_136] : memref<9x4x16xbf16, #tpu.memory_space<vmem>>, vector<1x4x16xbf16>
    %339 = vector.shape_cast %338 : vector<1x4x16xbf16> to vector<4x16xbf16>
    %340 = arith.truncf %337 : vector<128x4xf32> to vector<128x4xbf16>
    %cst_137 = arith.constant dense<0.000000e+00> : vector<128x16xf32>
    %341 = tpu.matmul %340, %339, %cst_137 {dimension_numbers = #tpu.dot_dimension_numbers<[1], [0], [0], [1], [0, 0, 1, 1], [], []>} : vector<128x4xbf16>, vector<4x16xbf16>, vector<128x16xf32> -> vector<128x16xf32>
    %342 = arith.addf %335, %341 : vector<128x16xf32>
    %343 = vector.extract_strided_slice %4 {offsets = [0, 1, 7, 0], sizes = [2, 8, 8, 4], strides = [1, 1, 1, 1]} : vector<2x10x24x4xf32> to vector<2x8x8x4xf32>
    %344 = vector.shape_cast %343 : vector<2x8x8x4xf32> to vector<128x4xf32>
    %c3_138 = arith.constant 3 : index
    %c0_139 = arith.constant 0 : index
    %c0_140 = arith.constant 0 : index
    %345 = vector.load %arg7[%c3_138, %c0_139, %c0_140] : memref<9x4x16xbf16, #tpu.memory_space<vmem>>, vector<1x4x16xbf16>
    %346 = vector.shape_cast %345 : vector<1x4x16xbf16> to vector<4x16xbf16>
    %347 = arith.truncf %344 : vector<128x4xf32> to vector<128x4xbf16>
    %cst_141 = arith.constant dense<0.000000e+00> : vector<128x16xf32>
    %348 = tpu.matmul %347, %346, %cst_141 {dimension_numbers = #tpu.dot_dimension_numbers<[1], [0], [0], [1], [0, 0, 1, 1], [], []>} : vector<128x4xbf16>, vector<4x16xbf16>, vector<128x16xf32> -> vector<128x16xf32>
    %349 = arith.addf %342, %348 : vector<128x16xf32>
    %350 = vector.extract_strided_slice %4 {offsets = [0, 1, 8, 0], sizes = [2, 8, 8, 4], strides = [1, 1, 1, 1]} : vector<2x10x24x4xf32> to vector<2x8x8x4xf32>
    %351 = vector.shape_cast %350 : vector<2x8x8x4xf32> to vector<128x4xf32>
    %c4_142 = arith.constant 4 : index
    %c0_143 = arith.constant 0 : index
    %c0_144 = arith.constant 0 : index
    %352 = vector.load %arg7[%c4_142, %c0_143, %c0_144] : memref<9x4x16xbf16, #tpu.memory_space<vmem>>, vector<1x4x16xbf16>
    %353 = vector.shape_cast %352 : vector<1x4x16xbf16> to vector<4x16xbf16>
    %354 = arith.truncf %351 : vector<128x4xf32> to vector<128x4xbf16>
    %cst_145 = arith.constant dense<0.000000e+00> : vector<128x16xf32>
    %355 = tpu.matmul %354, %353, %cst_145 {dimension_numbers = #tpu.dot_dimension_numbers<[1], [0], [0], [1], [0, 0, 1, 1], [], []>} : vector<128x4xbf16>, vector<4x16xbf16>, vector<128x16xf32> -> vector<128x16xf32>
    %356 = arith.addf %349, %355 : vector<128x16xf32>
    %357 = vector.extract_strided_slice %4 {offsets = [0, 1, 9, 0], sizes = [2, 8, 8, 4], strides = [1, 1, 1, 1]} : vector<2x10x24x4xf32> to vector<2x8x8x4xf32>
    %358 = vector.shape_cast %357 : vector<2x8x8x4xf32> to vector<128x4xf32>
    %c5_146 = arith.constant 5 : index
    %c0_147 = arith.constant 0 : index
    %c0_148 = arith.constant 0 : index
    %359 = vector.load %arg7[%c5_146, %c0_147, %c0_148] : memref<9x4x16xbf16, #tpu.memory_space<vmem>>, vector<1x4x16xbf16>
    %360 = vector.shape_cast %359 : vector<1x4x16xbf16> to vector<4x16xbf16>
    %361 = arith.truncf %358 : vector<128x4xf32> to vector<128x4xbf16>
    %cst_149 = arith.constant dense<0.000000e+00> : vector<128x16xf32>
    %362 = tpu.matmul %361, %360, %cst_149 {dimension_numbers = #tpu.dot_dimension_numbers<[1], [0], [0], [1], [0, 0, 1, 1], [], []>} : vector<128x4xbf16>, vector<4x16xbf16>, vector<128x16xf32> -> vector<128x16xf32>
    %363 = arith.addf %356, %362 : vector<128x16xf32>
    %364 = vector.extract_strided_slice %4 {offsets = [0, 2, 7, 0], sizes = [2, 8, 8, 4], strides = [1, 1, 1, 1]} : vector<2x10x24x4xf32> to vector<2x8x8x4xf32>
    %365 = vector.shape_cast %364 : vector<2x8x8x4xf32> to vector<128x4xf32>
    %c6_150 = arith.constant 6 : index
    %c0_151 = arith.constant 0 : index
    %c0_152 = arith.constant 0 : index
    %366 = vector.load %arg7[%c6_150, %c0_151, %c0_152] : memref<9x4x16xbf16, #tpu.memory_space<vmem>>, vector<1x4x16xbf16>
    %367 = vector.shape_cast %366 : vector<1x4x16xbf16> to vector<4x16xbf16>
    %368 = arith.truncf %365 : vector<128x4xf32> to vector<128x4xbf16>
    %cst_153 = arith.constant dense<0.000000e+00> : vector<128x16xf32>
    %369 = tpu.matmul %368, %367, %cst_153 {dimension_numbers = #tpu.dot_dimension_numbers<[1], [0], [0], [1], [0, 0, 1, 1], [], []>} : vector<128x4xbf16>, vector<4x16xbf16>, vector<128x16xf32> -> vector<128x16xf32>
    %370 = arith.addf %363, %369 : vector<128x16xf32>
    %371 = vector.extract_strided_slice %4 {offsets = [0, 2, 8, 0], sizes = [2, 8, 8, 4], strides = [1, 1, 1, 1]} : vector<2x10x24x4xf32> to vector<2x8x8x4xf32>
    %372 = vector.shape_cast %371 : vector<2x8x8x4xf32> to vector<128x4xf32>
    %c7_154 = arith.constant 7 : index
    %c0_155 = arith.constant 0 : index
    %c0_156 = arith.constant 0 : index
    %373 = vector.load %arg7[%c7_154, %c0_155, %c0_156] : memref<9x4x16xbf16, #tpu.memory_space<vmem>>, vector<1x4x16xbf16>
    %374 = vector.shape_cast %373 : vector<1x4x16xbf16> to vector<4x16xbf16>
    %375 = arith.truncf %372 : vector<128x4xf32> to vector<128x4xbf16>
    %cst_157 = arith.constant dense<0.000000e+00> : vector<128x16xf32>
    %376 = tpu.matmul %375, %374, %cst_157 {dimension_numbers = #tpu.dot_dimension_numbers<[1], [0], [0], [1], [0, 0, 1, 1], [], []>} : vector<128x4xbf16>, vector<4x16xbf16>, vector<128x16xf32> -> vector<128x16xf32>
    %377 = arith.addf %370, %376 : vector<128x16xf32>
    %378 = vector.extract_strided_slice %4 {offsets = [0, 2, 9, 0], sizes = [2, 8, 8, 4], strides = [1, 1, 1, 1]} : vector<2x10x24x4xf32> to vector<2x8x8x4xf32>
    %379 = vector.shape_cast %378 : vector<2x8x8x4xf32> to vector<128x4xf32>
    %c8_158 = arith.constant 8 : index
    %c0_159 = arith.constant 0 : index
    %c0_160 = arith.constant 0 : index
    %380 = vector.load %arg7[%c8_158, %c0_159, %c0_160] : memref<9x4x16xbf16, #tpu.memory_space<vmem>>, vector<1x4x16xbf16>
    %381 = vector.shape_cast %380 : vector<1x4x16xbf16> to vector<4x16xbf16>
    %382 = arith.truncf %379 : vector<128x4xf32> to vector<128x4xbf16>
    %cst_161 = arith.constant dense<0.000000e+00> : vector<128x16xf32>
    %383 = tpu.matmul %382, %381, %cst_161 {dimension_numbers = #tpu.dot_dimension_numbers<[1], [0], [0], [1], [0, 0, 1, 1], [], []>} : vector<128x4xbf16>, vector<4x16xbf16>, vector<128x16xf32> -> vector<128x16xf32>
    %384 = arith.addf %377, %383 : vector<128x16xf32>
    %385 = vector.extract_strided_slice %118 {offsets = [0, 0, 7, 0], sizes = [2, 8, 8, 20], strides = [1, 1, 1, 1]} : vector<2x10x24x20xf32> to vector<2x8x8x20xf32>
    %386 = vector.shape_cast %385 : vector<2x8x8x20xf32> to vector<128x20xf32>
    %c0_162 = arith.constant 0 : index
    %c0_163 = arith.constant 0 : index
    %c0_164 = arith.constant 0 : index
    %387 = vector.load %arg8[%c0_162, %c0_163, %c0_164] : memref<9x20x16xbf16, #tpu.memory_space<vmem>>, vector<1x20x16xbf16>
    %388 = vector.shape_cast %387 : vector<1x20x16xbf16> to vector<20x16xbf16>
    %389 = arith.truncf %386 : vector<128x20xf32> to vector<128x20xbf16>
    %cst_165 = arith.constant dense<0.000000e+00> : vector<128x16xf32>
    %390 = tpu.matmul %389, %388, %cst_165 {dimension_numbers = #tpu.dot_dimension_numbers<[1], [0], [0], [1], [0, 0, 1, 1], [], []>} : vector<128x20xbf16>, vector<20x16xbf16>, vector<128x16xf32> -> vector<128x16xf32>
    %391 = arith.addf %384, %390 : vector<128x16xf32>
    %392 = vector.extract_strided_slice %118 {offsets = [0, 0, 8, 0], sizes = [2, 8, 8, 20], strides = [1, 1, 1, 1]} : vector<2x10x24x20xf32> to vector<2x8x8x20xf32>
    %393 = vector.shape_cast %392 : vector<2x8x8x20xf32> to vector<128x20xf32>
    %c1_166 = arith.constant 1 : index
    %c0_167 = arith.constant 0 : index
    %c0_168 = arith.constant 0 : index
    %394 = vector.load %arg8[%c1_166, %c0_167, %c0_168] : memref<9x20x16xbf16, #tpu.memory_space<vmem>>, vector<1x20x16xbf16>
    %395 = vector.shape_cast %394 : vector<1x20x16xbf16> to vector<20x16xbf16>
    %396 = arith.truncf %393 : vector<128x20xf32> to vector<128x20xbf16>
    %cst_169 = arith.constant dense<0.000000e+00> : vector<128x16xf32>
    %397 = tpu.matmul %396, %395, %cst_169 {dimension_numbers = #tpu.dot_dimension_numbers<[1], [0], [0], [1], [0, 0, 1, 1], [], []>} : vector<128x20xbf16>, vector<20x16xbf16>, vector<128x16xf32> -> vector<128x16xf32>
    %398 = arith.addf %391, %397 : vector<128x16xf32>
    %399 = vector.extract_strided_slice %118 {offsets = [0, 0, 9, 0], sizes = [2, 8, 8, 20], strides = [1, 1, 1, 1]} : vector<2x10x24x20xf32> to vector<2x8x8x20xf32>
    %400 = vector.shape_cast %399 : vector<2x8x8x20xf32> to vector<128x20xf32>
    %c2_170 = arith.constant 2 : index
    %c0_171 = arith.constant 0 : index
    %c0_172 = arith.constant 0 : index
    %401 = vector.load %arg8[%c2_170, %c0_171, %c0_172] : memref<9x20x16xbf16, #tpu.memory_space<vmem>>, vector<1x20x16xbf16>
    %402 = vector.shape_cast %401 : vector<1x20x16xbf16> to vector<20x16xbf16>
    %403 = arith.truncf %400 : vector<128x20xf32> to vector<128x20xbf16>
    %cst_173 = arith.constant dense<0.000000e+00> : vector<128x16xf32>
    %404 = tpu.matmul %403, %402, %cst_173 {dimension_numbers = #tpu.dot_dimension_numbers<[1], [0], [0], [1], [0, 0, 1, 1], [], []>} : vector<128x20xbf16>, vector<20x16xbf16>, vector<128x16xf32> -> vector<128x16xf32>
    %405 = arith.addf %398, %404 : vector<128x16xf32>
    %406 = vector.extract_strided_slice %118 {offsets = [0, 1, 7, 0], sizes = [2, 8, 8, 20], strides = [1, 1, 1, 1]} : vector<2x10x24x20xf32> to vector<2x8x8x20xf32>
    %407 = vector.shape_cast %406 : vector<2x8x8x20xf32> to vector<128x20xf32>
    %c3_174 = arith.constant 3 : index
    %c0_175 = arith.constant 0 : index
    %c0_176 = arith.constant 0 : index
    %408 = vector.load %arg8[%c3_174, %c0_175, %c0_176] : memref<9x20x16xbf16, #tpu.memory_space<vmem>>, vector<1x20x16xbf16>
    %409 = vector.shape_cast %408 : vector<1x20x16xbf16> to vector<20x16xbf16>
    %410 = arith.truncf %407 : vector<128x20xf32> to vector<128x20xbf16>
    %cst_177 = arith.constant dense<0.000000e+00> : vector<128x16xf32>
    %411 = tpu.matmul %410, %409, %cst_177 {dimension_numbers = #tpu.dot_dimension_numbers<[1], [0], [0], [1], [0, 0, 1, 1], [], []>} : vector<128x20xbf16>, vector<20x16xbf16>, vector<128x16xf32> -> vector<128x16xf32>
    %412 = arith.addf %405, %411 : vector<128x16xf32>
    %413 = vector.extract_strided_slice %118 {offsets = [0, 1, 8, 0], sizes = [2, 8, 8, 20], strides = [1, 1, 1, 1]} : vector<2x10x24x20xf32> to vector<2x8x8x20xf32>
    %414 = vector.shape_cast %413 : vector<2x8x8x20xf32> to vector<128x20xf32>
    %c4_178 = arith.constant 4 : index
    %c0_179 = arith.constant 0 : index
    %c0_180 = arith.constant 0 : index
    %415 = vector.load %arg8[%c4_178, %c0_179, %c0_180] : memref<9x20x16xbf16, #tpu.memory_space<vmem>>, vector<1x20x16xbf16>
    %416 = vector.shape_cast %415 : vector<1x20x16xbf16> to vector<20x16xbf16>
    %417 = arith.truncf %414 : vector<128x20xf32> to vector<128x20xbf16>
    %cst_181 = arith.constant dense<0.000000e+00> : vector<128x16xf32>
    %418 = tpu.matmul %417, %416, %cst_181 {dimension_numbers = #tpu.dot_dimension_numbers<[1], [0], [0], [1], [0, 0, 1, 1], [], []>} : vector<128x20xbf16>, vector<20x16xbf16>, vector<128x16xf32> -> vector<128x16xf32>
    %419 = arith.addf %412, %418 : vector<128x16xf32>
    %420 = vector.extract_strided_slice %118 {offsets = [0, 1, 9, 0], sizes = [2, 8, 8, 20], strides = [1, 1, 1, 1]} : vector<2x10x24x20xf32> to vector<2x8x8x20xf32>
    %421 = vector.shape_cast %420 : vector<2x8x8x20xf32> to vector<128x20xf32>
    %c5_182 = arith.constant 5 : index
    %c0_183 = arith.constant 0 : index
    %c0_184 = arith.constant 0 : index
    %422 = vector.load %arg8[%c5_182, %c0_183, %c0_184] : memref<9x20x16xbf16, #tpu.memory_space<vmem>>, vector<1x20x16xbf16>
    %423 = vector.shape_cast %422 : vector<1x20x16xbf16> to vector<20x16xbf16>
    %424 = arith.truncf %421 : vector<128x20xf32> to vector<128x20xbf16>
    %cst_185 = arith.constant dense<0.000000e+00> : vector<128x16xf32>
    %425 = tpu.matmul %424, %423, %cst_185 {dimension_numbers = #tpu.dot_dimension_numbers<[1], [0], [0], [1], [0, 0, 1, 1], [], []>} : vector<128x20xbf16>, vector<20x16xbf16>, vector<128x16xf32> -> vector<128x16xf32>
    %426 = arith.addf %419, %425 : vector<128x16xf32>
    %427 = vector.extract_strided_slice %118 {offsets = [0, 2, 7, 0], sizes = [2, 8, 8, 20], strides = [1, 1, 1, 1]} : vector<2x10x24x20xf32> to vector<2x8x8x20xf32>
    %428 = vector.shape_cast %427 : vector<2x8x8x20xf32> to vector<128x20xf32>
    %c6_186 = arith.constant 6 : index
    %c0_187 = arith.constant 0 : index
    %c0_188 = arith.constant 0 : index
    %429 = vector.load %arg8[%c6_186, %c0_187, %c0_188] : memref<9x20x16xbf16, #tpu.memory_space<vmem>>, vector<1x20x16xbf16>
    %430 = vector.shape_cast %429 : vector<1x20x16xbf16> to vector<20x16xbf16>
    %431 = arith.truncf %428 : vector<128x20xf32> to vector<128x20xbf16>
    %cst_189 = arith.constant dense<0.000000e+00> : vector<128x16xf32>
    %432 = tpu.matmul %431, %430, %cst_189 {dimension_numbers = #tpu.dot_dimension_numbers<[1], [0], [0], [1], [0, 0, 1, 1], [], []>} : vector<128x20xbf16>, vector<20x16xbf16>, vector<128x16xf32> -> vector<128x16xf32>
    %433 = arith.addf %426, %432 : vector<128x16xf32>
    %434 = vector.extract_strided_slice %118 {offsets = [0, 2, 8, 0], sizes = [2, 8, 8, 20], strides = [1, 1, 1, 1]} : vector<2x10x24x20xf32> to vector<2x8x8x20xf32>
    %435 = vector.shape_cast %434 : vector<2x8x8x20xf32> to vector<128x20xf32>
    %c7_190 = arith.constant 7 : index
    %c0_191 = arith.constant 0 : index
    %c0_192 = arith.constant 0 : index
    %436 = vector.load %arg8[%c7_190, %c0_191, %c0_192] : memref<9x20x16xbf16, #tpu.memory_space<vmem>>, vector<1x20x16xbf16>
    %437 = vector.shape_cast %436 : vector<1x20x16xbf16> to vector<20x16xbf16>
    %438 = arith.truncf %435 : vector<128x20xf32> to vector<128x20xbf16>
    %cst_193 = arith.constant dense<0.000000e+00> : vector<128x16xf32>
    %439 = tpu.matmul %438, %437, %cst_193 {dimension_numbers = #tpu.dot_dimension_numbers<[1], [0], [0], [1], [0, 0, 1, 1], [], []>} : vector<128x20xbf16>, vector<20x16xbf16>, vector<128x16xf32> -> vector<128x16xf32>
    %440 = arith.addf %433, %439 : vector<128x16xf32>
    %441 = vector.extract_strided_slice %118 {offsets = [0, 2, 9, 0], sizes = [2, 8, 8, 20], strides = [1, 1, 1, 1]} : vector<2x10x24x20xf32> to vector<2x8x8x20xf32>
    %442 = vector.shape_cast %441 : vector<2x8x8x20xf32> to vector<128x20xf32>
    %c8_194 = arith.constant 8 : index
    %c0_195 = arith.constant 0 : index
    %c0_196 = arith.constant 0 : index
    %443 = vector.load %arg8[%c8_194, %c0_195, %c0_196] : memref<9x20x16xbf16, #tpu.memory_space<vmem>>, vector<1x20x16xbf16>
    %444 = vector.shape_cast %443 : vector<1x20x16xbf16> to vector<20x16xbf16>
    %445 = arith.truncf %442 : vector<128x20xf32> to vector<128x20xbf16>
    %cst_197 = arith.constant dense<0.000000e+00> : vector<128x16xf32>
    %446 = tpu.matmul %445, %444, %cst_197 {dimension_numbers = #tpu.dot_dimension_numbers<[1], [0], [0], [1], [0, 0, 1, 1], [], []>} : vector<128x20xbf16>, vector<20x16xbf16>, vector<128x16xf32> -> vector<128x16xf32>
    %447 = arith.addf %440, %446 : vector<128x16xf32>
    %448 = vector.extract_strided_slice %320 {offsets = [0, 0, 7, 0], sizes = [2, 8, 8, 16], strides = [1, 1, 1, 1]} : vector<2x10x24x16xf32> to vector<2x8x8x16xf32>
    %449 = vector.shape_cast %448 : vector<2x8x8x16xf32> to vector<128x16xf32>
    %c0_198 = arith.constant 0 : index
    %c0_199 = arith.constant 0 : index
    %c0_200 = arith.constant 0 : index
    %450 = vector.load %arg9[%c0_198, %c0_199, %c0_200] : memref<9x16x16xbf16, #tpu.memory_space<vmem>>, vector<1x16x16xbf16>
    %451 = vector.shape_cast %450 : vector<1x16x16xbf16> to vector<16x16xbf16>
    %452 = arith.truncf %449 : vector<128x16xf32> to vector<128x16xbf16>
    %cst_201 = arith.constant dense<0.000000e+00> : vector<128x16xf32>
    %453 = tpu.matmul %452, %451, %cst_201 {dimension_numbers = #tpu.dot_dimension_numbers<[1], [0], [0], [1], [0, 0, 1, 1], [], []>} : vector<128x16xbf16>, vector<16x16xbf16>, vector<128x16xf32> -> vector<128x16xf32>
    %454 = arith.addf %447, %453 : vector<128x16xf32>
    %455 = vector.extract_strided_slice %320 {offsets = [0, 0, 8, 0], sizes = [2, 8, 8, 16], strides = [1, 1, 1, 1]} : vector<2x10x24x16xf32> to vector<2x8x8x16xf32>
    %456 = vector.shape_cast %455 : vector<2x8x8x16xf32> to vector<128x16xf32>
    %c1_202 = arith.constant 1 : index
    %c0_203 = arith.constant 0 : index
    %c0_204 = arith.constant 0 : index
    %457 = vector.load %arg9[%c1_202, %c0_203, %c0_204] : memref<9x16x16xbf16, #tpu.memory_space<vmem>>, vector<1x16x16xbf16>
    %458 = vector.shape_cast %457 : vector<1x16x16xbf16> to vector<16x16xbf16>
    %459 = arith.truncf %456 : vector<128x16xf32> to vector<128x16xbf16>
    %cst_205 = arith.constant dense<0.000000e+00> : vector<128x16xf32>
    %460 = tpu.matmul %459, %458, %cst_205 {dimension_numbers = #tpu.dot_dimension_numbers<[1], [0], [0], [1], [0, 0, 1, 1], [], []>} : vector<128x16xbf16>, vector<16x16xbf16>, vector<128x16xf32> -> vector<128x16xf32>
    %461 = arith.addf %454, %460 : vector<128x16xf32>
    %462 = vector.extract_strided_slice %320 {offsets = [0, 0, 9, 0], sizes = [2, 8, 8, 16], strides = [1, 1, 1, 1]} : vector<2x10x24x16xf32> to vector<2x8x8x16xf32>
    %463 = vector.shape_cast %462 : vector<2x8x8x16xf32> to vector<128x16xf32>
    %c2_206 = arith.constant 2 : index
    %c0_207 = arith.constant 0 : index
    %c0_208 = arith.constant 0 : index
    %464 = vector.load %arg9[%c2_206, %c0_207, %c0_208] : memref<9x16x16xbf16, #tpu.memory_space<vmem>>, vector<1x16x16xbf16>
    %465 = vector.shape_cast %464 : vector<1x16x16xbf16> to vector<16x16xbf16>
    %466 = arith.truncf %463 : vector<128x16xf32> to vector<128x16xbf16>
    %cst_209 = arith.constant dense<0.000000e+00> : vector<128x16xf32>
    %467 = tpu.matmul %466, %465, %cst_209 {dimension_numbers = #tpu.dot_dimension_numbers<[1], [0], [0], [1], [0, 0, 1, 1], [], []>} : vector<128x16xbf16>, vector<16x16xbf16>, vector<128x16xf32> -> vector<128x16xf32>
    %468 = arith.addf %461, %467 : vector<128x16xf32>
    %469 = vector.extract_strided_slice %320 {offsets = [0, 1, 7, 0], sizes = [2, 8, 8, 16], strides = [1, 1, 1, 1]} : vector<2x10x24x16xf32> to vector<2x8x8x16xf32>
    %470 = vector.shape_cast %469 : vector<2x8x8x16xf32> to vector<128x16xf32>
    %c3_210 = arith.constant 3 : index
    %c0_211 = arith.constant 0 : index
    %c0_212 = arith.constant 0 : index
    %471 = vector.load %arg9[%c3_210, %c0_211, %c0_212] : memref<9x16x16xbf16, #tpu.memory_space<vmem>>, vector<1x16x16xbf16>
    %472 = vector.shape_cast %471 : vector<1x16x16xbf16> to vector<16x16xbf16>
    %473 = arith.truncf %470 : vector<128x16xf32> to vector<128x16xbf16>
    %cst_213 = arith.constant dense<0.000000e+00> : vector<128x16xf32>
    %474 = tpu.matmul %473, %472, %cst_213 {dimension_numbers = #tpu.dot_dimension_numbers<[1], [0], [0], [1], [0, 0, 1, 1], [], []>} : vector<128x16xbf16>, vector<16x16xbf16>, vector<128x16xf32> -> vector<128x16xf32>
    %475 = arith.addf %468, %474 : vector<128x16xf32>
    %476 = vector.extract_strided_slice %320 {offsets = [0, 1, 8, 0], sizes = [2, 8, 8, 16], strides = [1, 1, 1, 1]} : vector<2x10x24x16xf32> to vector<2x8x8x16xf32>
    %477 = vector.shape_cast %476 : vector<2x8x8x16xf32> to vector<128x16xf32>
    %c4_214 = arith.constant 4 : index
    %c0_215 = arith.constant 0 : index
    %c0_216 = arith.constant 0 : index
    %478 = vector.load %arg9[%c4_214, %c0_215, %c0_216] : memref<9x16x16xbf16, #tpu.memory_space<vmem>>, vector<1x16x16xbf16>
    %479 = vector.shape_cast %478 : vector<1x16x16xbf16> to vector<16x16xbf16>
    %480 = arith.truncf %477 : vector<128x16xf32> to vector<128x16xbf16>
    %cst_217 = arith.constant dense<0.000000e+00> : vector<128x16xf32>
    %481 = tpu.matmul %480, %479, %cst_217 {dimension_numbers = #tpu.dot_dimension_numbers<[1], [0], [0], [1], [0, 0, 1, 1], [], []>} : vector<128x16xbf16>, vector<16x16xbf16>, vector<128x16xf32> -> vector<128x16xf32>
    %482 = arith.addf %475, %481 : vector<128x16xf32>
    %483 = vector.extract_strided_slice %320 {offsets = [0, 1, 9, 0], sizes = [2, 8, 8, 16], strides = [1, 1, 1, 1]} : vector<2x10x24x16xf32> to vector<2x8x8x16xf32>
    %484 = vector.shape_cast %483 : vector<2x8x8x16xf32> to vector<128x16xf32>
    %c5_218 = arith.constant 5 : index
    %c0_219 = arith.constant 0 : index
    %c0_220 = arith.constant 0 : index
    %485 = vector.load %arg9[%c5_218, %c0_219, %c0_220] : memref<9x16x16xbf16, #tpu.memory_space<vmem>>, vector<1x16x16xbf16>
    %486 = vector.shape_cast %485 : vector<1x16x16xbf16> to vector<16x16xbf16>
    %487 = arith.truncf %484 : vector<128x16xf32> to vector<128x16xbf16>
    %cst_221 = arith.constant dense<0.000000e+00> : vector<128x16xf32>
    %488 = tpu.matmul %487, %486, %cst_221 {dimension_numbers = #tpu.dot_dimension_numbers<[1], [0], [0], [1], [0, 0, 1, 1], [], []>} : vector<128x16xbf16>, vector<16x16xbf16>, vector<128x16xf32> -> vector<128x16xf32>
    %489 = arith.addf %482, %488 : vector<128x16xf32>
    %490 = vector.extract_strided_slice %320 {offsets = [0, 2, 7, 0], sizes = [2, 8, 8, 16], strides = [1, 1, 1, 1]} : vector<2x10x24x16xf32> to vector<2x8x8x16xf32>
    %491 = vector.shape_cast %490 : vector<2x8x8x16xf32> to vector<128x16xf32>
    %c6_222 = arith.constant 6 : index
    %c0_223 = arith.constant 0 : index
    %c0_224 = arith.constant 0 : index
    %492 = vector.load %arg9[%c6_222, %c0_223, %c0_224] : memref<9x16x16xbf16, #tpu.memory_space<vmem>>, vector<1x16x16xbf16>
    %493 = vector.shape_cast %492 : vector<1x16x16xbf16> to vector<16x16xbf16>
    %494 = arith.truncf %491 : vector<128x16xf32> to vector<128x16xbf16>
    %cst_225 = arith.constant dense<0.000000e+00> : vector<128x16xf32>
    %495 = tpu.matmul %494, %493, %cst_225 {dimension_numbers = #tpu.dot_dimension_numbers<[1], [0], [0], [1], [0, 0, 1, 1], [], []>} : vector<128x16xbf16>, vector<16x16xbf16>, vector<128x16xf32> -> vector<128x16xf32>
    %496 = arith.addf %489, %495 : vector<128x16xf32>
    %497 = vector.extract_strided_slice %320 {offsets = [0, 2, 8, 0], sizes = [2, 8, 8, 16], strides = [1, 1, 1, 1]} : vector<2x10x24x16xf32> to vector<2x8x8x16xf32>
    %498 = vector.shape_cast %497 : vector<2x8x8x16xf32> to vector<128x16xf32>
    %c7_226 = arith.constant 7 : index
    %c0_227 = arith.constant 0 : index
    %c0_228 = arith.constant 0 : index
    %499 = vector.load %arg9[%c7_226, %c0_227, %c0_228] : memref<9x16x16xbf16, #tpu.memory_space<vmem>>, vector<1x16x16xbf16>
    %500 = vector.shape_cast %499 : vector<1x16x16xbf16> to vector<16x16xbf16>
    %501 = arith.truncf %498 : vector<128x16xf32> to vector<128x16xbf16>
    %cst_229 = arith.constant dense<0.000000e+00> : vector<128x16xf32>
    %502 = tpu.matmul %501, %500, %cst_229 {dimension_numbers = #tpu.dot_dimension_numbers<[1], [0], [0], [1], [0, 0, 1, 1], [], []>} : vector<128x16xbf16>, vector<16x16xbf16>, vector<128x16xf32> -> vector<128x16xf32>
    %503 = arith.addf %496, %502 : vector<128x16xf32>
    %504 = vector.extract_strided_slice %320 {offsets = [0, 2, 9, 0], sizes = [2, 8, 8, 16], strides = [1, 1, 1, 1]} : vector<2x10x24x16xf32> to vector<2x8x8x16xf32>
    %505 = vector.shape_cast %504 : vector<2x8x8x16xf32> to vector<128x16xf32>
    %c8_230 = arith.constant 8 : index
    %c0_231 = arith.constant 0 : index
    %c0_232 = arith.constant 0 : index
    %506 = vector.load %arg9[%c8_230, %c0_231, %c0_232] : memref<9x16x16xbf16, #tpu.memory_space<vmem>>, vector<1x16x16xbf16>
    %507 = vector.shape_cast %506 : vector<1x16x16xbf16> to vector<16x16xbf16>
    %508 = arith.truncf %505 : vector<128x16xf32> to vector<128x16xbf16>
    %cst_233 = arith.constant dense<0.000000e+00> : vector<128x16xf32>
    %509 = tpu.matmul %508, %507, %cst_233 {dimension_numbers = #tpu.dot_dimension_numbers<[1], [0], [0], [1], [0, 0, 1, 1], [], []>} : vector<128x16xbf16>, vector<16x16xbf16>, vector<128x16xf32> -> vector<128x16xf32>
    %510 = arith.addf %503, %509 : vector<128x16xf32>
    %c0_234 = arith.constant 0 : index
    %c0_235 = arith.constant 0 : index
    %511 = vector.load %arg10[%c0_234, %c0_235] : memref<1x16xf32, #tpu.memory_space<vmem>>, vector<1x16xf32>
    %512 = vector.broadcast %511 : vector<1x16xf32> to vector<128x16xf32>
    %513 = arith.addf %510, %512 : vector<128x16xf32>
    %cst_236 = arith.constant dense<0.000000e+00> : vector<16xf32>
    %514 = vector.multi_reduction <add>, %513, %cst_236 [0] : vector<128x16xf32> to vector<16xf32>
    %515 = vector.shape_cast %514 : vector<16xf32> to vector<1x16xf32>
    %cst_237 = arith.constant 1.280000e+02 : f32
    %516 = vector.broadcast %cst_237 : f32 to vector<1x16xf32>
    %517 = arith.divf %515, %516 : vector<1x16xf32>
    %518 = vector.broadcast %517 : vector<1x16xf32> to vector<128x16xf32>
    %519 = arith.subf %513, %518 : vector<128x16xf32>
    %520 = arith.mulf %519, %519 : vector<128x16xf32>
    %cst_238 = arith.constant dense<0.000000e+00> : vector<16xf32>
    %521 = vector.multi_reduction <add>, %520, %cst_238 [0] : vector<128x16xf32> to vector<16xf32>
    %522 = vector.shape_cast %521 : vector<16xf32> to vector<1x16xf32>
    %cst_239 = arith.constant 1.280000e+02 : f32
    %523 = vector.broadcast %cst_239 : f32 to vector<1x16xf32>
    %524 = arith.divf %522, %523 : vector<1x16xf32>
    %525 = vector.broadcast %517 : vector<1x16xf32> to vector<128x16xf32>
    %526 = arith.subf %513, %525 : vector<128x16xf32>
    %cst_240 = arith.constant 9.99999974E-6 : f32
    %527 = vector.broadcast %cst_240 : f32 to vector<1x16xf32>
    %528 = arith.addf %524, %527 : vector<1x16xf32>
    %529 = math.rsqrt %528 : vector<1x16xf32>
    %530 = vector.broadcast %529 : vector<1x16xf32> to vector<128x16xf32>
    %531 = arith.mulf %526, %530 : vector<128x16xf32>
    %c0_241 = arith.constant 0 : index
    %c0_242 = arith.constant 0 : index
    %532 = vector.load %arg11[%c0_241, %c0_242] : memref<128x16xf32, #tpu.memory_space<vmem>>, vector<128x16xf32>
    tpu.vector_store %arg11[%c0_241, %c0_242], %531 {strides = array<i32>} : memref<128x16xf32, #tpu.memory_space<vmem>>, vector<128x16xf32>,
    return
  }
}

</mosaic_0001>

<llo_original>
// kernel: dense_down_block_mobile.1
$region0: #{dense_down_block_mobile.1}
  #allocation0 [shape = 'u32[]', space=smem, size = 0x4, offset = 0x4, fixed_abs, tag = 'smem constant byte address 0x4 - core index']
  #allocation1 [shape = 'u32[144,128]{1,0:T(1,128)}', space=vmem, size = 0x12000, scoped, tag = 'internal scratch']
  %s0 = inlined_call_operand.vmem [shape: f32[2,8,8,4], index: 0, kind: input, shape index: {}]
  %s1 = inlined_call_operand.vmem [shape: f32[9,1,4], index: 1, kind: input, shape index: {}]
  %s2 = inlined_call_operand.vmem [shape: bf16[4,20], index: 2, kind: input, shape index: {}]
  %s3 = inlined_call_operand.vmem [shape: f32[9,1,4], index: 3, kind: input, shape index: {}]
  %s4 = inlined_call_operand.vmem [shape: f32[9,1,20], index: 4, kind: input, shape index: {}]
  %s5 = inlined_call_operand.vmem [shape: bf16[4,16], index: 5, kind: input, shape index: {}]
  %s6 = inlined_call_operand.vmem [shape: bf16[20,16], index: 6, kind: input, shape index: {}]
  %s7 = inlined_call_operand.vmem [shape: bf16[9,4,16], index: 7, kind: input, shape index: {}]
  %s8 = inlined_call_operand.vmem [shape: bf16[9,20,16], index: 8, kind: input, shape index: {}]
  %s9 = inlined_call_operand.vmem [shape: bf16[9,16,16], index: 9, kind: input, shape index: {}]
  %s10 = inlined_call_operand.vmem [shape: f32[1,16], index: 10, kind: input, shape index: {}]
  %s11 = inlined_call_operand.hbm [shape: f32[128,16], index: 11, kind: output, shape index: {}]
  %s12 = sld [smem:[#allocation0]]
  $region54: #{dense_down_block_mobile.1} parent=0
    _
  %s14 = ssub.s32 1, %s12
  %s15 = scalar_select 0, %s14, %s12
  $region1: #{dense_down_block_mobile.1} parent=0
    #allocation2 [shape = 'u8[65536]{0}', space=vmem, size = 0x10000, scoped, tag = 'output window, operand 0, single buffered']
    #allocation3 [shape = 's32[1]{0}', space=sflag, size = 0x4, scoped, tag = 'scoped memory for dense_down_block_mobile.1']
    %16 = vsyncpa [#allocation3], 0
    // Predicated region
    $region2: #{dense_down_block_mobile.1} parent=1 // pred_check
      _
    $region3: #{dense_down_block_mobile.1} parent=1 // pred_check_branch
      %18 = sbr.rel (0) target = $region5
    $region4: #{dense_down_block_mobile.1} parent=1 // pred_region
      _
    $region5: #{dense_down_block_mobile.1} parent=1 // pred_fallthru
      _
    // Predicated region
    $region6: #{dense_down_block_mobile.1} parent=1 // pred_check
      _
    $region7: #{dense_down_block_mobile.1} parent=1 // pred_check_branch
      %20 = sbr.rel (0) target = $region9
    $region8: #{dense_down_block_mobile.1} parent=1 // pred_region
      _
    $region9: #{dense_down_block_mobile.1} parent=1 // pred_fallthru
      _
    // Predicated region
    $region10: #{dense_down_block_mobile.1} parent=1 // pred_check
      _
    $region11: #{dense_down_block_mobile.1} parent=1 // pred_check_branch
      %22 = sbr.rel (0) target = $region13
    $region12: #{dense_down_block_mobile.1} parent=1 // pred_region
      _
    $region13: #{dense_down_block_mobile.1} parent=1 // pred_fallthru
      _
    // Predicated region
    $region14: #{dense_down_block_mobile.1} parent=1 // pred_check
      _
    $region15: #{dense_down_block_mobile.1} parent=1 // pred_check_branch
      %24 = sbr.rel (0) target = $region17
    $region16: #{dense_down_block_mobile.1} parent=1 // pred_region
      _
    $region17: #{dense_down_block_mobile.1} parent=1 // pred_fallthru
      _
    // Predicated region
    $region18: #{dense_down_block_mobile.1} parent=1 // pred_check
      _
    $region19: #{dense_down_block_mobile.1} parent=1 // pred_check_branch
      %26 = sbr.rel (0) target = $region21
    $region20: #{dense_down_block_mobile.1} parent=1 // pred_region
      _
    $region21: #{dense_down_block_mobile.1} parent=1 // pred_fallthru
      _
    // Predicated region
    $region22: #{dense_down_block_mobile.1} parent=1 // pred_check
      _
    $region23: #{dense_down_block_mobile.1} parent=1 // pred_check_branch
      %28 = sbr.rel (0) target = $region25
    $region24: #{dense_down_block_mobile.1} parent=1 // pred_region
      _
    $region25: #{dense_down_block_mobile.1} parent=1 // pred_fallthru
      _
    // Predicated region
    $region26: #{dense_down_block_mobile.1} parent=1 // pred_check
      _
    $region27: #{dense_down_block_mobile.1} parent=1 // pred_check_branch
      %30 = sbr.rel (0) target = $region29
    $region28: #{dense_down_block_mobile.1} parent=1 // pred_region
      _
    $region29: #{dense_down_block_mobile.1} parent=1 // pred_fallthru
      _
    // Predicated region
    $region30: #{dense_down_block_mobile.1} parent=1 // pred_check
      _
    $region31: #{dense_down_block_mobile.1} parent=1 // pred_check_branch
      %32 = sbr.rel (0) target = $region33
    $region32: #{dense_down_block_mobile.1} parent=1 // pred_region
      _
    $region33: #{dense_down_block_mobile.1} parent=1 // pred_fallthru
      _
    // Predicated region
    $region34: #{dense_down_block_mobile.1} parent=1 // pred_check
      _
    $region35: #{dense_down_block_mobile.1} parent=1 // pred_check_branch
      %34 = sbr.rel (0) target = $region37
    $region36: #{dense_down_block_mobile.1} parent=1 // pred_region
      _
    $region37: #{dense_down_block_mobile.1} parent=1 // pred_fallthru
      _
    // Predicated region
    $region38: #{dense_down_block_mobile.1} parent=1 // pred_check
      _
    $region39: #{dense_down_block_mobile.1} parent=1 // pred_check_branch
      %36 = sbr.rel (0) target = $region41
    $region40: #{dense_down_block_mobile.1} parent=1 // pred_region
      _
    $region41: #{dense_down_block_mobile.1} parent=1 // pred_fallthru
      _
    // Predicated region
    $region42: #{dense_down_block_mobile.1} parent=1 // pred_check
      _
    $region43: #{dense_down_block_mobile.1} parent=1 // pred_check_branch
      %38 = sbr.rel (0) target = $region45
    $region44: #{dense_down_block_mobile.1} parent=1 // pred_region
      _
    $region45: #{dense_down_block_mobile.1} parent=1 // pred_fallthru
      _
    %v40 = vld [vmem:[%s0] sm:$0xff]
    %v41 = vld [vmem:[%s0 + $0x8] sm:$0xff]
    %v42 = vld [vmem:[%s0 + $0x10] sm:$0xff]
    %v43 = vld [vmem:[%s0 + $0x18] sm:$0xff]
    %v44 = vld [vmem:[%s0 + $0x20] sm:$0xff]
    %v45 = vld [vmem:[%s0 + $0x28] sm:$0xff]
    %v46 = vld [vmem:[%s0 + $0x30] sm:$0xff]
    %v47 = vld [vmem:[%s0 + $0x38] sm:$0xff]
    %v48 = vld [vmem:[%s0 + $0x40] sm:$0xff]
    %v49 = vld [vmem:[%s0 + $0x48] sm:$0xff]
    %v50 = vld [vmem:[%s0 + $0x50] sm:$0xff]
    %v51 = vld [vmem:[%s0 + $0x58] sm:$0xff]
    %v52 = vld [vmem:[%s0 + $0x60] sm:$0xff]
    %v53 = vld [vmem:[%s0 + $0x68] sm:$0xff]
    %v54 = vld [vmem:[%s0 + $0x70] sm:$0xff]
    %v55 = vld [vmem:[%s0 + $0x78] sm:$0xff]
    %vm71 = vcmask 1040384
    %v72 = vrot.slane 0.0, 7
    %v73 = vsel %vm71, %v72, %v72
    %v74 = vrot.slane %v40, 7
    %v75 = vsel %vm71, %v72, %v74
    %v76 = vrot.slane %v41, 7
    %v77 = vsel %vm71, %v72, %v76
    %v78 = vrot.slane %v42, 7
    %v79 = vsel %vm71, %v72, %v78
    %v80 = vrot.slane %v43, 7
    %v81 = vsel %vm71, %v72, %v80
    %v82 = vrot.slane %v44, 7
    %v83 = vsel %vm71, %v72, %v82
    %v84 = vrot.slane %v45, 7
    %v85 = vsel %vm71, %v72, %v84
    %v86 = vrot.slane %v46, 7
    %v87 = vsel %vm71, %v72, %v86
    %v88 = vrot.slane %v48, 7
    %v89 = vsel %vm71, %v72, %v88
    %v90 = vrot.slane %v49, 7
    %v91 = vsel %vm71, %v72, %v90
    %v92 = vrot.slane %v50, 7
    %v93 = vsel %vm71, %v72, %v92
    %v94 = vrot.slane %v51, 7
    %v95 = vsel %vm71, %v72, %v94
    %v96 = vrot.slane %v52, 7
    %v97 = vsel %vm71, %v72, %v96
    %v98 = vrot.slane %v53, 7
    %v99 = vsel %vm71, %v72, %v98
    %v100 = vrot.slane %v54, 7
    %v101 = vsel %vm71, %v72, %v100
    %v117 = vld [vmem:[%s1] sm:$0x1]
    %v119 = vlaneseq
    %v120 = vshrl.u32 %v119, 7
    %v121 = vsub.s32 0, %v120
    %v122 = vrot.slane %v117, %v121
    %v124 = vmul.f32 %v73, %v122
    %v125 = vmul.f32 %v75, %v122
    %v126 = vmul.f32 %v77, %v122
    %v127 = vmul.f32 %v79, %v122
    %v128 = vmul.f32 %v81, %v122
    %v129 = vmul.f32 %v83, %v122
    %v130 = vmul.f32 %v85, %v122
    %v131 = vmul.f32 %v87, %v122
    %v132 = vmul.f32 %v89, %v122
    %v133 = vmul.f32 %v91, %v122
    %v134 = vmul.f32 %v93, %v122
    %v135 = vmul.f32 %v95, %v122
    %v136 = vmul.f32 %v97, %v122
    %v137 = vmul.f32 %v99, %v122
    %v138 = vmul.f32 %v101, %v122
    %s139 = scalar_lea.vmem %s1, 1
    %v140 = vld [vmem:[%s139] sm:$0x1]
    %v142 = vlaneseq
    %v143 = vshrl.u32 %v142, 7
    %v144 = vsub.s32 0, %v143
    %v145 = vrot.slane %v140, %v144
    %v147 = vmul.f32 %v145, 0.0
    %v148 = vmul.f32 %v40, %v145
    %v149 = vmul.f32 %v41, %v145
    %v150 = vmul.f32 %v42, %v145
    %v151 = vmul.f32 %v43, %v145
    %v152 = vmul.f32 %v44, %v145
    %v153 = vmul.f32 %v45, %v145
    %v154 = vmul.f32 %v46, %v145
    %v155 = vmul.f32 %v48, %v145
    %v156 = vmul.f32 %v49, %v145
    %v157 = vmul.f32 %v50, %v145
    %v158 = vmul.f32 %v51, %v145
    %v159 = vmul.f32 %v52, %v145
    %v160 = vmul.f32 %v53, %v145
    %v161 = vmul.f32 %v54, %v145
    %v162 = vadd.f32 %v124, %v147
    %v163 = vadd.f32 %v125, %v148
    %v164 = vadd.f32 %v126, %v149
    %v165 = vadd.f32 %v127, %v150
    %v166 = vadd.f32 %v128, %v151
    %v167 = vadd.f32 %v129, %v152
    %v168 = vadd.f32 %v130, %v153
    %v169 = vadd.f32 %v131, %v154
    %v170 = vadd.f32 %v132, %v155
    %v171 = vadd.f32 %v133, %v156
    %v172 = vadd.f32 %v134, %v157
    %v173 = vadd.f32 %v135, %v158
    %v174 = vadd.f32 %v136, %v159
    %v175 = vadd.f32 %v137, %v160
    %v176 = vadd.f32 %v138, %v161
    %vm177 = vcmask 1046528
    %v178 = vrot.slane 0.0, 1
    %v179 = vsel %vm177, %v178, %v178
    %v180 = vrot.slane %v40, 1
    %v181 = vsel %vm177, %v180, %v178
    %v182 = vrot.slane %v41, 1
    %v183 = vsel %vm177, %v182, %v178
    %v184 = vrot.slane %v42, 1
    %v185 = vsel %vm177, %v184, %v178
    %v186 = vrot.slane %v43, 1
    %v187 = vsel %vm177, %v186, %v178
    %v188 = vrot.slane %v44, 1
    %v189 = vsel %vm177, %v188, %v178
    %v190 = vrot.slane %v45, 1
    %v191 = vsel %vm177, %v190, %v178
    %v192 = vrot.slane %v46, 1
    %v193 = vsel %vm177, %v192, %v178
    %v194 = vrot.slane %v48, 1
    %v195 = vsel %vm177, %v194, %v178
    %v196 = vrot.slane %v49, 1
    %v197 = vsel %vm177, %v196, %v178
    %v198 = vrot.slane %v50, 1
    %v199 = vsel %vm177, %v198, %v178
    %v200 = vrot.slane %v51, 1
    %v201 = vsel %vm177, %v200, %v178
    %v202 = vrot.slane %v52, 1
    %v203 = vsel %vm177, %v202, %v178
    %v204 = vrot.slane %v53, 1
    %v205 = vsel %vm177, %v204, %v178
    %v206 = vrot.slane %v54, 1
    %v207 = vsel %vm177, %v206, %v178
    %s223 = scalar_lea.vmem %s1, 2
    %v224 = vld [vmem:[%s223] sm:$0x1]
    %v226 = vlaneseq
    %v227 = vshrl.u32 %v226, 7
    %v228 = vsub.s32 0, %v227
    %v229 = vrot.slane %v224, %v228
    %v231 = vmul.f32 %v179, %v229
    %v232 = vmul.f32 %v181, %v229
    %v233 = vmul.f32 %v183, %v229
    %v234 = vmul.f32 %v185, %v229
    %v235 = vmul.f32 %v187, %v229
    %v236 = vmul.f32 %v189, %v229
    %v237 = vmul.f32 %v191, %v229
    %v238 = vmul.f32 %v193, %v229
    %v239 = vmul.f32 %v195, %v229
    %v240 = vmul.f32 %v197, %v229
    %v241 = vmul.f32 %v199, %v229
    %v242 = vmul.f32 %v201, %v229
    %v243 = vmul.f32 %v203, %v229
    %v244 = vmul.f32 %v205, %v229
    %v245 = vmul.f32 %v207, %v229
    %v246 = vadd.f32 %v162, %v231
    %v247 = vadd.f32 %v163, %v232
    %v248 = vadd.f32 %v164, %v233
    %v249 = vadd.f32 %v165, %v234
    %v250 = vadd.f32 %v166, %v235
    %v251 = vadd.f32 %v167, %v236
    %v252 = vadd.f32 %v168, %v237
    %v253 = vadd.f32 %v169, %v238
    %v254 = vadd.f32 %v170, %v239
    %v255 = vadd.f32 %v171, %v240
    %v256 = vadd.f32 %v172, %v241
    %v257 = vadd.f32 %v173, %v242
    %v258 = vadd.f32 %v174, %v243
    %v259 = vadd.f32 %v175, %v244
    %v260 = vadd.f32 %v176, %v245
    %v263 = vrot.slane %v47, 7
    %v264 = vsel %vm71, %v72, %v263
    %v265 = vrot.slane %v55, 7
    %v266 = vsel %vm71, %v72, %v265
    %s269 = scalar_lea.vmem %s1, 3
    %v270 = vld [vmem:[%s269] sm:$0x1]
    %v272 = vlaneseq
    %v273 = vshrl.u32 %v272, 7
    %v274 = vsub.s32 0, %v273
    %v275 = vrot.slane %v270, %v274
    %v277 = vmul.f32 %v75, %v275
    %v278 = vmul.f32 %v77, %v275
    %v279 = vmul.f32 %v79, %v275
    %v280 = vmul.f32 %v81, %v275
    %v281 = vmul.f32 %v83, %v275
    %v282 = vmul.f32 %v85, %v275
    %v283 = vmul.f32 %v87, %v275
    %v284 = vmul.f32 %v264, %v275
    %v285 = vmul.f32 %v89, %v275
    %v286 = vmul.f32 %v91, %v275
    %v287 = vmul.f32 %v93, %v275
    %v288 = vmul.f32 %v95, %v275
    %v289 = vmul.f32 %v97, %v275
    %v290 = vmul.f32 %v99, %v275
    %v291 = vmul.f32 %v101, %v275
    %v292 = vmul.f32 %v266, %v275
    %v293 = vadd.f32 %v246, %v277
    %v294 = vadd.f32 %v247, %v278
    %v295 = vadd.f32 %v248, %v279
    %v296 = vadd.f32 %v249, %v280
    %v297 = vadd.f32 %v250, %v281
    %v298 = vadd.f32 %v251, %v282
    %v299 = vadd.f32 %v252, %v283
    %v300 = vadd.f32 %v253, %v284
    %v301 = vadd.f32 %v246, %v285
    %v302 = vadd.f32 %v254, %v286
    %v303 = vadd.f32 %v255, %v287
    %v304 = vadd.f32 %v256, %v288
    %v305 = vadd.f32 %v257, %v289
    %v306 = vadd.f32 %v258, %v290
    %v307 = vadd.f32 %v259, %v291
    %v308 = vadd.f32 %v260, %v292
    %s309 = scalar_lea.vmem %s1, 4
    %v310 = vld [vmem:[%s309] sm:$0x1]
    %v312 = vlaneseq
    %v313 = vshrl.u32 %v312, 7
    %v314 = vsub.s32 0, %v313
    %v315 = vrot.slane %v310, %v314
    %v317 = vmul.f32 %v40, %v315
    %v318 = vmul.f32 %v41, %v315
    %v319 = vmul.f32 %v42, %v315
    %v320 = vmul.f32 %v43, %v315
    %v321 = vmul.f32 %v44, %v315
    %v322 = vmul.f32 %v45, %v315
    %v323 = vmul.f32 %v46, %v315
    %v324 = vmul.f32 %v47, %v315
    %v325 = vmul.f32 %v48, %v315
    %v326 = vmul.f32 %v49, %v315
    %v327 = vmul.f32 %v50, %v315
    %v328 = vmul.f32 %v51, %v315
    %v329 = vmul.f32 %v52, %v315
    %v330 = vmul.f32 %v53, %v315
    %v331 = vmul.f32 %v54, %v315
    %v332 = vmul.f32 %v55, %v315
    %v333 = vadd.f32 %v293, %v317
    %v334 = vadd.f32 %v294, %v318
    %v335 = vadd.f32 %v295, %v319
    %v336 = vadd.f32 %v296, %v320
    %v337 = vadd.f32 %v297, %v321
    %v338 = vadd.f32 %v298, %v322
    %v339 = vadd.f32 %v299, %v323
    %v340 = vadd.f32 %v300, %v324
    %v341 = vadd.f32 %v301, %v325
    %v342 = vadd.f32 %v302, %v326
    %v343 = vadd.f32 %v303, %v327
    %v344 = vadd.f32 %v304, %v328
    %v345 = vadd.f32 %v305, %v329
    %v346 = vadd.f32 %v306, %v330
    %v347 = vadd.f32 %v307, %v331
    %v348 = vadd.f32 %v308, %v332
    %v349 = vrot.slane %v47, 1
    %v350 = vsel %vm177, %v349, %v178
    %v351 = vrot.slane %v55, 1
    %v352 = vsel %vm177, %v351, %v178
    %s355 = scalar_lea.vmem %s1, 5
    %v356 = vld [vmem:[%s355] sm:$0x1]
    %v358 = vlaneseq
    %v359 = vshrl.u32 %v358, 7
    %v360 = vsub.s32 0, %v359
    %v361 = vrot.slane %v356, %v360
    %v363 = vmul.f32 %v181, %v361
    %v364 = vmul.f32 %v183, %v361
    %v365 = vmul.f32 %v185, %v361
    %v366 = vmul.f32 %v187, %v361
    %v367 = vmul.f32 %v189, %v361
    %v368 = vmul.f32 %v191, %v361
    %v369 = vmul.f32 %v193, %v361
    %v370 = vmul.f32 %v350, %v361
    %v371 = vmul.f32 %v195, %v361
    %v372 = vmul.f32 %v197, %v361
    %v373 = vmul.f32 %v199, %v361
    %v374 = vmul.f32 %v201, %v361
    %v375 = vmul.f32 %v203, %v361
    %v376 = vmul.f32 %v205, %v361
    %v377 = vmul.f32 %v207, %v361
    %v378 = vmul.f32 %v352, %v361
    %v379 = vadd.f32 %v333, %v363
    %v380 = vadd.f32 %v334, %v364
    %v381 = vadd.f32 %v335, %v365
    %v382 = vadd.f32 %v336, %v366
    %v383 = vadd.f32 %v337, %v367
    %v384 = vadd.f32 %v338, %v368
    %v385 = vadd.f32 %v339, %v369
    %v386 = vadd.f32 %v340, %v370
    %v387 = vadd.f32 %v341, %v371
    %v388 = vadd.f32 %v342, %v372
    %v389 = vadd.f32 %v343, %v373
    %v390 = vadd.f32 %v344, %v374
    %v391 = vadd.f32 %v345, %v375
    %v392 = vadd.f32 %v346, %v376
    %v393 = vadd.f32 %v347, %v377
    %v394 = vadd.f32 %v348, %v378
    %s395 = scalar_lea.vmem %s1, 6
    %v396 = vld [vmem:[%s395] sm:$0x1]
    %v398 = vlaneseq
    %v399 = vshrl.u32 %v398, 7
    %v400 = vsub.s32 0, %v399
    %v401 = vrot.slane %v396, %v400
    %v403 = vmul.f32 %v77, %v401
    %v404 = vmul.f32 %v79, %v401
    %v405 = vmul.f32 %v81, %v401
    %v406 = vmul.f32 %v83, %v401
    %v407 = vmul.f32 %v85, %v401
    %v408 = vmul.f32 %v87, %v401
    %v409 = vmul.f32 %v264, %v401
    %v410 = vmul.f32 %v73, %v401
    %v411 = vmul.f32 %v91, %v401
    %v412 = vmul.f32 %v93, %v401
    %v413 = vmul.f32 %v95, %v401
    %v414 = vmul.f32 %v97, %v401
    %v415 = vmul.f32 %v99, %v401
    %v416 = vmul.f32 %v101, %v401
    %v417 = vmul.f32 %v266, %v401
    %v418 = vadd.f32 %v379, %v403
    %v419 = vadd.f32 %v380, %v404
    %v420 = vadd.f32 %v381, %v405
    %v421 = vadd.f32 %v382, %v406
    %v422 = vadd.f32 %v383, %v407
    %v423 = vadd.f32 %v384, %v408
    %v424 = vadd.f32 %v385, %v409
    %v425 = vadd.f32 %v386, %v410
    %v426 = vadd.f32 %v387, %v411
    %v427 = vadd.f32 %v388, %v412
    %v428 = vadd.f32 %v389, %v413
    %v429 = vadd.f32 %v390, %v414
    %v430 = vadd.f32 %v391, %v415
    %v431 = vadd.f32 %v392, %v416
    %v432 = vadd.f32 %v393, %v417
    %v433 = vadd.f32 %v394, %v410
    %s434 = scalar_lea.vmem %s1, 7
    %v435 = vld [vmem:[%s434] sm:$0x1]
    %v437 = vlaneseq
    %v438 = vshrl.u32 %v437, 7
    %v439 = vsub.s32 0, %v438
    %v440 = vrot.slane %v435, %v439
    %v442 = vmul.f32 %v41, %v440
    %v443 = vmul.f32 %v42, %v440
    %v444 = vmul.f32 %v43, %v440
    %v445 = vmul.f32 %v44, %v440
    %v446 = vmul.f32 %v45, %v440
    %v447 = vmul.f32 %v46, %v440
    %v448 = vmul.f32 %v47, %v440
    %v449 = vmul.f32 %v440, 0.0
    %v450 = vmul.f32 %v49, %v440
    %v451 = vmul.f32 %v50, %v440
    %v452 = vmul.f32 %v51, %v440
    %v453 = vmul.f32 %v52, %v440
    %v454 = vmul.f32 %v53, %v440
    %v455 = vmul.f32 %v54, %v440
    %v456 = vmul.f32 %v55, %v440
    %v457 = vadd.f32 %v418, %v442
    %v458 = vadd.f32 %v419, %v443
    %v459 = vadd.f32 %v420, %v444
    %v460 = vadd.f32 %v421, %v445
    %v461 = vadd.f32 %v422, %v446
    %v462 = vadd.f32 %v423, %v447
    %v463 = vadd.f32 %v424, %v448
    %v464 = vadd.f32 %v425, %v449
    %v465 = vadd.f32 %v426, %v450
    %v466 = vadd.f32 %v427, %v451
    %v467 = vadd.f32 %v428, %v452
    %v468 = vadd.f32 %v429, %v453
    %v469 = vadd.f32 %v430, %v454
    %v470 = vadd.f32 %v431, %v455
    %v471 = vadd.f32 %v432, %v456
    %v472 = vadd.f32 %v433, %v449
    %s473 = scalar_lea.vmem %s1, 8
    %v474 = vld [vmem:[%s473] sm:$0x1]
    %v476 = vlaneseq
    %v477 = vshrl.u32 %v476, 7
    %v478 = vsub.s32 0, %v477
    %v479 = vrot.slane %v474, %v478
    %v481 = vmul.f32 %v183, %v479
    %v482 = vmul.f32 %v185, %v479
    %v483 = vmul.f32 %v187, %v479
    %v484 = vmul.f32 %v189, %v479
    %v485 = vmul.f32 %v191, %v479
    %v486 = vmul.f32 %v193, %v479
    %v487 = vmul.f32 %v350, %v479
    %v488 = vmul.f32 %v179, %v479
    %v489 = vmul.f32 %v197, %v479
    %v490 = vmul.f32 %v199, %v479
    %v491 = vmul.f32 %v201, %v479
    %v492 = vmul.f32 %v203, %v479
    %v493 = vmul.f32 %v205, %v479
    %v494 = vmul.f32 %v207, %v479
    %v495 = vmul.f32 %v352, %v479
    %v496 = vadd.f32 %v457, %v481
    %v497 = vadd.f32 %v458, %v482
    %v498 = vadd.f32 %v459, %v483
    %v499 = vadd.f32 %v460, %v484
    %v500 = vadd.f32 %v461, %v485
    %v501 = vadd.f32 %v462, %v486
    %v502 = vadd.f32 %v463, %v487
    %v503 = vadd.f32 %v464, %v488
    %v504 = vadd.f32 %v465, %v489
    %v505 = vadd.f32 %v466, %v490
    %v506 = vadd.f32 %v467, %v491
    %v507 = vadd.f32 %v468, %v492
    %v508 = vadd.f32 %v469, %v493
    %v509 = vadd.f32 %v470, %v494
    %v510 = vadd.f32 %v471, %v495
    %v511 = vadd.f32 %v472, %v488
    %vm512 = vcmask 31744
    %v513 = vsel %vm512, %v496, 0.0
    %v514 = vsel %vm512, %v497, 0.0
    %v515 = vadd.f32 %v513, %v514
    %v516 = vsel %vm512, %v498, 0.0
    %v517 = vadd.f32 %v515, %v516
    %v518 = vsel %vm512, %v499, 0.0
    %v519 = vadd.f32 %v517, %v518
    %v520 = vsel %vm512, %v500, 0.0
    %v521 = vadd.f32 %v519, %v520
    %v522 = vsel %vm512, %v501, 0.0
    %v523 = vadd.f32 %v521, %v522
    %v524 = vsel %vm512, %v502, 0.0
    %v525 = vadd.f32 %v523, %v524
    %v526 = vsel %vm512, %v503, 0.0
    %v527 = vadd.f32 %v525, %v526
    %v528 = vsel %vm512, %v504, 0.0
    %v529 = vadd.f32 %v527, %v528
    %v530 = vsel %vm512, %v505, 0.0
    %v531 = vadd.f32 %v529, %v530
    %v532 = vsel %vm512, %v506, 0.0
    %v533 = vadd.f32 %v531, %v532
    %v534 = vsel %vm512, %v507, 0.0
    %v535 = vadd.f32 %v533, %v534
    %v536 = vsel %vm512, %v508, 0.0
    %v537 = vadd.f32 %v535, %v536
    %v538 = vsel %vm512, %v509, 0.0
    %v539 = vadd.f32 %v537, %v538
    %v540 = vsel %vm512, %v510, 0.0
    %v541 = vadd.f32 %v539, %v540
    %v542 = vsel %vm512, %v511, 0.0
    %v543 = vadd.f32 %v541, %v542
    %v544 = vrot.slane %v543, 4
    %v545 = vadd.f32 %v543, %v544
    %v546 = vrot.slane %v545, 2
    %v547 = vadd.f32 %v545, %v546
    %v548 = vrot.slane %v547, 1
    %v549 = vadd.f32 %v547, %v548
    %v550 = vrcp.pop 128.0
    %v551 = vmul.f32 %v549, %v550
    %v552 = vsub.f32 %v496, %v551
    %v553 = vsub.f32 %v497, %v551
    %v554 = vsub.f32 %v498, %v551
    %v555 = vsub.f32 %v499, %v551
    %v556 = vsub.f32 %v500, %v551
    %v557 = vsub.f32 %v501, %v551
    %v558 = vsub.f32 %v502, %v551
    %v559 = vsub.f32 %v503, %v551
    %v560 = vsub.f32 %v504, %v551
    %v561 = vsub.f32 %v505, %v551
    %v562 = vsub.f32 %v506, %v551
    %v563 = vsub.f32 %v507, %v551
    %v564 = vsub.f32 %v508, %v551
    %v565 = vsub.f32 %v509, %v551
    %v566 = vsub.f32 %v510, %v551
    %v567 = vsub.f32 %v511, %v551
    %v568 = vmul.f32 %v552, %v552
    %v569 = vmul.f32 %v553, %v553
    %v570 = vmul.f32 %v554, %v554
    %v571 = vmul.f32 %v555, %v555
    %v572 = vmul.f32 %v556, %v556
    %v573 = vmul.f32 %v557, %v557
    %v574 = vmul.f32 %v558, %v558
    %v575 = vmul.f32 %v559, %v559
    %v576 = vmul.f32 %v560, %v560
    %v577 = vmul.f32 %v561, %v561
    %v578 = vmul.f32 %v562, %v562
    %v579 = vmul.f32 %v563, %v563
    %v580 = vmul.f32 %v564, %v564
    %v581 = vmul.f32 %v565, %v565
    %v582 = vmul.f32 %v566, %v566
    %v583 = vmul.f32 %v567, %v567
    %v584 = vsel %vm512, %v568, 0.0
    %v585 = vsel %vm512, %v569, 0.0
    %v586 = vadd.f32 %v584, %v585
    %v587 = vsel %vm512, %v570, 0.0
    %v588 = vadd.f32 %v586, %v587
    %v589 = vsel %vm512, %v571, 0.0
    %v590 = vadd.f32 %v588, %v589
    %v591 = vsel %vm512, %v572, 0.0
    %v592 = vadd.f32 %v590, %v591
    %v593 = vsel %vm512, %v573, 0.0
    %v594 = vadd.f32 %v592, %v593
    %v595 = vsel %vm512, %v574, 0.0
    %v596 = vadd.f32 %v594, %v595
    %v597 = vsel %vm512, %v575, 0.0
    %v598 = vadd.f32 %v596, %v597
    %v599 = vsel %vm512, %v576, 0.0
    %v600 = vadd.f32 %v598, %v599
    %v601 = vsel %vm512, %v577, 0.0
    %v602 = vadd.f32 %v600, %v601
    %v603 = vsel %vm512, %v578, 0.0
    %v604 = vadd.f32 %v602, %v603
    %v605 = vsel %vm512, %v579, 0.0
    %v606 = vadd.f32 %v604, %v605
    %v607 = vsel %vm512, %v580, 0.0
    %v608 = vadd.f32 %v606, %v607
    %v609 = vsel %vm512, %v581, 0.0
    %v610 = vadd.f32 %v608, %v609
    %v611 = vsel %vm512, %v582, 0.0
    %v612 = vadd.f32 %v610, %v611
    %v613 = vsel %vm512, %v583, 0.0
    %v614 = vadd.f32 %v612, %v613
    %v615 = vrot.slane %v614, 4
    %v616 = vadd.f32 %v614, %v615
    %v617 = vrot.slane %v616, 2
    %v618 = vadd.f32 %v616, %v617
    %v619 = vrot.slane %v618, 1
    %v620 = vadd.f32 %v618, %v619
    %v621 = vmul.f32 %v620, %v550
    %v622 = vadd.f32 %v621, 1e-05
    %v623 = vrsqrt.pop %v622
    %v624 = vmul.f32 %v552, %v623
    %v625 = vmul.f32 %v553, %v623
    %v626 = vmul.f32 %v554, %v623
    %v627 = vmul.f32 %v555, %v623
    %v628 = vmul.f32 %v556, %v623
    %v629 = vmul.f32 %v557, %v623
    %v630 = vmul.f32 %v558, %v623
    %v631 = vmul.f32 %v559, %v623
    %v632 = vmul.f32 %v560, %v623
    %v633 = vmul.f32 %v561, %v623
    %v634 = vmul.f32 %v562, %v623
    %v635 = vmul.f32 %v563, %v623
    %v636 = vmul.f32 %v564, %v623
    %v637 = vmul.f32 %v565, %v623
    %v638 = vmul.f32 %v566, %v623
    %v639 = vmul.f32 %v567, %v623
    %v640 = vmax.f32 %v624, 0.0
    %v641 = vmax.f32 %v625, 0.0
    %v642 = vmax.f32 %v626, 0.0
    %v643 = vmax.f32 %v627, 0.0
    %v644 = vmax.f32 %v628, 0.0
    %v645 = vmax.f32 %v629, 0.0
    %v646 = vmax.f32 %v630, 0.0
    %v647 = vmax.f32 %v631, 0.0
    %v648 = vmax.f32 %v632, 0.0
    %v649 = vmax.f32 %v633, 0.0
    %v650 = vmax.f32 %v634, 0.0
    %v651 = vmax.f32 %v635, 0.0
    %v652 = vmax.f32 %v636, 0.0
    %v653 = vmax.f32 %v637, 0.0
    %v654 = vmax.f32 %v638, 0.0
    %v655 = vmax.f32 %v639, 0.0
    %v656 = vmin.f32 %v640, 6.0
    %v657 = vmin.f32 %v641, 6.0
    %v658 = vmin.f32 %v642, 6.0
    %v659 = vmin.f32 %v643, 6.0
    %v660 = vmin.f32 %v644, 6.0
    %v661 = vmin.f32 %v645, 6.0
    %v662 = vmin.f32 %v646, 6.0
    %v663 = vmin.f32 %v647, 6.0
    %v664 = vmin.f32 %v648, 6.0
    %v665 = vmin.f32 %v649, 6.0
    %v666 = vmin.f32 %v650, 6.0
    %v667 = vmin.f32 %v651, 6.0
    %v668 = vmin.f32 %v652, 6.0
    %v669 = vmin.f32 %v653, 6.0
    %v670 = vmin.f32 %v654, 6.0
    %v671 = vmin.f32 %v655, 6.0
    %v672 = vld [vmem:[%s2] sm:$0x3]
    %v673 = vpack.c.bf16 %v657, %v656
    %v674 = vpack.c.bf16 %v659, %v658
    %v675 = vpack.c.bf16 %v661, %v660
    %v676 = vpack.c.bf16 %v663, %v662
    %v677 = vpack.c.bf16 %v665, %v664
    %v678 = vpack.c.bf16 %v667, %v666
    %v679 = vpack.c.bf16 %v669, %v668
    %v680 = vpack.c.bf16 %v671, %v670
    %v682 = vsel %vm512, %v673, 0
    %v685 = vsel %vm512, %v674, 0
    %v688 = vsel %vm512, %v675, 0
    %v691 = vsel %vm512, %v676, 0
    %v694 = vsel %vm512, %v677, 0
    %v697 = vsel %vm512, %v678, 0
    %v700 = vsel %vm512, %v679, 0
    %v703 = vsel %vm512, %v680, 0
    %vm705 = vcmask 1041408
    %v707 = vsel %vm705, %v672, 0
    %709 = vmatprep.subr.bf16.mxu0 0
    %710 = vmatpush1.bf16.msra.mxu0 %v707
    %711 = vmatprep.subr.bf16.mxu0 0
    %712 = vmatpush1.bf16.msra.mxu0 0
    %713 = vmatprep.subr.bf16.mxu0 0
    %714 = vmatpush1.bf16.msra.mxu0 0
    %715 = vmatprep.subr.bf16.mxu0 0
    %716 = vmatpush1.bf16.msra.mxu0 0
    %717 = vmatprep.subr.bf16.mxu0 0
    %718 = vmatpush1.bf16.msra.mxu0 0
    %719 = vmatprep.subr.bf16.mxu0 0
    %720 = vmatpush1.bf16.msra.mxu0 0
    %721 = vmatprep.subr.bf16.mxu0 0
    %722 = vmatpush1.bf16.msra.mxu0 0
    %723 = vmatprep.subr.bf16.mxu0 0
    %724 = vmatpush1.bf16.msra.mxu0 0
    %725 = vmatprep.subr.bf16.mxu0 0
    %726 = vmatpush1.bf16.msra.mxu0 0
    %727 = vmatprep.subr.bf16.mxu0 0
    %728 = vmatpush1.bf16.msra.mxu0 0
    %729 = vmatprep.subr.bf16.mxu0 0
    %730 = vmatpush1.bf16.msra.mxu0 0
    %731 = vmatprep.subr.bf16.mxu0 0
    %732 = vmatpush1.bf16.msra.mxu0 0
    %733 = vmatprep.subr.bf16.mxu0 0
    %734 = vmatpush1.bf16.msra.mxu0 0
    %735 = vmatprep.subr.bf16.mxu0 0
    %736 = vmatpush1.bf16.msra.mxu0 0
    %737 = vmatprep.subr.bf16.mxu0 0
    %738 = vmatpush1.bf16.msra.mxu0 0
    %739 = vmatprep.subr.bf16.mxu0 0
    %740 = vmatpush1.bf16.msra.mxu0 0
    %741 = vmatprep.mubr.bf16.mxu0 0
    %742 = vmatmul.mubr.bf16.gmra.mrb[0].mxu0 %v682
    %v743 = vpop.f32.mrb[0].mxu0
    %v744 = vadd.f32 0.0, %v743
    %v745 = vpop.f32.mrb[0].mxu0
    %v746 = vpop.f32.mrb[0].mxu0
    %v747 = vadd.f32 0.0, %v746
    %v748 = vpop.f32.mrb[0].mxu0
    %749 = vmatprep.mubr.bf16.mxu0 0
    %750 = vmatmul.mubr.bf16.gmra.mrb[0].mxu0 %v685
    %v751 = vpop.f32.mrb[0].mxu0
    %v752 = vadd.f32 0.0, %v751
    %v753 = vpop.f32.mrb[0].mxu0
    %v754 = vpop.f32.mrb[0].mxu0
    %v755 = vadd.f32 0.0, %v754
    %v756 = vpop.f32.mrb[0].mxu0
    %757 = vmatprep.mubr.bf16.mxu0 0
    %758 = vmatmul.mubr.bf16.gmra.mrb[0].mxu0 %v688
    %v759 = vpop.f32.mrb[0].mxu0
    %v760 = vadd.f32 0.0, %v759
    %v761 = vpop.f32.mrb[0].mxu0
    %v762 = vpop.f32.mrb[0].mxu0
    %v763 = vadd.f32 0.0, %v762
    %v764 = vpop.f32.mrb[0].mxu0
    %765 = vmatprep.mubr.bf16.mxu0 0
    %766 = vmatmul.mubr.bf16.gmra.mrb[0].mxu0 %v691
    %v767 = vpop.f32.mrb[0].mxu0
    %v768 = vadd.f32 0.0, %v767
    %v769 = vpop.f32.mrb[0].mxu0
    %v770 = vpop.f32.mrb[0].mxu0
    %v771 = vadd.f32 0.0, %v770
    %v772 = vpop.f32.mrb[0].mxu0
    %773 = vmatprep.mubr.bf16.mxu0 0
    %774 = vmatmul.mubr.bf16.gmra.mrb[0].mxu0 %v694
    %v775 = vpop.f32.mrb[0].mxu0
    %v776 = vadd.f32 0.0, %v775
    %v777 = vpop.f32.mrb[0].mxu0
    %v778 = vpop.f32.mrb[0].mxu0
    %v779 = vadd.f32 0.0, %v778
    %v780 = vpop.f32.mrb[0].mxu0
    %781 = vmatprep.mubr.bf16.mxu0 0
    %782 = vmatmul.mubr.bf16.gmra.mrb[0].mxu0 %v697
    %v783 = vpop.f32.mrb[0].mxu0
    %v784 = vadd.f32 0.0, %v783
    %v785 = vpop.f32.mrb[0].mxu0
    %v786 = vpop.f32.mrb[0].mxu0
    %v787 = vadd.f32 0.0, %v786
    %v788 = vpop.f32.mrb[0].mxu0
    %789 = vmatprep.mubr.bf16.mxu0 0
    %790 = vmatmul.mubr.bf16.gmra.mrb[0].mxu0 %v700
    %v791 = vpop.f32.mrb[0].mxu0
    %v792 = vadd.f32 0.0, %v791
    %v793 = vpop.f32.mrb[0].mxu0
    %v794 = vpop.f32.mrb[0].mxu0
    %v795 = vadd.f32 0.0, %v794
    %v796 = vpop.f32.mrb[0].mxu0
    %797 = vmatprep.mubr.bf16.mxu0 0
    %798 = vmatmul.mubr.bf16.gmra.mrb[0].mxu0 %v703
    %v799 = vpop.f32.mrb[0].mxu0
    %v800 = vadd.f32 0.0, %v799
    %v801 = vpop.f32.mrb[0].mxu0
    %v802 = vpop.f32.mrb[0].mxu0
    %v803 = vadd.f32 0.0, %v802
    %v804 = vpop.f32.mrb[0].mxu0
    %805 = vdwg.mxu0
    %vm806 = vcmask 162816
    %v807 = vsel %vm806, %v744, 0.0
    %v808 = vsel %vm806, %v747, 0.0
    %v809 = vadd.f32 %v807, %v808
    %v810 = vsel %vm806, %v752, 0.0
    %v811 = vadd.f32 %v809, %v810
    %v812 = vsel %vm806, %v755, 0.0
    %v813 = vadd.f32 %v811, %v812
    %v814 = vsel %vm806, %v760, 0.0
    %v815 = vadd.f32 %v813, %v814
    %v816 = vsel %vm806, %v763, 0.0
    %v817 = vadd.f32 %v815, %v816
    %v818 = vsel %vm806, %v768, 0.0
    %v819 = vadd.f32 %v817, %v818
    %v820 = vsel %vm806, %v771, 0.0
    %v821 = vadd.f32 %v819, %v820
    %v822 = vsel %vm806, %v776, 0.0
    %v823 = vadd.f32 %v821, %v822
    %v824 = vsel %vm806, %v779, 0.0
    %v825 = vadd.f32 %v823, %v824
    %v826 = vsel %vm806, %v784, 0.0
    %v827 = vadd.f32 %v825, %v826
    %v828 = vsel %vm806, %v787, 0.0
    %v829 = vadd.f32 %v827, %v828
    %v830 = vsel %vm806, %v792, 0.0
    %v831 = vadd.f32 %v829, %v830
    %v832 = vsel %vm806, %v795, 0.0
    %v833 = vadd.f32 %v831, %v832
    %v834 = vsel %vm806, %v800, 0.0
    %v835 = vadd.f32 %v833, %v834
    %v836 = vsel %vm806, %v803, 0.0
    %v837 = vadd.f32 %v835, %v836
    %v838 = vrot.slane %v837, 4
    %v839 = vadd.f32 %v837, %v838
    %v840 = vrot.slane %v839, 2
    %v841 = vadd.f32 %v839, %v840
    %v842 = vrot.slane %v841, 1
    %v843 = vadd.f32 %v841, %v842
    %v844 = vmul.f32 %v843, %v550
    %v845 = vsub.f32 %v744, %v844
    %v846 = vsub.f32 %v747, %v844
    %v847 = vsub.f32 %v752, %v844
    %v848 = vsub.f32 %v755, %v844
    %v849 = vsub.f32 %v760, %v844
    %v850 = vsub.f32 %v763, %v844
    %v851 = vsub.f32 %v768, %v844
    %v852 = vsub.f32 %v771, %v844
    %v853 = vsub.f32 %v776, %v844
    %v854 = vsub.f32 %v779, %v844
    %v855 = vsub.f32 %v784, %v844
    %v856 = vsub.f32 %v787, %v844
    %v857 = vsub.f32 %v792, %v844
    %v858 = vsub.f32 %v795, %v844
    %v859 = vsub.f32 %v800, %v844
    %v860 = vsub.f32 %v803, %v844
    %v861 = vmul.f32 %v845, %v845
    %v862 = vmul.f32 %v846, %v846
    %v863 = vmul.f32 %v847, %v847
    %v864 = vmul.f32 %v848, %v848
    %v865 = vmul.f32 %v849, %v849
    %v866 = vmul.f32 %v850, %v850
    %v867 = vmul.f32 %v851, %v851
    %v868 = vmul.f32 %v852, %v852
    %v869 = vmul.f32 %v853, %v853
    %v870 = vmul.f32 %v854, %v854
    %v871 = vmul.f32 %v855, %v855
    %v872 = vmul.f32 %v856, %v856
    %v873 = vmul.f32 %v857, %v857
    %v874 = vmul.f32 %v858, %v858
    %v875 = vmul.f32 %v859, %v859
    %v876 = vmul.f32 %v860, %v860
    %v877 = vsel %vm806, %v861, 0.0
    %v878 = vsel %vm806, %v862, 0.0
    %v879 = vadd.f32 %v877, %v878
    %v880 = vsel %vm806, %v863, 0.0
    %v881 = vadd.f32 %v879, %v880
    %v882 = vsel %vm806, %v864, 0.0
    %v883 = vadd.f32 %v881, %v882
    %v884 = vsel %vm806, %v865, 0.0
    %v885 = vadd.f32 %v883, %v884
    %v886 = vsel %vm806, %v866, 0.0
    %v887 = vadd.f32 %v885, %v886
    %v888 = vsel %vm806, %v867, 0.0
    %v889 = vadd.f32 %v887, %v888
    %v890 = vsel %vm806, %v868, 0.0
    %v891 = vadd.f32 %v889, %v890
    %v892 = vsel %vm806, %v869, 0.0
    %v893 = vadd.f32 %v891, %v892
    %v894 = vsel %vm806, %v870, 0.0
    %v895 = vadd.f32 %v893, %v894
    %v896 = vsel %vm806, %v871, 0.0
    %v897 = vadd.f32 %v895, %v896
    %v898 = vsel %vm806, %v872, 0.0
    %v899 = vadd.f32 %v897, %v898
    %v900 = vsel %vm806, %v873, 0.0
    %v901 = vadd.f32 %v899, %v900
    %v902 = vsel %vm806, %v874, 0.0
    %v903 = vadd.f32 %v901, %v902
    %v904 = vsel %vm806, %v875, 0.0
    %v905 = vadd.f32 %v903, %v904
    %v906 = vsel %vm806, %v876, 0.0
    %v907 = vadd.f32 %v905, %v906
    %v908 = vrot.slane %v907, 4
    %v909 = vadd.f32 %v907, %v908
    %v910 = vrot.slane %v909, 2
    %v911 = vadd.f32 %v909, %v910
    %v912 = vrot.slane %v911, 1
    %v913 = vadd.f32 %v911, %v912
    %v914 = vmul.f32 %v913, %v550
    %v915 = vadd.f32 %v914, 1e-05
    %v916 = vrsqrt.pop %v915
    %v917 = vmul.f32 %v845, %v916
    %v918 = vmul.f32 %v846, %v916
    %v919 = vmul.f32 %v847, %v916
    %v920 = vmul.f32 %v848, %v916
    %v921 = vmul.f32 %v849, %v916
    %v922 = vmul.f32 %v850, %v916
    %v923 = vmul.f32 %v851, %v916
    %v924 = vmul.f32 %v852, %v916
    %v925 = vmul.f32 %v853, %v916
    %v926 = vmul.f32 %v854, %v916
    %v927 = vmul.f32 %v855, %v916
    %v928 = vmul.f32 %v856, %v916
    %v929 = vmul.f32 %v857, %v916
    %v930 = vmul.f32 %v858, %v916
    %v931 = vmul.f32 %v859, %v916
    %v932 = vmul.f32 %v860, %v916
    %v933 = vmax.f32 %v917, 0.0
    %v934 = vmax.f32 %v918, 0.0
    %v935 = vmax.f32 %v919, 0.0
    %v936 = vmax.f32 %v920, 0.0
    %v937 = vmax.f32 %v921, 0.0
    %v938 = vmax.f32 %v922, 0.0
    %v939 = vmax.f32 %v923, 0.0
    %v940 = vmax.f32 %v924, 0.0
    %v941 = vmax.f32 %v925, 0.0
    %v942 = vmax.f32 %v926, 0.0
    %v943 = vmax.f32 %v927, 0.0
    %v944 = vmax.f32 %v928, 0.0
    %v945 = vmax.f32 %v929, 0.0
    %v946 = vmax.f32 %v930, 0.0
    %v947 = vmax.f32 %v931, 0.0
    %v948 = vmax.f32 %v932, 0.0
    %v949 = vmin.f32 %v933, 6.0
    %v950 = vmin.f32 %v934, 6.0
    %v951 = vmin.f32 %v935, 6.0
    %v952 = vmin.f32 %v936, 6.0
    %v953 = vmin.f32 %v937, 6.0
    %v954 = vmin.f32 %v938, 6.0
    %v955 = vmin.f32 %v939, 6.0
    %v956 = vmin.f32 %v940, 6.0
    %v957 = vmin.f32 %v941, 6.0
    %v958 = vmin.f32 %v942, 6.0
    %v959 = vmin.f32 %v943, 6.0
    %v960 = vmin.f32 %v944, 6.0
    %v961 = vmin.f32 %v945, 6.0
    %v962 = vmin.f32 %v946, 6.0
    %v963 = vmin.f32 %v947, 6.0
    %v964 = vmin.f32 %v948, 6.0
    %v965 = vld [vmem:[%s3] sm:$0x1]
    %v967 = vlaneseq
    %v968 = vshrl.u32 %v967, 7
    %v969 = vsub.s32 0, %v968
    %v970 = vrot.slane %v965, %v969
    %v972 = vmul.f32 %v73, %v970
    %v973 = vmul.f32 %v75, %v970
    %v974 = vmul.f32 %v77, %v970
    %v975 = vmul.f32 %v79, %v970
    %v976 = vmul.f32 %v81, %v970
    %v977 = vmul.f32 %v83, %v970
    %v978 = vmul.f32 %v85, %v970
    %v979 = vmul.f32 %v87, %v970
    %v980 = vmul.f32 %v89, %v970
    %v981 = vmul.f32 %v91, %v970
    %v982 = vmul.f32 %v93, %v970
    %v983 = vmul.f32 %v95, %v970
    %v984 = vmul.f32 %v97, %v970
    %v985 = vmul.f32 %v99, %v970
    %v986 = vmul.f32 %v101, %v970
    %s987 = scalar_lea.vmem %s3, 1
    %v988 = vld [vmem:[%s987] sm:$0x1]
    %v990 = vlaneseq
    %v991 = vshrl.u32 %v990, 7
    %v992 = vsub.s32 0, %v991
    %v993 = vrot.slane %v988, %v992
    %v995 = vmul.f32 %v993, 0.0
    %v996 = vmul.f32 %v40, %v993
    %v997 = vmul.f32 %v41, %v993
    %v998 = vmul.f32 %v42, %v993
    %v999 = vmul.f32 %v43, %v993
    %v1000 = vmul.f32 %v44, %v993
    %v1001 = vmul.f32 %v45, %v993
    %v1002 = vmul.f32 %v46, %v993
    %v1003 = vmul.f32 %v48, %v993
    %v1004 = vmul.f32 %v49, %v993
    %v1005 = vmul.f32 %v50, %v993
    %v1006 = vmul.f32 %v51, %v993
    %v1007 = vmul.f32 %v52, %v993
    %v1008 = vmul.f32 %v53, %v993
    %v1009 = vmul.f32 %v54, %v993
    %v1010 = vadd.f32 %v972, %v995
    %v1011 = vadd.f32 %v973, %v996
    %v1012 = vadd.f32 %v974, %v997
    %v1013 = vadd.f32 %v975, %v998
    %v1014 = vadd.f32 %v976, %v999
    %v1015 = vadd.f32 %v977, %v1000
    %v1016 = vadd.f32 %v978, %v1001
    %v1017 = vadd.f32 %v979, %v1002
    %v1018 = vadd.f32 %v980, %v1003
    %v1019 = vadd.f32 %v981, %v1004
    %v1020 = vadd.f32 %v982, %v1005
    %v1021 = vadd.f32 %v983, %v1006
    %v1022 = vadd.f32 %v984, %v1007
    %v1023 = vadd.f32 %v985, %v1008
    %v1024 = vadd.f32 %v986, %v1009
    %s1025 = scalar_lea.vmem %s3, 2
    %v1026 = vld [vmem:[%s1025] sm:$0x1]
    %v1028 = vlaneseq
    %v1029 = vshrl.u32 %v1028, 7
    %v1030 = vsub.s32 0, %v1029
    %v1031 = vrot.slane %v1026, %v1030
    %v1033 = vmul.f32 %v179, %v1031
    %v1034 = vmul.f32 %v181, %v1031
    %v1035 = vmul.f32 %v183, %v1031
    %v1036 = vmul.f32 %v185, %v1031
    %v1037 = vmul.f32 %v187, %v1031
    %v1038 = vmul.f32 %v189, %v1031
    %v1039 = vmul.f32 %v191, %v1031
    %v1040 = vmul.f32 %v193, %v1031
    %v1041 = vmul.f32 %v195, %v1031
    %v1042 = vmul.f32 %v197, %v1031
    %v1043 = vmul.f32 %v199, %v1031
    %v1044 = vmul.f32 %v201, %v1031
    %v1045 = vmul.f32 %v203, %v1031
    %v1046 = vmul.f32 %v205, %v1031
    %v1047 = vmul.f32 %v207, %v1031
    %v1048 = vadd.f32 %v1010, %v1033
    %v1049 = vadd.f32 %v1011, %v1034
    %v1050 = vadd.f32 %v1012, %v1035
    %v1051 = vadd.f32 %v1013, %v1036
    %v1052 = vadd.f32 %v1014, %v1037
    %v1053 = vadd.f32 %v1015, %v1038
    %v1054 = vadd.f32 %v1016, %v1039
    %v1055 = vadd.f32 %v1017, %v1040
    %v1056 = vadd.f32 %v1018, %v1041
    %v1057 = vadd.f32 %v1019, %v1042
    %v1058 = vadd.f32 %v1020, %v1043
    %v1059 = vadd.f32 %v1021, %v1044
    %v1060 = vadd.f32 %v1022, %v1045
    %v1061 = vadd.f32 %v1023, %v1046
    %v1062 = vadd.f32 %v1024, %v1047
    %s1063 = scalar_lea.vmem %s3, 3
    %v1064 = vld [vmem:[%s1063] sm:$0x1]
    %v1066 = vlaneseq
    %v1067 = vshrl.u32 %v1066, 7
    %v1068 = vsub.s32 0, %v1067
    %v1069 = vrot.slane %v1064, %v1068
    %v1071 = vmul.f32 %v75, %v1069
    %v1072 = vmul.f32 %v77, %v1069
    %v1073 = vmul.f32 %v79, %v1069
    %v1074 = vmul.f32 %v81, %v1069
    %v1075 = vmul.f32 %v83, %v1069
    %v1076 = vmul.f32 %v85, %v1069
    %v1077 = vmul.f32 %v87, %v1069
    %v1078 = vmul.f32 %v264, %v1069
    %v1079 = vmul.f32 %v89, %v1069
    %v1080 = vmul.f32 %v91, %v1069
    %v1081 = vmul.f32 %v93, %v1069
    %v1082 = vmul.f32 %v95, %v1069
    %v1083 = vmul.f32 %v97, %v1069
    %v1084 = vmul.f32 %v99, %v1069
    %v1085 = vmul.f32 %v101, %v1069
    %v1086 = vmul.f32 %v266, %v1069
    %v1087 = vadd.f32 %v1048, %v1071
    %v1088 = vadd.f32 %v1049, %v1072
    %v1089 = vadd.f32 %v1050, %v1073
    %v1090 = vadd.f32 %v1051, %v1074
    %v1091 = vadd.f32 %v1052, %v1075
    %v1092 = vadd.f32 %v1053, %v1076
    %v1093 = vadd.f32 %v1054, %v1077
    %v1094 = vadd.f32 %v1055, %v1078
    %v1095 = vadd.f32 %v1048, %v1079
    %v1096 = vadd.f32 %v1056, %v1080
    %v1097 = vadd.f32 %v1057, %v1081
    %v1098 = vadd.f32 %v1058, %v1082
    %v1099 = vadd.f32 %v1059, %v1083
    %v1100 = vadd.f32 %v1060, %v1084
    %v1101 = vadd.f32 %v1061, %v1085
    %v1102 = vadd.f32 %v1062, %v1086
    %s1103 = scalar_lea.vmem %s3, 4
    %v1104 = vld [vmem:[%s1103] sm:$0x1]
    %v1106 = vlaneseq
    %v1107 = vshrl.u32 %v1106, 7
    %v1108 = vsub.s32 0, %v1107
    %v1109 = vrot.slane %v1104, %v1108
    %v1111 = vmul.f32 %v40, %v1109
    %v1112 = vmul.f32 %v41, %v1109
    %v1113 = vmul.f32 %v42, %v1109
    %v1114 = vmul.f32 %v43, %v1109
    %v1115 = vmul.f32 %v44, %v1109
    %v1116 = vmul.f32 %v45, %v1109
    %v1117 = vmul.f32 %v46, %v1109
    %v1118 = vmul.f32 %v47, %v1109
    %v1119 = vmul.f32 %v48, %v1109
    %v1120 = vmul.f32 %v49, %v1109
    %v1121 = vmul.f32 %v50, %v1109
    %v1122 = vmul.f32 %v51, %v1109
    %v1123 = vmul.f32 %v52, %v1109
    %v1124 = vmul.f32 %v53, %v1109
    %v1125 = vmul.f32 %v54, %v1109
    %v1126 = vmul.f32 %v55, %v1109
    %v1127 = vadd.f32 %v1087, %v1111
    %v1128 = vadd.f32 %v1088, %v1112
    %v1129 = vadd.f32 %v1089, %v1113
    %v1130 = vadd.f32 %v1090, %v1114
    %v1131 = vadd.f32 %v1091, %v1115
    %v1132 = vadd.f32 %v1092, %v1116
    %v1133 = vadd.f32 %v1093, %v1117
    %v1134 = vadd.f32 %v1094, %v1118
    %v1135 = vadd.f32 %v1095, %v1119
    %v1136 = vadd.f32 %v1096, %v1120
    %v1137 = vadd.f32 %v1097, %v1121
    %v1138 = vadd.f32 %v1098, %v1122
    %v1139 = vadd.f32 %v1099, %v1123
    %v1140 = vadd.f32 %v1100, %v1124
    %v1141 = vadd.f32 %v1101, %v1125
    %v1142 = vadd.f32 %v1102, %v1126
    %s1143 = scalar_lea.vmem %s3, 5
    %v1144 = vld [vmem:[%s1143] sm:$0x1]
    %v1146 = vlaneseq
    %v1147 = vshrl.u32 %v1146, 7
    %v1148 = vsub.s32 0, %v1147
    %v1149 = vrot.slane %v1144, %v1148
    %v1151 = vmul.f32 %v181, %v1149
    %v1152 = vmul.f32 %v183, %v1149
    %v1153 = vmul.f32 %v185, %v1149
    %v1154 = vmul.f32 %v187, %v1149
    %v1155 = vmul.f32 %v189, %v1149
    %v1156 = vmul.f32 %v191, %v1149
    %v1157 = vmul.f32 %v193, %v1149
    %v1158 = vmul.f32 %v350, %v1149
    %v1159 = vmul.f32 %v195, %v1149
    %v1160 = vmul.f32 %v197, %v1149
    %v1161 = vmul.f32 %v199, %v1149
    %v1162 = vmul.f32 %v201, %v1149
    %v1163 = vmul.f32 %v203, %v1149
    %v1164 = vmul.f32 %v205, %v1149
    %v1165 = vmul.f32 %v207, %v1149
    %v1166 = vmul.f32 %v352, %v1149
    %v1167 = vadd.f32 %v1127, %v1151
    %v1168 = vadd.f32 %v1128, %v1152
    %v1169 = vadd.f32 %v1129, %v1153
    %v1170 = vadd.f32 %v1130, %v1154
    %v1171 = vadd.f32 %v1131, %v1155
    %v1172 = vadd.f32 %v1132, %v1156
    %v1173 = vadd.f32 %v1133, %v1157
    %v1174 = vadd.f32 %v1134, %v1158
    %v1175 = vadd.f32 %v1135, %v1159
    %v1176 = vadd.f32 %v1136, %v1160
    %v1177 = vadd.f32 %v1137, %v1161
    %v1178 = vadd.f32 %v1138, %v1162
    %v1179 = vadd.f32 %v1139, %v1163
    %v1180 = vadd.f32 %v1140, %v1164
    %v1181 = vadd.f32 %v1141, %v1165
    %v1182 = vadd.f32 %v1142, %v1166
    %s1183 = scalar_lea.vmem %s3, 6
    %v1184 = vld [vmem:[%s1183] sm:$0x1]
    %v1186 = vlaneseq
    %v1187 = vshrl.u32 %v1186, 7
    %v1188 = vsub.s32 0, %v1187
    %v1189 = vrot.slane %v1184, %v1188
    %v1191 = vmul.f32 %v77, %v1189
    %v1192 = vmul.f32 %v79, %v1189
    %v1193 = vmul.f32 %v81, %v1189
    %v1194 = vmul.f32 %v83, %v1189
    %v1195 = vmul.f32 %v85, %v1189
    %v1196 = vmul.f32 %v87, %v1189
    %v1197 = vmul.f32 %v264, %v1189
    %v1198 = vmul.f32 %v73, %v1189
    %v1199 = vmul.f32 %v91, %v1189
    %v1200 = vmul.f32 %v93, %v1189
    %v1201 = vmul.f32 %v95, %v1189
    %v1202 = vmul.f32 %v97, %v1189
    %v1203 = vmul.f32 %v99, %v1189
    %v1204 = vmul.f32 %v101, %v1189
    %v1205 = vmul.f32 %v266, %v1189
    %v1206 = vadd.f32 %v1167, %v1191
    %v1207 = vadd.f32 %v1168, %v1192
    %v1208 = vadd.f32 %v1169, %v1193
    %v1209 = vadd.f32 %v1170, %v1194
    %v1210 = vadd.f32 %v1171, %v1195
    %v1211 = vadd.f32 %v1172, %v1196
    %v1212 = vadd.f32 %v1173, %v1197
    %v1213 = vadd.f32 %v1174, %v1198
    %v1214 = vadd.f32 %v1175, %v1199
    %v1215 = vadd.f32 %v1176, %v1200
    %v1216 = vadd.f32 %v1177, %v1201
    %v1217 = vadd.f32 %v1178, %v1202
    %v1218 = vadd.f32 %v1179, %v1203
    %v1219 = vadd.f32 %v1180, %v1204
    %v1220 = vadd.f32 %v1181, %v1205
    %v1221 = vadd.f32 %v1182, %v1198
    %s1222 = scalar_lea.vmem %s3, 7
    %v1223 = vld [vmem:[%s1222] sm:$0x1]
    %v1225 = vlaneseq
    %v1226 = vshrl.u32 %v1225, 7
    %v1227 = vsub.s32 0, %v1226
    %v1228 = vrot.slane %v1223, %v1227
    %v1230 = vmul.f32 %v41, %v1228
    %v1231 = vmul.f32 %v42, %v1228
    %v1232 = vmul.f32 %v43, %v1228
    %v1233 = vmul.f32 %v44, %v1228
    %v1234 = vmul.f32 %v45, %v1228
    %v1235 = vmul.f32 %v46, %v1228
    %v1236 = vmul.f32 %v47, %v1228
    %v1237 = vmul.f32 %v1228, 0.0
    %v1238 = vmul.f32 %v49, %v1228
    %v1239 = vmul.f32 %v50, %v1228
    %v1240 = vmul.f32 %v51, %v1228
    %v1241 = vmul.f32 %v52, %v1228
    %v1242 = vmul.f32 %v53, %v1228
    %v1243 = vmul.f32 %v54, %v1228
    %v1244 = vmul.f32 %v55, %v1228
    %v1245 = vadd.f32 %v1206, %v1230
    %v1246 = vadd.f32 %v1207, %v1231
    %v1247 = vadd.f32 %v1208, %v1232
    %v1248 = vadd.f32 %v1209, %v1233
    %v1249 = vadd.f32 %v1210, %v1234
    %v1250 = vadd.f32 %v1211, %v1235
    %v1251 = vadd.f32 %v1212, %v1236
    %v1252 = vadd.f32 %v1213, %v1237
    %v1253 = vadd.f32 %v1214, %v1238
    %v1254 = vadd.f32 %v1215, %v1239
    %v1255 = vadd.f32 %v1216, %v1240
    %v1256 = vadd.f32 %v1217, %v1241
    %v1257 = vadd.f32 %v1218, %v1242
    %v1258 = vadd.f32 %v1219, %v1243
    %v1259 = vadd.f32 %v1220, %v1244
    %v1260 = vadd.f32 %v1221, %v1237
    %s1261 = scalar_lea.vmem %s3, 8
    %v1262 = vld [vmem:[%s1261] sm:$0x1]
    %v1264 = vlaneseq
    %v1265 = vshrl.u32 %v1264, 7
    %v1266 = vsub.s32 0, %v1265
    %v1267 = vrot.slane %v1262, %v1266
    %v1269 = vmul.f32 %v183, %v1267
    %v1270 = vmul.f32 %v185, %v1267
    %v1271 = vmul.f32 %v187, %v1267
    %v1272 = vmul.f32 %v189, %v1267
    %v1273 = vmul.f32 %v191, %v1267
    %v1274 = vmul.f32 %v193, %v1267
    %v1275 = vmul.f32 %v350, %v1267
    %v1276 = vmul.f32 %v179, %v1267
    %v1277 = vmul.f32 %v197, %v1267
    %v1278 = vmul.f32 %v199, %v1267
    %v1279 = vmul.f32 %v201, %v1267
    %v1280 = vmul.f32 %v203, %v1267
    %v1281 = vmul.f32 %v205, %v1267
    %v1282 = vmul.f32 %v207, %v1267
    %v1283 = vmul.f32 %v352, %v1267
    %v1284 = vadd.f32 %v1245, %v1269
    %v1285 = vadd.f32 %v1246, %v1270
    %v1286 = vadd.f32 %v1247, %v1271
    %v1287 = vadd.f32 %v1248, %v1272
    %v1288 = vadd.f32 %v1249, %v1273
    %v1289 = vadd.f32 %v1250, %v1274
    %v1290 = vadd.f32 %v1251, %v1275
    %v1291 = vadd.f32 %v1252, %v1276
    %v1292 = vadd.f32 %v1253, %v1277
    %v1293 = vadd.f32 %v1254, %v1278
    %v1294 = vadd.f32 %v1255, %v1279
    %v1295 = vadd.f32 %v1256, %v1280
    %v1296 = vadd.f32 %v1257, %v1281
    %v1297 = vadd.f32 %v1258, %v1282
    %v1298 = vadd.f32 %v1259, %v1283
    %v1299 = vadd.f32 %v1260, %v1276
    %v1300 = vsel %vm512, %v1284, 0.0
    %v1301 = vsel %vm512, %v1285, 0.0
    %v1302 = vadd.f32 %v1300, %v1301
    %v1303 = vsel %vm512, %v1286, 0.0
    %v1304 = vadd.f32 %v1302, %v1303
    %v1305 = vsel %vm512, %v1287, 0.0
    %v1306 = vadd.f32 %v1304, %v1305
    %v1307 = vsel %vm512, %v1288, 0.0
    %v1308 = vadd.f32 %v1306, %v1307
    %v1309 = vsel %vm512, %v1289, 0.0
    %v1310 = vadd.f32 %v1308, %v1309
    %v1311 = vsel %vm512, %v1290, 0.0
    %v1312 = vadd.f32 %v1310, %v1311
    %v1313 = vsel %vm512, %v1291, 0.0
    %v1314 = vadd.f32 %v1312, %v1313
    %v1315 = vsel %vm512, %v1292, 0.0
    %v1316 = vadd.f32 %v1314, %v1315
    %v1317 = vsel %vm512, %v1293, 0.0
    %v1318 = vadd.f32 %v1316, %v1317
    %v1319 = vsel %vm512, %v1294, 0.0
    %v1320 = vadd.f32 %v1318, %v1319
    %v1321 = vsel %vm512, %v1295, 0.0
    %v1322 = vadd.f32 %v1320, %v1321
    %v1323 = vsel %vm512, %v1296, 0.0
    %v1324 = vadd.f32 %v1322, %v1323
    %v1325 = vsel %vm512, %v1297, 0.0
    %v1326 = vadd.f32 %v1324, %v1325
    %v1327 = vsel %vm512, %v1298, 0.0
    %v1328 = vadd.f32 %v1326, %v1327
    %v1329 = vsel %vm512, %v1299, 0.0
    %v1330 = vadd.f32 %v1328, %v1329
    %v1331 = vrot.slane %v1330, 4
    %v1332 = vadd.f32 %v1330, %v1331
    %v1333 = vrot.slane %v1332, 2
    %v1334 = vadd.f32 %v1332, %v1333
    %v1335 = vrot.slane %v1334, 1
    %v1336 = vadd.f32 %v1334, %v1335
    %v1337 = vmul.f32 %v1336, %v550
    %v1338 = vsub.f32 %v1284, %v1337
    %v1339 = vsub.f32 %v1285, %v1337
    %v1340 = vsub.f32 %v1286, %v1337
    %v1341 = vsub.f32 %v1287, %v1337
    %v1342 = vsub.f32 %v1288, %v1337
    %v1343 = vsub.f32 %v1289, %v1337
    %v1344 = vsub.f32 %v1290, %v1337
    %v1345 = vsub.f32 %v1291, %v1337
    %v1346 = vsub.f32 %v1292, %v1337
    %v1347 = vsub.f32 %v1293, %v1337
    %v1348 = vsub.f32 %v1294, %v1337
    %v1349 = vsub.f32 %v1295, %v1337
    %v1350 = vsub.f32 %v1296, %v1337
    %v1351 = vsub.f32 %v1297, %v1337
    %v1352 = vsub.f32 %v1298, %v1337
    %v1353 = vsub.f32 %v1299, %v1337
    %v1354 = vmul.f32 %v1338, %v1338
    %v1355 = vmul.f32 %v1339, %v1339
    %v1356 = vmul.f32 %v1340, %v1340
    %v1357 = vmul.f32 %v1341, %v1341
    %v1358 = vmul.f32 %v1342, %v1342
    %v1359 = vmul.f32 %v1343, %v1343
    %v1360 = vmul.f32 %v1344, %v1344
    %v1361 = vmul.f32 %v1345, %v1345
    %v1362 = vmul.f32 %v1346, %v1346
    %v1363 = vmul.f32 %v1347, %v1347
    %v1364 = vmul.f32 %v1348, %v1348
    %v1365 = vmul.f32 %v1349, %v1349
    %v1366 = vmul.f32 %v1350, %v1350
    %v1367 = vmul.f32 %v1351, %v1351
    %v1368 = vmul.f32 %v1352, %v1352
    %v1369 = vmul.f32 %v1353, %v1353
    %v1370 = vsel %vm512, %v1354, 0.0
    %v1371 = vsel %vm512, %v1355, 0.0
    %v1372 = vadd.f32 %v1370, %v1371
    %v1373 = vsel %vm512, %v1356, 0.0
    %v1374 = vadd.f32 %v1372, %v1373
    %v1375 = vsel %vm512, %v1357, 0.0
    %v1376 = vadd.f32 %v1374, %v1375
    %v1377 = vsel %vm512, %v1358, 0.0
    %v1378 = vadd.f32 %v1376, %v1377
    %v1379 = vsel %vm512, %v1359, 0.0
    %v1380 = vadd.f32 %v1378, %v1379
    %v1381 = vsel %vm512, %v1360, 0.0
    %v1382 = vadd.f32 %v1380, %v1381
    %v1383 = vsel %vm512, %v1361, 0.0
    %v1384 = vadd.f32 %v1382, %v1383
    %v1385 = vsel %vm512, %v1362, 0.0
    %v1386 = vadd.f32 %v1384, %v1385
    %v1387 = vsel %vm512, %v1363, 0.0
    %v1388 = vadd.f32 %v1386, %v1387
    %v1389 = vsel %vm512, %v1364, 0.0
    %v1390 = vadd.f32 %v1388, %v1389
    %v1391 = vsel %vm512, %v1365, 0.0
    %v1392 = vadd.f32 %v1390, %v1391
    %v1393 = vsel %vm512, %v1366, 0.0
    %v1394 = vadd.f32 %v1392, %v1393
    %v1395 = vsel %vm512, %v1367, 0.0
    %v1396 = vadd.f32 %v1394, %v1395
    %v1397 = vsel %vm512, %v1368, 0.0
    %v1398 = vadd.f32 %v1396, %v1397
    %v1399 = vsel %vm512, %v1369, 0.0
    %v1400 = vadd.f32 %v1398, %v1399
    %v1401 = vrot.slane %v1400, 4
    %v1402 = vadd.f32 %v1400, %v1401
    %v1403 = vrot.slane %v1402, 2
    %v1404 = vadd.f32 %v1402, %v1403
    %v1405 = vrot.slane %v1404, 1
    %v1406 = vadd.f32 %v1404, %v1405
    %v1407 = vmul.f32 %v1406, %v550
    %v1408 = vadd.f32 %v1407, 1e-05
    %v1409 = vrsqrt.pop %v1408
    %v1410 = vmul.f32 %v1338, %v1409
    %v1411 = vmul.f32 %v1339, %v1409
    %v1412 = vmul.f32 %v1340, %v1409
    %v1413 = vmul.f32 %v1341, %v1409
    %v1414 = vmul.f32 %v1342, %v1409
    %v1415 = vmul.f32 %v1343, %v1409
    %v1416 = vmul.f32 %v1344, %v1409
    %v1417 = vmul.f32 %v1345, %v1409
    %v1418 = vmul.f32 %v1346, %v1409
    %v1419 = vmul.f32 %v1347, %v1409
    %v1420 = vmul.f32 %v1348, %v1409
    %v1421 = vmul.f32 %v1349, %v1409
    %v1422 = vmul.f32 %v1350, %v1409
    %v1423 = vmul.f32 %v1351, %v1409
    %v1424 = vmul.f32 %v1352, %v1409
    %v1425 = vmul.f32 %v1353, %v1409
    %v1426 = vmax.f32 %v1410, 0.0
    %v1427 = vmax.f32 %v1411, 0.0
    %v1428 = vmax.f32 %v1412, 0.0
    %v1429 = vmax.f32 %v1413, 0.0
    %v1430 = vmax.f32 %v1414, 0.0
    %v1431 = vmax.f32 %v1415, 0.0
    %v1432 = vmax.f32 %v1416, 0.0
    %v1433 = vmax.f32 %v1417, 0.0
    %v1434 = vmax.f32 %v1418, 0.0
    %v1435 = vmax.f32 %v1419, 0.0
    %v1436 = vmax.f32 %v1420, 0.0
    %v1437 = vmax.f32 %v1421, 0.0
    %v1438 = vmax.f32 %v1422, 0.0
    %v1439 = vmax.f32 %v1423, 0.0
    %v1440 = vmax.f32 %v1424, 0.0
    %v1441 = vmax.f32 %v1425, 0.0
    %v1442 = vmin.f32 %v1426, 6.0
    %v1443 = vmin.f32 %v1427, 6.0
    %v1444 = vmin.f32 %v1428, 6.0
    %v1445 = vmin.f32 %v1429, 6.0
    %v1446 = vmin.f32 %v1430, 6.0
    %v1447 = vmin.f32 %v1431, 6.0
    %v1448 = vmin.f32 %v1432, 6.0
    %v1449 = vmin.f32 %v1433, 6.0
    %v1450 = vmin.f32 %v1434, 6.0
    %v1451 = vmin.f32 %v1435, 6.0
    %v1452 = vmin.f32 %v1436, 6.0
    %v1453 = vmin.f32 %v1437, 6.0
    %v1454 = vmin.f32 %v1438, 6.0
    %v1455 = vmin.f32 %v1439, 6.0
    %v1456 = vmin.f32 %v1440, 6.0
    %v1457 = vmin.f32 %v1441, 6.0
    %v1472 = vrot.slane %v949, 7
    %v1473 = vsel %vm71, %v72, %v1472
    %v1474 = vrot.slane %v950, 7
    %v1475 = vsel %vm71, %v72, %v1474
    %v1476 = vrot.slane %v951, 7
    %v1477 = vsel %vm71, %v72, %v1476
    %v1478 = vrot.slane %v952, 7
    %v1479 = vsel %vm71, %v72, %v1478
    %v1480 = vrot.slane %v953, 7
    %v1481 = vsel %vm71, %v72, %v1480
    %v1482 = vrot.slane %v954, 7
    %v1483 = vsel %vm71, %v72, %v1482
    %v1484 = vrot.slane %v955, 7
    %v1485 = vsel %vm71, %v72, %v1484
    %v1486 = vrot.slane %v957, 7
    %v1487 = vsel %vm71, %v72, %v1486
    %v1488 = vrot.slane %v958, 7
    %v1489 = vsel %vm71, %v72, %v1488
    %v1490 = vrot.slane %v959, 7
    %v1491 = vsel %vm71, %v72, %v1490
    %v1492 = vrot.slane %v960, 7
    %v1493 = vsel %vm71, %v72, %v1492
    %v1494 = vrot.slane %v961, 7
    %v1495 = vsel %vm71, %v72, %v1494
    %v1496 = vrot.slane %v962, 7
    %v1497 = vsel %vm71, %v72, %v1496
    %v1498 = vrot.slane %v963, 7
    %v1499 = vsel %vm71, %v72, %v1498
    %v1514 = vld [vmem:[%s4] sm:$0x1]
    %v1516 = vlaneseq
    %v1517 = vshrl.u32 %v1516, 7
    %v1518 = vsub.s32 0, %v1517
    %v1519 = vrot.slane %v1514, %v1518
    %v1521 = vmul.f32 %v73, %v1519
    %v1522 = vmul.f32 %v1473, %v1519
    %v1523 = vmul.f32 %v1475, %v1519
    %v1524 = vmul.f32 %v1477, %v1519
    %v1525 = vmul.f32 %v1479, %v1519
    %v1526 = vmul.f32 %v1481, %v1519
    %v1527 = vmul.f32 %v1483, %v1519
    %v1528 = vmul.f32 %v1485, %v1519
    %v1529 = vmul.f32 %v1487, %v1519
    %v1530 = vmul.f32 %v1489, %v1519
    %v1531 = vmul.f32 %v1491, %v1519
    %v1532 = vmul.f32 %v1493, %v1519
    %v1533 = vmul.f32 %v1495, %v1519
    %v1534 = vmul.f32 %v1497, %v1519
    %v1535 = vmul.f32 %v1499, %v1519
    %s1536 = scalar_lea.vmem %s4, 1
    %v1537 = vld [vmem:[%s1536] sm:$0x1]
    %v1539 = vlaneseq
    %v1540 = vshrl.u32 %v1539, 7
    %v1541 = vsub.s32 0, %v1540
    %v1542 = vrot.slane %v1537, %v1541
    %v1544 = vmul.f32 %v1542, 0.0
    %v1545 = vmul.f32 %v949, %v1542
    %v1546 = vmul.f32 %v950, %v1542
    %v1547 = vmul.f32 %v951, %v1542
    %v1548 = vmul.f32 %v952, %v1542
    %v1549 = vmul.f32 %v953, %v1542
    %v1550 = vmul.f32 %v954, %v1542
    %v1551 = vmul.f32 %v955, %v1542
    %v1552 = vmul.f32 %v957, %v1542
    %v1553 = vmul.f32 %v958, %v1542
    %v1554 = vmul.f32 %v959, %v1542
    %v1555 = vmul.f32 %v960, %v1542
    %v1556 = vmul.f32 %v961, %v1542
    %v1557 = vmul.f32 %v962, %v1542
    %v1558 = vmul.f32 %v963, %v1542
    %v1559 = vadd.f32 %v1521, %v1544
    %v1560 = vadd.f32 %v1522, %v1545
    %v1561 = vadd.f32 %v1523, %v1546
    %v1562 = vadd.f32 %v1524, %v1547
    %v1563 = vadd.f32 %v1525, %v1548
    %v1564 = vadd.f32 %v1526, %v1549
    %v1565 = vadd.f32 %v1527, %v1550
    %v1566 = vadd.f32 %v1528, %v1551
    %v1567 = vadd.f32 %v1529, %v1552
    %v1568 = vadd.f32 %v1530, %v1553
    %v1569 = vadd.f32 %v1531, %v1554
    %v1570 = vadd.f32 %v1532, %v1555
    %v1571 = vadd.f32 %v1533, %v1556
    %v1572 = vadd.f32 %v1534, %v1557
    %v1573 = vadd.f32 %v1535, %v1558
    %v1574 = vrot.slane %v949, 1
    %v1575 = vsel %vm177, %v1574, %v178
    %v1576 = vrot.slane %v950, 1
    %v1577 = vsel %vm177, %v1576, %v178
    %v1578 = vrot.slane %v951, 1
    %v1579 = vsel %vm177, %v1578, %v178
    %v1580 = vrot.slane %v952, 1
    %v1581 = vsel %vm177, %v1580, %v178
    %v1582 = vrot.slane %v953, 1
    %v1583 = vsel %vm177, %v1582, %v178
    %v1584 = vrot.slane %v954, 1
    %v1585 = vsel %vm177, %v1584, %v178
    %v1586 = vrot.slane %v955, 1
    %v1587 = vsel %vm177, %v1586, %v178
    %v1588 = vrot.slane %v957, 1
    %v1589 = vsel %vm177, %v1588, %v178
    %v1590 = vrot.slane %v958, 1
    %v1591 = vsel %vm177, %v1590, %v178
    %v1592 = vrot.slane %v959, 1
    %v1593 = vsel %vm177, %v1592, %v178
    %v1594 = vrot.slane %v960, 1
    %v1595 = vsel %vm177, %v1594, %v178
    %v1596 = vrot.slane %v961, 1
    %v1597 = vsel %vm177, %v1596, %v178
    %v1598 = vrot.slane %v962, 1
    %v1599 = vsel %vm177, %v1598, %v178
    %v1600 = vrot.slane %v963, 1
    %v1601 = vsel %vm177, %v1600, %v178
    %s1616 = scalar_lea.vmem %s4, 2
    %v1617 = vld [vmem:[%s1616] sm:$0x1]
    %v1619 = vlaneseq
    %v1620 = vshrl.u32 %v1619, 7
    %v1621 = vsub.s32 0, %v1620
    %v1622 = vrot.slane %v1617, %v1621
    %v1624 = vmul.f32 %v179, %v1622
    %v1625 = vmul.f32 %v1575, %v1622
    %v1626 = vmul.f32 %v1577, %v1622
    %v1627 = vmul.f32 %v1579, %v1622
    %v1628 = vmul.f32 %v1581, %v1622
    %v1629 = vmul.f32 %v1583, %v1622
    %v1630 = vmul.f32 %v1585, %v1622
    %v1631 = vmul.f32 %v1587, %v1622
    %v1632 = vmul.f32 %v1589, %v1622
    %v1633 = vmul.f32 %v1591, %v1622
    %v1634 = vmul.f32 %v1593, %v1622
    %v1635 = vmul.f32 %v1595, %v1622
    %v1636 = vmul.f32 %v1597, %v1622
    %v1637 = vmul.f32 %v1599, %v1622
    %v1638 = vmul.f32 %v1601, %v1622
    %v1639 = vadd.f32 %v1559, %v1624
    %v1640 = vadd.f32 %v1560, %v1625
    %v1641 = vadd.f32 %v1561, %v1626
    %v1642 = vadd.f32 %v1562, %v1627
    %v1643 = vadd.f32 %v1563, %v1628
    %v1644 = vadd.f32 %v1564, %v1629
    %v1645 = vadd.f32 %v1565, %v1630
    %v1646 = vadd.f32 %v1566, %v1631
    %v1647 = vadd.f32 %v1567, %v1632
    %v1648 = vadd.f32 %v1568, %v1633
    %v1649 = vadd.f32 %v1569, %v1634
    %v1650 = vadd.f32 %v1570, %v1635
    %v1651 = vadd.f32 %v1571, %v1636
    %v1652 = vadd.f32 %v1572, %v1637
    %v1653 = vadd.f32 %v1573, %v1638
    %v1656 = vrot.slane %v956, 7
    %v1657 = vsel %vm71, %v72, %v1656
    %v1658 = vrot.slane %v964, 7
    %v1659 = vsel %vm71, %v72, %v1658
    %s1662 = scalar_lea.vmem %s4, 3
    %v1663 = vld [vmem:[%s1662] sm:$0x1]
    %v1665 = vlaneseq
    %v1666 = vshrl.u32 %v1665, 7
    %v1667 = vsub.s32 0, %v1666
    %v1668 = vrot.slane %v1663, %v1667
    %v1670 = vmul.f32 %v1473, %v1668
    %v1671 = vmul.f32 %v1475, %v1668
    %v1672 = vmul.f32 %v1477, %v1668
    %v1673 = vmul.f32 %v1479, %v1668
    %v1674 = vmul.f32 %v1481, %v1668
    %v1675 = vmul.f32 %v1483, %v1668
    %v1676 = vmul.f32 %v1485, %v1668
    %v1677 = vmul.f32 %v1657, %v1668
    %v1678 = vmul.f32 %v1487, %v1668
    %v1679 = vmul.f32 %v1489, %v1668
    %v1680 = vmul.f32 %v1491, %v1668
    %v1681 = vmul.f32 %v1493, %v1668
    %v1682 = vmul.f32 %v1495, %v1668
    %v1683 = vmul.f32 %v1497, %v1668
    %v1684 = vmul.f32 %v1499, %v1668
    %v1685 = vmul.f32 %v1659, %v1668
    %v1686 = vadd.f32 %v1639, %v1670
    %v1687 = vadd.f32 %v1640, %v1671
    %v1688 = vadd.f32 %v1641, %v1672
    %v1689 = vadd.f32 %v1642, %v1673
    %v1690 = vadd.f32 %v1643, %v1674
    %v1691 = vadd.f32 %v1644, %v1675
    %v1692 = vadd.f32 %v1645, %v1676
    %v1693 = vadd.f32 %v1646, %v1677
    %v1694 = vadd.f32 %v1639, %v1678
    %v1695 = vadd.f32 %v1647, %v1679
    %v1696 = vadd.f32 %v1648, %v1680
    %v1697 = vadd.f32 %v1649, %v1681
    %v1698 = vadd.f32 %v1650, %v1682
    %v1699 = vadd.f32 %v1651, %v1683
    %v1700 = vadd.f32 %v1652, %v1684
    %v1701 = vadd.f32 %v1653, %v1685
    %s1702 = scalar_lea.vmem %s4, 4
    %v1703 = vld [vmem:[%s1702] sm:$0x1]
    %v1705 = vlaneseq
    %v1706 = vshrl.u32 %v1705, 7
    %v1707 = vsub.s32 0, %v1706
    %v1708 = vrot.slane %v1703, %v1707
    %v1710 = vmul.f32 %v949, %v1708
    %v1711 = vmul.f32 %v950, %v1708
    %v1712 = vmul.f32 %v951, %v1708
    %v1713 = vmul.f32 %v952, %v1708
    %v1714 = vmul.f32 %v953, %v1708
    %v1715 = vmul.f32 %v954, %v1708
    %v1716 = vmul.f32 %v955, %v1708
    %v1717 = vmul.f32 %v956, %v1708
    %v1718 = vmul.f32 %v957, %v1708
    %v1719 = vmul.f32 %v958, %v1708
    %v1720 = vmul.f32 %v959, %v1708
    %v1721 = vmul.f32 %v960, %v1708
    %v1722 = vmul.f32 %v961, %v1708
    %v1723 = vmul.f32 %v962, %v1708
    %v1724 = vmul.f32 %v963, %v1708
    %v1725 = vmul.f32 %v964, %v1708
    %v1726 = vadd.f32 %v1686, %v1710
    %v1727 = vadd.f32 %v1687, %v1711
    %v1728 = vadd.f32 %v1688, %v1712
    %v1729 = vadd.f32 %v1689, %v1713
    %v1730 = vadd.f32 %v1690, %v1714
    %v1731 = vadd.f32 %v1691, %v1715
    %v1732 = vadd.f32 %v1692, %v1716
    %v1733 = vadd.f32 %v1693, %v1717
    %v1734 = vadd.f32 %v1694, %v1718
    %v1735 = vadd.f32 %v1695, %v1719
    %v1736 = vadd.f32 %v1696, %v1720
    %v1737 = vadd.f32 %v1697, %v1721
    %v1738 = vadd.f32 %v1698, %v1722
    %v1739 = vadd.f32 %v1699, %v1723
    %v1740 = vadd.f32 %v1700, %v1724
    %v1741 = vadd.f32 %v1701, %v1725
    %v1742 = vrot.slane %v956, 1
    %v1743 = vsel %vm177, %v1742, %v178
    %v1744 = vrot.slane %v964, 1
    %v1745 = vsel %vm177, %v1744, %v178
    %s1748 = scalar_lea.vmem %s4, 5
    %v1749 = vld [vmem:[%s1748] sm:$0x1]
    %v1751 = vlaneseq
    %v1752 = vshrl.u32 %v1751, 7
    %v1753 = vsub.s32 0, %v1752
    %v1754 = vrot.slane %v1749, %v1753
    %v1756 = vmul.f32 %v1575, %v1754
    %v1757 = vmul.f32 %v1577, %v1754
    %v1758 = vmul.f32 %v1579, %v1754
    %v1759 = vmul.f32 %v1581, %v1754
    %v1760 = vmul.f32 %v1583, %v1754
    %v1761 = vmul.f32 %v1585, %v1754
    %v1762 = vmul.f32 %v1587, %v1754
    %v1763 = vmul.f32 %v1743, %v1754
    %v1764 = vmul.f32 %v1589, %v1754
    %v1765 = vmul.f32 %v1591, %v1754
    %v1766 = vmul.f32 %v1593, %v1754
    %v1767 = vmul.f32 %v1595, %v1754
    %v1768 = vmul.f32 %v1597, %v1754
    %v1769 = vmul.f32 %v1599, %v1754
    %v1770 = vmul.f32 %v1601, %v1754
    %v1771 = vmul.f32 %v1745, %v1754
    %v1772 = vadd.f32 %v1726, %v1756
    %v1773 = vadd.f32 %v1727, %v1757
    %v1774 = vadd.f32 %v1728, %v1758
    %v1775 = vadd.f32 %v1729, %v1759
    %v1776 = vadd.f32 %v1730, %v1760
    %v1777 = vadd.f32 %v1731, %v1761
    %v1778 = vadd.f32 %v1732, %v1762
    %v1779 = vadd.f32 %v1733, %v1763
    %v1780 = vadd.f32 %v1734, %v1764
    %v1781 = vadd.f32 %v1735, %v1765
    %v1782 = vadd.f32 %v1736, %v1766
    %v1783 = vadd.f32 %v1737, %v1767
    %v1784 = vadd.f32 %v1738, %v1768
    %v1785 = vadd.f32 %v1739, %v1769
    %v1786 = vadd.f32 %v1740, %v1770
    %v1787 = vadd.f32 %v1741, %v1771
    %s1788 = scalar_lea.vmem %s4, 6
    %v1789 = vld [vmem:[%s1788] sm:$0x1]
    %v1791 = vlaneseq
    %v1792 = vshrl.u32 %v1791, 7
    %v1793 = vsub.s32 0, %v1792
    %v1794 = vrot.slane %v1789, %v1793
    %v1796 = vmul.f32 %v1475, %v1794
    %v1797 = vmul.f32 %v1477, %v1794
    %v1798 = vmul.f32 %v1479, %v1794
    %v1799 = vmul.f32 %v1481, %v1794
    %v1800 = vmul.f32 %v1483, %v1794
    %v1801 = vmul.f32 %v1485, %v1794
    %v1802 = vmul.f32 %v1657, %v1794
    %v1803 = vmul.f32 %v73, %v1794
    %v1804 = vmul.f32 %v1489, %v1794
    %v1805 = vmul.f32 %v1491, %v1794
    %v1806 = vmul.f32 %v1493, %v1794
    %v1807 = vmul.f32 %v1495, %v1794
    %v1808 = vmul.f32 %v1497, %v1794
    %v1809 = vmul.f32 %v1499, %v1794
    %v1810 = vmul.f32 %v1659, %v1794
    %v1811 = vadd.f32 %v1772, %v1796
    %v1812 = vadd.f32 %v1773, %v1797
    %v1813 = vadd.f32 %v1774, %v1798
    %v1814 = vadd.f32 %v1775, %v1799
    %v1815 = vadd.f32 %v1776, %v1800
    %v1816 = vadd.f32 %v1777, %v1801
    %v1817 = vadd.f32 %v1778, %v1802
    %v1818 = vadd.f32 %v1779, %v1803
    %v1819 = vadd.f32 %v1780, %v1804
    %v1820 = vadd.f32 %v1781, %v1805
    %v1821 = vadd.f32 %v1782, %v1806
    %v1822 = vadd.f32 %v1783, %v1807
    %v1823 = vadd.f32 %v1784, %v1808
    %v1824 = vadd.f32 %v1785, %v1809
    %v1825 = vadd.f32 %v1786, %v1810
    %v1826 = vadd.f32 %v1787, %v1803
    %s1827 = scalar_lea.vmem %s4, 7
    %v1828 = vld [vmem:[%s1827] sm:$0x1]
    %v1830 = vlaneseq
    %v1831 = vshrl.u32 %v1830, 7
    %v1832 = vsub.s32 0, %v1831
    %v1833 = vrot.slane %v1828, %v1832
    %v1835 = vmul.f32 %v950, %v1833
    %v1836 = vmul.f32 %v951, %v1833
    %v1837 = vmul.f32 %v952, %v1833
    %v1838 = vmul.f32 %v953, %v1833
    %v1839 = vmul.f32 %v954, %v1833
    %v1840 = vmul.f32 %v955, %v1833
    %v1841 = vmul.f32 %v956, %v1833
    %v1842 = vmul.f32 %v1833, 0.0
    %v1843 = vmul.f32 %v958, %v1833
    %v1844 = vmul.f32 %v959, %v1833
    %v1845 = vmul.f32 %v960, %v1833
    %v1846 = vmul.f32 %v961, %v1833
    %v1847 = vmul.f32 %v962, %v1833
    %v1848 = vmul.f32 %v963, %v1833
    %v1849 = vmul.f32 %v964, %v1833
    %v1850 = vadd.f32 %v1811, %v1835
    %v1851 = vadd.f32 %v1812, %v1836
    %v1852 = vadd.f32 %v1813, %v1837
    %v1853 = vadd.f32 %v1814, %v1838
    %v1854 = vadd.f32 %v1815, %v1839
    %v1855 = vadd.f32 %v1816, %v1840
    %v1856 = vadd.f32 %v1817, %v1841
    %v1857 = vadd.f32 %v1818, %v1842
    %v1858 = vadd.f32 %v1819, %v1843
    %v1859 = vadd.f32 %v1820, %v1844
    %v1860 = vadd.f32 %v1821, %v1845
    %v1861 = vadd.f32 %v1822, %v1846
    %v1862 = vadd.f32 %v1823, %v1847
    %v1863 = vadd.f32 %v1824, %v1848
    %v1864 = vadd.f32 %v1825, %v1849
    %v1865 = vadd.f32 %v1826, %v1842
    %s1866 = scalar_lea.vmem %s4, 8
    %v1867 = vld [vmem:[%s1866] sm:$0x1]
    %v1869 = vlaneseq
    %v1870 = vshrl.u32 %v1869, 7
    %v1871 = vsub.s32 0, %v1870
    %v1872 = vrot.slane %v1867, %v1871
    %v1874 = vmul.f32 %v1577, %v1872
    %v1875 = vmul.f32 %v1579, %v1872
    %v1876 = vmul.f32 %v1581, %v1872
    %v1877 = vmul.f32 %v1583, %v1872
    %v1878 = vmul.f32 %v1585, %v1872
    %v1879 = vmul.f32 %v1587, %v1872
    %v1880 = vmul.f32 %v1743, %v1872
    %v1881 = vmul.f32 %v179, %v1872
    %v1882 = vmul.f32 %v1591, %v1872
    %v1883 = vmul.f32 %v1593, %v1872
    %v1884 = vmul.f32 %v1595, %v1872
    %v1885 = vmul.f32 %v1597, %v1872
    %v1886 = vmul.f32 %v1599, %v1872
    %v1887 = vmul.f32 %v1601, %v1872
    %v1888 = vmul.f32 %v1745, %v1872
    %v1889 = vadd.f32 %v1850, %v1874
    %v1890 = vadd.f32 %v1851, %v1875
    %v1891 = vadd.f32 %v1852, %v1876
    %v1892 = vadd.f32 %v1853, %v1877
    %v1893 = vadd.f32 %v1854, %v1878
    %v1894 = vadd.f32 %v1855, %v1879
    %v1895 = vadd.f32 %v1856, %v1880
    %v1896 = vadd.f32 %v1857, %v1881
    %v1897 = vadd.f32 %v1858, %v1882
    %v1898 = vadd.f32 %v1859, %v1883
    %v1899 = vadd.f32 %v1860, %v1884
    %v1900 = vadd.f32 %v1861, %v1885
    %v1901 = vadd.f32 %v1862, %v1886
    %v1902 = vadd.f32 %v1863, %v1887
    %v1903 = vadd.f32 %v1864, %v1888
    %v1904 = vadd.f32 %v1865, %v1881
    %v1905 = vsel %vm806, %v1889, 0.0
    %v1906 = vsel %vm806, %v1890, 0.0
    %v1907 = vadd.f32 %v1905, %v1906
    %v1908 = vsel %vm806, %v1891, 0.0
    %v1909 = vadd.f32 %v1907, %v1908
    %v1910 = vsel %vm806, %v1892, 0.0
    %v1911 = vadd.f32 %v1909, %v1910
    %v1912 = vsel %vm806, %v1893, 0.0
    %v1913 = vadd.f32 %v1911, %v1912
    %v1914 = vsel %vm806, %v1894, 0.0
    %v1915 = vadd.f32 %v1913, %v1914
    %v1916 = vsel %vm806, %v1895, 0.0
    %v1917 = vadd.f32 %v1915, %v1916
    %v1918 = vsel %vm806, %v1896, 0.0
    %v1919 = vadd.f32 %v1917, %v1918
    %v1920 = vsel %vm806, %v1897, 0.0
    %v1921 = vadd.f32 %v1919, %v1920
    %v1922 = vsel %vm806, %v1898, 0.0
    %v1923 = vadd.f32 %v1921, %v1922
    %v1924 = vsel %vm806, %v1899, 0.0
    %v1925 = vadd.f32 %v1923, %v1924
    %v1926 = vsel %vm806, %v1900, 0.0
    %v1927 = vadd.f32 %v1925, %v1926
    %v1928 = vsel %vm806, %v1901, 0.0
    %v1929 = vadd.f32 %v1927, %v1928
    %v1930 = vsel %vm806, %v1902, 0.0
    %v1931 = vadd.f32 %v1929, %v1930
    %v1932 = vsel %vm806, %v1903, 0.0
    %v1933 = vadd.f32 %v1931, %v1932
    %v1934 = vsel %vm806, %v1904, 0.0
    %v1935 = vadd.f32 %v1933, %v1934
    %v1936 = vrot.slane %v1935, 4
    %v1937 = vadd.f32 %v1935, %v1936
    %v1938 = vrot.slane %v1937, 2
    %v1939 = vadd.f32 %v1937, %v1938
    %v1940 = vrot.slane %v1939, 1
    %v1941 = vadd.f32 %v1939, %v1940
    %v1942 = vmul.f32 %v1941, %v550
    %v1943 = vsub.f32 %v1889, %v1942
    %v1944 = vsub.f32 %v1890, %v1942
    %v1945 = vsub.f32 %v1891, %v1942
    %v1946 = vsub.f32 %v1892, %v1942
    %v1947 = vsub.f32 %v1893, %v1942
    %v1948 = vsub.f32 %v1894, %v1942
    %v1949 = vsub.f32 %v1895, %v1942
    %v1950 = vsub.f32 %v1896, %v1942
    %v1951 = vsub.f32 %v1897, %v1942
    %v1952 = vsub.f32 %v1898, %v1942
    %v1953 = vsub.f32 %v1899, %v1942
    %v1954 = vsub.f32 %v1900, %v1942
    %v1955 = vsub.f32 %v1901, %v1942
    %v1956 = vsub.f32 %v1902, %v1942
    %v1957 = vsub.f32 %v1903, %v1942
    %v1958 = vsub.f32 %v1904, %v1942
    %v1959 = vmul.f32 %v1943, %v1943
    %v1960 = vmul.f32 %v1944, %v1944
    %v1961 = vmul.f32 %v1945, %v1945
    %v1962 = vmul.f32 %v1946, %v1946
    %v1963 = vmul.f32 %v1947, %v1947
    %v1964 = vmul.f32 %v1948, %v1948
    %v1965 = vmul.f32 %v1949, %v1949
    %v1966 = vmul.f32 %v1950, %v1950
    %v1967 = vmul.f32 %v1951, %v1951
    %v1968 = vmul.f32 %v1952, %v1952
    %v1969 = vmul.f32 %v1953, %v1953
    %v1970 = vmul.f32 %v1954, %v1954
    %v1971 = vmul.f32 %v1955, %v1955
    %v1972 = vmul.f32 %v1956, %v1956
    %v1973 = vmul.f32 %v1957, %v1957
    %v1974 = vmul.f32 %v1958, %v1958
    %v1975 = vsel %vm806, %v1959, 0.0
    %v1976 = vsel %vm806, %v1960, 0.0
    %v1977 = vadd.f32 %v1975, %v1976
    %v1978 = vsel %vm806, %v1961, 0.0
    %v1979 = vadd.f32 %v1977, %v1978
    %v1980 = vsel %vm806, %v1962, 0.0
    %v1981 = vadd.f32 %v1979, %v1980
    %v1982 = vsel %vm806, %v1963, 0.0
    %v1983 = vadd.f32 %v1981, %v1982
    %v1984 = vsel %vm806, %v1964, 0.0
    %v1985 = vadd.f32 %v1983, %v1984
    %v1986 = vsel %vm806, %v1965, 0.0
    %v1987 = vadd.f32 %v1985, %v1986
    %v1988 = vsel %vm806, %v1966, 0.0
    %v1989 = vadd.f32 %v1987, %v1988
    %v1990 = vsel %vm806, %v1967, 0.0
    %v1991 = vadd.f32 %v1989, %v1990
    %v1992 = vsel %vm806, %v1968, 0.0
    %v1993 = vadd.f32 %v1991, %v1992
    %v1994 = vsel %vm806, %v1969, 0.0
    %v1995 = vadd.f32 %v1993, %v1994
    %v1996 = vsel %vm806, %v1970, 0.0
    %v1997 = vadd.f32 %v1995, %v1996
    %v1998 = vsel %vm806, %v1971, 0.0
    %v1999 = vadd.f32 %v1997, %v1998
    %v2000 = vsel %vm806, %v1972, 0.0
    %v2001 = vadd.f32 %v1999, %v2000
    %v2002 = vsel %vm806, %v1973, 0.0
    %v2003 = vadd.f32 %v2001, %v2002
    %v2004 = vsel %vm806, %v1974, 0.0
    %v2005 = vadd.f32 %v2003, %v2004
    %v2006 = vrot.slane %v2005, 4
    %v2007 = vadd.f32 %v2005, %v2006
    %v2008 = vrot.slane %v2007, 2
    %v2009 = vadd.f32 %v2007, %v2008
    %v2010 = vrot.slane %v2009, 1
    %v2011 = vadd.f32 %v2009, %v2010
    %v2012 = vmul.f32 %v2011, %v550
    %v2013 = vadd.f32 %v2012, 1e-05
    %v2014 = vrsqrt.pop %v2013
    %v2015 = vmul.f32 %v1943, %v2014
    %v2016 = vmul.f32 %v1944, %v2014
    %v2017 = vmul.f32 %v1945, %v2014
    %v2018 = vmul.f32 %v1946, %v2014
    %v2019 = vmul.f32 %v1947, %v2014
    %v2020 = vmul.f32 %v1948, %v2014
    %v2021 = vmul.f32 %v1949, %v2014
    %v2022 = vmul.f32 %v1950, %v2014
    %v2023 = vmul.f32 %v1951, %v2014
    %v2024 = vmul.f32 %v1952, %v2014
    %v2025 = vmul.f32 %v1953, %v2014
    %v2026 = vmul.f32 %v1954, %v2014
    %v2027 = vmul.f32 %v1955, %v2014
    %v2028 = vmul.f32 %v1956, %v2014
    %v2029 = vmul.f32 %v1957, %v2014
    %v2030 = vmul.f32 %v1958, %v2014
    %v2031 = vmax.f32 %v2015, 0.0
    %v2032 = vmax.f32 %v2016, 0.0
    %v2033 = vmax.f32 %v2017, 0.0
    %v2034 = vmax.f32 %v2018, 0.0
    %v2035 = vmax.f32 %v2019, 0.0
    %v2036 = vmax.f32 %v2020, 0.0
    %v2037 = vmax.f32 %v2021, 0.0
    %v2038 = vmax.f32 %v2022, 0.0
    %v2039 = vmax.f32 %v2023, 0.0
    %v2040 = vmax.f32 %v2024, 0.0
    %v2041 = vmax.f32 %v2025, 0.0
    %v2042 = vmax.f32 %v2026, 0.0
    %v2043 = vmax.f32 %v2027, 0.0
    %v2044 = vmax.f32 %v2028, 0.0
    %v2045 = vmax.f32 %v2029, 0.0
    %v2046 = vmax.f32 %v2030, 0.0
    %v2047 = vmin.f32 %v2031, 6.0
    %v2048 = vmin.f32 %v2032, 6.0
    %v2049 = vmin.f32 %v2033, 6.0
    %v2050 = vmin.f32 %v2034, 6.0
    %v2051 = vmin.f32 %v2035, 6.0
    %v2052 = vmin.f32 %v2036, 6.0
    %v2053 = vmin.f32 %v2037, 6.0
    %v2054 = vmin.f32 %v2038, 6.0
    %v2055 = vmin.f32 %v2039, 6.0
    %v2056 = vmin.f32 %v2040, 6.0
    %v2057 = vmin.f32 %v2041, 6.0
    %v2058 = vmin.f32 %v2042, 6.0
    %v2059 = vmin.f32 %v2043, 6.0
    %v2060 = vmin.f32 %v2044, 6.0
    %v2061 = vmin.f32 %v2045, 6.0
    %v2062 = vmin.f32 %v2046, 6.0
    %v2063 = vld [vmem:[%s5] sm:$0x3]
    %v2064 = vpack.c.bf16 %v1443, %v1442
    %v2065 = vpack.c.bf16 %v1445, %v1444
    %v2066 = vpack.c.bf16 %v1447, %v1446
    %v2067 = vpack.c.bf16 %v1449, %v1448
    %v2068 = vpack.c.bf16 %v1451, %v1450
    %v2069 = vpack.c.bf16 %v1453, %v1452
    %v2070 = vpack.c.bf16 %v1455, %v1454
    %v2071 = vpack.c.bf16 %v1457, %v1456
    %v2072 = vld [vmem:[%s6] sm:$0xf]
    %v2073 = vld [vmem:[%s6 + $0x4] sm:$0xf]
    %v2074 = vld [vmem:[%s6 + $0x8] sm:$0x3]
    %v2075 = vpack.c.bf16 %v2048, %v2047
    %v2076 = vpack.c.bf16 %v2050, %v2049
    %v2077 = vpack.c.bf16 %v2052, %v2051
    %v2078 = vpack.c.bf16 %v2054, %v2053
    %v2079 = vpack.c.bf16 %v2056, %v2055
    %v2080 = vpack.c.bf16 %v2058, %v2057
    %v2081 = vpack.c.bf16 %v2060, %v2059
    %v2082 = vpack.c.bf16 %v2062, %v2061
    %v2086 = vunpack.c.l.b16 %v2072
    %v2087 = vunpack.c.l.b16 %v2073
    %v2088 = vunpack.c.l.b16 %v2074
    %v2089 = vpack.c.b16 %v2087, %v2086
    %v2090 = vpack.c.b16 %v2088, %v2088
    %v2093 = vsel %vm806, %v2075, 0
    %v2096 = vsel %vm806, %v2076, 0
    %v2099 = vsel %vm806, %v2077, 0
    %v2102 = vsel %vm806, %v2078, 0
    %v2105 = vsel %vm806, %v2079, 0
    %v2108 = vsel %vm806, %v2080, 0
    %v2111 = vsel %vm806, %v2081, 0
    %v2114 = vsel %vm806, %v2082, 0
    %v2117 = vsel %vm705, %v2090, 0
    %2119 = vmatprep.subr.bf16.mxu0 0
    %2120 = vmatpush1.bf16.msra.mxu0 %v2089
    %2121 = vmatprep.subr.bf16.mxu0 0
    %2122 = vmatpush1.bf16.msra.mxu0 %v2117
    %2123 = vmatprep.subr.bf16.mxu0 0
    %2124 = vmatpush1.bf16.msra.mxu0 0
    %2125 = vmatprep.subr.bf16.mxu0 0
    %2126 = vmatpush1.bf16.msra.mxu0 0
    %2127 = vmatprep.subr.bf16.mxu0 0
    %2128 = vmatpush1.bf16.msra.mxu0 0
    %2129 = vmatprep.subr.bf16.mxu0 0
    %2130 = vmatpush1.bf16.msra.mxu0 0
    %2131 = vmatprep.subr.bf16.mxu0 0
    %2132 = vmatpush1.bf16.msra.mxu0 0
    %2133 = vmatprep.subr.bf16.mxu0 0
    %2134 = vmatpush1.bf16.msra.mxu0 0
    %2135 = vmatprep.subr.bf16.mxu0 0
    %2136 = vmatpush1.bf16.msra.mxu0 0
    %2137 = vmatprep.subr.bf16.mxu0 0
    %2138 = vmatpush1.bf16.msra.mxu0 0
    %2139 = vmatprep.subr.bf16.mxu0 0
    %2140 = vmatpush1.bf16.msra.mxu0 0
    %2141 = vmatprep.subr.bf16.mxu0 0
    %2142 = vmatpush1.bf16.msra.mxu0 0
    %2143 = vmatprep.subr.bf16.mxu0 0
    %2144 = vmatpush1.bf16.msra.mxu0 0
    %2145 = vmatprep.subr.bf16.mxu0 0
    %2146 = vmatpush1.bf16.msra.mxu0 0
    %2147 = vmatprep.subr.bf16.mxu0 0
    %2148 = vmatpush1.bf16.msra.mxu0 0
    %2149 = vmatprep.subr.bf16.mxu0 0
    %2150 = vmatpush1.bf16.msra.mxu0 0
    %2151 = vmatprep.mubr.bf16.mxu0 0
    %2152 = vmatmul.mubr.bf16.gmra.mrb[0].mxu0 %v2093
    %v2153 = vpop.f32.mrb[0].mxu0
    %v2154 = vadd.f32 0.0, %v2153
    %v2155 = vpop.f32.mrb[0].mxu0
    %v2156 = vpop.f32.mrb[0].mxu0
    %v2157 = vadd.f32 0.0, %v2156
    %v2158 = vpop.f32.mrb[0].mxu0
    %2159 = vmatprep.mubr.bf16.mxu0 0
    %2160 = vmatmul.mubr.bf16.gmra.mrb[0].mxu0 %v2096
    %v2161 = vpop.f32.mrb[0].mxu0
    %v2162 = vadd.f32 0.0, %v2161
    %v2163 = vpop.f32.mrb[0].mxu0
    %v2164 = vpop.f32.mrb[0].mxu0
    %v2165 = vadd.f32 0.0, %v2164
    %v2166 = vpop.f32.mrb[0].mxu0
    %2167 = vmatprep.mubr.bf16.mxu0 0
    %2168 = vmatmul.mubr.bf16.gmra.mrb[0].mxu0 %v2099
    %v2169 = vpop.f32.mrb[0].mxu0
    %v2170 = vadd.f32 0.0, %v2169
    %v2171 = vpop.f32.mrb[0].mxu0
    %v2172 = vpop.f32.mrb[0].mxu0
    %v2173 = vadd.f32 0.0, %v2172
    %v2174 = vpop.f32.mrb[0].mxu0
    %2175 = vmatprep.mubr.bf16.mxu0 0
    %2176 = vmatmul.mubr.bf16.gmra.mrb[0].mxu0 %v2102
    %v2177 = vpop.f32.mrb[0].mxu0
    %v2178 = vadd.f32 0.0, %v2177
    %v2179 = vpop.f32.mrb[0].mxu0
    %v2180 = vpop.f32.mrb[0].mxu0
    %v2181 = vadd.f32 0.0, %v2180
    %v2182 = vpop.f32.mrb[0].mxu0
    %2183 = vmatprep.mubr.bf16.mxu0 0
    %2184 = vmatmul.mubr.bf16.gmra.mrb[0].mxu0 %v2105
    %v2185 = vpop.f32.mrb[0].mxu0
    %v2186 = vadd.f32 0.0, %v2185
    %v2187 = vpop.f32.mrb[0].mxu0
    %v2188 = vpop.f32.mrb[0].mxu0
    %v2189 = vadd.f32 0.0, %v2188
    %v2190 = vpop.f32.mrb[0].mxu0
    %2191 = vmatprep.mubr.bf16.mxu0 0
    %2192 = vmatmul.mubr.bf16.gmra.mrb[0].mxu0 %v2108
    %v2193 = vpop.f32.mrb[0].mxu0
    %v2194 = vadd.f32 0.0, %v2193
    %v2195 = vpop.f32.mrb[0].mxu0
    %v2196 = vpop.f32.mrb[0].mxu0
    %v2197 = vadd.f32 0.0, %v2196
    %v2198 = vpop.f32.mrb[0].mxu0
    %2199 = vmatprep.mubr.bf16.mxu0 0
    %2200 = vmatmul.mubr.bf16.gmra.mrb[0].mxu0 %v2111
    %v2201 = vpop.f32.mrb[0].mxu0
    %v2202 = vadd.f32 0.0, %v2201
    %v2203 = vpop.f32.mrb[0].mxu0
    %v2204 = vpop.f32.mrb[0].mxu0
    %v2205 = vadd.f32 0.0, %v2204
    %v2206 = vpop.f32.mrb[0].mxu0
    %2207 = vmatprep.mubr.bf16.mxu0 0
    %2208 = vmatmul.mubr.bf16.gmra.mrb[0].mxu0 %v2114
    %v2209 = vpop.f32.mrb[0].mxu0
    %v2210 = vadd.f32 0.0, %v2209
    %v2211 = vpop.f32.mrb[0].mxu0
    %v2212 = vpop.f32.mrb[0].mxu0
    %v2213 = vadd.f32 0.0, %v2212
    %v2214 = vpop.f32.mrb[0].mxu0
    %2215 = vdwg.mxu0
    %v2217 = vsel %vm512, %v2064, 0
    %v2220 = vsel %vm512, %v2065, 0
    %v2223 = vsel %vm512, %v2066, 0
    %v2226 = vsel %vm512, %v2067, 0
    %v2229 = vsel %vm512, %v2068, 0
    %v2232 = vsel %vm512, %v2069, 0
    %v2235 = vsel %vm512, %v2070, 0
    %v2238 = vsel %vm512, %v2071, 0
    %v2241 = vsel %vm705, %v2063, 0
    %2243 = vmatprep.subr.bf16.mxu0 0
    %2244 = vmatpush1.bf16.msra.mxu0 %v2241
    %2245 = vmatprep.subr.bf16.mxu0 0
    %2246 = vmatpush1.bf16.msra.mxu0 0
    %2247 = vmatprep.subr.bf16.mxu0 0
    %2248 = vmatpush1.bf16.msra.mxu0 0
    %2249 = vmatprep.subr.bf16.mxu0 0
    %2250 = vmatpush1.bf16.msra.mxu0 0
    %2251 = vmatprep.subr.bf16.mxu0 0
    %2252 = vmatpush1.bf16.msra.mxu0 0
    %2253 = vmatprep.subr.bf16.mxu0 0
    %2254 = vmatpush1.bf16.msra.mxu0 0
    %2255 = vmatprep.subr.bf16.mxu0 0
    %2256 = vmatpush1.bf16.msra.mxu0 0
    %2257 = vmatprep.subr.bf16.mxu0 0
    %2258 = vmatpush1.bf16.msra.mxu0 0
    %2259 = vmatprep.subr.bf16.mxu0 0
    %2260 = vmatpush1.bf16.msra.mxu0 0
    %2261 = vmatprep.subr.bf16.mxu0 0
    %2262 = vmatpush1.bf16.msra.mxu0 0
    %2263 = vmatprep.subr.bf16.mxu0 0
    %2264 = vmatpush1.bf16.msra.mxu0 0
    %2265 = vmatprep.subr.bf16.mxu0 0
    %2266 = vmatpush1.bf16.msra.mxu0 0
    %2267 = vmatprep.subr.bf16.mxu0 0
    %2268 = vmatpush1.bf16.msra.mxu0 0
    %2269 = vmatprep.subr.bf16.mxu0 0
    %2270 = vmatpush1.bf16.msra.mxu0 0
    %2271 = vmatprep.subr.bf16.mxu0 0
    %2272 = vmatpush1.bf16.msra.mxu0 0
    %2273 = vmatprep.subr.bf16.mxu0 0
    %2274 = vmatpush1.bf16.msra.mxu0 0
    %2275 = vmatprep.mubr.bf16.mxu0 0
    %2276 = vmatmul.mubr.bf16.gmra.mrb[0].mxu0 %v2217
    %v2277 = vpop.f32.mrb[0].mxu0
    %v2278 = vadd.f32 %v2154, %v2277
    %v2279 = vpop.f32.mrb[0].mxu0
    %v2280 = vpop.f32.mrb[0].mxu0
    %v2281 = vadd.f32 %v2157, %v2280
    %v2282 = vpop.f32.mrb[0].mxu0
    %2283 = vmatprep.mubr.bf16.mxu0 0
    %2284 = vmatmul.mubr.bf16.gmra.mrb[0].mxu0 %v2220
    %v2285 = vpop.f32.mrb[0].mxu0
    %v2286 = vadd.f32 %v2162, %v2285
    %v2287 = vpop.f32.mrb[0].mxu0
    %v2288 = vpop.f32.mrb[0].mxu0
    %v2289 = vadd.f32 %v2165, %v2288
    %v2290 = vpop.f32.mrb[0].mxu0
    %2291 = vmatprep.mubr.bf16.mxu0 0
    %2292 = vmatmul.mubr.bf16.gmra.mrb[0].mxu0 %v2223
    %v2293 = vpop.f32.mrb[0].mxu0
    %v2294 = vadd.f32 %v2170, %v2293
    %v2295 = vpop.f32.mrb[0].mxu0
    %v2296 = vpop.f32.mrb[0].mxu0
    %v2297 = vadd.f32 %v2173, %v2296
    %v2298 = vpop.f32.mrb[0].mxu0
    %2299 = vmatprep.mubr.bf16.mxu0 0
    %2300 = vmatmul.mubr.bf16.gmra.mrb[0].mxu0 %v2226
    %v2301 = vpop.f32.mrb[0].mxu0
    %v2302 = vadd.f32 %v2178, %v2301
    %v2303 = vpop.f32.mrb[0].mxu0
    %v2304 = vpop.f32.mrb[0].mxu0
    %v2305 = vadd.f32 %v2181, %v2304
    %v2306 = vpop.f32.mrb[0].mxu0
    %2307 = vmatprep.mubr.bf16.mxu0 0
    %2308 = vmatmul.mubr.bf16.gmra.mrb[0].mxu0 %v2229
    %v2309 = vpop.f32.mrb[0].mxu0
    %v2310 = vadd.f32 %v2186, %v2309
    %v2311 = vpop.f32.mrb[0].mxu0
    %v2312 = vpop.f32.mrb[0].mxu0
    %v2313 = vadd.f32 %v2189, %v2312
    %v2314 = vpop.f32.mrb[0].mxu0
    %2315 = vmatprep.mubr.bf16.mxu0 0
    %2316 = vmatmul.mubr.bf16.gmra.mrb[0].mxu0 %v2232
    %v2317 = vpop.f32.mrb[0].mxu0
    %v2318 = vadd.f32 %v2194, %v2317
    %v2319 = vpop.f32.mrb[0].mxu0
    %v2320 = vpop.f32.mrb[0].mxu0
    %v2321 = vadd.f32 %v2197, %v2320
    %v2322 = vpop.f32.mrb[0].mxu0
    %2323 = vmatprep.mubr.bf16.mxu0 0
    %2324 = vmatmul.mubr.bf16.gmra.mrb[0].mxu0 %v2235
    %v2325 = vpop.f32.mrb[0].mxu0
    %v2326 = vadd.f32 %v2202, %v2325
    %v2327 = vpop.f32.mrb[0].mxu0
    %v2328 = vpop.f32.mrb[0].mxu0
    %v2329 = vadd.f32 %v2205, %v2328
    %v2330 = vpop.f32.mrb[0].mxu0
    %2331 = vmatprep.mubr.bf16.mxu0 0
    %2332 = vmatmul.mubr.bf16.gmra.mrb[0].mxu0 %v2238
    %v2333 = vpop.f32.mrb[0].mxu0
    %v2334 = vadd.f32 %v2210, %v2333
    %v2335 = vpop.f32.mrb[0].mxu0
    %v2336 = vpop.f32.mrb[0].mxu0
    %v2337 = vadd.f32 %v2213, %v2336
    %v2338 = vpop.f32.mrb[0].mxu0
    %2339 = vdwg.mxu0
    %vm2340 = vcmask 130048
    %v2341 = vsel %vm2340, %v2278, 0.0
    %v2342 = vsel %vm2340, %v2281, 0.0
    %v2343 = vadd.f32 %v2341, %v2342
    %v2344 = vsel %vm2340, %v2286, 0.0
    %v2345 = vadd.f32 %v2343, %v2344
    %v2346 = vsel %vm2340, %v2289, 0.0
    %v2347 = vadd.f32 %v2345, %v2346
    %v2348 = vsel %vm2340, %v2294, 0.0
    %v2349 = vadd.f32 %v2347, %v2348
    %v2350 = vsel %vm2340, %v2297, 0.0
    %v2351 = vadd.f32 %v2349, %v2350
    %v2352 = vsel %vm2340, %v2302, 0.0
    %v2353 = vadd.f32 %v2351, %v2352
    %v2354 = vsel %vm2340, %v2305, 0.0
    %v2355 = vadd.f32 %v2353, %v2354
    %v2356 = vsel %vm2340, %v2310, 0.0
    %v2357 = vadd.f32 %v2355, %v2356
    %v2358 = vsel %vm2340, %v2313, 0.0
    %v2359 = vadd.f32 %v2357, %v2358
    %v2360 = vsel %vm2340, %v2318, 0.0
    %v2361 = vadd.f32 %v2359, %v2360
    %v2362 = vsel %vm2340, %v2321, 0.0
    %v2363 = vadd.f32 %v2361, %v2362
    %v2364 = vsel %vm2340, %v2326, 0.0
    %v2365 = vadd.f32 %v2363, %v2364
    %v2366 = vsel %vm2340, %v2329, 0.0
    %v2367 = vadd.f32 %v2365, %v2366
    %v2368 = vsel %vm2340, %v2334, 0.0
    %v2369 = vadd.f32 %v2367, %v2368
    %v2370 = vsel %vm2340, %v2337, 0.0
    %v2371 = vadd.f32 %v2369, %v2370
    %v2372 = vrot.slane %v2371, 4
    %v2373 = vadd.f32 %v2371, %v2372
    %v2374 = vrot.slane %v2373, 2
    %v2375 = vadd.f32 %v2373, %v2374
    %v2376 = vrot.slane %v2375, 1
    %v2377 = vadd.f32 %v2375, %v2376
    %v2378 = vmul.f32 %v2377, %v550
    %v2379 = vsub.f32 %v2278, %v2378
    %v2380 = vsub.f32 %v2281, %v2378
    %v2381 = vsub.f32 %v2286, %v2378
    %v2382 = vsub.f32 %v2289, %v2378
    %v2383 = vsub.f32 %v2294, %v2378
    %v2384 = vsub.f32 %v2297, %v2378
    %v2385 = vsub.f32 %v2302, %v2378
    %v2386 = vsub.f32 %v2305, %v2378
    %v2387 = vsub.f32 %v2310, %v2378
    %v2388 = vsub.f32 %v2313, %v2378
    %v2389 = vsub.f32 %v2318, %v2378
    %v2390 = vsub.f32 %v2321, %v2378
    %v2391 = vsub.f32 %v2326, %v2378
    %v2392 = vsub.f32 %v2329, %v2378
    %v2393 = vsub.f32 %v2334, %v2378
    %v2394 = vsub.f32 %v2337, %v2378
    %v2395 = vmul.f32 %v2379, %v2379
    %v2396 = vmul.f32 %v2380, %v2380
    %v2397 = vmul.f32 %v2381, %v2381
    %v2398 = vmul.f32 %v2382, %v2382
    %v2399 = vmul.f32 %v2383, %v2383
    %v2400 = vmul.f32 %v2384, %v2384
    %v2401 = vmul.f32 %v2385, %v2385
    %v2402 = vmul.f32 %v2386, %v2386
    %v2403 = vmul.f32 %v2387, %v2387
    %v2404 = vmul.f32 %v2388, %v2388
    %v2405 = vmul.f32 %v2389, %v2389
    %v2406 = vmul.f32 %v2390, %v2390
    %v2407 = vmul.f32 %v2391, %v2391
    %v2408 = vmul.f32 %v2392, %v2392
    %v2409 = vmul.f32 %v2393, %v2393
    %v2410 = vmul.f32 %v2394, %v2394
    %v2411 = vsel %vm2340, %v2395, 0.0
    %v2412 = vsel %vm2340, %v2396, 0.0
    %v2413 = vadd.f32 %v2411, %v2412
    %v2414 = vsel %vm2340, %v2397, 0.0
    %v2415 = vadd.f32 %v2413, %v2414
    %v2416 = vsel %vm2340, %v2398, 0.0
    %v2417 = vadd.f32 %v2415, %v2416
    %v2418 = vsel %vm2340, %v2399, 0.0
    %v2419 = vadd.f32 %v2417, %v2418
    %v2420 = vsel %vm2340, %v2400, 0.0
    %v2421 = vadd.f32 %v2419, %v2420
    %v2422 = vsel %vm2340, %v2401, 0.0
    %v2423 = vadd.f32 %v2421, %v2422
    %v2424 = vsel %vm2340, %v2402, 0.0
    %v2425 = vadd.f32 %v2423, %v2424
    %v2426 = vsel %vm2340, %v2403, 0.0
    %v2427 = vadd.f32 %v2425, %v2426
    %v2428 = vsel %vm2340, %v2404, 0.0
    %v2429 = vadd.f32 %v2427, %v2428
    %v2430 = vsel %vm2340, %v2405, 0.0
    %v2431 = vadd.f32 %v2429, %v2430
    %v2432 = vsel %vm2340, %v2406, 0.0
    %v2433 = vadd.f32 %v2431, %v2432
    %v2434 = vsel %vm2340, %v2407, 0.0
    %v2435 = vadd.f32 %v2433, %v2434
    %v2436 = vsel %vm2340, %v2408, 0.0
    %v2437 = vadd.f32 %v2435, %v2436
    %v2438 = vsel %vm2340, %v2409, 0.0
    %v2439 = vadd.f32 %v2437, %v2438
    %v2440 = vsel %vm2340, %v2410, 0.0
    %v2441 = vadd.f32 %v2439, %v2440
    %v2442 = vrot.slane %v2441, 4
    %v2443 = vadd.f32 %v2441, %v2442
    %v2444 = vrot.slane %v2443, 2
    %v2445 = vadd.f32 %v2443, %v2444
    %v2446 = vrot.slane %v2445, 1
    %v2447 = vadd.f32 %v2445, %v2446
    %v2448 = vmul.f32 %v2447, %v550
    %v2449 = vadd.f32 %v2448, 1e-05
    %v2450 = vrsqrt.pop %v2449
    %v2451 = vmul.f32 %v2379, %v2450
    %v2452 = vmul.f32 %v2380, %v2450
    %v2453 = vmul.f32 %v2381, %v2450
    %v2454 = vmul.f32 %v2382, %v2450
    %v2455 = vmul.f32 %v2383, %v2450
    %v2456 = vmul.f32 %v2384, %v2450
    %v2457 = vmul.f32 %v2385, %v2450
    %v2458 = vmul.f32 %v2386, %v2450
    %v2459 = vmul.f32 %v2387, %v2450
    %v2460 = vmul.f32 %v2388, %v2450
    %v2461 = vmul.f32 %v2389, %v2450
    %v2462 = vmul.f32 %v2390, %v2450
    %v2463 = vmul.f32 %v2391, %v2450
    %v2464 = vmul.f32 %v2392, %v2450
    %v2465 = vmul.f32 %v2393, %v2450
    %v2466 = vmul.f32 %v2394, %v2450
    %v2467 = vmax.f32 %v2451, 0.0
    %v2468 = vmax.f32 %v2452, 0.0
    %v2469 = vmax.f32 %v2453, 0.0
    %v2470 = vmax.f32 %v2454, 0.0
    %v2471 = vmax.f32 %v2455, 0.0
    %v2472 = vmax.f32 %v2456, 0.0
    %v2473 = vmax.f32 %v2457, 0.0
    %v2474 = vmax.f32 %v2458, 0.0
    %v2475 = vmax.f32 %v2459, 0.0
    %v2476 = vmax.f32 %v2460, 0.0
    %v2477 = vmax.f32 %v2461, 0.0
    %v2478 = vmax.f32 %v2462, 0.0
    %v2479 = vmax.f32 %v2463, 0.0
    %v2480 = vmax.f32 %v2464, 0.0
    %v2481 = vmax.f32 %v2465, 0.0
    %v2482 = vmax.f32 %v2466, 0.0
    %v2483 = vmin.f32 %v2467, 6.0
    %v2484 = vmin.f32 %v2468, 6.0
    %v2485 = vmin.f32 %v2469, 6.0
    %v2486 = vmin.f32 %v2470, 6.0
    %v2487 = vmin.f32 %v2471, 6.0
    %v2488 = vmin.f32 %v2472, 6.0
    %v2489 = vmin.f32 %v2473, 6.0
    %v2490 = vmin.f32 %v2474, 6.0
    %v2491 = vmin.f32 %v2475, 6.0
    %v2492 = vmin.f32 %v2476, 6.0
    %v2493 = vmin.f32 %v2477, 6.0
    %v2494 = vmin.f32 %v2478, 6.0
    %v2495 = vmin.f32 %v2479, 6.0
    %v2496 = vmin.f32 %v2480, 6.0
    %v2497 = vmin.f32 %v2481, 6.0
    %v2498 = vmin.f32 %v2482, 6.0
    %v2499 = vld [vmem:[%s7] sm:$0x3]
    %v2500 = vpack.c.bf16 %v75, %v73
    %v2501 = vpack.c.bf16 %v79, %v77
    %v2502 = vpack.c.bf16 %v83, %v81
    %v2503 = vpack.c.bf16 %v87, %v85
    %v2504 = vpack.c.bf16 %v89, %v73
    %v2505 = vpack.c.bf16 %v93, %v91
    %v2506 = vpack.c.bf16 %v97, %v95
    %v2507 = vpack.c.bf16 %v101, %v99
    %s2508 = scalar_lea.vmem %s7, 2
    %v2509 = vld [vmem:[%s2508] sm:$0x3]
    %v2510 = vpack.c.bf16 %v40, 0.0
    %v2511 = vpack.c.bf16 %v42, %v41
    %v2512 = vpack.c.bf16 %v44, %v43
    %v2513 = vpack.c.bf16 %v46, %v45
    %v2514 = vpack.c.bf16 %v48, 0.0
    %v2515 = vpack.c.bf16 %v50, %v49
    %v2516 = vpack.c.bf16 %v52, %v51
    %v2517 = vpack.c.bf16 %v54, %v53
    %v2519 = vsel %vm512, %v2510, 0
    %v2522 = vsel %vm512, %v2511, 0
    %v2525 = vsel %vm512, %v2512, 0
    %v2528 = vsel %vm512, %v2513, 0
    %v2531 = vsel %vm512, %v2514, 0
    %v2534 = vsel %vm512, %v2515, 0
    %v2537 = vsel %vm512, %v2516, 0
    %v2540 = vsel %vm512, %v2517, 0
    %v2543 = vsel %vm705, %v2509, 0
    %2545 = vmatprep.subr.bf16.mxu0 0
    %2546 = vmatpush1.bf16.msra.mxu0 %v2543
    %2547 = vmatprep.subr.bf16.mxu0 0
    %2548 = vmatpush1.bf16.msra.mxu0 0
    %2549 = vmatprep.subr.bf16.mxu0 0
    %2550 = vmatpush1.bf16.msra.mxu0 0
    %2551 = vmatprep.subr.bf16.mxu0 0
    %2552 = vmatpush1.bf16.msra.mxu0 0
    %2553 = vmatprep.subr.bf16.mxu0 0
    %2554 = vmatpush1.bf16.msra.mxu0 0
    %2555 = vmatprep.subr.bf16.mxu0 0
    %2556 = vmatpush1.bf16.msra.mxu0 0
    %2557 = vmatprep.subr.bf16.mxu0 0
    %2558 = vmatpush1.bf16.msra.mxu0 0
    %2559 = vmatprep.subr.bf16.mxu0 0
    %2560 = vmatpush1.bf16.msra.mxu0 0
    %2561 = vmatprep.subr.bf16.mxu0 0
    %2562 = vmatpush1.bf16.msra.mxu0 0
    %2563 = vmatprep.subr.bf16.mxu0 0
    %2564 = vmatpush1.bf16.msra.mxu0 0
    %2565 = vmatprep.subr.bf16.mxu0 0
    %2566 = vmatpush1.bf16.msra.mxu0 0
    %2567 = vmatprep.subr.bf16.mxu0 0
    %2568 = vmatpush1.bf16.msra.mxu0 0
    %2569 = vmatprep.subr.bf16.mxu0 0
    %2570 = vmatpush1.bf16.msra.mxu0 0
    %2571 = vmatprep.subr.bf16.mxu0 0
    %2572 = vmatpush1.bf16.msra.mxu0 0
    %2573 = vmatprep.subr.bf16.mxu0 0
    %2574 = vmatpush1.bf16.msra.mxu0 0
    %2575 = vmatprep.subr.bf16.mxu0 0
    %2576 = vmatpush1.bf16.msra.mxu0 0
    %2577 = vmatprep.mubr.bf16.mxu0 0
    %2578 = vmatmul.mubr.bf16.gmra.mrb[0].mxu0 %v2519
    %v2579 = vpop.f32.mrb[0].mxu0
    %v2580 = vadd.f32 0.0, %v2579
    %v2581 = vpop.f32.mrb[0].mxu0
    %v2582 = vpop.f32.mrb[0].mxu0
    %v2583 = vadd.f32 0.0, %v2582
    %v2584 = vpop.f32.mrb[0].mxu0
    %2585 = vmatprep.mubr.bf16.mxu0 0
    %2586 = vmatmul.mubr.bf16.gmra.mrb[0].mxu0 %v2522
    %v2587 = vpop.f32.mrb[0].mxu0
    %v2588 = vadd.f32 0.0, %v2587
    %v2589 = vpop.f32.mrb[0].mxu0
    %v2590 = vpop.f32.mrb[0].mxu0
    %v2591 = vadd.f32 0.0, %v2590
    %v2592 = vpop.f32.mrb[0].mxu0
    %2593 = vmatprep.mubr.bf16.mxu0 0
    %2594 = vmatmul.mubr.bf16.gmra.mrb[0].mxu0 %v2525
    %v2595 = vpop.f32.mrb[0].mxu0
    %v2596 = vadd.f32 0.0, %v2595
    %v2597 = vpop.f32.mrb[0].mxu0
    %v2598 = vpop.f32.mrb[0].mxu0
    %v2599 = vadd.f32 0.0, %v2598
    %v2600 = vpop.f32.mrb[0].mxu0
    %2601 = vmatprep.mubr.bf16.mxu0 0
    %2602 = vmatmul.mubr.bf16.gmra.mrb[0].mxu0 %v2528
    %v2603 = vpop.f32.mrb[0].mxu0
    %v2604 = vadd.f32 0.0, %v2603
    %v2605 = vpop.f32.mrb[0].mxu0
    %v2606 = vpop.f32.mrb[0].mxu0
    %v2607 = vadd.f32 0.0, %v2606
    %v2608 = vpop.f32.mrb[0].mxu0
    %2609 = vmatprep.mubr.bf16.mxu0 0
    %2610 = vmatmul.mubr.bf16.gmra.mrb[0].mxu0 %v2531
    %v2611 = vpop.f32.mrb[0].mxu0
    %v2612 = vadd.f32 0.0, %v2611
    %v2613 = vpop.f32.mrb[0].mxu0
    %v2614 = vpop.f32.mrb[0].mxu0
    %v2615 = vadd.f32 0.0, %v2614
    %v2616 = vpop.f32.mrb[0].mxu0
    %2617 = vmatprep.mubr.bf16.mxu0 0
    %2618 = vmatmul.mubr.bf16.gmra.mrb[0].mxu0 %v2534
    %v2619 = vpop.f32.mrb[0].mxu0
    %v2620 = vadd.f32 0.0, %v2619
    %v2621 = vpop.f32.mrb[0].mxu0
    %v2622 = vpop.f32.mrb[0].mxu0
    %v2623 = vadd.f32 0.0, %v2622
    %v2624 = vpop.f32.mrb[0].mxu0
    %2625 = vmatprep.mubr.bf16.mxu0 0
    %2626 = vmatmul.mubr.bf16.gmra.mrb[0].mxu0 %v2537
    %v2627 = vpop.f32.mrb[0].mxu0
    %v2628 = vadd.f32 0.0, %v2627
    %v2629 = vpop.f32.mrb[0].mxu0
    %v2630 = vpop.f32.mrb[0].mxu0
    %v2631 = vadd.f32 0.0, %v2630
    %v2632 = vpop.f32.mrb[0].mxu0
    %2633 = vmatprep.mubr.bf16.mxu0 0
    %2634 = vmatmul.mubr.bf16.gmra.mrb[0].mxu0 %v2540
    %v2635 = vpop.f32.mrb[0].mxu0
    %v2636 = vadd.f32 0.0, %v2635
    %v2637 = vpop.f32.mrb[0].mxu0
    %v2638 = vpop.f32.mrb[0].mxu0
    %v2639 = vadd.f32 0.0, %v2638
    %v2640 = vpop.f32.mrb[0].mxu0
    %2641 = vdwg.mxu0
    %v2643 = vsel %vm512, %v2500, 0
    %v2646 = vsel %vm512, %v2501, 0
    %v2649 = vsel %vm512, %v2502, 0
    %v2652 = vsel %vm512, %v2503, 0
    %v2655 = vsel %vm512, %v2504, 0
    %v2658 = vsel %vm512, %v2505, 0
    %v2661 = vsel %vm512, %v2506, 0
    %v2664 = vsel %vm512, %v2507, 0
    %v2667 = vsel %vm705, %v2499, 0
    %2669 = vmatprep.subr.bf16.mxu0 0
    %2670 = vmatpush1.bf16.msra.mxu0 %v2667
    %2671 = vmatprep.subr.bf16.mxu0 0
    %2672 = vmatpush1.bf16.msra.mxu0 0
    %2673 = vmatprep.subr.bf16.mxu0 0
    %2674 = vmatpush1.bf16.msra.mxu0 0
    %2675 = vmatprep.subr.bf16.mxu0 0
    %2676 = vmatpush1.bf16.msra.mxu0 0
    %2677 = vmatprep.subr.bf16.mxu0 0
    %2678 = vmatpush1.bf16.msra.mxu0 0
    %2679 = vmatprep.subr.bf16.mxu0 0
    %2680 = vmatpush1.bf16.msra.mxu0 0
    %2681 = vmatprep.subr.bf16.mxu0 0
    %2682 = vmatpush1.bf16.msra.mxu0 0
    %2683 = vmatprep.subr.bf16.mxu0 0
    %2684 = vmatpush1.bf16.msra.mxu0 0
    %2685 = vmatprep.subr.bf16.mxu0 0
    %2686 = vmatpush1.bf16.msra.mxu0 0
    %2687 = vmatprep.subr.bf16.mxu0 0
    %2688 = vmatpush1.bf16.msra.mxu0 0
    %2689 = vmatprep.subr.bf16.mxu0 0
    %2690 = vmatpush1.bf16.msra.mxu0 0
    %2691 = vmatprep.subr.bf16.mxu0 0
    %2692 = vmatpush1.bf16.msra.mxu0 0
    %2693 = vmatprep.subr.bf16.mxu0 0
    %2694 = vmatpush1.bf16.msra.mxu0 0
    %2695 = vmatprep.subr.bf16.mxu0 0
    %2696 = vmatpush1.bf16.msra.mxu0 0
    %2697 = vmatprep.subr.bf16.mxu0 0
    %2698 = vmatpush1.bf16.msra.mxu0 0
    %2699 = vmatprep.subr.bf16.mxu0 0
    %2700 = vmatpush1.bf16.msra.mxu0 0
    %2701 = vmatprep.mubr.bf16.mxu0 0
    %2702 = vmatmul.mubr.bf16.gmra.mrb[0].mxu0 %v2643
    %v2703 = vpop.f32.mrb[0].mxu0
    %v2704 = vadd.f32 %v2580, %v2703
    %v2705 = vpop.f32.mrb[0].mxu0
    %v2706 = vpop.f32.mrb[0].mxu0
    %v2707 = vadd.f32 %v2583, %v2706
    %v2708 = vpop.f32.mrb[0].mxu0
    %2709 = vmatprep.mubr.bf16.mxu0 0
    %2710 = vmatmul.mubr.bf16.gmra.mrb[0].mxu0 %v2646
    %v2711 = vpop.f32.mrb[0].mxu0
    %v2712 = vadd.f32 %v2588, %v2711
    %v2713 = vpop.f32.mrb[0].mxu0
    %v2714 = vpop.f32.mrb[0].mxu0
    %v2715 = vadd.f32 %v2591, %v2714
    %v2716 = vpop.f32.mrb[0].mxu0
    %2717 = vmatprep.mubr.bf16.mxu0 0
    %2718 = vmatmul.mubr.bf16.gmra.mrb[0].mxu0 %v2649
    %v2719 = vpop.f32.mrb[0].mxu0
    %v2720 = vadd.f32 %v2596, %v2719
    %v2721 = vpop.f32.mrb[0].mxu0
    %v2722 = vpop.f32.mrb[0].mxu0
    %v2723 = vadd.f32 %v2599, %v2722
    %v2724 = vpop.f32.mrb[0].mxu0
    %2725 = vmatprep.mubr.bf16.mxu0 0
    %2726 = vmatmul.mubr.bf16.gmra.mrb[0].mxu0 %v2652
    %v2727 = vpop.f32.mrb[0].mxu0
    %v2728 = vadd.f32 %v2604, %v2727
    %v2729 = vpop.f32.mrb[0].mxu0
    %v2730 = vpop.f32.mrb[0].mxu0
    %v2731 = vadd.f32 %v2607, %v2730
    %v2732 = vpop.f32.mrb[0].mxu0
    %2733 = vmatprep.mubr.bf16.mxu0 0
    %2734 = vmatmul.mubr.bf16.gmra.mrb[0].mxu0 %v2655
    %v2735 = vpop.f32.mrb[0].mxu0
    %v2736 = vadd.f32 %v2612, %v2735
    %v2737 = vpop.f32.mrb[0].mxu0
    %v2738 = vpop.f32.mrb[0].mxu0
    %v2739 = vadd.f32 %v2615, %v2738
    %v2740 = vpop.f32.mrb[0].mxu0
    %2741 = vmatprep.mubr.bf16.mxu0 0
    %2742 = vmatmul.mubr.bf16.gmra.mrb[0].mxu0 %v2658
    %v2743 = vpop.f32.mrb[0].mxu0
    %v2744 = vadd.f32 %v2620, %v2743
    %v2745 = vpop.f32.mrb[0].mxu0
    %v2746 = vpop.f32.mrb[0].mxu0
    %v2747 = vadd.f32 %v2623, %v2746
    %v2748 = vpop.f32.mrb[0].mxu0
    %2749 = vmatprep.mubr.bf16.mxu0 0
    %2750 = vmatmul.mubr.bf16.gmra.mrb[0].mxu0 %v2661
    %v2751 = vpop.f32.mrb[0].mxu0
    %v2752 = vadd.f32 %v2628, %v2751
    %v2753 = vpop.f32.mrb[0].mxu0
    %v2754 = vpop.f32.mrb[0].mxu0
    %v2755 = vadd.f32 %v2631, %v2754
    %v2756 = vpop.f32.mrb[0].mxu0
    %2757 = vmatprep.mubr.bf16.mxu0 0
    %2758 = vmatmul.mubr.bf16.gmra.mrb[0].mxu0 %v2664
    %v2759 = vpop.f32.mrb[0].mxu0
    %v2760 = vadd.f32 %v2636, %v2759
    %v2761 = vpop.f32.mrb[0].mxu0
    %v2762 = vpop.f32.mrb[0].mxu0
    %v2763 = vadd.f32 %v2639, %v2762
    %v2764 = vpop.f32.mrb[0].mxu0
    %2765 = vdwg.mxu0
    %s2766 = scalar_lea.vmem %s7, 4
    %v2767 = vld [vmem:[%s2766] sm:$0x3]
    %v2768 = vpack.c.bf16 %v181, %v179
    %v2769 = vpack.c.bf16 %v185, %v183
    %v2770 = vpack.c.bf16 %v189, %v187
    %v2771 = vpack.c.bf16 %v193, %v191
    %v2772 = vpack.c.bf16 %v195, %v179
    %v2773 = vpack.c.bf16 %v199, %v197
    %v2774 = vpack.c.bf16 %v203, %v201
    %v2775 = vpack.c.bf16 %v207, %v205
    %v2777 = vsel %vm512, %v2768, 0
    %v2780 = vsel %vm512, %v2769, 0
    %v2783 = vsel %vm512, %v2770, 0
    %v2786 = vsel %vm512, %v2771, 0
    %v2789 = vsel %vm512, %v2772, 0
    %v2792 = vsel %vm512, %v2773, 0
    %v2795 = vsel %vm512, %v2774, 0
    %v2798 = vsel %vm512, %v2775, 0
    %v2801 = vsel %vm705, %v2767, 0
    %2803 = vmatprep.subr.bf16.mxu0 0
    %2804 = vmatpush1.bf16.msra.mxu0 %v2801
    %2805 = vmatprep.subr.bf16.mxu0 0
    %2806 = vmatpush1.bf16.msra.mxu0 0
    %2807 = vmatprep.subr.bf16.mxu0 0
    %2808 = vmatpush1.bf16.msra.mxu0 0
    %2809 = vmatprep.subr.bf16.mxu0 0
    %2810 = vmatpush1.bf16.msra.mxu0 0
    %2811 = vmatprep.subr.bf16.mxu0 0
    %2812 = vmatpush1.bf16.msra.mxu0 0
    %2813 = vmatprep.subr.bf16.mxu0 0
    %2814 = vmatpush1.bf16.msra.mxu0 0
    %2815 = vmatprep.subr.bf16.mxu0 0
    %2816 = vmatpush1.bf16.msra.mxu0 0
    %2817 = vmatprep.subr.bf16.mxu0 0
    %2818 = vmatpush1.bf16.msra.mxu0 0
    %2819 = vmatprep.subr.bf16.mxu0 0
    %2820 = vmatpush1.bf16.msra.mxu0 0
    %2821 = vmatprep.subr.bf16.mxu0 0
    %2822 = vmatpush1.bf16.msra.mxu0 0
    %2823 = vmatprep.subr.bf16.mxu0 0
    %2824 = vmatpush1.bf16.msra.mxu0 0
    %2825 = vmatprep.subr.bf16.mxu0 0
    %2826 = vmatpush1.bf16.msra.mxu0 0
    %2827 = vmatprep.subr.bf16.mxu0 0
    %2828 = vmatpush1.bf16.msra.mxu0 0
    %2829 = vmatprep.subr.bf16.mxu0 0
    %2830 = vmatpush1.bf16.msra.mxu0 0
    %2831 = vmatprep.subr.bf16.mxu0 0
    %2832 = vmatpush1.bf16.msra.mxu0 0
    %2833 = vmatprep.subr.bf16.mxu0 0
    %2834 = vmatpush1.bf16.msra.mxu0 0
    %2835 = vmatprep.mubr.bf16.mxu0 0
    %2836 = vmatmul.mubr.bf16.gmra.mrb[0].mxu0 %v2777
    %v2837 = vpop.f32.mrb[0].mxu0
    %v2838 = vadd.f32 0.0, %v2837
    %v2839 = vpop.f32.mrb[0].mxu0
    %v2840 = vpop.f32.mrb[0].mxu0
    %v2841 = vadd.f32 0.0, %v2840
    %v2842 = vpop.f32.mrb[0].mxu0
    %2843 = vmatprep.mubr.bf16.mxu0 0
    %2844 = vmatmul.mubr.bf16.gmra.mrb[0].mxu0 %v2780
    %v2845 = vpop.f32.mrb[0].mxu0
    %v2846 = vadd.f32 0.0, %v2845
    %v2847 = vpop.f32.mrb[0].mxu0
    %v2848 = vpop.f32.mrb[0].mxu0
    %v2849 = vadd.f32 0.0, %v2848
    %v2850 = vpop.f32.mrb[0].mxu0
    %2851 = vmatprep.mubr.bf16.mxu0 0
    %2852 = vmatmul.mubr.bf16.gmra.mrb[0].mxu0 %v2783
    %v2853 = vpop.f32.mrb[0].mxu0
    %v2854 = vadd.f32 0.0, %v2853
    %v2855 = vpop.f32.mrb[0].mxu0
    %v2856 = vpop.f32.mrb[0].mxu0
    %v2857 = vadd.f32 0.0, %v2856
    %v2858 = vpop.f32.mrb[0].mxu0
    %2859 = vmatprep.mubr.bf16.mxu0 0
    %2860 = vmatmul.mubr.bf16.gmra.mrb[0].mxu0 %v2786
    %v2861 = vpop.f32.mrb[0].mxu0
    %v2862 = vadd.f32 0.0, %v2861
    %v2863 = vpop.f32.mrb[0].mxu0
    %v2864 = vpop.f32.mrb[0].mxu0
    %v2865 = vadd.f32 0.0, %v2864
    %v2866 = vpop.f32.mrb[0].mxu0
    %2867 = vmatprep.mubr.bf16.mxu0 0
    %2868 = vmatmul.mubr.bf16.gmra.mrb[0].mxu0 %v2789
    %v2869 = vpop.f32.mrb[0].mxu0
    %v2870 = vadd.f32 0.0, %v2869
    %v2871 = vpop.f32.mrb[0].mxu0
    %v2872 = vpop.f32.mrb[0].mxu0
    %v2873 = vadd.f32 0.0, %v2872
    %v2874 = vpop.f32.mrb[0].mxu0
    %2875 = vmatprep.mubr.bf16.mxu0 0
    %2876 = vmatmul.mubr.bf16.gmra.mrb[0].mxu0 %v2792
    %v2877 = vpop.f32.mrb[0].mxu0
    %v2878 = vadd.f32 0.0, %v2877
    %v2879 = vpop.f32.mrb[0].mxu0
    %v2880 = vpop.f32.mrb[0].mxu0
    %v2881 = vadd.f32 0.0, %v2880
    %v2882 = vpop.f32.mrb[0].mxu0
    %2883 = vmatprep.mubr.bf16.mxu0 0
    %2884 = vmatmul.mubr.bf16.gmra.mrb[0].mxu0 %v2795
    %v2885 = vpop.f32.mrb[0].mxu0
    %v2886 = vadd.f32 0.0, %v2885
    %v2887 = vpop.f32.mrb[0].mxu0
    %v2888 = vpop.f32.mrb[0].mxu0
    %v2889 = vadd.f32 0.0, %v2888
    %v2890 = vpop.f32.mrb[0].mxu0
    %2891 = vmatprep.mubr.bf16.mxu0 0
    %2892 = vmatmul.mubr.bf16.gmra.mrb[0].mxu0 %v2798
    %v2893 = vpop.f32.mrb[0].mxu0
    %v2894 = vadd.f32 0.0, %v2893
    %v2895 = vpop.f32.mrb[0].mxu0
    %v2896 = vpop.f32.mrb[0].mxu0
    %v2897 = vadd.f32 0.0, %v2896
    %v2898 = vpop.f32.mrb[0].mxu0
    %2899 = vdwg.mxu0
    %v2900 = vadd.f32 %v2704, %v2838
    %v2901 = vadd.f32 %v2707, %v2841
    %v2902 = vadd.f32 %v2712, %v2846
    %v2903 = vadd.f32 %v2715, %v2849
    %v2904 = vadd.f32 %v2720, %v2854
    %v2905 = vadd.f32 %v2723, %v2857
    %v2906 = vadd.f32 %v2728, %v2862
    %v2907 = vadd.f32 %v2731, %v2865
    %v2908 = vadd.f32 %v2736, %v2870
    %v2909 = vadd.f32 %v2739, %v2873
    %v2910 = vadd.f32 %v2744, %v2878
    %v2911 = vadd.f32 %v2747, %v2881
    %v2912 = vadd.f32 %v2752, %v2886
    %v2913 = vadd.f32 %v2755, %v2889
    %v2914 = vadd.f32 %v2760, %v2894
    %v2915 = vadd.f32 %v2763, %v2897
    %s2916 = scalar_lea.vmem %s7, 6
    %v2917 = vld [vmem:[%s2916] sm:$0x3]
    %v2918 = vpack.c.bf16 %v77, %v75
    %v2919 = vpack.c.bf16 %v81, %v79
    %v2920 = vpack.c.bf16 %v85, %v83
    %v2921 = vpack.c.bf16 %v264, %v87
    %v2922 = vpack.c.bf16 %v91, %v89
    %v2923 = vpack.c.bf16 %v95, %v93
    %v2924 = vpack.c.bf16 %v99, %v97
    %v2925 = vpack.c.bf16 %v266, %v101
    %v2927 = vsel %vm512, %v2918, 0
    %v2930 = vsel %vm512, %v2919, 0
    %v2933 = vsel %vm512, %v2920, 0
    %v2936 = vsel %vm512, %v2921, 0
    %v2939 = vsel %vm512, %v2922, 0
    %v2942 = vsel %vm512, %v2923, 0
    %v2945 = vsel %vm512, %v2924, 0
    %v2948 = vsel %vm512, %v2925, 0
    %v2951 = vsel %vm705, %v2917, 0
    %2953 = vmatprep.subr.bf16.mxu0 0
    %2954 = vmatpush1.bf16.msra.mxu0 %v2951
    %2955 = vmatprep.subr.bf16.mxu0 0
    %2956 = vmatpush1.bf16.msra.mxu0 0
    %2957 = vmatprep.subr.bf16.mxu0 0
    %2958 = vmatpush1.bf16.msra.mxu0 0
    %2959 = vmatprep.subr.bf16.mxu0 0
    %2960 = vmatpush1.bf16.msra.mxu0 0
    %2961 = vmatprep.subr.bf16.mxu0 0
    %2962 = vmatpush1.bf16.msra.mxu0 0
    %2963 = vmatprep.subr.bf16.mxu0 0
    %2964 = vmatpush1.bf16.msra.mxu0 0
    %2965 = vmatprep.subr.bf16.mxu0 0
    %2966 = vmatpush1.bf16.msra.mxu0 0
    %2967 = vmatprep.subr.bf16.mxu0 0
    %2968 = vmatpush1.bf16.msra.mxu0 0
    %2969 = vmatprep.subr.bf16.mxu0 0
    %2970 = vmatpush1.bf16.msra.mxu0 0
    %2971 = vmatprep.subr.bf16.mxu0 0
    %2972 = vmatpush1.bf16.msra.mxu0 0
    %2973 = vmatprep.subr.bf16.mxu0 0
    %2974 = vmatpush1.bf16.msra.mxu0 0
    %2975 = vmatprep.subr.bf16.mxu0 0
    %2976 = vmatpush1.bf16.msra.mxu0 0
    %2977 = vmatprep.subr.bf16.mxu0 0
    %2978 = vmatpush1.bf16.msra.mxu0 0
    %2979 = vmatprep.subr.bf16.mxu0 0
    %2980 = vmatpush1.bf16.msra.mxu0 0
    %2981 = vmatprep.subr.bf16.mxu0 0
    %2982 = vmatpush1.bf16.msra.mxu0 0
    %2983 = vmatprep.subr.bf16.mxu0 0
    %2984 = vmatpush1.bf16.msra.mxu0 0
    %2985 = vmatprep.mubr.bf16.mxu0 0
    %2986 = vmatmul.mubr.bf16.gmra.mrb[0].mxu0 %v2927
    %v2987 = vpop.f32.mrb[0].mxu0
    %v2988 = vadd.f32 0.0, %v2987
    %v2989 = vpop.f32.mrb[0].mxu0
    %v2990 = vpop.f32.mrb[0].mxu0
    %v2991 = vadd.f32 0.0, %v2990
    %v2992 = vpop.f32.mrb[0].mxu0
    %2993 = vmatprep.mubr.bf16.mxu0 0
    %2994 = vmatmul.mubr.bf16.gmra.mrb[0].mxu0 %v2930
    %v2995 = vpop.f32.mrb[0].mxu0
    %v2996 = vadd.f32 0.0, %v2995
    %v2997 = vpop.f32.mrb[0].mxu0
    %v2998 = vpop.f32.mrb[0].mxu0
    %v2999 = vadd.f32 0.0, %v2998
    %v3000 = vpop.f32.mrb[0].mxu0
    %3001 = vmatprep.mubr.bf16.mxu0 0
    %3002 = vmatmul.mubr.bf16.gmra.mrb[0].mxu0 %v2933
    %v3003 = vpop.f32.mrb[0].mxu0
    %v3004 = vadd.f32 0.0, %v3003
    %v3005 = vpop.f32.mrb[0].mxu0
    %v3006 = vpop.f32.mrb[0].mxu0
    %v3007 = vadd.f32 0.0, %v3006
    %v3008 = vpop.f32.mrb[0].mxu0
    %3009 = vmatprep.mubr.bf16.mxu0 0
    %3010 = vmatmul.mubr.bf16.gmra.mrb[0].mxu0 %v2936
    %v3011 = vpop.f32.mrb[0].mxu0
    %v3012 = vadd.f32 0.0, %v3011
    %v3013 = vpop.f32.mrb[0].mxu0
    %v3014 = vpop.f32.mrb[0].mxu0
    %v3015 = vadd.f32 0.0, %v3014
    %v3016 = vpop.f32.mrb[0].mxu0
    %3017 = vmatprep.mubr.bf16.mxu0 0
    %3018 = vmatmul.mubr.bf16.gmra.mrb[0].mxu0 %v2939
    %v3019 = vpop.f32.mrb[0].mxu0
    %v3020 = vadd.f32 0.0, %v3019
    %v3021 = vpop.f32.mrb[0].mxu0
    %v3022 = vpop.f32.mrb[0].mxu0
    %v3023 = vadd.f32 0.0, %v3022
    %v3024 = vpop.f32.mrb[0].mxu0
    %3025 = vmatprep.mubr.bf16.mxu0 0
    %3026 = vmatmul.mubr.bf16.gmra.mrb[0].mxu0 %v2942
    %v3027 = vpop.f32.mrb[0].mxu0
    %v3028 = vadd.f32 0.0, %v3027
    %v3029 = vpop.f32.mrb[0].mxu0
    %v3030 = vpop.f32.mrb[0].mxu0
    %v3031 = vadd.f32 0.0, %v3030
    %v3032 = vpop.f32.mrb[0].mxu0
    %3033 = vmatprep.mubr.bf16.mxu0 0
    %3034 = vmatmul.mubr.bf16.gmra.mrb[0].mxu0 %v2945
    %v3035 = vpop.f32.mrb[0].mxu0
    %v3036 = vadd.f32 0.0, %v3035
    %v3037 = vpop.f32.mrb[0].mxu0
    %v3038 = vpop.f32.mrb[0].mxu0
    %v3039 = vadd.f32 0.0, %v3038
    %v3040 = vpop.f32.mrb[0].mxu0
    %3041 = vmatprep.mubr.bf16.mxu0 0
    %3042 = vmatmul.mubr.bf16.gmra.mrb[0].mxu0 %v2948
    %v3043 = vpop.f32.mrb[0].mxu0
    %v3044 = vadd.f32 0.0, %v3043
    %v3045 = vpop.f32.mrb[0].mxu0
    %v3046 = vpop.f32.mrb[0].mxu0
    %v3047 = vadd.f32 0.0, %v3046
    %v3048 = vpop.f32.mrb[0].mxu0
    %3049 = vdwg.mxu0
    %v3050 = vadd.f32 %v2900, %v2988
    %v3051 = vadd.f32 %v2901, %v2991
    %v3052 = vadd.f32 %v2902, %v2996
    %v3053 = vadd.f32 %v2903, %v2999
    %v3054 = vadd.f32 %v2904, %v3004
    %v3055 = vadd.f32 %v2905, %v3007
    %v3056 = vadd.f32 %v2906, %v3012
    %v3057 = vadd.f32 %v2907, %v3015
    %v3058 = vadd.f32 %v2908, %v3020
    %v3059 = vadd.f32 %v2909, %v3023
    %v3060 = vadd.f32 %v2910, %v3028
    %v3061 = vadd.f32 %v2911, %v3031
    %v3062 = vadd.f32 %v2912, %v3036
    %v3063 = vadd.f32 %v2913, %v3039
    %v3064 = vadd.f32 %v2914, %v3044
    %v3065 = vadd.f32 %v2915, %v3047
    %s3066 = scalar_lea.vmem %s7, 8
    %v3067 = vld [vmem:[%s3066] sm:$0x3]
    %v3068 = vpack.c.bf16 %v41, %v40
    %v3069 = vpack.c.bf16 %v43, %v42
    %v3070 = vpack.c.bf16 %v45, %v44
    %v3071 = vpack.c.bf16 %v47, %v46
    %v3072 = vpack.c.bf16 %v49, %v48
    %v3073 = vpack.c.bf16 %v51, %v50
    %v3074 = vpack.c.bf16 %v53, %v52
    %v3075 = vpack.c.bf16 %v55, %v54
    %v3077 = vsel %vm512, %v3068, 0
    %v3080 = vsel %vm512, %v3069, 0
    %v3083 = vsel %vm512, %v3070, 0
    %v3086 = vsel %vm512, %v3071, 0
    %v3089 = vsel %vm512, %v3072, 0
    %v3092 = vsel %vm512, %v3073, 0
    %v3095 = vsel %vm512, %v3074, 0
    %v3098 = vsel %vm512, %v3075, 0
    %v3101 = vsel %vm705, %v3067, 0
    %3103 = vmatprep.subr.bf16.mxu0 0
    %3104 = vmatpush1.bf16.msra.mxu0 %v3101
    %3105 = vmatprep.subr.bf16.mxu0 0
    %3106 = vmatpush1.bf16.msra.mxu0 0
    %3107 = vmatprep.subr.bf16.mxu0 0
    %3108 = vmatpush1.bf16.msra.mxu0 0
    %3109 = vmatprep.subr.bf16.mxu0 0
    %3110 = vmatpush1.bf16.msra.mxu0 0
    %3111 = vmatprep.subr.bf16.mxu0 0
    %3112 = vmatpush1.bf16.msra.mxu0 0
    %3113 = vmatprep.subr.bf16.mxu0 0
    %3114 = vmatpush1.bf16.msra.mxu0 0
    %3115 = vmatprep.subr.bf16.mxu0 0
    %3116 = vmatpush1.bf16.msra.mxu0 0
    %3117 = vmatprep.subr.bf16.mxu0 0
    %3118 = vmatpush1.bf16.msra.mxu0 0
    %3119 = vmatprep.subr.bf16.mxu0 0
    %3120 = vmatpush1.bf16.msra.mxu0 0
    %3121 = vmatprep.subr.bf16.mxu0 0
    %3122 = vmatpush1.bf16.msra.mxu0 0
    %3123 = vmatprep.subr.bf16.mxu0 0
    %3124 = vmatpush1.bf16.msra.mxu0 0
    %3125 = vmatprep.subr.bf16.mxu0 0
    %3126 = vmatpush1.bf16.msra.mxu0 0
    %3127 = vmatprep.subr.bf16.mxu0 0
    %3128 = vmatpush1.bf16.msra.mxu0 0
    %3129 = vmatprep.subr.bf16.mxu0 0
    %3130 = vmatpush1.bf16.msra.mxu0 0
    %3131 = vmatprep.subr.bf16.mxu0 0
    %3132 = vmatpush1.bf16.msra.mxu0 0
    %3133 = vmatprep.subr.bf16.mxu0 0
    %3134 = vmatpush1.bf16.msra.mxu0 0
    %3135 = vmatprep.mubr.bf16.mxu0 0
    %3136 = vmatmul.mubr.bf16.gmra.mrb[0].mxu0 %v3077
    %v3137 = vpop.f32.mrb[0].mxu0
    %v3138 = vadd.f32 0.0, %v3137
    %v3139 = vpop.f32.mrb[0].mxu0
    %v3140 = vpop.f32.mrb[0].mxu0
    %v3141 = vadd.f32 0.0, %v3140
    %v3142 = vpop.f32.mrb[0].mxu0
    %3143 = vmatprep.mubr.bf16.mxu0 0
    %3144 = vmatmul.mubr.bf16.gmra.mrb[0].mxu0 %v3080
    %v3145 = vpop.f32.mrb[0].mxu0
    %v3146 = vadd.f32 0.0, %v3145
    %v3147 = vpop.f32.mrb[0].mxu0
    %v3148 = vpop.f32.mrb[0].mxu0
    %v3149 = vadd.f32 0.0, %v3148
    %v3150 = vpop.f32.mrb[0].mxu0
    %3151 = vmatprep.mubr.bf16.mxu0 0
    %3152 = vmatmul.mubr.bf16.gmra.mrb[0].mxu0 %v3083
    %v3153 = vpop.f32.mrb[0].mxu0
    %v3154 = vadd.f32 0.0, %v3153
    %v3155 = vpop.f32.mrb[0].mxu0
    %v3156 = vpop.f32.mrb[0].mxu0
    %v3157 = vadd.f32 0.0, %v3156
    %v3158 = vpop.f32.mrb[0].mxu0
    %3159 = vmatprep.mubr.bf16.mxu0 0
    %3160 = vmatmul.mubr.bf16.gmra.mrb[0].mxu0 %v3086
    %v3161 = vpop.f32.mrb[0].mxu0
    %v3162 = vadd.f32 0.0, %v3161
    %v3163 = vpop.f32.mrb[0].mxu0
    %v3164 = vpop.f32.mrb[0].mxu0
    %v3165 = vadd.f32 0.0, %v3164
    %v3166 = vpop.f32.mrb[0].mxu0
    %3167 = vmatprep.mubr.bf16.mxu0 0
    %3168 = vmatmul.mubr.bf16.gmra.mrb[0].mxu0 %v3089
    %v3169 = vpop.f32.mrb[0].mxu0
    %v3170 = vadd.f32 0.0, %v3169
    %v3171 = vpop.f32.mrb[0].mxu0
    %v3172 = vpop.f32.mrb[0].mxu0
    %v3173 = vadd.f32 0.0, %v3172
    %v3174 = vpop.f32.mrb[0].mxu0
    %3175 = vmatprep.mubr.bf16.mxu0 0
    %3176 = vmatmul.mubr.bf16.gmra.mrb[0].mxu0 %v3092
    %v3177 = vpop.f32.mrb[0].mxu0
    %v3178 = vadd.f32 0.0, %v3177
    %v3179 = vpop.f32.mrb[0].mxu0
    %v3180 = vpop.f32.mrb[0].mxu0
    %v3181 = vadd.f32 0.0, %v3180
    %v3182 = vpop.f32.mrb[0].mxu0
    %3183 = vmatprep.mubr.bf16.mxu0 0
    %3184 = vmatmul.mubr.bf16.gmra.mrb[0].mxu0 %v3095
    %v3185 = vpop.f32.mrb[0].mxu0
    %v3186 = vadd.f32 0.0, %v3185
    %v3187 = vpop.f32.mrb[0].mxu0
    %v3188 = vpop.f32.mrb[0].mxu0
    %v3189 = vadd.f32 0.0, %v3188
    %v3190 = vpop.f32.mrb[0].mxu0
    %3191 = vmatprep.mubr.bf16.mxu0 0
    %3192 = vmatmul.mubr.bf16.gmra.mrb[0].mxu0 %v3098
    %v3193 = vpop.f32.mrb[0].mxu0
    %v3194 = vadd.f32 0.0, %v3193
    %v3195 = vpop.f32.mrb[0].mxu0
    %v3196 = vpop.f32.mrb[0].mxu0
    %v3197 = vadd.f32 0.0, %v3196
    %v3198 = vpop.f32.mrb[0].mxu0
    %3199 = vdwg.mxu0
    %v3200 = vadd.f32 %v3050, %v3138
    %v3201 = vadd.f32 %v3051, %v3141
    %v3202 = vadd.f32 %v3052, %v3146
    %v3203 = vadd.f32 %v3053, %v3149
    %v3204 = vadd.f32 %v3054, %v3154
    %v3205 = vadd.f32 %v3055, %v3157
    %v3206 = vadd.f32 %v3056, %v3162
    %v3207 = vadd.f32 %v3057, %v3165
    %v3208 = vadd.f32 %v3058, %v3170
    %v3209 = vadd.f32 %v3059, %v3173
    %v3210 = vadd.f32 %v3060, %v3178
    %v3211 = vadd.f32 %v3061, %v3181
    %v3212 = vadd.f32 %v3062, %v3186
    %v3213 = vadd.f32 %v3063, %v3189
    %v3214 = vadd.f32 %v3064, %v3194
    %v3215 = vadd.f32 %v3065, %v3197
    %s3216 = scalar_lea.vmem %s7, 10
    %v3217 = vld [vmem:[%s3216] sm:$0x3]
    %v3218 = vpack.c.bf16 %v183, %v181
    %v3219 = vpack.c.bf16 %v187, %v185
    %v3220 = vpack.c.bf16 %v191, %v189
    %v3221 = vpack.c.bf16 %v350, %v193
    %v3222 = vpack.c.bf16 %v197, %v195
    %v3223 = vpack.c.bf16 %v201, %v199
    %v3224 = vpack.c.bf16 %v205, %v203
    %v3225 = vpack.c.bf16 %v352, %v207
    %v3227 = vsel %vm512, %v3218, 0
    %v3230 = vsel %vm512, %v3219, 0
    %v3233 = vsel %vm512, %v3220, 0
    %v3236 = vsel %vm512, %v3221, 0
    %v3239 = vsel %vm512, %v3222, 0
    %v3242 = vsel %vm512, %v3223, 0
    %v3245 = vsel %vm512, %v3224, 0
    %v3248 = vsel %vm512, %v3225, 0
    %v3251 = vsel %vm705, %v3217, 0
    %3253 = vmatprep.subr.bf16.mxu0 0
    %3254 = vmatpush1.bf16.msra.mxu0 %v3251
    %3255 = vmatprep.subr.bf16.mxu0 0
    %3256 = vmatpush1.bf16.msra.mxu0 0
    %3257 = vmatprep.subr.bf16.mxu0 0
    %3258 = vmatpush1.bf16.msra.mxu0 0
    %3259 = vmatprep.subr.bf16.mxu0 0
    %3260 = vmatpush1.bf16.msra.mxu0 0
    %3261 = vmatprep.subr.bf16.mxu0 0
    %3262 = vmatpush1.bf16.msra.mxu0 0
    %3263 = vmatprep.subr.bf16.mxu0 0
    %3264 = vmatpush1.bf16.msra.mxu0 0
    %3265 = vmatprep.subr.bf16.mxu0 0
    %3266 = vmatpush1.bf16.msra.mxu0 0
    %3267 = vmatprep.subr.bf16.mxu0 0
    %3268 = vmatpush1.bf16.msra.mxu0 0
    %3269 = vmatprep.subr.bf16.mxu0 0
    %3270 = vmatpush1.bf16.msra.mxu0 0
    %3271 = vmatprep.subr.bf16.mxu0 0
    %3272 = vmatpush1.bf16.msra.mxu0 0
    %3273 = vmatprep.subr.bf16.mxu0 0
    %3274 = vmatpush1.bf16.msra.mxu0 0
    %3275 = vmatprep.subr.bf16.mxu0 0
    %3276 = vmatpush1.bf16.msra.mxu0 0
    %3277 = vmatprep.subr.bf16.mxu0 0
    %3278 = vmatpush1.bf16.msra.mxu0 0
    %3279 = vmatprep.subr.bf16.mxu0 0
    %3280 = vmatpush1.bf16.msra.mxu0 0
    %3281 = vmatprep.subr.bf16.mxu0 0
    %3282 = vmatpush1.bf16.msra.mxu0 0
    %3283 = vmatprep.subr.bf16.mxu0 0
    %3284 = vmatpush1.bf16.msra.mxu0 0
    %3285 = vmatprep.mubr.bf16.mxu0 0
    %3286 = vmatmul.mubr.bf16.gmra.mrb[0].mxu0 %v3227
    %v3287 = vpop.f32.mrb[0].mxu0
    %v3288 = vadd.f32 0.0, %v3287
    %v3289 = vpop.f32.mrb[0].mxu0
    %v3290 = vpop.f32.mrb[0].mxu0
    %v3291 = vadd.f32 0.0, %v3290
    %v3292 = vpop.f32.mrb[0].mxu0
    %3293 = vmatprep.mubr.bf16.mxu0 0
    %3294 = vmatmul.mubr.bf16.gmra.mrb[0].mxu0 %v3230
    %v3295 = vpop.f32.mrb[0].mxu0
    %v3296 = vadd.f32 0.0, %v3295
    %v3297 = vpop.f32.mrb[0].mxu0
    %v3298 = vpop.f32.mrb[0].mxu0
    %v3299 = vadd.f32 0.0, %v3298
    %v3300 = vpop.f32.mrb[0].mxu0
    %3301 = vmatprep.mubr.bf16.mxu0 0
    %3302 = vmatmul.mubr.bf16.gmra.mrb[0].mxu0 %v3233
    %v3303 = vpop.f32.mrb[0].mxu0
    %v3304 = vadd.f32 0.0, %v3303
    %v3305 = vpop.f32.mrb[0].mxu0
    %v3306 = vpop.f32.mrb[0].mxu0
    %v3307 = vadd.f32 0.0, %v3306
    %v3308 = vpop.f32.mrb[0].mxu0
    %3309 = vmatprep.mubr.bf16.mxu0 0
    %3310 = vmatmul.mubr.bf16.gmra.mrb[0].mxu0 %v3236
    %v3311 = vpop.f32.mrb[0].mxu0
    %v3312 = vadd.f32 0.0, %v3311
    %v3313 = vpop.f32.mrb[0].mxu0
    %v3314 = vpop.f32.mrb[0].mxu0
    %v3315 = vadd.f32 0.0, %v3314
    %v3316 = vpop.f32.mrb[0].mxu0
    %3317 = vmatprep.mubr.bf16.mxu0 0
    %3318 = vmatmul.mubr.bf16.gmra.mrb[0].mxu0 %v3239
    %v3319 = vpop.f32.mrb[0].mxu0
    %v3320 = vadd.f32 0.0, %v3319
    %v3321 = vpop.f32.mrb[0].mxu0
    %v3322 = vpop.f32.mrb[0].mxu0
    %v3323 = vadd.f32 0.0, %v3322
    %v3324 = vpop.f32.mrb[0].mxu0
    %3325 = vmatprep.mubr.bf16.mxu0 0
    %3326 = vmatmul.mubr.bf16.gmra.mrb[0].mxu0 %v3242
    %v3327 = vpop.f32.mrb[0].mxu0
    %v3328 = vadd.f32 0.0, %v3327
    %v3329 = vpop.f32.mrb[0].mxu0
    %v3330 = vpop.f32.mrb[0].mxu0
    %v3331 = vadd.f32 0.0, %v3330
    %v3332 = vpop.f32.mrb[0].mxu0
    %3333 = vmatprep.mubr.bf16.mxu0 0
    %3334 = vmatmul.mubr.bf16.gmra.mrb[0].mxu0 %v3245
    %v3335 = vpop.f32.mrb[0].mxu0
    %v3336 = vadd.f32 0.0, %v3335
    %v3337 = vpop.f32.mrb[0].mxu0
    %v3338 = vpop.f32.mrb[0].mxu0
    %v3339 = vadd.f32 0.0, %v3338
    %v3340 = vpop.f32.mrb[0].mxu0
    %3341 = vmatprep.mubr.bf16.mxu0 0
    %3342 = vmatmul.mubr.bf16.gmra.mrb[0].mxu0 %v3248
    %v3343 = vpop.f32.mrb[0].mxu0
    %v3344 = vadd.f32 0.0, %v3343
    %v3345 = vpop.f32.mrb[0].mxu0
    %v3346 = vpop.f32.mrb[0].mxu0
    %v3347 = vadd.f32 0.0, %v3346
    %v3348 = vpop.f32.mrb[0].mxu0
    %3349 = vdwg.mxu0
    %v3350 = vadd.f32 %v3200, %v3288
    %v3351 = vadd.f32 %v3201, %v3291
    %v3352 = vadd.f32 %v3202, %v3296
    %v3353 = vadd.f32 %v3203, %v3299
    %v3354 = vadd.f32 %v3204, %v3304
    %v3355 = vadd.f32 %v3205, %v3307
    %v3356 = vadd.f32 %v3206, %v3312
    %v3357 = vadd.f32 %v3207, %v3315
    %v3358 = vadd.f32 %v3208, %v3320
    %v3359 = vadd.f32 %v3209, %v3323
    %v3360 = vadd.f32 %v3210, %v3328
    %v3361 = vadd.f32 %v3211, %v3331
    %v3362 = vadd.f32 %v3212, %v3336
    %v3363 = vadd.f32 %v3213, %v3339
    %v3364 = vadd.f32 %v3214, %v3344
    %v3365 = vadd.f32 %v3215, %v3347
    %s3366 = scalar_lea.vmem %s7, 12
    %v3367 = vld [vmem:[%s3366] sm:$0x3]
    %v3368 = vpack.c.bf16 %v73, %v264
    %v3369 = vpack.c.bf16 %v73, %v266
    %v3371 = vsel %vm512, %v3368, 0
    %v3374 = vsel %vm512, %v3369, 0
    %v3377 = vsel %vm705, %v3367, 0
    %3379 = vmatprep.subr.bf16.mxu0 0
    %3380 = vmatpush1.bf16.msra.mxu0 %v3377
    %3381 = vmatprep.subr.bf16.mxu0 0
    %3382 = vmatpush1.bf16.msra.mxu0 0
    %3383 = vmatprep.subr.bf16.mxu0 0
    %3384 = vmatpush1.bf16.msra.mxu0 0
    %3385 = vmatprep.subr.bf16.mxu0 0
    %3386 = vmatpush1.bf16.msra.mxu0 0
    %3387 = vmatprep.subr.bf16.mxu0 0
    %3388 = vmatpush1.bf16.msra.mxu0 0
    %3389 = vmatprep.subr.bf16.mxu0 0
    %3390 = vmatpush1.bf16.msra.mxu0 0
    %3391 = vmatprep.subr.bf16.mxu0 0
    %3392 = vmatpush1.bf16.msra.mxu0 0
    %3393 = vmatprep.subr.bf16.mxu0 0
    %3394 = vmatpush1.bf16.msra.mxu0 0
    %3395 = vmatprep.subr.bf16.mxu0 0
    %3396 = vmatpush1.bf16.msra.mxu0 0
    %3397 = vmatprep.subr.bf16.mxu0 0
    %3398 = vmatpush1.bf16.msra.mxu0 0
    %3399 = vmatprep.subr.bf16.mxu0 0
    %3400 = vmatpush1.bf16.msra.mxu0 0
    %3401 = vmatprep.subr.bf16.mxu0 0
    %3402 = vmatpush1.bf16.msra.mxu0 0
    %3403 = vmatprep.subr.bf16.mxu0 0
    %3404 = vmatpush1.bf16.msra.mxu0 0
    %3405 = vmatprep.subr.bf16.mxu0 0
    %3406 = vmatpush1.bf16.msra.mxu0 0
    %3407 = vmatprep.subr.bf16.mxu0 0
    %3408 = vmatpush1.bf16.msra.mxu0 0
    %3409 = vmatprep.subr.bf16.mxu0 0
    %3410 = vmatpush1.bf16.msra.mxu0 0
    %3411 = vmatprep.mubr.bf16.mxu0 0
    %3412 = vmatmul.mubr.bf16.gmra.mrb[0].mxu0 %v2646
    %v3413 = vpop.f32.mrb[0].mxu0
    %v3414 = vadd.f32 0.0, %v3413
    %v3415 = vpop.f32.mrb[0].mxu0
    %v3416 = vpop.f32.mrb[0].mxu0
    %v3417 = vadd.f32 0.0, %v3416
    %v3418 = vpop.f32.mrb[0].mxu0
    %3419 = vmatprep.mubr.bf16.mxu0 0
    %3420 = vmatmul.mubr.bf16.gmra.mrb[0].mxu0 %v2649
    %v3421 = vpop.f32.mrb[0].mxu0
    %v3422 = vadd.f32 0.0, %v3421
    %v3423 = vpop.f32.mrb[0].mxu0
    %v3424 = vpop.f32.mrb[0].mxu0
    %v3425 = vadd.f32 0.0, %v3424
    %v3426 = vpop.f32.mrb[0].mxu0
    %3427 = vmatprep.mubr.bf16.mxu0 0
    %3428 = vmatmul.mubr.bf16.gmra.mrb[0].mxu0 %v2652
    %v3429 = vpop.f32.mrb[0].mxu0
    %v3430 = vadd.f32 0.0, %v3429
    %v3431 = vpop.f32.mrb[0].mxu0
    %v3432 = vpop.f32.mrb[0].mxu0
    %v3433 = vadd.f32 0.0, %v3432
    %v3434 = vpop.f32.mrb[0].mxu0
    %3435 = vmatprep.mubr.bf16.mxu0 0
    %3436 = vmatmul.mubr.bf16.gmra.mrb[0].mxu0 %v3371
    %v3437 = vpop.f32.mrb[0].mxu0
    %v3438 = vadd.f32 0.0, %v3437
    %v3439 = vpop.f32.mrb[0].mxu0
    %v3440 = vpop.f32.mrb[0].mxu0
    %v3441 = vadd.f32 0.0, %v3440
    %v3442 = vpop.f32.mrb[0].mxu0
    %3443 = vmatprep.mubr.bf16.mxu0 0
    %3444 = vmatmul.mubr.bf16.gmra.mrb[0].mxu0 %v2658
    %v3445 = vpop.f32.mrb[0].mxu0
    %v3446 = vadd.f32 0.0, %v3445
    %v3447 = vpop.f32.mrb[0].mxu0
    %v3448 = vpop.f32.mrb[0].mxu0
    %v3449 = vadd.f32 0.0, %v3448
    %v3450 = vpop.f32.mrb[0].mxu0
    %3451 = vmatprep.mubr.bf16.mxu0 0
    %3452 = vmatmul.mubr.bf16.gmra.mrb[0].mxu0 %v2661
    %v3453 = vpop.f32.mrb[0].mxu0
    %v3454 = vadd.f32 0.0, %v3453
    %v3455 = vpop.f32.mrb[0].mxu0
    %v3456 = vpop.f32.mrb[0].mxu0
    %v3457 = vadd.f32 0.0, %v3456
    %v3458 = vpop.f32.mrb[0].mxu0
    %3459 = vmatprep.mubr.bf16.mxu0 0
    %3460 = vmatmul.mubr.bf16.gmra.mrb[0].mxu0 %v2664
    %v3461 = vpop.f32.mrb[0].mxu0
    %v3462 = vadd.f32 0.0, %v3461
    %v3463 = vpop.f32.mrb[0].mxu0
    %v3464 = vpop.f32.mrb[0].mxu0
    %v3465 = vadd.f32 0.0, %v3464
    %v3466 = vpop.f32.mrb[0].mxu0
    %3467 = vmatprep.mubr.bf16.mxu0 0
    %3468 = vmatmul.mubr.bf16.gmra.mrb[0].mxu0 %v3374
    %v3469 = vpop.f32.mrb[0].mxu0
    %v3470 = vadd.f32 0.0, %v3469
    %v3471 = vpop.f32.mrb[0].mxu0
    %v3472 = vpop.f32.mrb[0].mxu0
    %v3473 = vadd.f32 0.0, %v3472
    %v3474 = vpop.f32.mrb[0].mxu0
    %3475 = vdwg.mxu0
    %v3476 = vadd.f32 %v3350, %v3414
    %v3477 = vadd.f32 %v3351, %v3417
    %v3478 = vadd.f32 %v3352, %v3422
    %v3479 = vadd.f32 %v3353, %v3425
    %v3480 = vadd.f32 %v3354, %v3430
    %v3481 = vadd.f32 %v3355, %v3433
    %v3482 = vadd.f32 %v3356, %v3438
    %v3483 = vadd.f32 %v3357, %v3441
    %v3484 = vadd.f32 %v3358, %v3446
    %v3485 = vadd.f32 %v3359, %v3449
    %v3486 = vadd.f32 %v3360, %v3454
    %v3487 = vadd.f32 %v3361, %v3457
    %v3488 = vadd.f32 %v3362, %v3462
    %v3489 = vadd.f32 %v3363, %v3465
    %v3490 = vadd.f32 %v3364, %v3470
    %v3491 = vadd.f32 %v3365, %v3473
    %s3492 = scalar_lea.vmem %s7, 14
    %v3493 = vld [vmem:[%s3492] sm:$0x3]
    %v3494 = vpack.c.bf16 0.0, %v47
    %v3495 = vpack.c.bf16 0.0, %v55
    %v3497 = vsel %vm512, %v3494, 0
    %v3500 = vsel %vm512, %v3495, 0
    %v3503 = vsel %vm705, %v3493, 0
    %3505 = vmatprep.subr.bf16.mxu0 0
    %3506 = vmatpush1.bf16.msra.mxu0 %v3503
    %3507 = vmatprep.subr.bf16.mxu0 0
    %3508 = vmatpush1.bf16.msra.mxu0 0
    %3509 = vmatprep.subr.bf16.mxu0 0
    %3510 = vmatpush1.bf16.msra.mxu0 0
    %3511 = vmatprep.subr.bf16.mxu0 0
    %3512 = vmatpush1.bf16.msra.mxu0 0
    %3513 = vmatprep.subr.bf16.mxu0 0
    %3514 = vmatpush1.bf16.msra.mxu0 0
    %3515 = vmatprep.subr.bf16.mxu0 0
    %3516 = vmatpush1.bf16.msra.mxu0 0
    %3517 = vmatprep.subr.bf16.mxu0 0
    %3518 = vmatpush1.bf16.msra.mxu0 0
    %3519 = vmatprep.subr.bf16.mxu0 0
    %3520 = vmatpush1.bf16.msra.mxu0 0
    %3521 = vmatprep.subr.bf16.mxu0 0
    %3522 = vmatpush1.bf16.msra.mxu0 0
    %3523 = vmatprep.subr.bf16.mxu0 0
    %3524 = vmatpush1.bf16.msra.mxu0 0
    %3525 = vmatprep.subr.bf16.mxu0 0
    %3526 = vmatpush1.bf16.msra.mxu0 0
    %3527 = vmatprep.subr.bf16.mxu0 0
    %3528 = vmatpush1.bf16.msra.mxu0 0
    %3529 = vmatprep.subr.bf16.mxu0 0
    %3530 = vmatpush1.bf16.msra.mxu0 0
    %3531 = vmatprep.subr.bf16.mxu0 0
    %3532 = vmatpush1.bf16.msra.mxu0 0
    %3533 = vmatprep.subr.bf16.mxu0 0
    %3534 = vmatpush1.bf16.msra.mxu0 0
    %3535 = vmatprep.subr.bf16.mxu0 0
    %3536 = vmatpush1.bf16.msra.mxu0 0
    %3537 = vmatprep.mubr.bf16.mxu0 0
    %3538 = vmatmul.mubr.bf16.gmra.mrb[0].mxu0 %v2522
    %v3539 = vpop.f32.mrb[0].mxu0
    %v3540 = vadd.f32 0.0, %v3539
    %v3541 = vpop.f32.mrb[0].mxu0
    %v3542 = vpop.f32.mrb[0].mxu0
    %v3543 = vadd.f32 0.0, %v3542
    %v3544 = vpop.f32.mrb[0].mxu0
    %3545 = vmatprep.mubr.bf16.mxu0 0
    %3546 = vmatmul.mubr.bf16.gmra.mrb[0].mxu0 %v2525
    %v3547 = vpop.f32.mrb[0].mxu0
    %v3548 = vadd.f32 0.0, %v3547
    %v3549 = vpop.f32.mrb[0].mxu0
    %v3550 = vpop.f32.mrb[0].mxu0
    %v3551 = vadd.f32 0.0, %v3550
    %v3552 = vpop.f32.mrb[0].mxu0
    %3553 = vmatprep.mubr.bf16.mxu0 0
    %3554 = vmatmul.mubr.bf16.gmra.mrb[0].mxu0 %v2528
    %v3555 = vpop.f32.mrb[0].mxu0
    %v3556 = vadd.f32 0.0, %v3555
    %v3557 = vpop.f32.mrb[0].mxu0
    %v3558 = vpop.f32.mrb[0].mxu0
    %v3559 = vadd.f32 0.0, %v3558
    %v3560 = vpop.f32.mrb[0].mxu0
    %3561 = vmatprep.mubr.bf16.mxu0 0
    %3562 = vmatmul.mubr.bf16.gmra.mrb[0].mxu0 %v3497
    %v3563 = vpop.f32.mrb[0].mxu0
    %v3564 = vadd.f32 0.0, %v3563
    %v3565 = vpop.f32.mrb[0].mxu0
    %v3566 = vpop.f32.mrb[0].mxu0
    %v3567 = vadd.f32 0.0, %v3566
    %v3568 = vpop.f32.mrb[0].mxu0
    %3569 = vmatprep.mubr.bf16.mxu0 0
    %3570 = vmatmul.mubr.bf16.gmra.mrb[0].mxu0 %v2534
    %v3571 = vpop.f32.mrb[0].mxu0
    %v3572 = vadd.f32 0.0, %v3571
    %v3573 = vpop.f32.mrb[0].mxu0
    %v3574 = vpop.f32.mrb[0].mxu0
    %v3575 = vadd.f32 0.0, %v3574
    %v3576 = vpop.f32.mrb[0].mxu0
    %3577 = vmatprep.mubr.bf16.mxu0 0
    %3578 = vmatmul.mubr.bf16.gmra.mrb[0].mxu0 %v2537
    %v3579 = vpop.f32.mrb[0].mxu0
    %v3580 = vadd.f32 0.0, %v3579
    %v3581 = vpop.f32.mrb[0].mxu0
    %v3582 = vpop.f32.mrb[0].mxu0
    %v3583 = vadd.f32 0.0, %v3582
    %v3584 = vpop.f32.mrb[0].mxu0
    %3585 = vmatprep.mubr.bf16.mxu0 0
    %3586 = vmatmul.mubr.bf16.gmra.mrb[0].mxu0 %v2540
    %v3587 = vpop.f32.mrb[0].mxu0
    %v3588 = vadd.f32 0.0, %v3587
    %v3589 = vpop.f32.mrb[0].mxu0
    %v3590 = vpop.f32.mrb[0].mxu0
    %v3591 = vadd.f32 0.0, %v3590
    %v3592 = vpop.f32.mrb[0].mxu0
    %3593 = vmatprep.mubr.bf16.mxu0 0
    %3594 = vmatmul.mubr.bf16.gmra.mrb[0].mxu0 %v3500
    %v3595 = vpop.f32.mrb[0].mxu0
    %v3596 = vadd.f32 0.0, %v3595
    %v3597 = vpop.f32.mrb[0].mxu0
    %v3598 = vpop.f32.mrb[0].mxu0
    %v3599 = vadd.f32 0.0, %v3598
    %v3600 = vpop.f32.mrb[0].mxu0
    %3601 = vdwg.mxu0
    %v3602 = vadd.f32 %v3476, %v3540
    %v3603 = vadd.f32 %v3477, %v3543
    %v3604 = vadd.f32 %v3478, %v3548
    %v3605 = vadd.f32 %v3479, %v3551
    %v3606 = vadd.f32 %v3480, %v3556
    %v3607 = vadd.f32 %v3481, %v3559
    %v3608 = vadd.f32 %v3482, %v3564
    %v3609 = vadd.f32 %v3483, %v3567
    %v3610 = vadd.f32 %v3484, %v3572
    %v3611 = vadd.f32 %v3485, %v3575
    %v3612 = vadd.f32 %v3486, %v3580
    %v3613 = vadd.f32 %v3487, %v3583
    %v3614 = vadd.f32 %v3488, %v3588
    %v3615 = vadd.f32 %v3489, %v3591
    %v3616 = vadd.f32 %v3490, %v3596
    %v3617 = vadd.f32 %v3491, %v3599
    %s3618 = scalar_lea.vmem %s7, 16
    %v3619 = vld [vmem:[%s3618] sm:$0x3]
    %v3620 = vpack.c.bf16 %v179, %v350
    %v3621 = vpack.c.bf16 %v179, %v352
    %v3623 = vsel %vm512, %v3620, 0
    %v3626 = vsel %vm512, %v3621, 0
    %v3629 = vsel %vm705, %v3619, 0
    %3631 = vmatprep.subr.bf16.mxu0 0
    %3632 = vmatpush1.bf16.msra.mxu0 %v3629
    %3633 = vmatprep.subr.bf16.mxu0 0
    %3634 = vmatpush1.bf16.msra.mxu0 0
    %3635 = vmatprep.subr.bf16.mxu0 0
    %3636 = vmatpush1.bf16.msra.mxu0 0
    %3637 = vmatprep.subr.bf16.mxu0 0
    %3638 = vmatpush1.bf16.msra.mxu0 0
    %3639 = vmatprep.subr.bf16.mxu0 0
    %3640 = vmatpush1.bf16.msra.mxu0 0
    %3641 = vmatprep.subr.bf16.mxu0 0
    %3642 = vmatpush1.bf16.msra.mxu0 0
    %3643 = vmatprep.subr.bf16.mxu0 0
    %3644 = vmatpush1.bf16.msra.mxu0 0
    %3645 = vmatprep.subr.bf16.mxu0 0
    %3646 = vmatpush1.bf16.msra.mxu0 0
    %3647 = vmatprep.subr.bf16.mxu0 0
    %3648 = vmatpush1.bf16.msra.mxu0 0
    %3649 = vmatprep.subr.bf16.mxu0 0
    %3650 = vmatpush1.bf16.msra.mxu0 0
    %3651 = vmatprep.subr.bf16.mxu0 0
    %3652 = vmatpush1.bf16.msra.mxu0 0
    %3653 = vmatprep.subr.bf16.mxu0 0
    %3654 = vmatpush1.bf16.msra.mxu0 0
    %3655 = vmatprep.subr.bf16.mxu0 0
    %3656 = vmatpush1.bf16.msra.mxu0 0
    %3657 = vmatprep.subr.bf16.mxu0 0
    %3658 = vmatpush1.bf16.msra.mxu0 0
    %3659 = vmatprep.subr.bf16.mxu0 0
    %3660 = vmatpush1.bf16.msra.mxu0 0
    %3661 = vmatprep.subr.bf16.mxu0 0
    %3662 = vmatpush1.bf16.msra.mxu0 0
    %3663 = vmatprep.mubr.bf16.mxu0 0
    %3664 = vmatmul.mubr.bf16.gmra.mrb[0].mxu0 %v2780
    %v3665 = vpop.f32.mrb[0].mxu0
    %v3666 = vadd.f32 0.0, %v3665
    %v3667 = vpop.f32.mrb[0].mxu0
    %v3668 = vpop.f32.mrb[0].mxu0
    %v3669 = vadd.f32 0.0, %v3668
    %v3670 = vpop.f32.mrb[0].mxu0
    %3671 = vmatprep.mubr.bf16.mxu0 0
    %3672 = vmatmul.mubr.bf16.gmra.mrb[0].mxu0 %v2783
    %v3673 = vpop.f32.mrb[0].mxu0
    %v3674 = vadd.f32 0.0, %v3673
    %v3675 = vpop.f32.mrb[0].mxu0
    %v3676 = vpop.f32.mrb[0].mxu0
    %v3677 = vadd.f32 0.0, %v3676
    %v3678 = vpop.f32.mrb[0].mxu0
    %3679 = vmatprep.mubr.bf16.mxu0 0
    %3680 = vmatmul.mubr.bf16.gmra.mrb[0].mxu0 %v2786
    %v3681 = vpop.f32.mrb[0].mxu0
    %v3682 = vadd.f32 0.0, %v3681
    %v3683 = vpop.f32.mrb[0].mxu0
    %v3684 = vpop.f32.mrb[0].mxu0
    %v3685 = vadd.f32 0.0, %v3684
    %v3686 = vpop.f32.mrb[0].mxu0
    %3687 = vmatprep.mubr.bf16.mxu0 0
    %3688 = vmatmul.mubr.bf16.gmra.mrb[0].mxu0 %v3623
    %v3689 = vpop.f32.mrb[0].mxu0
    %v3690 = vadd.f32 0.0, %v3689
    %v3691 = vpop.f32.mrb[0].mxu0
    %v3692 = vpop.f32.mrb[0].mxu0
    %v3693 = vadd.f32 0.0, %v3692
    %v3694 = vpop.f32.mrb[0].mxu0
    %3695 = vmatprep.mubr.bf16.mxu0 0
    %3696 = vmatmul.mubr.bf16.gmra.mrb[0].mxu0 %v2792
    %v3697 = vpop.f32.mrb[0].mxu0
    %v3698 = vadd.f32 0.0, %v3697
    %v3699 = vpop.f32.mrb[0].mxu0
    %v3700 = vpop.f32.mrb[0].mxu0
    %v3701 = vadd.f32 0.0, %v3700
    %v3702 = vpop.f32.mrb[0].mxu0
    %3703 = vmatprep.mubr.bf16.mxu0 0
    %3704 = vmatmul.mubr.bf16.gmra.mrb[0].mxu0 %v2795
    %v3705 = vpop.f32.mrb[0].mxu0
    %v3706 = vadd.f32 0.0, %v3705
    %v3707 = vpop.f32.mrb[0].mxu0
    %v3708 = vpop.f32.mrb[0].mxu0
    %v3709 = vadd.f32 0.0, %v3708
    %v3710 = vpop.f32.mrb[0].mxu0
    %3711 = vmatprep.mubr.bf16.mxu0 0
    %3712 = vmatmul.mubr.bf16.gmra.mrb[0].mxu0 %v2798
    %v3713 = vpop.f32.mrb[0].mxu0
    %v3714 = vadd.f32 0.0, %v3713
    %v3715 = vpop.f32.mrb[0].mxu0
    %v3716 = vpop.f32.mrb[0].mxu0
    %v3717 = vadd.f32 0.0, %v3716
    %v3718 = vpop.f32.mrb[0].mxu0
    %3719 = vmatprep.mubr.bf16.mxu0 0
    %3720 = vmatmul.mubr.bf16.gmra.mrb[0].mxu0 %v3626
    %v3721 = vpop.f32.mrb[0].mxu0
    %v3722 = vadd.f32 0.0, %v3721
    %v3723 = vpop.f32.mrb[0].mxu0
    %v3724 = vpop.f32.mrb[0].mxu0
    %v3725 = vadd.f32 0.0, %v3724
    %v3726 = vpop.f32.mrb[0].mxu0
    %3727 = vdwg.mxu0
    %v3728 = vadd.f32 %v3602, %v3666
    %v3729 = vadd.f32 %v3603, %v3669
    %v3730 = vadd.f32 %v3604, %v3674
    %v3731 = vadd.f32 %v3605, %v3677
    %v3732 = vadd.f32 %v3606, %v3682
    %v3733 = vadd.f32 %v3607, %v3685
    %v3734 = vadd.f32 %v3608, %v3690
    %v3735 = vadd.f32 %v3609, %v3693
    %v3736 = vadd.f32 %v3610, %v3698
    %v3737 = vadd.f32 %v3611, %v3701
    %v3738 = vadd.f32 %v3612, %v3706
    %v3739 = vadd.f32 %v3613, %v3709
    %v3740 = vadd.f32 %v3614, %v3714
    %v3741 = vadd.f32 %v3615, %v3717
    %v3742 = vadd.f32 %v3616, %v3722
    %v3743 = vadd.f32 %v3617, %v3725
    %v3744 = vld [vmem:[%s8] sm:$0xf]
    %v3745 = vld [vmem:[%s8 + $0x4] sm:$0xf]
    %v3746 = vld [vmem:[%s8 + $0x8] sm:$0x3]
    %v3747 = vpack.c.bf16 %v1473, %v73
    %v3748 = vpack.c.bf16 %v1477, %v1475
    %v3749 = vpack.c.bf16 %v1481, %v1479
    %v3750 = vpack.c.bf16 %v1485, %v1483
    %v3751 = vpack.c.bf16 %v1487, %v73
    %v3752 = vpack.c.bf16 %v1491, %v1489
    %v3753 = vpack.c.bf16 %v1495, %v1493
    %v3754 = vpack.c.bf16 %v1499, %v1497
    %v3758 = vunpack.c.l.b16 %v3744
    %v3759 = vunpack.c.l.b16 %v3745
    %v3760 = vunpack.c.l.b16 %v3746
    %v3761 = vpack.c.b16 %v3759, %v3758
    %v3762 = vpack.c.b16 %v3760, %v3760
    %v3765 = vsel %vm806, %v3747, 0
    %v3768 = vsel %vm806, %v3748, 0
    %v3771 = vsel %vm806, %v3749, 0
    %v3774 = vsel %vm806, %v3750, 0
    %v3777 = vsel %vm806, %v3751, 0
    %v3780 = vsel %vm806, %v3752, 0
    %v3783 = vsel %vm806, %v3753, 0
    %v3786 = vsel %vm806, %v3754, 0
    %v3789 = vsel %vm705, %v3762, 0
    %3791 = vmatprep.subr.bf16.mxu0 0
    %3792 = vmatpush1.bf16.msra.mxu0 %v3761
    %3793 = vmatprep.subr.bf16.mxu0 0
    %3794 = vmatpush1.bf16.msra.mxu0 %v3789
    %3795 = vmatprep.subr.bf16.mxu0 0
    %3796 = vmatpush1.bf16.msra.mxu0 0
    %3797 = vmatprep.subr.bf16.mxu0 0
    %3798 = vmatpush1.bf16.msra.mxu0 0
    %3799 = vmatprep.subr.bf16.mxu0 0
    %3800 = vmatpush1.bf16.msra.mxu0 0
    %3801 = vmatprep.subr.bf16.mxu0 0
    %3802 = vmatpush1.bf16.msra.mxu0 0
    %3803 = vmatprep.subr.bf16.mxu0 0
    %3804 = vmatpush1.bf16.msra.mxu0 0
    %3805 = vmatprep.subr.bf16.mxu0 0
    %3806 = vmatpush1.bf16.msra.mxu0 0
    %3807 = vmatprep.subr.bf16.mxu0 0
    %3808 = vmatpush1.bf16.msra.mxu0 0
    %3809 = vmatprep.subr.bf16.mxu0 0
    %3810 = vmatpush1.bf16.msra.mxu0 0
    %3811 = vmatprep.subr.bf16.mxu0 0
    %3812 = vmatpush1.bf16.msra.mxu0 0
    %3813 = vmatprep.subr.bf16.mxu0 0
    %3814 = vmatpush1.bf16.msra.mxu0 0
    %3815 = vmatprep.subr.bf16.mxu0 0
    %3816 = vmatpush1.bf16.msra.mxu0 0
    %3817 = vmatprep.subr.bf16.mxu0 0
    %3818 = vmatpush1.bf16.msra.mxu0 0
    %3819 = vmatprep.subr.bf16.mxu0 0
    %3820 = vmatpush1.bf16.msra.mxu0 0
    %3821 = vmatprep.subr.bf16.mxu0 0
    %3822 = vmatpush1.bf16.msra.mxu0 0
    %3823 = vmatprep.mubr.bf16.mxu0 0
    %3824 = vmatmul.mubr.bf16.gmra.mrb[0].mxu0 %v3765
    %v3825 = vpop.f32.mrb[0].mxu0
    %v3826 = vadd.f32 0.0, %v3825
    %v3827 = vpop.f32.mrb[0].mxu0
    %v3828 = vpop.f32.mrb[0].mxu0
    %v3829 = vadd.f32 0.0, %v3828
    %v3830 = vpop.f32.mrb[0].mxu0
    %3831 = vmatprep.mubr.bf16.mxu0 0
    %3832 = vmatmul.mubr.bf16.gmra.mrb[0].mxu0 %v3768
    %v3833 = vpop.f32.mrb[0].mxu0
    %v3834 = vadd.f32 0.0, %v3833
    %v3835 = vpop.f32.mrb[0].mxu0
    %v3836 = vpop.f32.mrb[0].mxu0
    %v3837 = vadd.f32 0.0, %v3836
    %v3838 = vpop.f32.mrb[0].mxu0
    %3839 = vmatprep.mubr.bf16.mxu0 0
    %3840 = vmatmul.mubr.bf16.gmra.mrb[0].mxu0 %v3771
    %v3841 = vpop.f32.mrb[0].mxu0
    %v3842 = vadd.f32 0.0, %v3841
    %v3843 = vpop.f32.mrb[0].mxu0
    %v3844 = vpop.f32.mrb[0].mxu0
    %v3845 = vadd.f32 0.0, %v3844
    %v3846 = vpop.f32.mrb[0].mxu0
    %3847 = vmatprep.mubr.bf16.mxu0 0
    %3848 = vmatmul.mubr.bf16.gmra.mrb[0].mxu0 %v3774
    %v3849 = vpop.f32.mrb[0].mxu0
    %v3850 = vadd.f32 0.0, %v3849
    %v3851 = vpop.f32.mrb[0].mxu0
    %v3852 = vpop.f32.mrb[0].mxu0
    %v3853 = vadd.f32 0.0, %v3852
    %v3854 = vpop.f32.mrb[0].mxu0
    %3855 = vmatprep.mubr.bf16.mxu0 0
    %3856 = vmatmul.mubr.bf16.gmra.mrb[0].mxu0 %v3777
    %v3857 = vpop.f32.mrb[0].mxu0
    %v3858 = vadd.f32 0.0, %v3857
    %v3859 = vpop.f32.mrb[0].mxu0
    %v3860 = vpop.f32.mrb[0].mxu0
    %v3861 = vadd.f32 0.0, %v3860
    %v3862 = vpop.f32.mrb[0].mxu0
    %3863 = vmatprep.mubr.bf16.mxu0 0
    %3864 = vmatmul.mubr.bf16.gmra.mrb[0].mxu0 %v3780
    %v3865 = vpop.f32.mrb[0].mxu0
    %v3866 = vadd.f32 0.0, %v3865
    %v3867 = vpop.f32.mrb[0].mxu0
    %v3868 = vpop.f32.mrb[0].mxu0
    %v3869 = vadd.f32 0.0, %v3868
    %v3870 = vpop.f32.mrb[0].mxu0
    %3871 = vmatprep.mubr.bf16.mxu0 0
    %3872 = vmatmul.mubr.bf16.gmra.mrb[0].mxu0 %v3783
    %v3873 = vpop.f32.mrb[0].mxu0
    %v3874 = vadd.f32 0.0, %v3873
    %v3875 = vpop.f32.mrb[0].mxu0
    %v3876 = vpop.f32.mrb[0].mxu0
    %v3877 = vadd.f32 0.0, %v3876
    %v3878 = vpop.f32.mrb[0].mxu0
    %3879 = vmatprep.mubr.bf16.mxu0 0
    %3880 = vmatmul.mubr.bf16.gmra.mrb[0].mxu0 %v3786
    %v3881 = vpop.f32.mrb[0].mxu0
    %v3882 = vadd.f32 0.0, %v3881
    %v3883 = vpop.f32.mrb[0].mxu0
    %v3884 = vpop.f32.mrb[0].mxu0
    %v3885 = vadd.f32 0.0, %v3884
    %v3886 = vpop.f32.mrb[0].mxu0
    %3887 = vdwg.mxu0
    %v3888 = vadd.f32 %v3728, %v3826
    %v3889 = vadd.f32 %v3729, %v3829
    %v3890 = vadd.f32 %v3730, %v3834
    %v3891 = vadd.f32 %v3731, %v3837
    %v3892 = vadd.f32 %v3732, %v3842
    %v3893 = vadd.f32 %v3733, %v3845
    %v3894 = vadd.f32 %v3734, %v3850
    %v3895 = vadd.f32 %v3735, %v3853
    %v3896 = vadd.f32 %v3736, %v3858
    %v3897 = vadd.f32 %v3737, %v3861
    %v3898 = vadd.f32 %v3738, %v3866
    %v3899 = vadd.f32 %v3739, %v3869
    %v3900 = vadd.f32 %v3740, %v3874
    %v3901 = vadd.f32 %v3741, %v3877
    %v3902 = vadd.f32 %v3742, %v3882
    %v3903 = vadd.f32 %v3743, %v3885
    %s3904 = scalar_lea.vmem %s8, 12
    %v3905 = vld [vmem:[%s3904] sm:$0xf]
    %v3906 = vld [vmem:[%s3904 + $0x4] sm:$0xf]
    %v3907 = vld [vmem:[%s3904 + $0x8] sm:$0x3]
    %v3908 = vpack.c.bf16 %v949, 0.0
    %v3909 = vpack.c.bf16 %v951, %v950
    %v3910 = vpack.c.bf16 %v953, %v952
    %v3911 = vpack.c.bf16 %v955, %v954
    %v3912 = vpack.c.bf16 %v957, 0.0
    %v3913 = vpack.c.bf16 %v959, %v958
    %v3914 = vpack.c.bf16 %v961, %v960
    %v3915 = vpack.c.bf16 %v963, %v962
    %v3919 = vunpack.c.l.b16 %v3905
    %v3920 = vunpack.c.l.b16 %v3906
    %v3921 = vunpack.c.l.b16 %v3907
    %v3922 = vpack.c.b16 %v3920, %v3919
    %v3923 = vpack.c.b16 %v3921, %v3921
    %v3926 = vsel %vm806, %v3908, 0
    %v3929 = vsel %vm806, %v3909, 0
    %v3932 = vsel %vm806, %v3910, 0
    %v3935 = vsel %vm806, %v3911, 0
    %v3938 = vsel %vm806, %v3912, 0
    %v3941 = vsel %vm806, %v3913, 0
    %v3944 = vsel %vm806, %v3914, 0
    %v3947 = vsel %vm806, %v3915, 0
    %v3950 = vsel %vm705, %v3923, 0
    %3952 = vmatprep.subr.bf16.mxu0 0
    %3953 = vmatpush1.bf16.msra.mxu0 %v3922
    %3954 = vmatprep.subr.bf16.mxu0 0
    %3955 = vmatpush1.bf16.msra.mxu0 %v3950
    %3956 = vmatprep.subr.bf16.mxu0 0
    %3957 = vmatpush1.bf16.msra.mxu0 0
    %3958 = vmatprep.subr.bf16.mxu0 0
    %3959 = vmatpush1.bf16.msra.mxu0 0
    %3960 = vmatprep.subr.bf16.mxu0 0
    %3961 = vmatpush1.bf16.msra.mxu0 0
    %3962 = vmatprep.subr.bf16.mxu0 0
    %3963 = vmatpush1.bf16.msra.mxu0 0
    %3964 = vmatprep.subr.bf16.mxu0 0
    %3965 = vmatpush1.bf16.msra.mxu0 0
    %3966 = vmatprep.subr.bf16.mxu0 0
    %3967 = vmatpush1.bf16.msra.mxu0 0
    %3968 = vmatprep.subr.bf16.mxu0 0
    %3969 = vmatpush1.bf16.msra.mxu0 0
    %3970 = vmatprep.subr.bf16.mxu0 0
    %3971 = vmatpush1.bf16.msra.mxu0 0
    %3972 = vmatprep.subr.bf16.mxu0 0
    %3973 = vmatpush1.bf16.msra.mxu0 0
    %3974 = vmatprep.subr.bf16.mxu0 0
    %3975 = vmatpush1.bf16.msra.mxu0 0
    %3976 = vmatprep.subr.bf16.mxu0 0
    %3977 = vmatpush1.bf16.msra.mxu0 0
    %3978 = vmatprep.subr.bf16.mxu0 0
    %3979 = vmatpush1.bf16.msra.mxu0 0
    %3980 = vmatprep.subr.bf16.mxu0 0
    %3981 = vmatpush1.bf16.msra.mxu0 0
    %3982 = vmatprep.subr.bf16.mxu0 0
    %3983 = vmatpush1.bf16.msra.mxu0 0
    %3984 = vmatprep.mubr.bf16.mxu0 0
    %3985 = vmatmul.mubr.bf16.gmra.mrb[0].mxu0 %v3926
    %v3986 = vpop.f32.mrb[0].mxu0
    %v3987 = vadd.f32 0.0, %v3986
    %v3988 = vpop.f32.mrb[0].mxu0
    %v3989 = vpop.f32.mrb[0].mxu0
    %v3990 = vadd.f32 0.0, %v3989
    %v3991 = vpop.f32.mrb[0].mxu0
    %3992 = vmatprep.mubr.bf16.mxu0 0
    %3993 = vmatmul.mubr.bf16.gmra.mrb[0].mxu0 %v3929
    %v3994 = vpop.f32.mrb[0].mxu0
    %v3995 = vadd.f32 0.0, %v3994
    %v3996 = vpop.f32.mrb[0].mxu0
    %v3997 = vpop.f32.mrb[0].mxu0
    %v3998 = vadd.f32 0.0, %v3997
    %v3999 = vpop.f32.mrb[0].mxu0
    %4000 = vmatprep.mubr.bf16.mxu0 0
    %4001 = vmatmul.mubr.bf16.gmra.mrb[0].mxu0 %v3932
    %v4002 = vpop.f32.mrb[0].mxu0
    %v4003 = vadd.f32 0.0, %v4002
    %v4004 = vpop.f32.mrb[0].mxu0
    %v4005 = vpop.f32.mrb[0].mxu0
    %v4006 = vadd.f32 0.0, %v4005
    %v4007 = vpop.f32.mrb[0].mxu0
    %4008 = vmatprep.mubr.bf16.mxu0 0
    %4009 = vmatmul.mubr.bf16.gmra.mrb[0].mxu0 %v3935
    %v4010 = vpop.f32.mrb[0].mxu0
    %v4011 = vadd.f32 0.0, %v4010
    %v4012 = vpop.f32.mrb[0].mxu0
    %v4013 = vpop.f32.mrb[0].mxu0
    %v4014 = vadd.f32 0.0, %v4013
    %v4015 = vpop.f32.mrb[0].mxu0
    %4016 = vmatprep.mubr.bf16.mxu0 0
    %4017 = vmatmul.mubr.bf16.gmra.mrb[0].mxu0 %v3938
    %v4018 = vpop.f32.mrb[0].mxu0
    %v4019 = vadd.f32 0.0, %v4018
    %v4020 = vpop.f32.mrb[0].mxu0
    %v4021 = vpop.f32.mrb[0].mxu0
    %v4022 = vadd.f32 0.0, %v4021
    %v4023 = vpop.f32.mrb[0].mxu0
    %4024 = vmatprep.mubr.bf16.mxu0 0
    %4025 = vmatmul.mubr.bf16.gmra.mrb[0].mxu0 %v3941
    %v4026 = vpop.f32.mrb[0].mxu0
    %v4027 = vadd.f32 0.0, %v4026
    %v4028 = vpop.f32.mrb[0].mxu0
    %v4029 = vpop.f32.mrb[0].mxu0
    %v4030 = vadd.f32 0.0, %v4029
    %v4031 = vpop.f32.mrb[0].mxu0
    %4032 = vmatprep.mubr.bf16.mxu0 0
    %4033 = vmatmul.mubr.bf16.gmra.mrb[0].mxu0 %v3944
    %v4034 = vpop.f32.mrb[0].mxu0
    %v4035 = vadd.f32 0.0, %v4034
    %v4036 = vpop.f32.mrb[0].mxu0
    %v4037 = vpop.f32.mrb[0].mxu0
    %v4038 = vadd.f32 0.0, %v4037
    %v4039 = vpop.f32.mrb[0].mxu0
    %4040 = vmatprep.mubr.bf16.mxu0 0
    %4041 = vmatmul.mubr.bf16.gmra.mrb[0].mxu0 %v3947
    %v4042 = vpop.f32.mrb[0].mxu0
    %v4043 = vadd.f32 0.0, %v4042
    %v4044 = vpop.f32.mrb[0].mxu0
    %v4045 = vpop.f32.mrb[0].mxu0
    %v4046 = vadd.f32 0.0, %v4045
    %v4047 = vpop.f32.mrb[0].mxu0
    %4048 = vdwg.mxu0
    %v4049 = vadd.f32 %v3888, %v3987
    %v4050 = vadd.f32 %v3889, %v3990
    %v4051 = vadd.f32 %v3890, %v3995
    %v4052 = vadd.f32 %v3891, %v3998
    %v4053 = vadd.f32 %v3892, %v4003
    %v4054 = vadd.f32 %v3893, %v4006
    %v4055 = vadd.f32 %v3894, %v4011
    %v4056 = vadd.f32 %v3895, %v4014
    %v4057 = vadd.f32 %v3896, %v4019
    %v4058 = vadd.f32 %v3897, %v4022
    %v4059 = vadd.f32 %v3898, %v4027
    %v4060 = vadd.f32 %v3899, %v4030
    %v4061 = vadd.f32 %v3900, %v4035
    %v4062 = vadd.f32 %v3901, %v4038
    %v4063 = vadd.f32 %v3902, %v4043
    %v4064 = vadd.f32 %v3903, %v4046
    %s4065 = scalar_lea.vmem %s8, 24
    %v4066 = vld [vmem:[%s4065] sm:$0xf]
    %v4067 = vld [vmem:[%s4065 + $0x4] sm:$0xf]
    %v4068 = vld [vmem:[%s4065 + $0x8] sm:$0x3]
    %v4069 = vpack.c.bf16 %v1575, %v179
    %v4070 = vpack.c.bf16 %v1579, %v1577
    %v4071 = vpack.c.bf16 %v1583, %v1581
    %v4072 = vpack.c.bf16 %v1587, %v1585
    %v4073 = vpack.c.bf16 %v1589, %v179
    %v4074 = vpack.c.bf16 %v1593, %v1591
    %v4075 = vpack.c.bf16 %v1597, %v1595
    %v4076 = vpack.c.bf16 %v1601, %v1599
    %v4080 = vunpack.c.l.b16 %v4066
    %v4081 = vunpack.c.l.b16 %v4067
    %v4082 = vunpack.c.l.b16 %v4068
    %v4083 = vpack.c.b16 %v4081, %v4080
    %v4084 = vpack.c.b16 %v4082, %v4082
    %v4087 = vsel %vm806, %v4069, 0
    %v4090 = vsel %vm806, %v4070, 0
    %v4093 = vsel %vm806, %v4071, 0
    %v4096 = vsel %vm806, %v4072, 0
    %v4099 = vsel %vm806, %v4073, 0
    %v4102 = vsel %vm806, %v4074, 0
    %v4105 = vsel %vm806, %v4075, 0
    %v4108 = vsel %vm806, %v4076, 0
    %v4111 = vsel %vm705, %v4084, 0
    %4113 = vmatprep.subr.bf16.mxu0 0
    %4114 = vmatpush1.bf16.msra.mxu0 %v4083
    %4115 = vmatprep.subr.bf16.mxu0 0
    %4116 = vmatpush1.bf16.msra.mxu0 %v4111
    %4117 = vmatprep.subr.bf16.mxu0 0
    %4118 = vmatpush1.bf16.msra.mxu0 0
    %4119 = vmatprep.subr.bf16.mxu0 0
    %4120 = vmatpush1.bf16.msra.mxu0 0
    %4121 = vmatprep.subr.bf16.mxu0 0
    %4122 = vmatpush1.bf16.msra.mxu0 0
    %4123 = vmatprep.subr.bf16.mxu0 0
    %4124 = vmatpush1.bf16.msra.mxu0 0
    %4125 = vmatprep.subr.bf16.mxu0 0
    %4126 = vmatpush1.bf16.msra.mxu0 0
    %4127 = vmatprep.subr.bf16.mxu0 0
    %4128 = vmatpush1.bf16.msra.mxu0 0
    %4129 = vmatprep.subr.bf16.mxu0 0
    %4130 = vmatpush1.bf16.msra.mxu0 0
    %4131 = vmatprep.subr.bf16.mxu0 0
    %4132 = vmatpush1.bf16.msra.mxu0 0
    %4133 = vmatprep.subr.bf16.mxu0 0
    %4134 = vmatpush1.bf16.msra.mxu0 0
    %4135 = vmatprep.subr.bf16.mxu0 0
    %4136 = vmatpush1.bf16.msra.mxu0 0
    %4137 = vmatprep.subr.bf16.mxu0 0
    %4138 = vmatpush1.bf16.msra.mxu0 0
    %4139 = vmatprep.subr.bf16.mxu0 0
    %4140 = vmatpush1.bf16.msra.mxu0 0
    %4141 = vmatprep.subr.bf16.mxu0 0
    %4142 = vmatpush1.bf16.msra.mxu0 0
    %4143 = vmatprep.subr.bf16.mxu0 0
    %4144 = vmatpush1.bf16.msra.mxu0 0
    %4145 = vmatprep.mubr.bf16.mxu0 0
    %4146 = vmatmul.mubr.bf16.gmra.mrb[0].mxu0 %v4087
    %v4147 = vpop.f32.mrb[0].mxu0
    %v4148 = vadd.f32 0.0, %v4147
    %v4149 = vpop.f32.mrb[0].mxu0
    %v4150 = vpop.f32.mrb[0].mxu0
    %v4151 = vadd.f32 0.0, %v4150
    %v4152 = vpop.f32.mrb[0].mxu0
    %4153 = vmatprep.mubr.bf16.mxu0 0
    %4154 = vmatmul.mubr.bf16.gmra.mrb[0].mxu0 %v4090
    %v4155 = vpop.f32.mrb[0].mxu0
    %v4156 = vadd.f32 0.0, %v4155
    %v4157 = vpop.f32.mrb[0].mxu0
    %v4158 = vpop.f32.mrb[0].mxu0
    %v4159 = vadd.f32 0.0, %v4158
    %v4160 = vpop.f32.mrb[0].mxu0
    %4161 = vmatprep.mubr.bf16.mxu0 0
    %4162 = vmatmul.mubr.bf16.gmra.mrb[0].mxu0 %v4093
    %v4163 = vpop.f32.mrb[0].mxu0
    %v4164 = vadd.f32 0.0, %v4163
    %v4165 = vpop.f32.mrb[0].mxu0
    %v4166 = vpop.f32.mrb[0].mxu0
    %v4167 = vadd.f32 0.0, %v4166
    %v4168 = vpop.f32.mrb[0].mxu0
    %4169 = vmatprep.mubr.bf16.mxu0 0
    %4170 = vmatmul.mubr.bf16.gmra.mrb[0].mxu0 %v4096
    %v4171 = vpop.f32.mrb[0].mxu0
    %v4172 = vadd.f32 0.0, %v4171
    %v4173 = vpop.f32.mrb[0].mxu0
    %v4174 = vpop.f32.mrb[0].mxu0
    %v4175 = vadd.f32 0.0, %v4174
    %v4176 = vpop.f32.mrb[0].mxu0
    %4177 = vmatprep.mubr.bf16.mxu0 0
    %4178 = vmatmul.mubr.bf16.gmra.mrb[0].mxu0 %v4099
    %v4179 = vpop.f32.mrb[0].mxu0
    %v4180 = vadd.f32 0.0, %v4179
    %v4181 = vpop.f32.mrb[0].mxu0
    %v4182 = vpop.f32.mrb[0].mxu0
    %v4183 = vadd.f32 0.0, %v4182
    %v4184 = vpop.f32.mrb[0].mxu0
    %4185 = vmatprep.mubr.bf16.mxu0 0
    %4186 = vmatmul.mubr.bf16.gmra.mrb[0].mxu0 %v4102
    %v4187 = vpop.f32.mrb[0].mxu0
    %v4188 = vadd.f32 0.0, %v4187
    %v4189 = vpop.f32.mrb[0].mxu0
    %v4190 = vpop.f32.mrb[0].mxu0
    %v4191 = vadd.f32 0.0, %v4190
    %v4192 = vpop.f32.mrb[0].mxu0
    %4193 = vmatprep.mubr.bf16.mxu0 0
    %4194 = vmatmul.mubr.bf16.gmra.mrb[0].mxu0 %v4105
    %v4195 = vpop.f32.mrb[0].mxu0
    %v4196 = vadd.f32 0.0, %v4195
    %v4197 = vpop.f32.mrb[0].mxu0
    %v4198 = vpop.f32.mrb[0].mxu0
    %v4199 = vadd.f32 0.0, %v4198
    %v4200 = vpop.f32.mrb[0].mxu0
    %4201 = vmatprep.mubr.bf16.mxu0 0
    %4202 = vmatmul.mubr.bf16.gmra.mrb[0].mxu0 %v4108
    %v4203 = vpop.f32.mrb[0].mxu0
    %v4204 = vadd.f32 0.0, %v4203
    %v4205 = vpop.f32.mrb[0].mxu0
    %v4206 = vpop.f32.mrb[0].mxu0
    %v4207 = vadd.f32 0.0, %v4206
    %v4208 = vpop.f32.mrb[0].mxu0
    %4209 = vdwg.mxu0
    %v4210 = vadd.f32 %v4049, %v4148
    %v4211 = vadd.f32 %v4050, %v4151
    %v4212 = vadd.f32 %v4051, %v4156
    %v4213 = vadd.f32 %v4052, %v4159
    %v4214 = vadd.f32 %v4053, %v4164
    %v4215 = vadd.f32 %v4054, %v4167
    %v4216 = vadd.f32 %v4055, %v4172
    %v4217 = vadd.f32 %v4056, %v4175
    %v4218 = vadd.f32 %v4057, %v4180
    %v4219 = vadd.f32 %v4058, %v4183
    %v4220 = vadd.f32 %v4059, %v4188
    %v4221 = vadd.f32 %v4060, %v4191
    %v4222 = vadd.f32 %v4061, %v4196
    %v4223 = vadd.f32 %v4062, %v4199
    %v4224 = vadd.f32 %v4063, %v4204
    %v4225 = vadd.f32 %v4064, %v4207
    %s4226 = scalar_lea.vmem %s8, 36
    %v4227 = vld [vmem:[%s4226] sm:$0xf]
    %v4228 = vld [vmem:[%s4226 + $0x4] sm:$0xf]
    %v4229 = vld [vmem:[%s4226 + $0x8] sm:$0x3]
    %v4230 = vpack.c.bf16 %v1475, %v1473
    %v4231 = vpack.c.bf16 %v1479, %v1477
    %v4232 = vpack.c.bf16 %v1483, %v1481
    %v4233 = vpack.c.bf16 %v1657, %v1485
    %v4234 = vpack.c.bf16 %v1489, %v1487
    %v4235 = vpack.c.bf16 %v1493, %v1491
    %v4236 = vpack.c.bf16 %v1497, %v1495
    %v4237 = vpack.c.bf16 %v1659, %v1499
    %v4241 = vunpack.c.l.b16 %v4227
    %v4242 = vunpack.c.l.b16 %v4228
    %v4243 = vunpack.c.l.b16 %v4229
    %v4244 = vpack.c.b16 %v4242, %v4241
    %v4245 = vpack.c.b16 %v4243, %v4243
    %v4248 = vsel %vm806, %v4230, 0
    %v4251 = vsel %vm806, %v4231, 0
    %v4254 = vsel %vm806, %v4232, 0
    %v4257 = vsel %vm806, %v4233, 0
    %v4260 = vsel %vm806, %v4234, 0
    %v4263 = vsel %vm806, %v4235, 0
    %v4266 = vsel %vm806, %v4236, 0
    %v4269 = vsel %vm806, %v4237, 0
    %v4272 = vsel %vm705, %v4245, 0
    %4274 = vmatprep.subr.bf16.mxu0 0
    %4275 = vmatpush1.bf16.msra.mxu0 %v4244
    %4276 = vmatprep.subr.bf16.mxu0 0
    %4277 = vmatpush1.bf16.msra.mxu0 %v4272
    %4278 = vmatprep.subr.bf16.mxu0 0
    %4279 = vmatpush1.bf16.msra.mxu0 0
    %4280 = vmatprep.subr.bf16.mxu0 0
    %4281 = vmatpush1.bf16.msra.mxu0 0
    %4282 = vmatprep.subr.bf16.mxu0 0
    %4283 = vmatpush1.bf16.msra.mxu0 0
    %4284 = vmatprep.subr.bf16.mxu0 0
    %4285 = vmatpush1.bf16.msra.mxu0 0
    %4286 = vmatprep.subr.bf16.mxu0 0
    %4287 = vmatpush1.bf16.msra.mxu0 0
    %4288 = vmatprep.subr.bf16.mxu0 0
    %4289 = vmatpush1.bf16.msra.mxu0 0
    %4290 = vmatprep.subr.bf16.mxu0 0
    %4291 = vmatpush1.bf16.msra.mxu0 0
    %4292 = vmatprep.subr.bf16.mxu0 0
    %4293 = vmatpush1.bf16.msra.mxu0 0
    %4294 = vmatprep.subr.bf16.mxu0 0
    %4295 = vmatpush1.bf16.msra.mxu0 0
    %4296 = vmatprep.subr.bf16.mxu0 0
    %4297 = vmatpush1.bf16.msra.mxu0 0
    %4298 = vmatprep.subr.bf16.mxu0 0
    %4299 = vmatpush1.bf16.msra.mxu0 0
    %4300 = vmatprep.subr.bf16.mxu0 0
    %4301 = vmatpush1.bf16.msra.mxu0 0
    %4302 = vmatprep.subr.bf16.mxu0 0
    %4303 = vmatpush1.bf16.msra.mxu0 0
    %4304 = vmatprep.subr.bf16.mxu0 0
    %4305 = vmatpush1.bf16.msra.mxu0 0
    %4306 = vmatprep.mubr.bf16.mxu0 0
    %4307 = vmatmul.mubr.bf16.gmra.mrb[0].mxu0 %v4248
    %v4308 = vpop.f32.mrb[0].mxu0
    %v4309 = vadd.f32 0.0, %v4308
    %v4310 = vpop.f32.mrb[0].mxu0
    %v4311 = vpop.f32.mrb[0].mxu0
    %v4312 = vadd.f32 0.0, %v4311
    %v4313 = vpop.f32.mrb[0].mxu0
    %4314 = vmatprep.mubr.bf16.mxu0 0
    %4315 = vmatmul.mubr.bf16.gmra.mrb[0].mxu0 %v4251
    %v4316 = vpop.f32.mrb[0].mxu0
    %v4317 = vadd.f32 0.0, %v4316
    %v4318 = vpop.f32.mrb[0].mxu0
    %v4319 = vpop.f32.mrb[0].mxu0
    %v4320 = vadd.f32 0.0, %v4319
    %v4321 = vpop.f32.mrb[0].mxu0
    %4322 = vmatprep.mubr.bf16.mxu0 0
    %4323 = vmatmul.mubr.bf16.gmra.mrb[0].mxu0 %v4254
    %v4324 = vpop.f32.mrb[0].mxu0
    %v4325 = vadd.f32 0.0, %v4324
    %v4326 = vpop.f32.mrb[0].mxu0
    %v4327 = vpop.f32.mrb[0].mxu0
    %v4328 = vadd.f32 0.0, %v4327
    %v4329 = vpop.f32.mrb[0].mxu0
    %4330 = vmatprep.mubr.bf16.mxu0 0
    %4331 = vmatmul.mubr.bf16.gmra.mrb[0].mxu0 %v4257
    %v4332 = vpop.f32.mrb[0].mxu0
    %v4333 = vadd.f32 0.0, %v4332
    %v4334 = vpop.f32.mrb[0].mxu0
    %v4335 = vpop.f32.mrb[0].mxu0
    %v4336 = vadd.f32 0.0, %v4335
    %v4337 = vpop.f32.mrb[0].mxu0
    %4338 = vmatprep.mubr.bf16.mxu0 0
    %4339 = vmatmul.mubr.bf16.gmra.mrb[0].mxu0 %v4260
    %v4340 = vpop.f32.mrb[0].mxu0
    %v4341 = vadd.f32 0.0, %v4340
    %v4342 = vpop.f32.mrb[0].mxu0
    %v4343 = vpop.f32.mrb[0].mxu0
    %v4344 = vadd.f32 0.0, %v4343
    %v4345 = vpop.f32.mrb[0].mxu0
    %4346 = vmatprep.mubr.bf16.mxu0 0
    %4347 = vmatmul.mubr.bf16.gmra.mrb[0].mxu0 %v4263
    %v4348 = vpop.f32.mrb[0].mxu0
    %v4349 = vadd.f32 0.0, %v4348
    %v4350 = vpop.f32.mrb[0].mxu0
    %v4351 = vpop.f32.mrb[0].mxu0
    %v4352 = vadd.f32 0.0, %v4351
    %v4353 = vpop.f32.mrb[0].mxu0
    %4354 = vmatprep.mubr.bf16.mxu0 0
    %4355 = vmatmul.mubr.bf16.gmra.mrb[0].mxu0 %v4266
    %v4356 = vpop.f32.mrb[0].mxu0
    %v4357 = vadd.f32 0.0, %v4356
    %v4358 = vpop.f32.mrb[0].mxu0
    %v4359 = vpop.f32.mrb[0].mxu0
    %v4360 = vadd.f32 0.0, %v4359
    %v4361 = vpop.f32.mrb[0].mxu0
    %4362 = vmatprep.mubr.bf16.mxu0 0
    %4363 = vmatmul.mubr.bf16.gmra.mrb[0].mxu0 %v4269
    %v4364 = vpop.f32.mrb[0].mxu0
    %v4365 = vadd.f32 0.0, %v4364
    %v4366 = vpop.f32.mrb[0].mxu0
    %v4367 = vpop.f32.mrb[0].mxu0
    %v4368 = vadd.f32 0.0, %v4367
    %v4369 = vpop.f32.mrb[0].mxu0
    %4370 = vdwg.mxu0
    %v4371 = vadd.f32 %v4210, %v4309
    %v4372 = vadd.f32 %v4211, %v4312
    %v4373 = vadd.f32 %v4212, %v4317
    %v4374 = vadd.f32 %v4213, %v4320
    %v4375 = vadd.f32 %v4214, %v4325
    %v4376 = vadd.f32 %v4215, %v4328
    %v4377 = vadd.f32 %v4216, %v4333
    %v4378 = vadd.f32 %v4217, %v4336
    %v4379 = vadd.f32 %v4218, %v4341
    %v4380 = vadd.f32 %v4219, %v4344
    %v4381 = vadd.f32 %v4220, %v4349
    %v4382 = vadd.f32 %v4221, %v4352
    %v4383 = vadd.f32 %v4222, %v4357
    %v4384 = vadd.f32 %v4223, %v4360
    %v4385 = vadd.f32 %v4224, %v4365
    %v4386 = vadd.f32 %v4225, %v4368
    %s4387 = scalar_lea.vmem %s8, 48
    %v4388 = vld [vmem:[%s4387] sm:$0xf]
    %v4389 = vld [vmem:[%s4387 + $0x4] sm:$0xf]
    %v4390 = vld [vmem:[%s4387 + $0x8] sm:$0x3]
    %v4391 = vpack.c.bf16 %v950, %v949
    %v4392 = vpack.c.bf16 %v952, %v951
    %v4393 = vpack.c.bf16 %v954, %v953
    %v4394 = vpack.c.bf16 %v956, %v955
    %v4395 = vpack.c.bf16 %v958, %v957
    %v4396 = vpack.c.bf16 %v960, %v959
    %v4397 = vpack.c.bf16 %v962, %v961
    %v4398 = vpack.c.bf16 %v964, %v963
    %v4402 = vunpack.c.l.b16 %v4388
    %v4403 = vunpack.c.l.b16 %v4389
    %v4404 = vunpack.c.l.b16 %v4390
    %v4405 = vpack.c.b16 %v4403, %v4402
    %v4406 = vpack.c.b16 %v4404, %v4404
    %v4409 = vsel %vm806, %v4391, 0
    %v4412 = vsel %vm806, %v4392, 0
    %v4415 = vsel %vm806, %v4393, 0
    %v4418 = vsel %vm806, %v4394, 0
    %v4421 = vsel %vm806, %v4395, 0
    %v4424 = vsel %vm806, %v4396, 0
    %v4427 = vsel %vm806, %v4397, 0
    %v4430 = vsel %vm806, %v4398, 0
    %v4433 = vsel %vm705, %v4406, 0
    %4435 = vmatprep.subr.bf16.mxu0 0
    %4436 = vmatpush1.bf16.msra.mxu0 %v4405
    %4437 = vmatprep.subr.bf16.mxu0 0
    %4438 = vmatpush1.bf16.msra.mxu0 %v4433
    %4439 = vmatprep.subr.bf16.mxu0 0
    %4440 = vmatpush1.bf16.msra.mxu0 0
    %4441 = vmatprep.subr.bf16.mxu0 0
    %4442 = vmatpush1.bf16.msra.mxu0 0
    %4443 = vmatprep.subr.bf16.mxu0 0
    %4444 = vmatpush1.bf16.msra.mxu0 0
    %4445 = vmatprep.subr.bf16.mxu0 0
    %4446 = vmatpush1.bf16.msra.mxu0 0
    %4447 = vmatprep.subr.bf16.mxu0 0
    %4448 = vmatpush1.bf16.msra.mxu0 0
    %4449 = vmatprep.subr.bf16.mxu0 0
    %4450 = vmatpush1.bf16.msra.mxu0 0
    %4451 = vmatprep.subr.bf16.mxu0 0
    %4452 = vmatpush1.bf16.msra.mxu0 0
    %4453 = vmatprep.subr.bf16.mxu0 0
    %4454 = vmatpush1.bf16.msra.mxu0 0
    %4455 = vmatprep.subr.bf16.mxu0 0
    %4456 = vmatpush1.bf16.msra.mxu0 0
    %4457 = vmatprep.subr.bf16.mxu0 0
    %4458 = vmatpush1.bf16.msra.mxu0 0
    %4459 = vmatprep.subr.bf16.mxu0 0
    %4460 = vmatpush1.bf16.msra.mxu0 0
    %4461 = vmatprep.subr.bf16.mxu0 0
    %4462 = vmatpush1.bf16.msra.mxu0 0
    %4463 = vmatprep.subr.bf16.mxu0 0
    %4464 = vmatpush1.bf16.msra.mxu0 0
    %4465 = vmatprep.subr.bf16.mxu0 0
    %4466 = vmatpush1.bf16.msra.mxu0 0
    %4467 = vmatprep.mubr.bf16.mxu0 0
    %4468 = vmatmul.mubr.bf16.gmra.mrb[0].mxu0 %v4409
    %v4469 = vpop.f32.mrb[0].mxu0
    %v4470 = vadd.f32 0.0, %v4469
    %v4471 = vpop.f32.mrb[0].mxu0
    %v4472 = vpop.f32.mrb[0].mxu0
    %v4473 = vadd.f32 0.0, %v4472
    %v4474 = vpop.f32.mrb[0].mxu0
    %4475 = vmatprep.mubr.bf16.mxu0 0
    %4476 = vmatmul.mubr.bf16.gmra.mrb[0].mxu0 %v4412
    %v4477 = vpop.f32.mrb[0].mxu0
    %v4478 = vadd.f32 0.0, %v4477
    %v4479 = vpop.f32.mrb[0].mxu0
    %v4480 = vpop.f32.mrb[0].mxu0
    %v4481 = vadd.f32 0.0, %v4480
    %v4482 = vpop.f32.mrb[0].mxu0
    %4483 = vmatprep.mubr.bf16.mxu0 0
    %4484 = vmatmul.mubr.bf16.gmra.mrb[0].mxu0 %v4415
    %v4485 = vpop.f32.mrb[0].mxu0
    %v4486 = vadd.f32 0.0, %v4485
    %v4487 = vpop.f32.mrb[0].mxu0
    %v4488 = vpop.f32.mrb[0].mxu0
    %v4489 = vadd.f32 0.0, %v4488
    %v4490 = vpop.f32.mrb[0].mxu0
    %4491 = vmatprep.mubr.bf16.mxu0 0
    %4492 = vmatmul.mubr.bf16.gmra.mrb[0].mxu0 %v4418
    %v4493 = vpop.f32.mrb[0].mxu0
    %v4494 = vadd.f32 0.0, %v4493
    %v4495 = vpop.f32.mrb[0].mxu0
    %v4496 = vpop.f32.mrb[0].mxu0
    %v4497 = vadd.f32 0.0, %v4496
    %v4498 = vpop.f32.mrb[0].mxu0
    %4499 = vmatprep.mubr.bf16.mxu0 0
    %4500 = vmatmul.mubr.bf16.gmra.mrb[0].mxu0 %v4421
    %v4501 = vpop.f32.mrb[0].mxu0
    %v4502 = vadd.f32 0.0, %v4501
    %v4503 = vpop.f32.mrb[0].mxu0
    %v4504 = vpop.f32.mrb[0].mxu0
    %v4505 = vadd.f32 0.0, %v4504
    %v4506 = vpop.f32.mrb[0].mxu0
    %4507 = vmatprep.mubr.bf16.mxu0 0
    %4508 = vmatmul.mubr.bf16.gmra.mrb[0].mxu0 %v4424
    %v4509 = vpop.f32.mrb[0].mxu0
    %v4510 = vadd.f32 0.0, %v4509
    %v4511 = vpop.f32.mrb[0].mxu0
    %v4512 = vpop.f32.mrb[0].mxu0
    %v4513 = vadd.f32 0.0, %v4512
    %v4514 = vpop.f32.mrb[0].mxu0
    %4515 = vmatprep.mubr.bf16.mxu0 0
    %4516 = vmatmul.mubr.bf16.gmra.mrb[0].mxu0 %v4427
    %v4517 = vpop.f32.mrb[0].mxu0
    %v4518 = vadd.f32 0.0, %v4517
    %v4519 = vpop.f32.mrb[0].mxu0
    %v4520 = vpop.f32.mrb[0].mxu0
    %v4521 = vadd.f32 0.0, %v4520
    %v4522 = vpop.f32.mrb[0].mxu0
    %4523 = vmatprep.mubr.bf16.mxu0 0
    %4524 = vmatmul.mubr.bf16.gmra.mrb[0].mxu0 %v4430
    %v4525 = vpop.f32.mrb[0].mxu0
    %v4526 = vadd.f32 0.0, %v4525
    %v4527 = vpop.f32.mrb[0].mxu0
    %v4528 = vpop.f32.mrb[0].mxu0
    %v4529 = vadd.f32 0.0, %v4528
    %v4530 = vpop.f32.mrb[0].mxu0
    %4531 = vdwg.mxu0
    %v4532 = vadd.f32 %v4371, %v4470
    %v4533 = vadd.f32 %v4372, %v4473
    %v4534 = vadd.f32 %v4373, %v4478
    %v4535 = vadd.f32 %v4374, %v4481
    %v4536 = vadd.f32 %v4375, %v4486
    %v4537 = vadd.f32 %v4376, %v4489
    %v4538 = vadd.f32 %v4377, %v4494
    %v4539 = vadd.f32 %v4378, %v4497
    %v4540 = vadd.f32 %v4379, %v4502
    %v4541 = vadd.f32 %v4380, %v4505
    %v4542 = vadd.f32 %v4381, %v4510
    %v4543 = vadd.f32 %v4382, %v4513
    %v4544 = vadd.f32 %v4383, %v4518
    %v4545 = vadd.f32 %v4384, %v4521
    %v4546 = vadd.f32 %v4385, %v4526
    %v4547 = vadd.f32 %v4386, %v4529
    %s4548 = scalar_lea.vmem %s8, 60
    %v4549 = vld [vmem:[%s4548] sm:$0xf]
    %v4550 = vld [vmem:[%s4548 + $0x4] sm:$0xf]
    %v4551 = vld [vmem:[%s4548 + $0x8] sm:$0x3]
    %v4552 = vpack.c.bf16 %v1577, %v1575
    %v4553 = vpack.c.bf16 %v1581, %v1579
    %v4554 = vpack.c.bf16 %v1585, %v1583
    %v4555 = vpack.c.bf16 %v1743, %v1587
    %v4556 = vpack.c.bf16 %v1591, %v1589
    %v4557 = vpack.c.bf16 %v1595, %v1593
    %v4558 = vpack.c.bf16 %v1599, %v1597
    %v4559 = vpack.c.bf16 %v1745, %v1601
    %v4563 = vunpack.c.l.b16 %v4549
    %v4564 = vunpack.c.l.b16 %v4550
    %v4565 = vunpack.c.l.b16 %v4551
    %v4566 = vpack.c.b16 %v4564, %v4563
    %v4567 = vpack.c.b16 %v4565, %v4565
    %v4570 = vsel %vm806, %v4552, 0
    %v4573 = vsel %vm806, %v4553, 0
    %v4576 = vsel %vm806, %v4554, 0
    %v4579 = vsel %vm806, %v4555, 0
    %v4582 = vsel %vm806, %v4556, 0
    %v4585 = vsel %vm806, %v4557, 0
    %v4588 = vsel %vm806, %v4558, 0
    %v4591 = vsel %vm806, %v4559, 0
    %v4594 = vsel %vm705, %v4567, 0
    %4596 = vmatprep.subr.bf16.mxu0 0
    %4597 = vmatpush1.bf16.msra.mxu0 %v4566
    %4598 = vmatprep.subr.bf16.mxu0 0
    %4599 = vmatpush1.bf16.msra.mxu0 %v4594
    %4600 = vmatprep.subr.bf16.mxu0 0
    %4601 = vmatpush1.bf16.msra.mxu0 0
    %4602 = vmatprep.subr.bf16.mxu0 0
    %4603 = vmatpush1.bf16.msra.mxu0 0
    %4604 = vmatprep.subr.bf16.mxu0 0
    %4605 = vmatpush1.bf16.msra.mxu0 0
    %4606 = vmatprep.subr.bf16.mxu0 0
    %4607 = vmatpush1.bf16.msra.mxu0 0
    %4608 = vmatprep.subr.bf16.mxu0 0
    %4609 = vmatpush1.bf16.msra.mxu0 0
    %4610 = vmatprep.subr.bf16.mxu0 0
    %4611 = vmatpush1.bf16.msra.mxu0 0
    %4612 = vmatprep.subr.bf16.mxu0 0
    %4613 = vmatpush1.bf16.msra.mxu0 0
    %4614 = vmatprep.subr.bf16.mxu0 0
    %4615 = vmatpush1.bf16.msra.mxu0 0
    %4616 = vmatprep.subr.bf16.mxu0 0
    %4617 = vmatpush1.bf16.msra.mxu0 0
    %4618 = vmatprep.subr.bf16.mxu0 0
    %4619 = vmatpush1.bf16.msra.mxu0 0
    %4620 = vmatprep.subr.bf16.mxu0 0
    %4621 = vmatpush1.bf16.msra.mxu0 0
    %4622 = vmatprep.subr.bf16.mxu0 0
    %4623 = vmatpush1.bf16.msra.mxu0 0
    %4624 = vmatprep.subr.bf16.mxu0 0
    %4625 = vmatpush1.bf16.msra.mxu0 0
    %4626 = vmatprep.subr.bf16.mxu0 0
    %4627 = vmatpush1.bf16.msra.mxu0 0
    %4628 = vmatprep.mubr.bf16.mxu0 0
    %4629 = vmatmul.mubr.bf16.gmra.mrb[0].mxu0 %v4570
    %v4630 = vpop.f32.mrb[0].mxu0
    %v4631 = vadd.f32 0.0, %v4630
    %v4632 = vpop.f32.mrb[0].mxu0
    %v4633 = vpop.f32.mrb[0].mxu0
    %v4634 = vadd.f32 0.0, %v4633
    %v4635 = vpop.f32.mrb[0].mxu0
    %4636 = vmatprep.mubr.bf16.mxu0 0
    %4637 = vmatmul.mubr.bf16.gmra.mrb[0].mxu0 %v4573
    %v4638 = vpop.f32.mrb[0].mxu0
    %v4639 = vadd.f32 0.0, %v4638
    %v4640 = vpop.f32.mrb[0].mxu0
    %v4641 = vpop.f32.mrb[0].mxu0
    %v4642 = vadd.f32 0.0, %v4641
    %v4643 = vpop.f32.mrb[0].mxu0
    %4644 = vmatprep.mubr.bf16.mxu0 0
    %4645 = vmatmul.mubr.bf16.gmra.mrb[0].mxu0 %v4576
    %v4646 = vpop.f32.mrb[0].mxu0
    %v4647 = vadd.f32 0.0, %v4646
    %v4648 = vpop.f32.mrb[0].mxu0
    %v4649 = vpop.f32.mrb[0].mxu0
    %v4650 = vadd.f32 0.0, %v4649
    %v4651 = vpop.f32.mrb[0].mxu0
    %4652 = vmatprep.mubr.bf16.mxu0 0
    %4653 = vmatmul.mubr.bf16.gmra.mrb[0].mxu0 %v4579
    %v4654 = vpop.f32.mrb[0].mxu0
    %v4655 = vadd.f32 0.0, %v4654
    %v4656 = vpop.f32.mrb[0].mxu0
    %v4657 = vpop.f32.mrb[0].mxu0
    %v4658 = vadd.f32 0.0, %v4657
    %v4659 = vpop.f32.mrb[0].mxu0
    %4660 = vmatprep.mubr.bf16.mxu0 0
    %4661 = vmatmul.mubr.bf16.gmra.mrb[0].mxu0 %v4582
    %v4662 = vpop.f32.mrb[0].mxu0
    %v4663 = vadd.f32 0.0, %v4662
    %v4664 = vpop.f32.mrb[0].mxu0
    %v4665 = vpop.f32.mrb[0].mxu0
    %v4666 = vadd.f32 0.0, %v4665
    %v4667 = vpop.f32.mrb[0].mxu0
    %4668 = vmatprep.mubr.bf16.mxu0 0
    %4669 = vmatmul.mubr.bf16.gmra.mrb[0].mxu0 %v4585
    %v4670 = vpop.f32.mrb[0].mxu0
    %v4671 = vadd.f32 0.0, %v4670
    %v4672 = vpop.f32.mrb[0].mxu0
    %v4673 = vpop.f32.mrb[0].mxu0
    %v4674 = vadd.f32 0.0, %v4673
    %v4675 = vpop.f32.mrb[0].mxu0
    %4676 = vmatprep.mubr.bf16.mxu0 0
    %4677 = vmatmul.mubr.bf16.gmra.mrb[0].mxu0 %v4588
    %v4678 = vpop.f32.mrb[0].mxu0
    %v4679 = vadd.f32 0.0, %v4678
    %v4680 = vpop.f32.mrb[0].mxu0
    %v4681 = vpop.f32.mrb[0].mxu0
    %v4682 = vadd.f32 0.0, %v4681
    %v4683 = vpop.f32.mrb[0].mxu0
    %4684 = vmatprep.mubr.bf16.mxu0 0
    %4685 = vmatmul.mubr.bf16.gmra.mrb[0].mxu0 %v4591
    %v4686 = vpop.f32.mrb[0].mxu0
    %v4687 = vadd.f32 0.0, %v4686
    %v4688 = vpop.f32.mrb[0].mxu0
    %v4689 = vpop.f32.mrb[0].mxu0
    %v4690 = vadd.f32 0.0, %v4689
    %v4691 = vpop.f32.mrb[0].mxu0
    %4692 = vdwg.mxu0
    %v4693 = vadd.f32 %v4532, %v4631
    %v4694 = vadd.f32 %v4533, %v4634
    %v4695 = vadd.f32 %v4534, %v4639
    %v4696 = vadd.f32 %v4535, %v4642
    %v4697 = vadd.f32 %v4536, %v4647
    %v4698 = vadd.f32 %v4537, %v4650
    %v4699 = vadd.f32 %v4538, %v4655
    %v4700 = vadd.f32 %v4539, %v4658
    %v4701 = vadd.f32 %v4540, %v4663
    %v4702 = vadd.f32 %v4541, %v4666
    %v4703 = vadd.f32 %v4542, %v4671
    %v4704 = vadd.f32 %v4543, %v4674
    %v4705 = vadd.f32 %v4544, %v4679
    %v4706 = vadd.f32 %v4545, %v4682
    %v4707 = vadd.f32 %v4546, %v4687
    %v4708 = vadd.f32 %v4547, %v4690
    %s4709 = scalar_lea.vmem %s8, 72
    %v4710 = vld [vmem:[%s4709] sm:$0xf]
    %v4711 = vld [vmem:[%s4709 + $0x4] sm:$0xf]
    %v4712 = vld [vmem:[%s4709 + $0x8] sm:$0x3]
    %v4713 = vpack.c.bf16 %v73, %v1657
    %v4714 = vpack.c.bf16 %v73, %v1659
    %v4718 = vunpack.c.l.b16 %v4710
    %v4719 = vunpack.c.l.b16 %v4711
    %v4720 = vunpack.c.l.b16 %v4712
    %v4721 = vpack.c.b16 %v4719, %v4718
    %v4722 = vpack.c.b16 %v4720, %v4720
    %v4725 = vsel %vm806, %v4713, 0
    %v4728 = vsel %vm806, %v4714, 0
    %v4731 = vsel %vm705, %v4722, 0
    %4733 = vmatprep.subr.bf16.mxu0 0
    %4734 = vmatpush1.bf16.msra.mxu0 %v4721
    %4735 = vmatprep.subr.bf16.mxu0 0
    %4736 = vmatpush1.bf16.msra.mxu0 %v4731
    %4737 = vmatprep.subr.bf16.mxu0 0
    %4738 = vmatpush1.bf16.msra.mxu0 0
    %4739 = vmatprep.subr.bf16.mxu0 0
    %4740 = vmatpush1.bf16.msra.mxu0 0
    %4741 = vmatprep.subr.bf16.mxu0 0
    %4742 = vmatpush1.bf16.msra.mxu0 0
    %4743 = vmatprep.subr.bf16.mxu0 0
    %4744 = vmatpush1.bf16.msra.mxu0 0
    %4745 = vmatprep.subr.bf16.mxu0 0
    %4746 = vmatpush1.bf16.msra.mxu0 0
    %4747 = vmatprep.subr.bf16.mxu0 0
    %4748 = vmatpush1.bf16.msra.mxu0 0
    %4749 = vmatprep.subr.bf16.mxu0 0
    %4750 = vmatpush1.bf16.msra.mxu0 0
    %4751 = vmatprep.subr.bf16.mxu0 0
    %4752 = vmatpush1.bf16.msra.mxu0 0
    %4753 = vmatprep.subr.bf16.mxu0 0
    %4754 = vmatpush1.bf16.msra.mxu0 0
    %4755 = vmatprep.subr.bf16.mxu0 0
    %4756 = vmatpush1.bf16.msra.mxu0 0
    %4757 = vmatprep.subr.bf16.mxu0 0
    %4758 = vmatpush1.bf16.msra.mxu0 0
    %4759 = vmatprep.subr.bf16.mxu0 0
    %4760 = vmatpush1.bf16.msra.mxu0 0
    %4761 = vmatprep.subr.bf16.mxu0 0
    %4762 = vmatpush1.bf16.msra.mxu0 0
    %4763 = vmatprep.subr.bf16.mxu0 0
    %4764 = vmatpush1.bf16.msra.mxu0 0
    %4765 = vmatprep.mubr.bf16.mxu0 0
    %4766 = vmatmul.mubr.bf16.gmra.mrb[0].mxu0 %v3768
    %v4767 = vpop.f32.mrb[0].mxu0
    %v4768 = vadd.f32 0.0, %v4767
    %v4769 = vpop.f32.mrb[0].mxu0
    %v4770 = vpop.f32.mrb[0].mxu0
    %v4771 = vadd.f32 0.0, %v4770
    %v4772 = vpop.f32.mrb[0].mxu0
    %4773 = vmatprep.mubr.bf16.mxu0 0
    %4774 = vmatmul.mubr.bf16.gmra.mrb[0].mxu0 %v3771
    %v4775 = vpop.f32.mrb[0].mxu0
    %v4776 = vadd.f32 0.0, %v4775
    %v4777 = vpop.f32.mrb[0].mxu0
    %v4778 = vpop.f32.mrb[0].mxu0
    %v4779 = vadd.f32 0.0, %v4778
    %v4780 = vpop.f32.mrb[0].mxu0
    %4781 = vmatprep.mubr.bf16.mxu0 0
    %4782 = vmatmul.mubr.bf16.gmra.mrb[0].mxu0 %v3774
    %v4783 = vpop.f32.mrb[0].mxu0
    %v4784 = vadd.f32 0.0, %v4783
    %v4785 = vpop.f32.mrb[0].mxu0
    %v4786 = vpop.f32.mrb[0].mxu0
    %v4787 = vadd.f32 0.0, %v4786
    %v4788 = vpop.f32.mrb[0].mxu0
    %4789 = vmatprep.mubr.bf16.mxu0 0
    %4790 = vmatmul.mubr.bf16.gmra.mrb[0].mxu0 %v4725
    %v4791 = vpop.f32.mrb[0].mxu0
    %v4792 = vadd.f32 0.0, %v4791
    %v4793 = vpop.f32.mrb[0].mxu0
    %v4794 = vpop.f32.mrb[0].mxu0
    %v4795 = vadd.f32 0.0, %v4794
    %v4796 = vpop.f32.mrb[0].mxu0
    %4797 = vmatprep.mubr.bf16.mxu0 0
    %4798 = vmatmul.mubr.bf16.gmra.mrb[0].mxu0 %v3780
    %v4799 = vpop.f32.mrb[0].mxu0
    %v4800 = vadd.f32 0.0, %v4799
    %v4801 = vpop.f32.mrb[0].mxu0
    %v4802 = vpop.f32.mrb[0].mxu0
    %v4803 = vadd.f32 0.0, %v4802
    %v4804 = vpop.f32.mrb[0].mxu0
    %4805 = vmatprep.mubr.bf16.mxu0 0
    %4806 = vmatmul.mubr.bf16.gmra.mrb[0].mxu0 %v3783
    %v4807 = vpop.f32.mrb[0].mxu0
    %v4808 = vadd.f32 0.0, %v4807
    %v4809 = vpop.f32.mrb[0].mxu0
    %v4810 = vpop.f32.mrb[0].mxu0
    %v4811 = vadd.f32 0.0, %v4810
    %v4812 = vpop.f32.mrb[0].mxu0
    %4813 = vmatprep.mubr.bf16.mxu0 0
    %4814 = vmatmul.mubr.bf16.gmra.mrb[0].mxu0 %v3786
    %v4815 = vpop.f32.mrb[0].mxu0
    %v4816 = vadd.f32 0.0, %v4815
    %v4817 = vpop.f32.mrb[0].mxu0
    %v4818 = vpop.f32.mrb[0].mxu0
    %v4819 = vadd.f32 0.0, %v4818
    %v4820 = vpop.f32.mrb[0].mxu0
    %4821 = vmatprep.mubr.bf16.mxu0 0
    %4822 = vmatmul.mubr.bf16.gmra.mrb[0].mxu0 %v4728
    %v4823 = vpop.f32.mrb[0].mxu0
    %v4824 = vadd.f32 0.0, %v4823
    %v4825 = vpop.f32.mrb[0].mxu0
    %v4826 = vpop.f32.mrb[0].mxu0
    %v4827 = vadd.f32 0.0, %v4826
    %v4828 = vpop.f32.mrb[0].mxu0
    %4829 = vdwg.mxu0
    %v4830 = vadd.f32 %v4693, %v4768
    %v4831 = vadd.f32 %v4694, %v4771
    %v4832 = vadd.f32 %v4695, %v4776
    %v4833 = vadd.f32 %v4696, %v4779
    %v4834 = vadd.f32 %v4697, %v4784
    %v4835 = vadd.f32 %v4698, %v4787
    %v4836 = vadd.f32 %v4699, %v4792
    %v4837 = vadd.f32 %v4700, %v4795
    %v4838 = vadd.f32 %v4701, %v4800
    %v4839 = vadd.f32 %v4702, %v4803
    %v4840 = vadd.f32 %v4703, %v4808
    %v4841 = vadd.f32 %v4704, %v4811
    %v4842 = vadd.f32 %v4705, %v4816
    %v4843 = vadd.f32 %v4706, %v4819
    %v4844 = vadd.f32 %v4707, %v4824
    %v4845 = vadd.f32 %v4708, %v4827
    %s4846 = scalar_lea.vmem %s8, 84
    %v4847 = vld [vmem:[%s4846] sm:$0xf]
    %v4848 = vld [vmem:[%s4846 + $0x4] sm:$0xf]
    %v4849 = vld [vmem:[%s4846 + $0x8] sm:$0x3]
    %v4850 = vpack.c.bf16 0.0, %v956
    %v4851 = vpack.c.bf16 0.0, %v964
    %v4855 = vunpack.c.l.b16 %v4847
    %v4856 = vunpack.c.l.b16 %v4848
    %v4857 = vunpack.c.l.b16 %v4849
    %v4858 = vpack.c.b16 %v4856, %v4855
    %v4859 = vpack.c.b16 %v4857, %v4857
    %v4862 = vsel %vm806, %v4850, 0
    %v4865 = vsel %vm806, %v4851, 0
    %v4868 = vsel %vm705, %v4859, 0
    %4870 = vmatprep.subr.bf16.mxu0 0
    %4871 = vmatpush1.bf16.msra.mxu0 %v4858
    %4872 = vmatprep.subr.bf16.mxu0 0
    %4873 = vmatpush1.bf16.msra.mxu0 %v4868
    %4874 = vmatprep.subr.bf16.mxu0 0
    %4875 = vmatpush1.bf16.msra.mxu0 0
    %4876 = vmatprep.subr.bf16.mxu0 0
    %4877 = vmatpush1.bf16.msra.mxu0 0
    %4878 = vmatprep.subr.bf16.mxu0 0
    %4879 = vmatpush1.bf16.msra.mxu0 0
    %4880 = vmatprep.subr.bf16.mxu0 0
    %4881 = vmatpush1.bf16.msra.mxu0 0
    %4882 = vmatprep.subr.bf16.mxu0 0
    %4883 = vmatpush1.bf16.msra.mxu0 0
    %4884 = vmatprep.subr.bf16.mxu0 0
    %4885 = vmatpush1.bf16.msra.mxu0 0
    %4886 = vmatprep.subr.bf16.mxu0 0
    %4887 = vmatpush1.bf16.msra.mxu0 0
    %4888 = vmatprep.subr.bf16.mxu0 0
    %4889 = vmatpush1.bf16.msra.mxu0 0
    %4890 = vmatprep.subr.bf16.mxu0 0
    %4891 = vmatpush1.bf16.msra.mxu0 0
    %4892 = vmatprep.subr.bf16.mxu0 0
    %4893 = vmatpush1.bf16.msra.mxu0 0
    %4894 = vmatprep.subr.bf16.mxu0 0
    %4895 = vmatpush1.bf16.msra.mxu0 0
    %4896 = vmatprep.subr.bf16.mxu0 0
    %4897 = vmatpush1.bf16.msra.mxu0 0
    %4898 = vmatprep.subr.bf16.mxu0 0
    %4899 = vmatpush1.bf16.msra.mxu0 0
    %4900 = vmatprep.subr.bf16.mxu0 0
    %4901 = vmatpush1.bf16.msra.mxu0 0
    %4902 = vmatprep.mubr.bf16.mxu0 0
    %4903 = vmatmul.mubr.bf16.gmra.mrb[0].mxu0 %v3929
    %v4904 = vpop.f32.mrb[0].mxu0
    %v4905 = vadd.f32 0.0, %v4904
    %v4906 = vpop.f32.mrb[0].mxu0
    %v4907 = vpop.f32.mrb[0].mxu0
    %v4908 = vadd.f32 0.0, %v4907
    %v4909 = vpop.f32.mrb[0].mxu0
    %4910 = vmatprep.mubr.bf16.mxu0 0
    %4911 = vmatmul.mubr.bf16.gmra.mrb[0].mxu0 %v3932
    %v4912 = vpop.f32.mrb[0].mxu0
    %v4913 = vadd.f32 0.0, %v4912
    %v4914 = vpop.f32.mrb[0].mxu0
    %v4915 = vpop.f32.mrb[0].mxu0
    %v4916 = vadd.f32 0.0, %v4915
    %v4917 = vpop.f32.mrb[0].mxu0
    %4918 = vmatprep.mubr.bf16.mxu0 0
    %4919 = vmatmul.mubr.bf16.gmra.mrb[0].mxu0 %v3935
    %v4920 = vpop.f32.mrb[0].mxu0
    %v4921 = vadd.f32 0.0, %v4920
    %v4922 = vpop.f32.mrb[0].mxu0
    %v4923 = vpop.f32.mrb[0].mxu0
    %v4924 = vadd.f32 0.0, %v4923
    %v4925 = vpop.f32.mrb[0].mxu0
    %4926 = vmatprep.mubr.bf16.mxu0 0
    %4927 = vmatmul.mubr.bf16.gmra.mrb[0].mxu0 %v4862
    %v4928 = vpop.f32.mrb[0].mxu0
    %v4929 = vadd.f32 0.0, %v4928
    %v4930 = vpop.f32.mrb[0].mxu0
    %v4931 = vpop.f32.mrb[0].mxu0
    %v4932 = vadd.f32 0.0, %v4931
    %v4933 = vpop.f32.mrb[0].mxu0
    %4934 = vmatprep.mubr.bf16.mxu0 0
    %4935 = vmatmul.mubr.bf16.gmra.mrb[0].mxu0 %v3941
    %v4936 = vpop.f32.mrb[0].mxu0
    %v4937 = vadd.f32 0.0, %v4936
    %v4938 = vpop.f32.mrb[0].mxu0
    %v4939 = vpop.f32.mrb[0].mxu0
    %v4940 = vadd.f32 0.0, %v4939
    %v4941 = vpop.f32.mrb[0].mxu0
    %4942 = vmatprep.mubr.bf16.mxu0 0
    %4943 = vmatmul.mubr.bf16.gmra.mrb[0].mxu0 %v3944
    %v4944 = vpop.f32.mrb[0].mxu0
    %v4945 = vadd.f32 0.0, %v4944
    %v4946 = vpop.f32.mrb[0].mxu0
    %v4947 = vpop.f32.mrb[0].mxu0
    %v4948 = vadd.f32 0.0, %v4947
    %v4949 = vpop.f32.mrb[0].mxu0
    %4950 = vmatprep.mubr.bf16.mxu0 0
    %4951 = vmatmul.mubr.bf16.gmra.mrb[0].mxu0 %v3947
    %v4952 = vpop.f32.mrb[0].mxu0
    %v4953 = vadd.f32 0.0, %v4952
    %v4954 = vpop.f32.mrb[0].mxu0
    %v4955 = vpop.f32.mrb[0].mxu0
    %v4956 = vadd.f32 0.0, %v4955
    %v4957 = vpop.f32.mrb[0].mxu0
    %4958 = vmatprep.mubr.bf16.mxu0 0
    %4959 = vmatmul.mubr.bf16.gmra.mrb[0].mxu0 %v4865
    %v4960 = vpop.f32.mrb[0].mxu0
    %v4961 = vadd.f32 0.0, %v4960
    %v4962 = vpop.f32.mrb[0].mxu0
    %v4963 = vpop.f32.mrb[0].mxu0
    %v4964 = vadd.f32 0.0, %v4963
    %v4965 = vpop.f32.mrb[0].mxu0
    %4966 = vdwg.mxu0
    %v4967 = vadd.f32 %v4830, %v4905
    %v4968 = vadd.f32 %v4831, %v4908
    %v4969 = vadd.f32 %v4832, %v4913
    %v4970 = vadd.f32 %v4833, %v4916
    %v4971 = vadd.f32 %v4834, %v4921
    %v4972 = vadd.f32 %v4835, %v4924
    %v4973 = vadd.f32 %v4836, %v4929
    %v4974 = vadd.f32 %v4837, %v4932
    %v4975 = vadd.f32 %v4838, %v4937
    %v4976 = vadd.f32 %v4839, %v4940
    %v4977 = vadd.f32 %v4840, %v4945
    %v4978 = vadd.f32 %v4841, %v4948
    %v4979 = vadd.f32 %v4842, %v4953
    %v4980 = vadd.f32 %v4843, %v4956
    %v4981 = vadd.f32 %v4844, %v4961
    %v4982 = vadd.f32 %v4845, %v4964
    %s4983 = scalar_lea.vmem %s8, 96
    %v4984 = vld [vmem:[%s4983] sm:$0xf]
    %v4985 = vld [vmem:[%s4983 + $0x4] sm:$0xf]
    %v4986 = vld [vmem:[%s4983 + $0x8] sm:$0x3]
    %v4987 = vpack.c.bf16 %v179, %v1743
    %v4988 = vpack.c.bf16 %v179, %v1745
    %v4992 = vunpack.c.l.b16 %v4984
    %v4993 = vunpack.c.l.b16 %v4985
    %v4994 = vunpack.c.l.b16 %v4986
    %v4995 = vpack.c.b16 %v4993, %v4992
    %v4996 = vpack.c.b16 %v4994, %v4994
    %v4999 = vsel %vm806, %v4987, 0
    %v5002 = vsel %vm806, %v4988, 0
    %v5005 = vsel %vm705, %v4996, 0
    %5007 = vmatprep.subr.bf16.mxu0 0
    %5008 = vmatpush1.bf16.msra.mxu0 %v4995
    %5009 = vmatprep.subr.bf16.mxu0 0
    %5010 = vmatpush1.bf16.msra.mxu0 %v5005
    %5011 = vmatprep.subr.bf16.mxu0 0
    %5012 = vmatpush1.bf16.msra.mxu0 0
    %5013 = vmatprep.subr.bf16.mxu0 0
    %5014 = vmatpush1.bf16.msra.mxu0 0
    %5015 = vmatprep.subr.bf16.mxu0 0
    %5016 = vmatpush1.bf16.msra.mxu0 0
    %5017 = vmatprep.subr.bf16.mxu0 0
    %5018 = vmatpush1.bf16.msra.mxu0 0
    %5019 = vmatprep.subr.bf16.mxu0 0
    %5020 = vmatpush1.bf16.msra.mxu0 0
    %5021 = vmatprep.subr.bf16.mxu0 0
    %5022 = vmatpush1.bf16.msra.mxu0 0
    %5023 = vmatprep.subr.bf16.mxu0 0
    %5024 = vmatpush1.bf16.msra.mxu0 0
    %5025 = vmatprep.subr.bf16.mxu0 0
    %5026 = vmatpush1.bf16.msra.mxu0 0
    %5027 = vmatprep.subr.bf16.mxu0 0
    %5028 = vmatpush1.bf16.msra.mxu0 0
    %5029 = vmatprep.subr.bf16.mxu0 0
    %5030 = vmatpush1.bf16.msra.mxu0 0
    %5031 = vmatprep.subr.bf16.mxu0 0
    %5032 = vmatpush1.bf16.msra.mxu0 0
    %5033 = vmatprep.subr.bf16.mxu0 0
    %5034 = vmatpush1.bf16.msra.mxu0 0
    %5035 = vmatprep.subr.bf16.mxu0 0
    %5036 = vmatpush1.bf16.msra.mxu0 0
    %5037 = vmatprep.subr.bf16.mxu0 0
    %5038 = vmatpush1.bf16.msra.mxu0 0
    %5039 = vmatprep.mubr.bf16.mxu0 0
    %5040 = vmatmul.mubr.bf16.gmra.mrb[0].mxu0 %v4090
    %v5041 = vpop.f32.mrb[0].mxu0
    %v5042 = vadd.f32 0.0, %v5041
    %v5043 = vpop.f32.mrb[0].mxu0
    %v5044 = vpop.f32.mrb[0].mxu0
    %v5045 = vadd.f32 0.0, %v5044
    %v5046 = vpop.f32.mrb[0].mxu0
    %5047 = vmatprep.mubr.bf16.mxu0 0
    %5048 = vmatmul.mubr.bf16.gmra.mrb[0].mxu0 %v4093
    %v5049 = vpop.f32.mrb[0].mxu0
    %v5050 = vadd.f32 0.0, %v5049
    %v5051 = vpop.f32.mrb[0].mxu0
    %v5052 = vpop.f32.mrb[0].mxu0
    %v5053 = vadd.f32 0.0, %v5052
    %v5054 = vpop.f32.mrb[0].mxu0
    %5055 = vmatprep.mubr.bf16.mxu0 0
    %5056 = vmatmul.mubr.bf16.gmra.mrb[0].mxu0 %v4096
    %v5057 = vpop.f32.mrb[0].mxu0
    %v5058 = vadd.f32 0.0, %v5057
    %v5059 = vpop.f32.mrb[0].mxu0
    %v5060 = vpop.f32.mrb[0].mxu0
    %v5061 = vadd.f32 0.0, %v5060
    %v5062 = vpop.f32.mrb[0].mxu0
    %5063 = vmatprep.mubr.bf16.mxu0 0
    %5064 = vmatmul.mubr.bf16.gmra.mrb[0].mxu0 %v4999
    %v5065 = vpop.f32.mrb[0].mxu0
    %v5066 = vadd.f32 0.0, %v5065
    %v5067 = vpop.f32.mrb[0].mxu0
    %v5068 = vpop.f32.mrb[0].mxu0
    %v5069 = vadd.f32 0.0, %v5068
    %v5070 = vpop.f32.mrb[0].mxu0
    %5071 = vmatprep.mubr.bf16.mxu0 0
    %5072 = vmatmul.mubr.bf16.gmra.mrb[0].mxu0 %v4102
    %v5073 = vpop.f32.mrb[0].mxu0
    %v5074 = vadd.f32 0.0, %v5073
    %v5075 = vpop.f32.mrb[0].mxu0
    %v5076 = vpop.f32.mrb[0].mxu0
    %v5077 = vadd.f32 0.0, %v5076
    %v5078 = vpop.f32.mrb[0].mxu0
    %5079 = vmatprep.mubr.bf16.mxu0 0
    %5080 = vmatmul.mubr.bf16.gmra.mrb[0].mxu0 %v4105
    %v5081 = vpop.f32.mrb[0].mxu0
    %v5082 = vadd.f32 0.0, %v5081
    %v5083 = vpop.f32.mrb[0].mxu0
    %v5084 = vpop.f32.mrb[0].mxu0
    %v5085 = vadd.f32 0.0, %v5084
    %v5086 = vpop.f32.mrb[0].mxu0
    %5087 = vmatprep.mubr.bf16.mxu0 0
    %5088 = vmatmul.mubr.bf16.gmra.mrb[0].mxu0 %v4108
    %v5089 = vpop.f32.mrb[0].mxu0
    %v5090 = vadd.f32 0.0, %v5089
    %v5091 = vpop.f32.mrb[0].mxu0
    %v5092 = vpop.f32.mrb[0].mxu0
    %v5093 = vadd.f32 0.0, %v5092
    %v5094 = vpop.f32.mrb[0].mxu0
    %5095 = vmatprep.mubr.bf16.mxu0 0
    %5096 = vmatmul.mubr.bf16.gmra.mrb[0].mxu0 %v5002
    %v5097 = vpop.f32.mrb[0].mxu0
    %v5098 = vadd.f32 0.0, %v5097
    %v5099 = vpop.f32.mrb[0].mxu0
    %v5100 = vpop.f32.mrb[0].mxu0
    %v5101 = vadd.f32 0.0, %v5100
    %v5102 = vpop.f32.mrb[0].mxu0
    %5103 = vdwg.mxu0
    %v5104 = vadd.f32 %v4967, %v5042
    %v5105 = vadd.f32 %v4968, %v5045
    %v5106 = vadd.f32 %v4969, %v5050
    %v5107 = vadd.f32 %v4970, %v5053
    %v5108 = vadd.f32 %v4971, %v5058
    %v5109 = vadd.f32 %v4972, %v5061
    %v5110 = vadd.f32 %v4973, %v5066
    %v5111 = vadd.f32 %v4974, %v5069
    %v5112 = vadd.f32 %v4975, %v5074
    %v5113 = vadd.f32 %v4976, %v5077
    %v5114 = vadd.f32 %v4977, %v5082
    %v5115 = vadd.f32 %v4978, %v5085
    %v5116 = vadd.f32 %v4979, %v5090
    %v5117 = vadd.f32 %v4980, %v5093
    %v5118 = vadd.f32 %v4981, %v5098
    %v5119 = vadd.f32 %v4982, %v5101
    %v5134 = vrot.slane %v2483, 7
    %v5135 = vsel %vm71, %v72, %v5134
    %v5136 = vrot.slane %v2484, 7
    %v5137 = vsel %vm71, %v72, %v5136
    %v5138 = vrot.slane %v2485, 7
    %v5139 = vsel %vm71, %v72, %v5138
    %v5140 = vrot.slane %v2486, 7
    %v5141 = vsel %vm71, %v72, %v5140
    %v5142 = vrot.slane %v2487, 7
    %v5143 = vsel %vm71, %v72, %v5142
    %v5144 = vrot.slane %v2488, 7
    %v5145 = vsel %vm71, %v72, %v5144
    %v5146 = vrot.slane %v2489, 7
    %v5147 = vsel %vm71, %v72, %v5146
    %v5148 = vrot.slane %v2491, 7
    %v5149 = vsel %vm71, %v72, %v5148
    %v5150 = vrot.slane %v2492, 7
    %v5151 = vsel %vm71, %v72, %v5150
    %v5152 = vrot.slane %v2493, 7
    %v5153 = vsel %vm71, %v72, %v5152
    %v5154 = vrot.slane %v2494, 7
    %v5155 = vsel %vm71, %v72, %v5154
    %v5156 = vrot.slane %v2495, 7
    %v5157 = vsel %vm71, %v72, %v5156
    %v5158 = vrot.slane %v2496, 7
    %v5159 = vsel %vm71, %v72, %v5158
    %v5160 = vrot.slane %v2497, 7
    %v5161 = vsel %vm71, %v72, %v5160
    %v5176 = vld [vmem:[%s9] sm:$0xf]
    %v5177 = vld [vmem:[%s9 + $0x4] sm:$0xf]
    %v5178 = vpack.c.bf16 %v5135, %v73
    %v5179 = vpack.c.bf16 %v5139, %v5137
    %v5180 = vpack.c.bf16 %v5143, %v5141
    %v5181 = vpack.c.bf16 %v5147, %v5145
    %v5182 = vpack.c.bf16 %v5149, %v73
    %v5183 = vpack.c.bf16 %v5153, %v5151
    %v5184 = vpack.c.bf16 %v5157, %v5155
    %v5185 = vpack.c.bf16 %v5161, %v5159
    %v5188 = vunpack.c.l.b16 %v5176
    %v5189 = vunpack.c.l.b16 %v5177
    %v5190 = vpack.c.b16 %v5189, %v5188
    %v5193 = vsel %vm2340, %v5178, 0
    %v5196 = vsel %vm2340, %v5179, 0
    %v5199 = vsel %vm2340, %v5180, 0
    %v5202 = vsel %vm2340, %v5181, 0
    %v5205 = vsel %vm2340, %v5182, 0
    %v5208 = vsel %vm2340, %v5183, 0
    %v5211 = vsel %vm2340, %v5184, 0
    %v5214 = vsel %vm2340, %v5185, 0
    %5216 = vmatprep.subr.bf16.mxu0 0
    %5217 = vmatpush1.bf16.msra.mxu0 %v5190
    %5218 = vmatprep.subr.bf16.mxu0 0
    %5219 = vmatpush1.bf16.msra.mxu0 0
    %5220 = vmatprep.subr.bf16.mxu0 0
    %5221 = vmatpush1.bf16.msra.mxu0 0
    %5222 = vmatprep.subr.bf16.mxu0 0
    %5223 = vmatpush1.bf16.msra.mxu0 0
    %5224 = vmatprep.subr.bf16.mxu0 0
    %5225 = vmatpush1.bf16.msra.mxu0 0
    %5226 = vmatprep.subr.bf16.mxu0 0
    %5227 = vmatpush1.bf16.msra.mxu0 0
    %5228 = vmatprep.subr.bf16.mxu0 0
    %5229 = vmatpush1.bf16.msra.mxu0 0
    %5230 = vmatprep.subr.bf16.mxu0 0
    %5231 = vmatpush1.bf16.msra.mxu0 0
    %5232 = vmatprep.subr.bf16.mxu0 0
    %5233 = vmatpush1.bf16.msra.mxu0 0
    %5234 = vmatprep.subr.bf16.mxu0 0
    %5235 = vmatpush1.bf16.msra.mxu0 0
    %5236 = vmatprep.subr.bf16.mxu0 0
    %5237 = vmatpush1.bf16.msra.mxu0 0
    %5238 = vmatprep.subr.bf16.mxu0 0
    %5239 = vmatpush1.bf16.msra.mxu0 0
    %5240 = vmatprep.subr.bf16.mxu0 0
    %5241 = vmatpush1.bf16.msra.mxu0 0
    %5242 = vmatprep.subr.bf16.mxu0 0
    %5243 = vmatpush1.bf16.msra.mxu0 0
    %5244 = vmatprep.subr.bf16.mxu0 0
    %5245 = vmatpush1.bf16.msra.mxu0 0
    %5246 = vmatprep.subr.bf16.mxu0 0
    %5247 = vmatpush1.bf16.msra.mxu0 0
    %5248 = vmatprep.mubr.bf16.mxu0 0
    %5249 = vmatmul.mubr.bf16.gmra.mrb[0].mxu0 %v5193
    %v5250 = vpop.f32.mrb[0].mxu0
    %v5251 = vadd.f32 0.0, %v5250
    %v5252 = vpop.f32.mrb[0].mxu0
    %v5253 = vpop.f32.mrb[0].mxu0
    %v5254 = vadd.f32 0.0, %v5253
    %v5255 = vpop.f32.mrb[0].mxu0
    %5256 = vmatprep.mubr.bf16.mxu0 0
    %5257 = vmatmul.mubr.bf16.gmra.mrb[0].mxu0 %v5196
    %v5258 = vpop.f32.mrb[0].mxu0
    %v5259 = vadd.f32 0.0, %v5258
    %v5260 = vpop.f32.mrb[0].mxu0
    %v5261 = vpop.f32.mrb[0].mxu0
    %v5262 = vadd.f32 0.0, %v5261
    %v5263 = vpop.f32.mrb[0].mxu0
    %5264 = vmatprep.mubr.bf16.mxu0 0
    %5265 = vmatmul.mubr.bf16.gmra.mrb[0].mxu0 %v5199
    %v5266 = vpop.f32.mrb[0].mxu0
    %v5267 = vadd.f32 0.0, %v5266
    %v5268 = vpop.f32.mrb[0].mxu0
    %v5269 = vpop.f32.mrb[0].mxu0
    %v5270 = vadd.f32 0.0, %v5269
    %v5271 = vpop.f32.mrb[0].mxu0
    %5272 = vmatprep.mubr.bf16.mxu0 0
    %5273 = vmatmul.mubr.bf16.gmra.mrb[0].mxu0 %v5202
    %v5274 = vpop.f32.mrb[0].mxu0
    %v5275 = vadd.f32 0.0, %v5274
    %v5276 = vpop.f32.mrb[0].mxu0
    %v5277 = vpop.f32.mrb[0].mxu0
    %v5278 = vadd.f32 0.0, %v5277
    %v5279 = vpop.f32.mrb[0].mxu0
    %5280 = vmatprep.mubr.bf16.mxu0 0
    %5281 = vmatmul.mubr.bf16.gmra.mrb[0].mxu0 %v5205
    %v5282 = vpop.f32.mrb[0].mxu0
    %v5283 = vadd.f32 0.0, %v5282
    %v5284 = vpop.f32.mrb[0].mxu0
    %v5285 = vpop.f32.mrb[0].mxu0
    %v5286 = vadd.f32 0.0, %v5285
    %v5287 = vpop.f32.mrb[0].mxu0
    %5288 = vmatprep.mubr.bf16.mxu0 0
    %5289 = vmatmul.mubr.bf16.gmra.mrb[0].mxu0 %v5208
    %v5290 = vpop.f32.mrb[0].mxu0
    %v5291 = vadd.f32 0.0, %v5290
    %v5292 = vpop.f32.mrb[0].mxu0
    %v5293 = vpop.f32.mrb[0].mxu0
    %v5294 = vadd.f32 0.0, %v5293
    %v5295 = vpop.f32.mrb[0].mxu0
    %5296 = vmatprep.mubr.bf16.mxu0 0
    %5297 = vmatmul.mubr.bf16.gmra.mrb[0].mxu0 %v5211
    %v5298 = vpop.f32.mrb[0].mxu0
    %v5299 = vadd.f32 0.0, %v5298
    %v5300 = vpop.f32.mrb[0].mxu0
    %v5301 = vpop.f32.mrb[0].mxu0
    %v5302 = vadd.f32 0.0, %v5301
    %v5303 = vpop.f32.mrb[0].mxu0
    %5304 = vmatprep.mubr.bf16.mxu0 0
    %5305 = vmatmul.mubr.bf16.gmra.mrb[0].mxu0 %v5214
    %v5306 = vpop.f32.mrb[0].mxu0
    %v5307 = vadd.f32 0.0, %v5306
    %v5308 = vpop.f32.mrb[0].mxu0
    %v5309 = vpop.f32.mrb[0].mxu0
    %v5310 = vadd.f32 0.0, %v5309
    %v5311 = vpop.f32.mrb[0].mxu0
    %5312 = vdwg.mxu0
    %v5313 = vadd.f32 %v5104, %v5251
    %v5314 = vadd.f32 %v5105, %v5254
    %v5315 = vadd.f32 %v5106, %v5259
    %v5316 = vadd.f32 %v5107, %v5262
    %v5317 = vadd.f32 %v5108, %v5267
    %v5318 = vadd.f32 %v5109, %v5270
    %v5319 = vadd.f32 %v5110, %v5275
    %v5320 = vadd.f32 %v5111, %v5278
    %v5321 = vadd.f32 %v5112, %v5283
    %v5322 = vadd.f32 %v5113, %v5286
    %v5323 = vadd.f32 %v5114, %v5291
    %v5324 = vadd.f32 %v5115, %v5294
    %v5325 = vadd.f32 %v5116, %v5299
    %v5326 = vadd.f32 %v5117, %v5302
    %v5327 = vadd.f32 %v5118, %v5307
    %v5328 = vadd.f32 %v5119, %v5310
    %s5329 = scalar_lea.vmem %s9, 8
    %v5330 = vld [vmem:[%s5329] sm:$0xf]
    %v5331 = vld [vmem:[%s5329 + $0x4] sm:$0xf]
    %v5332 = vpack.c.bf16 %v2483, 0.0
    %v5333 = vpack.c.bf16 %v2485, %v2484
    %v5334 = vpack.c.bf16 %v2487, %v2486
    %v5335 = vpack.c.bf16 %v2489, %v2488
    %v5336 = vpack.c.bf16 %v2491, 0.0
    %v5337 = vpack.c.bf16 %v2493, %v2492
    %v5338 = vpack.c.bf16 %v2495, %v2494
    %v5339 = vpack.c.bf16 %v2497, %v2496
    %v5342 = vunpack.c.l.b16 %v5330
    %v5343 = vunpack.c.l.b16 %v5331
    %v5344 = vpack.c.b16 %v5343, %v5342
    %v5347 = vsel %vm2340, %v5332, 0
    %v5350 = vsel %vm2340, %v5333, 0
    %v5353 = vsel %vm2340, %v5334, 0
    %v5356 = vsel %vm2340, %v5335, 0
    %v5359 = vsel %vm2340, %v5336, 0
    %v5362 = vsel %vm2340, %v5337, 0
    %v5365 = vsel %vm2340, %v5338, 0
    %v5368 = vsel %vm2340, %v5339, 0
    %5370 = vmatprep.subr.bf16.mxu0 0
    %5371 = vmatpush1.bf16.msra.mxu0 %v5344
    %5372 = vmatprep.subr.bf16.mxu0 0
    %5373 = vmatpush1.bf16.msra.mxu0 0
    %5374 = vmatprep.subr.bf16.mxu0 0
    %5375 = vmatpush1.bf16.msra.mxu0 0
    %5376 = vmatprep.subr.bf16.mxu0 0
    %5377 = vmatpush1.bf16.msra.mxu0 0
    %5378 = vmatprep.subr.bf16.mxu0 0
    %5379 = vmatpush1.bf16.msra.mxu0 0
    %5380 = vmatprep.subr.bf16.mxu0 0
    %5381 = vmatpush1.bf16.msra.mxu0 0
    %5382 = vmatprep.subr.bf16.mxu0 0
    %5383 = vmatpush1.bf16.msra.mxu0 0
    %5384 = vmatprep.subr.bf16.mxu0 0
    %5385 = vmatpush1.bf16.msra.mxu0 0
    %5386 = vmatprep.subr.bf16.mxu0 0
    %5387 = vmatpush1.bf16.msra.mxu0 0
    %5388 = vmatprep.subr.bf16.mxu0 0
    %5389 = vmatpush1.bf16.msra.mxu0 0
    %5390 = vmatprep.subr.bf16.mxu0 0
    %5391 = vmatpush1.bf16.msra.mxu0 0
    %5392 = vmatprep.subr.bf16.mxu0 0
    %5393 = vmatpush1.bf16.msra.mxu0 0
    %5394 = vmatprep.subr.bf16.mxu0 0
    %5395 = vmatpush1.bf16.msra.mxu0 0
    %5396 = vmatprep.subr.bf16.mxu0 0
    %5397 = vmatpush1.bf16.msra.mxu0 0
    %5398 = vmatprep.subr.bf16.mxu0 0
    %5399 = vmatpush1.bf16.msra.mxu0 0
    %5400 = vmatprep.subr.bf16.mxu0 0
    %5401 = vmatpush1.bf16.msra.mxu0 0
    %5402 = vmatprep.mubr.bf16.mxu0 0
    %5403 = vmatmul.mubr.bf16.gmra.mrb[0].mxu0 %v5347
    %v5404 = vpop.f32.mrb[0].mxu0
    %v5405 = vadd.f32 0.0, %v5404
    %v5406 = vpop.f32.mrb[0].mxu0
    %v5407 = vpop.f32.mrb[0].mxu0
    %v5408 = vadd.f32 0.0, %v5407
    %v5409 = vpop.f32.mrb[0].mxu0
    %5410 = vmatprep.mubr.bf16.mxu0 0
    %5411 = vmatmul.mubr.bf16.gmra.mrb[0].mxu0 %v5350
    %v5412 = vpop.f32.mrb[0].mxu0
    %v5413 = vadd.f32 0.0, %v5412
    %v5414 = vpop.f32.mrb[0].mxu0
    %v5415 = vpop.f32.mrb[0].mxu0
    %v5416 = vadd.f32 0.0, %v5415
    %v5417 = vpop.f32.mrb[0].mxu0
    %5418 = vmatprep.mubr.bf16.mxu0 0
    %5419 = vmatmul.mubr.bf16.gmra.mrb[0].mxu0 %v5353
    %v5420 = vpop.f32.mrb[0].mxu0
    %v5421 = vadd.f32 0.0, %v5420
    %v5422 = vpop.f32.mrb[0].mxu0
    %v5423 = vpop.f32.mrb[0].mxu0
    %v5424 = vadd.f32 0.0, %v5423
    %v5425 = vpop.f32.mrb[0].mxu0
    %5426 = vmatprep.mubr.bf16.mxu0 0
    %5427 = vmatmul.mubr.bf16.gmra.mrb[0].mxu0 %v5356
    %v5428 = vpop.f32.mrb[0].mxu0
    %v5429 = vadd.f32 0.0, %v5428
    %v5430 = vpop.f32.mrb[0].mxu0
    %v5431 = vpop.f32.mrb[0].mxu0
    %v5432 = vadd.f32 0.0, %v5431
    %v5433 = vpop.f32.mrb[0].mxu0
    %5434 = vmatprep.mubr.bf16.mxu0 0
    %5435 = vmatmul.mubr.bf16.gmra.mrb[0].mxu0 %v5359
    %v5436 = vpop.f32.mrb[0].mxu0
    %v5437 = vadd.f32 0.0, %v5436
    %v5438 = vpop.f32.mrb[0].mxu0
    %v5439 = vpop.f32.mrb[0].mxu0
    %v5440 = vadd.f32 0.0, %v5439
    %v5441 = vpop.f32.mrb[0].mxu0
    %5442 = vmatprep.mubr.bf16.mxu0 0
    %5443 = vmatmul.mubr.bf16.gmra.mrb[0].mxu0 %v5362
    %v5444 = vpop.f32.mrb[0].mxu0
    %v5445 = vadd.f32 0.0, %v5444
    %v5446 = vpop.f32.mrb[0].mxu0
    %v5447 = vpop.f32.mrb[0].mxu0
    %v5448 = vadd.f32 0.0, %v5447
    %v5449 = vpop.f32.mrb[0].mxu0
    %5450 = vmatprep.mubr.bf16.mxu0 0
    %5451 = vmatmul.mubr.bf16.gmra.mrb[0].mxu0 %v5365
    %v5452 = vpop.f32.mrb[0].mxu0
    %v5453 = vadd.f32 0.0, %v5452
    %v5454 = vpop.f32.mrb[0].mxu0
    %v5455 = vpop.f32.mrb[0].mxu0
    %v5456 = vadd.f32 0.0, %v5455
    %v5457 = vpop.f32.mrb[0].mxu0
    %5458 = vmatprep.mubr.bf16.mxu0 0
    %5459 = vmatmul.mubr.bf16.gmra.mrb[0].mxu0 %v5368
    %v5460 = vpop.f32.mrb[0].mxu0
    %v5461 = vadd.f32 0.0, %v5460
    %v5462 = vpop.f32.mrb[0].mxu0
    %v5463 = vpop.f32.mrb[0].mxu0
    %v5464 = vadd.f32 0.0, %v5463
    %v5465 = vpop.f32.mrb[0].mxu0
    %5466 = vdwg.mxu0
    %v5467 = vadd.f32 %v5313, %v5405
    %v5468 = vadd.f32 %v5314, %v5408
    %v5469 = vadd.f32 %v5315, %v5413
    %v5470 = vadd.f32 %v5316, %v5416
    %v5471 = vadd.f32 %v5317, %v5421
    %v5472 = vadd.f32 %v5318, %v5424
    %v5473 = vadd.f32 %v5319, %v5429
    %v5474 = vadd.f32 %v5320, %v5432
    %v5475 = vadd.f32 %v5321, %v5437
    %v5476 = vadd.f32 %v5322, %v5440
    %v5477 = vadd.f32 %v5323, %v5445
    %v5478 = vadd.f32 %v5324, %v5448
    %v5479 = vadd.f32 %v5325, %v5453
    %v5480 = vadd.f32 %v5326, %v5456
    %v5481 = vadd.f32 %v5327, %v5461
    %v5482 = vadd.f32 %v5328, %v5464
    %v5483 = vrot.slane %v2483, 1
    %v5484 = vsel %vm177, %v5483, %v178
    %v5485 = vrot.slane %v2484, 1
    %v5486 = vsel %vm177, %v5485, %v178
    %v5487 = vrot.slane %v2485, 1
    %v5488 = vsel %vm177, %v5487, %v178
    %v5489 = vrot.slane %v2486, 1
    %v5490 = vsel %vm177, %v5489, %v178
    %v5491 = vrot.slane %v2487, 1
    %v5492 = vsel %vm177, %v5491, %v178
    %v5493 = vrot.slane %v2488, 1
    %v5494 = vsel %vm177, %v5493, %v178
    %v5495 = vrot.slane %v2489, 1
    %v5496 = vsel %vm177, %v5495, %v178
    %v5497 = vrot.slane %v2491, 1
    %v5498 = vsel %vm177, %v5497, %v178
    %v5499 = vrot.slane %v2492, 1
    %v5500 = vsel %vm177, %v5499, %v178
    %v5501 = vrot.slane %v2493, 1
    %v5502 = vsel %vm177, %v5501, %v178
    %v5503 = vrot.slane %v2494, 1
    %v5504 = vsel %vm177, %v5503, %v178
    %v5505 = vrot.slane %v2495, 1
    %v5506 = vsel %vm177, %v5505, %v178
    %v5507 = vrot.slane %v2496, 1
    %v5508 = vsel %vm177, %v5507, %v178
    %v5509 = vrot.slane %v2497, 1
    %v5510 = vsel %vm177, %v5509, %v178
    %s5525 = scalar_lea.vmem %s9, 16
    %v5526 = vld [vmem:[%s5525] sm:$0xf]
    %v5527 = vld [vmem:[%s5525 + $0x4] sm:$0xf]
    %v5528 = vpack.c.bf16 %v5484, %v179
    %v5529 = vpack.c.bf16 %v5488, %v5486
    %v5530 = vpack.c.bf16 %v5492, %v5490
    %v5531 = vpack.c.bf16 %v5496, %v5494
    %v5532 = vpack.c.bf16 %v5498, %v179
    %v5533 = vpack.c.bf16 %v5502, %v5500
    %v5534 = vpack.c.bf16 %v5506, %v5504
    %v5535 = vpack.c.bf16 %v5510, %v5508
    %v5538 = vunpack.c.l.b16 %v5526
    %v5539 = vunpack.c.l.b16 %v5527
    %v5540 = vpack.c.b16 %v5539, %v5538
    %v5543 = vsel %vm2340, %v5528, 0
    %v5546 = vsel %vm2340, %v5529, 0
    %v5549 = vsel %vm2340, %v5530, 0
    %v5552 = vsel %vm2340, %v5531, 0
    %v5555 = vsel %vm2340, %v5532, 0
    %v5558 = vsel %vm2340, %v5533, 0
    %v5561 = vsel %vm2340, %v5534, 0
    %v5564 = vsel %vm2340, %v5535, 0
    %5566 = vmatprep.subr.bf16.mxu0 0
    %5567 = vmatpush1.bf16.msra.mxu0 %v5540
    %5568 = vmatprep.subr.bf16.mxu0 0
    %5569 = vmatpush1.bf16.msra.mxu0 0
    %5570 = vmatprep.subr.bf16.mxu0 0
    %5571 = vmatpush1.bf16.msra.mxu0 0
    %5572 = vmatprep.subr.bf16.mxu0 0
    %5573 = vmatpush1.bf16.msra.mxu0 0
    %5574 = vmatprep.subr.bf16.mxu0 0
    %5575 = vmatpush1.bf16.msra.mxu0 0
    %5576 = vmatprep.subr.bf16.mxu0 0
    %5577 = vmatpush1.bf16.msra.mxu0 0
    %5578 = vmatprep.subr.bf16.mxu0 0
    %5579 = vmatpush1.bf16.msra.mxu0 0
    %5580 = vmatprep.subr.bf16.mxu0 0
    %5581 = vmatpush1.bf16.msra.mxu0 0
    %5582 = vmatprep.subr.bf16.mxu0 0
    %5583 = vmatpush1.bf16.msra.mxu0 0
    %5584 = vmatprep.subr.bf16.mxu0 0
    %5585 = vmatpush1.bf16.msra.mxu0 0
    %5586 = vmatprep.subr.bf16.mxu0 0
    %5587 = vmatpush1.bf16.msra.mxu0 0
    %5588 = vmatprep.subr.bf16.mxu0 0
    %5589 = vmatpush1.bf16.msra.mxu0 0
    %5590 = vmatprep.subr.bf16.mxu0 0
    %5591 = vmatpush1.bf16.msra.mxu0 0
    %5592 = vmatprep.subr.bf16.mxu0 0
    %5593 = vmatpush1.bf16.msra.mxu0 0
    %5594 = vmatprep.subr.bf16.mxu0 0
    %5595 = vmatpush1.bf16.msra.mxu0 0
    %5596 = vmatprep.subr.bf16.mxu0 0
    %5597 = vmatpush1.bf16.msra.mxu0 0
    %5598 = vmatprep.mubr.bf16.mxu0 0
    %5599 = vmatmul.mubr.bf16.gmra.mrb[0].mxu0 %v5543
    %v5600 = vpop.f32.mrb[0].mxu0
    %v5601 = vadd.f32 0.0, %v5600
    %v5602 = vpop.f32.mrb[0].mxu0
    %v5603 = vpop.f32.mrb[0].mxu0
    %v5604 = vadd.f32 0.0, %v5603
    %v5605 = vpop.f32.mrb[0].mxu0
    %5606 = vmatprep.mubr.bf16.mxu0 0
    %5607 = vmatmul.mubr.bf16.gmra.mrb[0].mxu0 %v5546
    %v5608 = vpop.f32.mrb[0].mxu0
    %v5609 = vadd.f32 0.0, %v5608
    %v5610 = vpop.f32.mrb[0].mxu0
    %v5611 = vpop.f32.mrb[0].mxu0
    %v5612 = vadd.f32 0.0, %v5611
    %v5613 = vpop.f32.mrb[0].mxu0
    %5614 = vmatprep.mubr.bf16.mxu0 0
    %5615 = vmatmul.mubr.bf16.gmra.mrb[0].mxu0 %v5549
    %v5616 = vpop.f32.mrb[0].mxu0
    %v5617 = vadd.f32 0.0, %v5616
    %v5618 = vpop.f32.mrb[0].mxu0
    %v5619 = vpop.f32.mrb[0].mxu0
    %v5620 = vadd.f32 0.0, %v5619
    %v5621 = vpop.f32.mrb[0].mxu0
    %5622 = vmatprep.mubr.bf16.mxu0 0
    %5623 = vmatmul.mubr.bf16.gmra.mrb[0].mxu0 %v5552
    %v5624 = vpop.f32.mrb[0].mxu0
    %v5625 = vadd.f32 0.0, %v5624
    %v5626 = vpop.f32.mrb[0].mxu0
    %v5627 = vpop.f32.mrb[0].mxu0
    %v5628 = vadd.f32 0.0, %v5627
    %v5629 = vpop.f32.mrb[0].mxu0
    %5630 = vmatprep.mubr.bf16.mxu0 0
    %5631 = vmatmul.mubr.bf16.gmra.mrb[0].mxu0 %v5555
    %v5632 = vpop.f32.mrb[0].mxu0
    %v5633 = vadd.f32 0.0, %v5632
    %v5634 = vpop.f32.mrb[0].mxu0
    %v5635 = vpop.f32.mrb[0].mxu0
    %v5636 = vadd.f32 0.0, %v5635
    %v5637 = vpop.f32.mrb[0].mxu0
    %5638 = vmatprep.mubr.bf16.mxu0 0
    %5639 = vmatmul.mubr.bf16.gmra.mrb[0].mxu0 %v5558
    %v5640 = vpop.f32.mrb[0].mxu0
    %v5641 = vadd.f32 0.0, %v5640
    %v5642 = vpop.f32.mrb[0].mxu0
    %v5643 = vpop.f32.mrb[0].mxu0
    %v5644 = vadd.f32 0.0, %v5643
    %v5645 = vpop.f32.mrb[0].mxu0
    %5646 = vmatprep.mubr.bf16.mxu0 0
    %5647 = vmatmul.mubr.bf16.gmra.mrb[0].mxu0 %v5561
    %v5648 = vpop.f32.mrb[0].mxu0
    %v5649 = vadd.f32 0.0, %v5648
    %v5650 = vpop.f32.mrb[0].mxu0
    %v5651 = vpop.f32.mrb[0].mxu0
    %v5652 = vadd.f32 0.0, %v5651
    %v5653 = vpop.f32.mrb[0].mxu0
    %5654 = vmatprep.mubr.bf16.mxu0 0
    %5655 = vmatmul.mubr.bf16.gmra.mrb[0].mxu0 %v5564
    %v5656 = vpop.f32.mrb[0].mxu0
    %v5657 = vadd.f32 0.0, %v5656
    %v5658 = vpop.f32.mrb[0].mxu0
    %v5659 = vpop.f32.mrb[0].mxu0
    %v5660 = vadd.f32 0.0, %v5659
    %v5661 = vpop.f32.mrb[0].mxu0
    %5662 = vdwg.mxu0
    %v5663 = vadd.f32 %v5467, %v5601
    %v5664 = vadd.f32 %v5468, %v5604
    %v5665 = vadd.f32 %v5469, %v5609
    %v5666 = vadd.f32 %v5470, %v5612
    %v5667 = vadd.f32 %v5471, %v5617
    %v5668 = vadd.f32 %v5472, %v5620
    %v5669 = vadd.f32 %v5473, %v5625
    %v5670 = vadd.f32 %v5474, %v5628
    %v5671 = vadd.f32 %v5475, %v5633
    %v5672 = vadd.f32 %v5476, %v5636
    %v5673 = vadd.f32 %v5477, %v5641
    %v5674 = vadd.f32 %v5478, %v5644
    %v5675 = vadd.f32 %v5479, %v5649
    %v5676 = vadd.f32 %v5480, %v5652
    %v5677 = vadd.f32 %v5481, %v5657
    %v5678 = vadd.f32 %v5482, %v5660
    %v5681 = vrot.slane %v2490, 7
    %v5682 = vsel %vm71, %v72, %v5681
    %v5683 = vrot.slane %v2498, 7
    %v5684 = vsel %vm71, %v72, %v5683
    %s5687 = scalar_lea.vmem %s9, 24
    %v5688 = vld [vmem:[%s5687] sm:$0xf]
    %v5689 = vld [vmem:[%s5687 + $0x4] sm:$0xf]
    %v5690 = vpack.c.bf16 %v5137, %v5135
    %v5691 = vpack.c.bf16 %v5141, %v5139
    %v5692 = vpack.c.bf16 %v5145, %v5143
    %v5693 = vpack.c.bf16 %v5682, %v5147
    %v5694 = vpack.c.bf16 %v5151, %v5149
    %v5695 = vpack.c.bf16 %v5155, %v5153
    %v5696 = vpack.c.bf16 %v5159, %v5157
    %v5697 = vpack.c.bf16 %v5684, %v5161
    %v5700 = vunpack.c.l.b16 %v5688
    %v5701 = vunpack.c.l.b16 %v5689
    %v5702 = vpack.c.b16 %v5701, %v5700
    %v5705 = vsel %vm2340, %v5690, 0
    %v5708 = vsel %vm2340, %v5691, 0
    %v5711 = vsel %vm2340, %v5692, 0
    %v5714 = vsel %vm2340, %v5693, 0
    %v5717 = vsel %vm2340, %v5694, 0
    %v5720 = vsel %vm2340, %v5695, 0
    %v5723 = vsel %vm2340, %v5696, 0
    %v5726 = vsel %vm2340, %v5697, 0
    %5728 = vmatprep.subr.bf16.mxu0 0
    %5729 = vmatpush1.bf16.msra.mxu0 %v5702
    %5730 = vmatprep.subr.bf16.mxu0 0
    %5731 = vmatpush1.bf16.msra.mxu0 0
    %5732 = vmatprep.subr.bf16.mxu0 0
    %5733 = vmatpush1.bf16.msra.mxu0 0
    %5734 = vmatprep.subr.bf16.mxu0 0
    %5735 = vmatpush1.bf16.msra.mxu0 0
    %5736 = vmatprep.subr.bf16.mxu0 0
    %5737 = vmatpush1.bf16.msra.mxu0 0
    %5738 = vmatprep.subr.bf16.mxu0 0
    %5739 = vmatpush1.bf16.msra.mxu0 0
    %5740 = vmatprep.subr.bf16.mxu0 0
    %5741 = vmatpush1.bf16.msra.mxu0 0
    %5742 = vmatprep.subr.bf16.mxu0 0
    %5743 = vmatpush1.bf16.msra.mxu0 0
    %5744 = vmatprep.subr.bf16.mxu0 0
    %5745 = vmatpush1.bf16.msra.mxu0 0
    %5746 = vmatprep.subr.bf16.mxu0 0
    %5747 = vmatpush1.bf16.msra.mxu0 0
    %5748 = vmatprep.subr.bf16.mxu0 0
    %5749 = vmatpush1.bf16.msra.mxu0 0
    %5750 = vmatprep.subr.bf16.mxu0 0
    %5751 = vmatpush1.bf16.msra.mxu0 0
    %5752 = vmatprep.subr.bf16.mxu0 0
    %5753 = vmatpush1.bf16.msra.mxu0 0
    %5754 = vmatprep.subr.bf16.mxu0 0
    %5755 = vmatpush1.bf16.msra.mxu0 0
    %5756 = vmatprep.subr.bf16.mxu0 0
    %5757 = vmatpush1.bf16.msra.mxu0 0
    %5758 = vmatprep.subr.bf16.mxu0 0
    %5759 = vmatpush1.bf16.msra.mxu0 0
    %5760 = vmatprep.mubr.bf16.mxu0 0
    %5761 = vmatmul.mubr.bf16.gmra.mrb[0].mxu0 %v5705
    %v5762 = vpop.f32.mrb[0].mxu0
    %v5763 = vadd.f32 0.0, %v5762
    %v5764 = vpop.f32.mrb[0].mxu0
    %v5765 = vpop.f32.mrb[0].mxu0
    %v5766 = vadd.f32 0.0, %v5765
    %v5767 = vpop.f32.mrb[0].mxu0
    %5768 = vmatprep.mubr.bf16.mxu0 0
    %5769 = vmatmul.mubr.bf16.gmra.mrb[0].mxu0 %v5708
    %v5770 = vpop.f32.mrb[0].mxu0
    %v5771 = vadd.f32 0.0, %v5770
    %v5772 = vpop.f32.mrb[0].mxu0
    %v5773 = vpop.f32.mrb[0].mxu0
    %v5774 = vadd.f32 0.0, %v5773
    %v5775 = vpop.f32.mrb[0].mxu0
    %5776 = vmatprep.mubr.bf16.mxu0 0
    %5777 = vmatmul.mubr.bf16.gmra.mrb[0].mxu0 %v5711
    %v5778 = vpop.f32.mrb[0].mxu0
    %v5779 = vadd.f32 0.0, %v5778
    %v5780 = vpop.f32.mrb[0].mxu0
    %v5781 = vpop.f32.mrb[0].mxu0
    %v5782 = vadd.f32 0.0, %v5781
    %v5783 = vpop.f32.mrb[0].mxu0
    %5784 = vmatprep.mubr.bf16.mxu0 0
    %5785 = vmatmul.mubr.bf16.gmra.mrb[0].mxu0 %v5714
    %v5786 = vpop.f32.mrb[0].mxu0
    %v5787 = vadd.f32 0.0, %v5786
    %v5788 = vpop.f32.mrb[0].mxu0
    %v5789 = vpop.f32.mrb[0].mxu0
    %v5790 = vadd.f32 0.0, %v5789
    %v5791 = vpop.f32.mrb[0].mxu0
    %5792 = vmatprep.mubr.bf16.mxu0 0
    %5793 = vmatmul.mubr.bf16.gmra.mrb[0].mxu0 %v5717
    %v5794 = vpop.f32.mrb[0].mxu0
    %v5795 = vadd.f32 0.0, %v5794
    %v5796 = vpop.f32.mrb[0].mxu0
    %v5797 = vpop.f32.mrb[0].mxu0
    %v5798 = vadd.f32 0.0, %v5797
    %v5799 = vpop.f32.mrb[0].mxu0
    %5800 = vmatprep.mubr.bf16.mxu0 0
    %5801 = vmatmul.mubr.bf16.gmra.mrb[0].mxu0 %v5720
    %v5802 = vpop.f32.mrb[0].mxu0
    %v5803 = vadd.f32 0.0, %v5802
    %v5804 = vpop.f32.mrb[0].mxu0
    %v5805 = vpop.f32.mrb[0].mxu0
    %v5806 = vadd.f32 0.0, %v5805
    %v5807 = vpop.f32.mrb[0].mxu0
    %5808 = vmatprep.mubr.bf16.mxu0 0
    %5809 = vmatmul.mubr.bf16.gmra.mrb[0].mxu0 %v5723
    %v5810 = vpop.f32.mrb[0].mxu0
    %v5811 = vadd.f32 0.0, %v5810
    %v5812 = vpop.f32.mrb[0].mxu0
    %v5813 = vpop.f32.mrb[0].mxu0
    %v5814 = vadd.f32 0.0, %v5813
    %v5815 = vpop.f32.mrb[0].mxu0
    %5816 = vmatprep.mubr.bf16.mxu0 0
    %5817 = vmatmul.mubr.bf16.gmra.mrb[0].mxu0 %v5726
    %v5818 = vpop.f32.mrb[0].mxu0
    %v5819 = vadd.f32 0.0, %v5818
    %v5820 = vpop.f32.mrb[0].mxu0
    %v5821 = vpop.f32.mrb[0].mxu0
    %v5822 = vadd.f32 0.0, %v5821
    %v5823 = vpop.f32.mrb[0].mxu0
    %5824 = vdwg.mxu0
    %v5825 = vadd.f32 %v5663, %v5763
    %v5826 = vadd.f32 %v5664, %v5766
    %v5827 = vadd.f32 %v5665, %v5771
    %v5828 = vadd.f32 %v5666, %v5774
    %v5829 = vadd.f32 %v5667, %v5779
    %v5830 = vadd.f32 %v5668, %v5782
    %v5831 = vadd.f32 %v5669, %v5787
    %v5832 = vadd.f32 %v5670, %v5790
    %v5833 = vadd.f32 %v5671, %v5795
    %v5834 = vadd.f32 %v5672, %v5798
    %v5835 = vadd.f32 %v5673, %v5803
    %v5836 = vadd.f32 %v5674, %v5806
    %v5837 = vadd.f32 %v5675, %v5811
    %v5838 = vadd.f32 %v5676, %v5814
    %v5839 = vadd.f32 %v5677, %v5819
    %v5840 = vadd.f32 %v5678, %v5822
    %s5841 = scalar_lea.vmem %s9, 32
    %v5842 = vld [vmem:[%s5841] sm:$0xf]
    %v5843 = vld [vmem:[%s5841 + $0x4] sm:$0xf]
    %v5844 = vpack.c.bf16 %v2484, %v2483
    %v5845 = vpack.c.bf16 %v2486, %v2485
    %v5846 = vpack.c.bf16 %v2488, %v2487
    %v5847 = vpack.c.bf16 %v2490, %v2489
    %v5848 = vpack.c.bf16 %v2492, %v2491
    %v5849 = vpack.c.bf16 %v2494, %v2493
    %v5850 = vpack.c.bf16 %v2496, %v2495
    %v5851 = vpack.c.bf16 %v2498, %v2497
    %v5854 = vunpack.c.l.b16 %v5842
    %v5855 = vunpack.c.l.b16 %v5843
    %v5856 = vpack.c.b16 %v5855, %v5854
    %v5859 = vsel %vm2340, %v5844, 0
    %v5862 = vsel %vm2340, %v5845, 0
    %v5865 = vsel %vm2340, %v5846, 0
    %v5868 = vsel %vm2340, %v5847, 0
    %v5871 = vsel %vm2340, %v5848, 0
    %v5874 = vsel %vm2340, %v5849, 0
    %v5877 = vsel %vm2340, %v5850, 0
    %v5880 = vsel %vm2340, %v5851, 0
    %5882 = vmatprep.subr.bf16.mxu0 0
    %5883 = vmatpush1.bf16.msra.mxu0 %v5856
    %5884 = vmatprep.subr.bf16.mxu0 0
    %5885 = vmatpush1.bf16.msra.mxu0 0
    %5886 = vmatprep.subr.bf16.mxu0 0
    %5887 = vmatpush1.bf16.msra.mxu0 0
    %5888 = vmatprep.subr.bf16.mxu0 0
    %5889 = vmatpush1.bf16.msra.mxu0 0
    %5890 = vmatprep.subr.bf16.mxu0 0
    %5891 = vmatpush1.bf16.msra.mxu0 0
    %5892 = vmatprep.subr.bf16.mxu0 0
    %5893 = vmatpush1.bf16.msra.mxu0 0
    %5894 = vmatprep.subr.bf16.mxu0 0
    %5895 = vmatpush1.bf16.msra.mxu0 0
    %5896 = vmatprep.subr.bf16.mxu0 0
    %5897 = vmatpush1.bf16.msra.mxu0 0
    %5898 = vmatprep.subr.bf16.mxu0 0
    %5899 = vmatpush1.bf16.msra.mxu0 0
    %5900 = vmatprep.subr.bf16.mxu0 0
    %5901 = vmatpush1.bf16.msra.mxu0 0
    %5902 = vmatprep.subr.bf16.mxu0 0
    %5903 = vmatpush1.bf16.msra.mxu0 0
    %5904 = vmatprep.subr.bf16.mxu0 0
    %5905 = vmatpush1.bf16.msra.mxu0 0
    %5906 = vmatprep.subr.bf16.mxu0 0
    %5907 = vmatpush1.bf16.msra.mxu0 0
    %5908 = vmatprep.subr.bf16.mxu0 0
    %5909 = vmatpush1.bf16.msra.mxu0 0
    %5910 = vmatprep.subr.bf16.mxu0 0
    %5911 = vmatpush1.bf16.msra.mxu0 0
    %5912 = vmatprep.subr.bf16.mxu0 0
    %5913 = vmatpush1.bf16.msra.mxu0 0
    %5914 = vmatprep.mubr.bf16.mxu0 0
    %5915 = vmatmul.mubr.bf16.gmra.mrb[0].mxu0 %v5859
    %v5916 = vpop.f32.mrb[0].mxu0
    %v5917 = vadd.f32 0.0, %v5916
    %v5918 = vpop.f32.mrb[0].mxu0
    %v5919 = vpop.f32.mrb[0].mxu0
    %v5920 = vadd.f32 0.0, %v5919
    %v5921 = vpop.f32.mrb[0].mxu0
    %5922 = vmatprep.mubr.bf16.mxu0 0
    %5923 = vmatmul.mubr.bf16.gmra.mrb[0].mxu0 %v5862
    %v5924 = vpop.f32.mrb[0].mxu0
    %v5925 = vadd.f32 0.0, %v5924
    %v5926 = vpop.f32.mrb[0].mxu0
    %v5927 = vpop.f32.mrb[0].mxu0
    %v5928 = vadd.f32 0.0, %v5927
    %v5929 = vpop.f32.mrb[0].mxu0
    %5930 = vmatprep.mubr.bf16.mxu0 0
    %5931 = vmatmul.mubr.bf16.gmra.mrb[0].mxu0 %v5865
    %v5932 = vpop.f32.mrb[0].mxu0
    %v5933 = vadd.f32 0.0, %v5932
    %v5934 = vpop.f32.mrb[0].mxu0
    %v5935 = vpop.f32.mrb[0].mxu0
    %v5936 = vadd.f32 0.0, %v5935
    %v5937 = vpop.f32.mrb[0].mxu0
    %5938 = vmatprep.mubr.bf16.mxu0 0
    %5939 = vmatmul.mubr.bf16.gmra.mrb[0].mxu0 %v5868
    %v5940 = vpop.f32.mrb[0].mxu0
    %v5941 = vadd.f32 0.0, %v5940
    %v5942 = vpop.f32.mrb[0].mxu0
    %v5943 = vpop.f32.mrb[0].mxu0
    %v5944 = vadd.f32 0.0, %v5943
    %v5945 = vpop.f32.mrb[0].mxu0
    %5946 = vmatprep.mubr.bf16.mxu0 0
    %5947 = vmatmul.mubr.bf16.gmra.mrb[0].mxu0 %v5871
    %v5948 = vpop.f32.mrb[0].mxu0
    %v5949 = vadd.f32 0.0, %v5948
    %v5950 = vpop.f32.mrb[0].mxu0
    %v5951 = vpop.f32.mrb[0].mxu0
    %v5952 = vadd.f32 0.0, %v5951
    %v5953 = vpop.f32.mrb[0].mxu0
    %5954 = vmatprep.mubr.bf16.mxu0 0
    %5955 = vmatmul.mubr.bf16.gmra.mrb[0].mxu0 %v5874
    %v5956 = vpop.f32.mrb[0].mxu0
    %v5957 = vadd.f32 0.0, %v5956
    %v5958 = vpop.f32.mrb[0].mxu0
    %v5959 = vpop.f32.mrb[0].mxu0
    %v5960 = vadd.f32 0.0, %v5959
    %v5961 = vpop.f32.mrb[0].mxu0
    %5962 = vmatprep.mubr.bf16.mxu0 0
    %5963 = vmatmul.mubr.bf16.gmra.mrb[0].mxu0 %v5877
    %v5964 = vpop.f32.mrb[0].mxu0
    %v5965 = vadd.f32 0.0, %v5964
    %v5966 = vpop.f32.mrb[0].mxu0
    %v5967 = vpop.f32.mrb[0].mxu0
    %v5968 = vadd.f32 0.0, %v5967
    %v5969 = vpop.f32.mrb[0].mxu0
    %5970 = vmatprep.mubr.bf16.mxu0 0
    %5971 = vmatmul.mubr.bf16.gmra.mrb[0].mxu0 %v5880
    %v5972 = vpop.f32.mrb[0].mxu0
    %v5973 = vadd.f32 0.0, %v5972
    %v5974 = vpop.f32.mrb[0].mxu0
    %v5975 = vpop.f32.mrb[0].mxu0
    %v5976 = vadd.f32 0.0, %v5975
    %v5977 = vpop.f32.mrb[0].mxu0
    %5978 = vdwg.mxu0
    %v5979 = vadd.f32 %v5825, %v5917
    %v5980 = vadd.f32 %v5826, %v5920
    %v5981 = vadd.f32 %v5827, %v5925
    %v5982 = vadd.f32 %v5828, %v5928
    %v5983 = vadd.f32 %v5829, %v5933
    %v5984 = vadd.f32 %v5830, %v5936
    %v5985 = vadd.f32 %v5831, %v5941
    %v5986 = vadd.f32 %v5832, %v5944
    %v5987 = vadd.f32 %v5833, %v5949
    %v5988 = vadd.f32 %v5834, %v5952
    %v5989 = vadd.f32 %v5835, %v5957
    %v5990 = vadd.f32 %v5836, %v5960
    %v5991 = vadd.f32 %v5837, %v5965
    %v5992 = vadd.f32 %v5838, %v5968
    %v5993 = vadd.f32 %v5839, %v5973
    %v5994 = vadd.f32 %v5840, %v5976
    %v5995 = vrot.slane %v2490, 1
    %v5996 = vsel %vm177, %v5995, %v178
    %v5997 = vrot.slane %v2498, 1
    %v5998 = vsel %vm177, %v5997, %v178
    %s6001 = scalar_lea.vmem %s9, 40
    %v6002 = vld [vmem:[%s6001] sm:$0xf]
    %v6003 = vld [vmem:[%s6001 + $0x4] sm:$0xf]
    %v6004 = vpack.c.bf16 %v5486, %v5484
    %v6005 = vpack.c.bf16 %v5490, %v5488
    %v6006 = vpack.c.bf16 %v5494, %v5492
    %v6007 = vpack.c.bf16 %v5996, %v5496
    %v6008 = vpack.c.bf16 %v5500, %v5498
    %v6009 = vpack.c.bf16 %v5504, %v5502
    %v6010 = vpack.c.bf16 %v5508, %v5506
    %v6011 = vpack.c.bf16 %v5998, %v5510
    %v6014 = vunpack.c.l.b16 %v6002
    %v6015 = vunpack.c.l.b16 %v6003
    %v6016 = vpack.c.b16 %v6015, %v6014
    %v6019 = vsel %vm2340, %v6004, 0
    %v6022 = vsel %vm2340, %v6005, 0
    %v6025 = vsel %vm2340, %v6006, 0
    %v6028 = vsel %vm2340, %v6007, 0
    %v6031 = vsel %vm2340, %v6008, 0
    %v6034 = vsel %vm2340, %v6009, 0
    %v6037 = vsel %vm2340, %v6010, 0
    %v6040 = vsel %vm2340, %v6011, 0
    %6042 = vmatprep.subr.bf16.mxu0 0
    %6043 = vmatpush1.bf16.msra.mxu0 %v6016
    %6044 = vmatprep.subr.bf16.mxu0 0
    %6045 = vmatpush1.bf16.msra.mxu0 0
    %6046 = vmatprep.subr.bf16.mxu0 0
    %6047 = vmatpush1.bf16.msra.mxu0 0
    %6048 = vmatprep.subr.bf16.mxu0 0
    %6049 = vmatpush1.bf16.msra.mxu0 0
    %6050 = vmatprep.subr.bf16.mxu0 0
    %6051 = vmatpush1.bf16.msra.mxu0 0
    %6052 = vmatprep.subr.bf16.mxu0 0
    %6053 = vmatpush1.bf16.msra.mxu0 0
    %6054 = vmatprep.subr.bf16.mxu0 0
    %6055 = vmatpush1.bf16.msra.mxu0 0
    %6056 = vmatprep.subr.bf16.mxu0 0
    %6057 = vmatpush1.bf16.msra.mxu0 0
    %6058 = vmatprep.subr.bf16.mxu0 0
    %6059 = vmatpush1.bf16.msra.mxu0 0
    %6060 = vmatprep.subr.bf16.mxu0 0
    %6061 = vmatpush1.bf16.msra.mxu0 0
    %6062 = vmatprep.subr.bf16.mxu0 0
    %6063 = vmatpush1.bf16.msra.mxu0 0
    %6064 = vmatprep.subr.bf16.mxu0 0
    %6065 = vmatpush1.bf16.msra.mxu0 0
    %6066 = vmatprep.subr.bf16.mxu0 0
    %6067 = vmatpush1.bf16.msra.mxu0 0
    %6068 = vmatprep.subr.bf16.mxu0 0
    %6069 = vmatpush1.bf16.msra.mxu0 0
    %6070 = vmatprep.subr.bf16.mxu0 0
    %6071 = vmatpush1.bf16.msra.mxu0 0
    %6072 = vmatprep.subr.bf16.mxu0 0
    %6073 = vmatpush1.bf16.msra.mxu0 0
    %6074 = vmatprep.mubr.bf16.mxu0 0
    %6075 = vmatmul.mubr.bf16.gmra.mrb[0].mxu0 %v6019
    %v6076 = vpop.f32.mrb[0].mxu0
    %v6077 = vadd.f32 0.0, %v6076
    %v6078 = vpop.f32.mrb[0].mxu0
    %v6079 = vpop.f32.mrb[0].mxu0
    %v6080 = vadd.f32 0.0, %v6079
    %v6081 = vpop.f32.mrb[0].mxu0
    %6082 = vmatprep.mubr.bf16.mxu0 0
    %6083 = vmatmul.mubr.bf16.gmra.mrb[0].mxu0 %v6022
    %v6084 = vpop.f32.mrb[0].mxu0
    %v6085 = vadd.f32 0.0, %v6084
    %v6086 = vpop.f32.mrb[0].mxu0
    %v6087 = vpop.f32.mrb[0].mxu0
    %v6088 = vadd.f32 0.0, %v6087
    %v6089 = vpop.f32.mrb[0].mxu0
    %6090 = vmatprep.mubr.bf16.mxu0 0
    %6091 = vmatmul.mubr.bf16.gmra.mrb[0].mxu0 %v6025
    %v6092 = vpop.f32.mrb[0].mxu0
    %v6093 = vadd.f32 0.0, %v6092
    %v6094 = vpop.f32.mrb[0].mxu0
    %v6095 = vpop.f32.mrb[0].mxu0
    %v6096 = vadd.f32 0.0, %v6095
    %v6097 = vpop.f32.mrb[0].mxu0
    %6098 = vmatprep.mubr.bf16.mxu0 0
    %6099 = vmatmul.mubr.bf16.gmra.mrb[0].mxu0 %v6028
    %v6100 = vpop.f32.mrb[0].mxu0
    %v6101 = vadd.f32 0.0, %v6100
    %v6102 = vpop.f32.mrb[0].mxu0
    %v6103 = vpop.f32.mrb[0].mxu0
    %v6104 = vadd.f32 0.0, %v6103
    %v6105 = vpop.f32.mrb[0].mxu0
    %6106 = vmatprep.mubr.bf16.mxu0 0
    %6107 = vmatmul.mubr.bf16.gmra.mrb[0].mxu0 %v6031
    %v6108 = vpop.f32.mrb[0].mxu0
    %v6109 = vadd.f32 0.0, %v6108
    %v6110 = vpop.f32.mrb[0].mxu0
    %v6111 = vpop.f32.mrb[0].mxu0
    %v6112 = vadd.f32 0.0, %v6111
    %v6113 = vpop.f32.mrb[0].mxu0
    %6114 = vmatprep.mubr.bf16.mxu0 0
    %6115 = vmatmul.mubr.bf16.gmra.mrb[0].mxu0 %v6034
    %v6116 = vpop.f32.mrb[0].mxu0
    %v6117 = vadd.f32 0.0, %v6116
    %v6118 = vpop.f32.mrb[0].mxu0
    %v6119 = vpop.f32.mrb[0].mxu0
    %v6120 = vadd.f32 0.0, %v6119
    %v6121 = vpop.f32.mrb[0].mxu0
    %6122 = vmatprep.mubr.bf16.mxu0 0
    %6123 = vmatmul.mubr.bf16.gmra.mrb[0].mxu0 %v6037
    %v6124 = vpop.f32.mrb[0].mxu0
    %v6125 = vadd.f32 0.0, %v6124
    %v6126 = vpop.f32.mrb[0].mxu0
    %v6127 = vpop.f32.mrb[0].mxu0
    %v6128 = vadd.f32 0.0, %v6127
    %v6129 = vpop.f32.mrb[0].mxu0
    %6130 = vmatprep.mubr.bf16.mxu0 0
    %6131 = vmatmul.mubr.bf16.gmra.mrb[0].mxu0 %v6040
    %v6132 = vpop.f32.mrb[0].mxu0
    %v6133 = vadd.f32 0.0, %v6132
    %v6134 = vpop.f32.mrb[0].mxu0
    %v6135 = vpop.f32.mrb[0].mxu0
    %v6136 = vadd.f32 0.0, %v6135
    %v6137 = vpop.f32.mrb[0].mxu0
    %6138 = vdwg.mxu0
    %v6139 = vadd.f32 %v5979, %v6077
    %v6140 = vadd.f32 %v5980, %v6080
    %v6141 = vadd.f32 %v5981, %v6085
    %v6142 = vadd.f32 %v5982, %v6088
    %v6143 = vadd.f32 %v5983, %v6093
    %v6144 = vadd.f32 %v5984, %v6096
    %v6145 = vadd.f32 %v5985, %v6101
    %v6146 = vadd.f32 %v5986, %v6104
    %v6147 = vadd.f32 %v5987, %v6109
    %v6148 = vadd.f32 %v5988, %v6112
    %v6149 = vadd.f32 %v5989, %v6117
    %v6150 = vadd.f32 %v5990, %v6120
    %v6151 = vadd.f32 %v5991, %v6125
    %v6152 = vadd.f32 %v5992, %v6128
    %v6153 = vadd.f32 %v5993, %v6133
    %v6154 = vadd.f32 %v5994, %v6136
    %s6155 = scalar_lea.vmem %s9, 48
    %v6156 = vld [vmem:[%s6155] sm:$0xf]
    %v6157 = vld [vmem:[%s6155 + $0x4] sm:$0xf]
    %v6158 = vpack.c.bf16 %v73, %v5682
    %v6159 = vpack.c.bf16 %v73, %v5684
    %v6162 = vunpack.c.l.b16 %v6156
    %v6163 = vunpack.c.l.b16 %v6157
    %v6164 = vpack.c.b16 %v6163, %v6162
    %v6167 = vsel %vm2340, %v6158, 0
    %v6170 = vsel %vm2340, %v6159, 0
    %6172 = vmatprep.subr.bf16.mxu0 0
    %6173 = vmatpush1.bf16.msra.mxu0 %v6164
    %6174 = vmatprep.subr.bf16.mxu0 0
    %6175 = vmatpush1.bf16.msra.mxu0 0
    %6176 = vmatprep.subr.bf16.mxu0 0
    %6177 = vmatpush1.bf16.msra.mxu0 0
    %6178 = vmatprep.subr.bf16.mxu0 0
    %6179 = vmatpush1.bf16.msra.mxu0 0
    %6180 = vmatprep.subr.bf16.mxu0 0
    %6181 = vmatpush1.bf16.msra.mxu0 0
    %6182 = vmatprep.subr.bf16.mxu0 0
    %6183 = vmatpush1.bf16.msra.mxu0 0
    %6184 = vmatprep.subr.bf16.mxu0 0
    %6185 = vmatpush1.bf16.msra.mxu0 0
    %6186 = vmatprep.subr.bf16.mxu0 0
    %6187 = vmatpush1.bf16.msra.mxu0 0
    %6188 = vmatprep.subr.bf16.mxu0 0
    %6189 = vmatpush1.bf16.msra.mxu0 0
    %6190 = vmatprep.subr.bf16.mxu0 0
    %6191 = vmatpush1.bf16.msra.mxu0 0
    %6192 = vmatprep.subr.bf16.mxu0 0
    %6193 = vmatpush1.bf16.msra.mxu0 0
    %6194 = vmatprep.subr.bf16.mxu0 0
    %6195 = vmatpush1.bf16.msra.mxu0 0
    %6196 = vmatprep.subr.bf16.mxu0 0
    %6197 = vmatpush1.bf16.msra.mxu0 0
    %6198 = vmatprep.subr.bf16.mxu0 0
    %6199 = vmatpush1.bf16.msra.mxu0 0
    %6200 = vmatprep.subr.bf16.mxu0 0
    %6201 = vmatpush1.bf16.msra.mxu0 0
    %6202 = vmatprep.subr.bf16.mxu0 0
    %6203 = vmatpush1.bf16.msra.mxu0 0
    %6204 = vmatprep.mubr.bf16.mxu0 0
    %6205 = vmatmul.mubr.bf16.gmra.mrb[0].mxu0 %v5196
    %v6206 = vpop.f32.mrb[0].mxu0
    %v6207 = vadd.f32 0.0, %v6206
    %v6208 = vpop.f32.mrb[0].mxu0
    %v6209 = vpop.f32.mrb[0].mxu0
    %v6210 = vadd.f32 0.0, %v6209
    %v6211 = vpop.f32.mrb[0].mxu0
    %6212 = vmatprep.mubr.bf16.mxu0 0
    %6213 = vmatmul.mubr.bf16.gmra.mrb[0].mxu0 %v5199
    %v6214 = vpop.f32.mrb[0].mxu0
    %v6215 = vadd.f32 0.0, %v6214
    %v6216 = vpop.f32.mrb[0].mxu0
    %v6217 = vpop.f32.mrb[0].mxu0
    %v6218 = vadd.f32 0.0, %v6217
    %v6219 = vpop.f32.mrb[0].mxu0
    %6220 = vmatprep.mubr.bf16.mxu0 0
    %6221 = vmatmul.mubr.bf16.gmra.mrb[0].mxu0 %v5202
    %v6222 = vpop.f32.mrb[0].mxu0
    %v6223 = vadd.f32 0.0, %v6222
    %v6224 = vpop.f32.mrb[0].mxu0
    %v6225 = vpop.f32.mrb[0].mxu0
    %v6226 = vadd.f32 0.0, %v6225
    %v6227 = vpop.f32.mrb[0].mxu0
    %6228 = vmatprep.mubr.bf16.mxu0 0
    %6229 = vmatmul.mubr.bf16.gmra.mrb[0].mxu0 %v6167
    %v6230 = vpop.f32.mrb[0].mxu0
    %v6231 = vadd.f32 0.0, %v6230
    %v6232 = vpop.f32.mrb[0].mxu0
    %v6233 = vpop.f32.mrb[0].mxu0
    %v6234 = vadd.f32 0.0, %v6233
    %v6235 = vpop.f32.mrb[0].mxu0
    %6236 = vmatprep.mubr.bf16.mxu0 0
    %6237 = vmatmul.mubr.bf16.gmra.mrb[0].mxu0 %v5208
    %v6238 = vpop.f32.mrb[0].mxu0
    %v6239 = vadd.f32 0.0, %v6238
    %v6240 = vpop.f32.mrb[0].mxu0
    %v6241 = vpop.f32.mrb[0].mxu0
    %v6242 = vadd.f32 0.0, %v6241
    %v6243 = vpop.f32.mrb[0].mxu0
    %6244 = vmatprep.mubr.bf16.mxu0 0
    %6245 = vmatmul.mubr.bf16.gmra.mrb[0].mxu0 %v5211
    %v6246 = vpop.f32.mrb[0].mxu0
    %v6247 = vadd.f32 0.0, %v6246
    %v6248 = vpop.f32.mrb[0].mxu0
    %v6249 = vpop.f32.mrb[0].mxu0
    %v6250 = vadd.f32 0.0, %v6249
    %v6251 = vpop.f32.mrb[0].mxu0
    %6252 = vmatprep.mubr.bf16.mxu0 0
    %6253 = vmatmul.mubr.bf16.gmra.mrb[0].mxu0 %v5214
    %v6254 = vpop.f32.mrb[0].mxu0
    %v6255 = vadd.f32 0.0, %v6254
    %v6256 = vpop.f32.mrb[0].mxu0
    %v6257 = vpop.f32.mrb[0].mxu0
    %v6258 = vadd.f32 0.0, %v6257
    %v6259 = vpop.f32.mrb[0].mxu0
    %6260 = vmatprep.mubr.bf16.mxu0 0
    %6261 = vmatmul.mubr.bf16.gmra.mrb[0].mxu0 %v6170
    %v6262 = vpop.f32.mrb[0].mxu0
    %v6263 = vadd.f32 0.0, %v6262
    %v6264 = vpop.f32.mrb[0].mxu0
    %v6265 = vpop.f32.mrb[0].mxu0
    %v6266 = vadd.f32 0.0, %v6265
    %v6267 = vpop.f32.mrb[0].mxu0
    %6268 = vdwg.mxu0
    %v6269 = vadd.f32 %v6139, %v6207
    %v6270 = vadd.f32 %v6140, %v6210
    %v6271 = vadd.f32 %v6141, %v6215
    %v6272 = vadd.f32 %v6142, %v6218
    %v6273 = vadd.f32 %v6143, %v6223
    %v6274 = vadd.f32 %v6144, %v6226
    %v6275 = vadd.f32 %v6145, %v6231
    %v6276 = vadd.f32 %v6146, %v6234
    %v6277 = vadd.f32 %v6147, %v6239
    %v6278 = vadd.f32 %v6148, %v6242
    %v6279 = vadd.f32 %v6149, %v6247
    %v6280 = vadd.f32 %v6150, %v6250
    %v6281 = vadd.f32 %v6151, %v6255
    %v6282 = vadd.f32 %v6152, %v6258
    %v6283 = vadd.f32 %v6153, %v6263
    %v6284 = vadd.f32 %v6154, %v6266
    %s6285 = scalar_lea.vmem %s9, 56
    %v6286 = vld [vmem:[%s6285] sm:$0xf]
    %v6287 = vld [vmem:[%s6285 + $0x4] sm:$0xf]
    %v6288 = vpack.c.bf16 0.0, %v2490
    %v6289 = vpack.c.bf16 0.0, %v2498
    %v6292 = vunpack.c.l.b16 %v6286
    %v6293 = vunpack.c.l.b16 %v6287
    %v6294 = vpack.c.b16 %v6293, %v6292
    %v6297 = vsel %vm2340, %v6288, 0
    %v6300 = vsel %vm2340, %v6289, 0
    %6302 = vmatprep.subr.bf16.mxu0 0
    %6303 = vmatpush1.bf16.msra.mxu0 %v6294
    %6304 = vmatprep.subr.bf16.mxu0 0
    %6305 = vmatpush1.bf16.msra.mxu0 0
    %6306 = vmatprep.subr.bf16.mxu0 0
    %6307 = vmatpush1.bf16.msra.mxu0 0
    %6308 = vmatprep.subr.bf16.mxu0 0
    %6309 = vmatpush1.bf16.msra.mxu0 0
    %6310 = vmatprep.subr.bf16.mxu0 0
    %6311 = vmatpush1.bf16.msra.mxu0 0
    %6312 = vmatprep.subr.bf16.mxu0 0
    %6313 = vmatpush1.bf16.msra.mxu0 0
    %6314 = vmatprep.subr.bf16.mxu0 0
    %6315 = vmatpush1.bf16.msra.mxu0 0
    %6316 = vmatprep.subr.bf16.mxu0 0
    %6317 = vmatpush1.bf16.msra.mxu0 0
    %6318 = vmatprep.subr.bf16.mxu0 0
    %6319 = vmatpush1.bf16.msra.mxu0 0
    %6320 = vmatprep.subr.bf16.mxu0 0
    %6321 = vmatpush1.bf16.msra.mxu0 0
    %6322 = vmatprep.subr.bf16.mxu0 0
    %6323 = vmatpush1.bf16.msra.mxu0 0
    %6324 = vmatprep.subr.bf16.mxu0 0
    %6325 = vmatpush1.bf16.msra.mxu0 0
    %6326 = vmatprep.subr.bf16.mxu0 0
    %6327 = vmatpush1.bf16.msra.mxu0 0
    %6328 = vmatprep.subr.bf16.mxu0 0
    %6329 = vmatpush1.bf16.msra.mxu0 0
    %6330 = vmatprep.subr.bf16.mxu0 0
    %6331 = vmatpush1.bf16.msra.mxu0 0
    %6332 = vmatprep.subr.bf16.mxu0 0
    %6333 = vmatpush1.bf16.msra.mxu0 0
    %6334 = vmatprep.mubr.bf16.mxu0 0
    %6335 = vmatmul.mubr.bf16.gmra.mrb[0].mxu0 %v5350
    %v6336 = vpop.f32.mrb[0].mxu0
    %v6337 = vadd.f32 0.0, %v6336
    %v6338 = vpop.f32.mrb[0].mxu0
    %v6339 = vpop.f32.mrb[0].mxu0
    %v6340 = vadd.f32 0.0, %v6339
    %v6341 = vpop.f32.mrb[0].mxu0
    %6342 = vmatprep.mubr.bf16.mxu0 0
    %6343 = vmatmul.mubr.bf16.gmra.mrb[0].mxu0 %v5353
    %v6344 = vpop.f32.mrb[0].mxu0
    %v6345 = vadd.f32 0.0, %v6344
    %v6346 = vpop.f32.mrb[0].mxu0
    %v6347 = vpop.f32.mrb[0].mxu0
    %v6348 = vadd.f32 0.0, %v6347
    %v6349 = vpop.f32.mrb[0].mxu0
    %6350 = vmatprep.mubr.bf16.mxu0 0
    %6351 = vmatmul.mubr.bf16.gmra.mrb[0].mxu0 %v5356
    %v6352 = vpop.f32.mrb[0].mxu0
    %v6353 = vadd.f32 0.0, %v6352
    %v6354 = vpop.f32.mrb[0].mxu0
    %v6355 = vpop.f32.mrb[0].mxu0
    %v6356 = vadd.f32 0.0, %v6355
    %v6357 = vpop.f32.mrb[0].mxu0
    %6358 = vmatprep.mubr.bf16.mxu0 0
    %6359 = vmatmul.mubr.bf16.gmra.mrb[0].mxu0 %v6297
    %v6360 = vpop.f32.mrb[0].mxu0
    %v6361 = vadd.f32 0.0, %v6360
    %v6362 = vpop.f32.mrb[0].mxu0
    %v6363 = vpop.f32.mrb[0].mxu0
    %v6364 = vadd.f32 0.0, %v6363
    %v6365 = vpop.f32.mrb[0].mxu0
    %6366 = vmatprep.mubr.bf16.mxu0 0
    %6367 = vmatmul.mubr.bf16.gmra.mrb[0].mxu0 %v5362
    %v6368 = vpop.f32.mrb[0].mxu0
    %v6369 = vadd.f32 0.0, %v6368
    %v6370 = vpop.f32.mrb[0].mxu0
    %v6371 = vpop.f32.mrb[0].mxu0
    %v6372 = vadd.f32 0.0, %v6371
    %v6373 = vpop.f32.mrb[0].mxu0
    %6374 = vmatprep.mubr.bf16.mxu0 0
    %6375 = vmatmul.mubr.bf16.gmra.mrb[0].mxu0 %v5365
    %v6376 = vpop.f32.mrb[0].mxu0
    %v6377 = vadd.f32 0.0, %v6376
    %v6378 = vpop.f32.mrb[0].mxu0
    %v6379 = vpop.f32.mrb[0].mxu0
    %v6380 = vadd.f32 0.0, %v6379
    %v6381 = vpop.f32.mrb[0].mxu0
    %6382 = vmatprep.mubr.bf16.mxu0 0
    %6383 = vmatmul.mubr.bf16.gmra.mrb[0].mxu0 %v5368
    %v6384 = vpop.f32.mrb[0].mxu0
    %v6385 = vadd.f32 0.0, %v6384
    %v6386 = vpop.f32.mrb[0].mxu0
    %v6387 = vpop.f32.mrb[0].mxu0
    %v6388 = vadd.f32 0.0, %v6387
    %v6389 = vpop.f32.mrb[0].mxu0
    %6390 = vmatprep.mubr.bf16.mxu0 0
    %6391 = vmatmul.mubr.bf16.gmra.mrb[0].mxu0 %v6300
    %v6392 = vpop.f32.mrb[0].mxu0
    %v6393 = vadd.f32 0.0, %v6392
    %v6394 = vpop.f32.mrb[0].mxu0
    %v6395 = vpop.f32.mrb[0].mxu0
    %v6396 = vadd.f32 0.0, %v6395
    %v6397 = vpop.f32.mrb[0].mxu0
    %6398 = vdwg.mxu0
    %v6399 = vadd.f32 %v6269, %v6337
    %v6400 = vadd.f32 %v6270, %v6340
    %v6401 = vadd.f32 %v6271, %v6345
    %v6402 = vadd.f32 %v6272, %v6348
    %v6403 = vadd.f32 %v6273, %v6353
    %v6404 = vadd.f32 %v6274, %v6356
    %v6405 = vadd.f32 %v6275, %v6361
    %v6406 = vadd.f32 %v6276, %v6364
    %v6407 = vadd.f32 %v6277, %v6369
    %v6408 = vadd.f32 %v6278, %v6372
    %v6409 = vadd.f32 %v6279, %v6377
    %v6410 = vadd.f32 %v6280, %v6380
    %v6411 = vadd.f32 %v6281, %v6385
    %v6412 = vadd.f32 %v6282, %v6388
    %v6413 = vadd.f32 %v6283, %v6393
    %v6414 = vadd.f32 %v6284, %v6396
    %s6415 = scalar_lea.vmem %s9, 64
    %v6416 = vld [vmem:[%s6415] sm:$0xf]
    %v6417 = vld [vmem:[%s6415 + $0x4] sm:$0xf]
    %v6418 = vpack.c.bf16 %v179, %v5996
    %v6419 = vpack.c.bf16 %v179, %v5998
    %v6422 = vunpack.c.l.b16 %v6416
    %v6423 = vunpack.c.l.b16 %v6417
    %v6424 = vpack.c.b16 %v6423, %v6422
    %v6427 = vsel %vm2340, %v6418, 0
    %v6430 = vsel %vm2340, %v6419, 0
    %6432 = vmatprep.subr.bf16.mxu0 0
    %6433 = vmatpush1.bf16.msra.mxu0 %v6424
    %6434 = vmatprep.subr.bf16.mxu0 0
    %6435 = vmatpush1.bf16.msra.mxu0 0
    %6436 = vmatprep.subr.bf16.mxu0 0
    %6437 = vmatpush1.bf16.msra.mxu0 0
    %6438 = vmatprep.subr.bf16.mxu0 0
    %6439 = vmatpush1.bf16.msra.mxu0 0
    %6440 = vmatprep.subr.bf16.mxu0 0
    %6441 = vmatpush1.bf16.msra.mxu0 0
    %6442 = vmatprep.subr.bf16.mxu0 0
    %6443 = vmatpush1.bf16.msra.mxu0 0
    %6444 = vmatprep.subr.bf16.mxu0 0
    %6445 = vmatpush1.bf16.msra.mxu0 0
    %6446 = vmatprep.subr.bf16.mxu0 0
    %6447 = vmatpush1.bf16.msra.mxu0 0
    %6448 = vmatprep.subr.bf16.mxu0 0
    %6449 = vmatpush1.bf16.msra.mxu0 0
    %6450 = vmatprep.subr.bf16.mxu0 0
    %6451 = vmatpush1.bf16.msra.mxu0 0
    %6452 = vmatprep.subr.bf16.mxu0 0
    %6453 = vmatpush1.bf16.msra.mxu0 0
    %6454 = vmatprep.subr.bf16.mxu0 0
    %6455 = vmatpush1.bf16.msra.mxu0 0
    %6456 = vmatprep.subr.bf16.mxu0 0
    %6457 = vmatpush1.bf16.msra.mxu0 0
    %6458 = vmatprep.subr.bf16.mxu0 0
    %6459 = vmatpush1.bf16.msra.mxu0 0
    %6460 = vmatprep.subr.bf16.mxu0 0
    %6461 = vmatpush1.bf16.msra.mxu0 0
    %6462 = vmatprep.subr.bf16.mxu0 0
    %6463 = vmatpush1.bf16.msra.mxu0 0
    %6464 = vmatprep.mubr.bf16.mxu0 0
    %6465 = vmatmul.mubr.bf16.gmra.mrb[0].mxu0 %v5546
    %v6466 = vpop.f32.mrb[0].mxu0
    %v6467 = vadd.f32 0.0, %v6466
    %v6468 = vpop.f32.mrb[0].mxu0
    %v6469 = vpop.f32.mrb[0].mxu0
    %v6470 = vadd.f32 0.0, %v6469
    %v6471 = vpop.f32.mrb[0].mxu0
    %6472 = vmatprep.mubr.bf16.mxu0 0
    %6473 = vmatmul.mubr.bf16.gmra.mrb[0].mxu0 %v5549
    %v6474 = vpop.f32.mrb[0].mxu0
    %v6475 = vadd.f32 0.0, %v6474
    %v6476 = vpop.f32.mrb[0].mxu0
    %v6477 = vpop.f32.mrb[0].mxu0
    %v6478 = vadd.f32 0.0, %v6477
    %v6479 = vpop.f32.mrb[0].mxu0
    %6480 = vmatprep.mubr.bf16.mxu0 0
    %6481 = vmatmul.mubr.bf16.gmra.mrb[0].mxu0 %v5552
    %v6482 = vpop.f32.mrb[0].mxu0
    %v6483 = vadd.f32 0.0, %v6482
    %v6484 = vpop.f32.mrb[0].mxu0
    %v6485 = vpop.f32.mrb[0].mxu0
    %v6486 = vadd.f32 0.0, %v6485
    %v6487 = vpop.f32.mrb[0].mxu0
    %6488 = vmatprep.mubr.bf16.mxu0 0
    %6489 = vmatmul.mubr.bf16.gmra.mrb[0].mxu0 %v6427
    %v6490 = vpop.f32.mrb[0].mxu0
    %v6491 = vadd.f32 0.0, %v6490
    %v6492 = vpop.f32.mrb[0].mxu0
    %v6493 = vpop.f32.mrb[0].mxu0
    %v6494 = vadd.f32 0.0, %v6493
    %v6495 = vpop.f32.mrb[0].mxu0
    %6496 = vmatprep.mubr.bf16.mxu0 0
    %6497 = vmatmul.mubr.bf16.gmra.mrb[0].mxu0 %v5558
    %v6498 = vpop.f32.mrb[0].mxu0
    %v6499 = vadd.f32 0.0, %v6498
    %v6500 = vpop.f32.mrb[0].mxu0
    %v6501 = vpop.f32.mrb[0].mxu0
    %v6502 = vadd.f32 0.0, %v6501
    %v6503 = vpop.f32.mrb[0].mxu0
    %6504 = vmatprep.mubr.bf16.mxu0 0
    %6505 = vmatmul.mubr.bf16.gmra.mrb[0].mxu0 %v5561
    %v6506 = vpop.f32.mrb[0].mxu0
    %v6507 = vadd.f32 0.0, %v6506
    %v6508 = vpop.f32.mrb[0].mxu0
    %v6509 = vpop.f32.mrb[0].mxu0
    %v6510 = vadd.f32 0.0, %v6509
    %v6511 = vpop.f32.mrb[0].mxu0
    %6512 = vmatprep.mubr.bf16.mxu0 0
    %6513 = vmatmul.mubr.bf16.gmra.mrb[0].mxu0 %v5564
    %v6514 = vpop.f32.mrb[0].mxu0
    %v6515 = vadd.f32 0.0, %v6514
    %v6516 = vpop.f32.mrb[0].mxu0
    %v6517 = vpop.f32.mrb[0].mxu0
    %v6518 = vadd.f32 0.0, %v6517
    %v6519 = vpop.f32.mrb[0].mxu0
    %6520 = vmatprep.mubr.bf16.mxu0 0
    %6521 = vmatmul.mubr.bf16.gmra.mrb[0].mxu0 %v6430
    %v6522 = vpop.f32.mrb[0].mxu0
    %v6523 = vadd.f32 0.0, %v6522
    %v6524 = vpop.f32.mrb[0].mxu0
    %v6525 = vpop.f32.mrb[0].mxu0
    %v6526 = vadd.f32 0.0, %v6525
    %v6527 = vpop.f32.mrb[0].mxu0
    %6528 = vdwg.mxu0
    %v6529 = vadd.f32 %v6399, %v6467
    %v6530 = vadd.f32 %v6400, %v6470
    %v6531 = vadd.f32 %v6401, %v6475
    %v6532 = vadd.f32 %v6402, %v6478
    %v6533 = vadd.f32 %v6403, %v6483
    %v6534 = vadd.f32 %v6404, %v6486
    %v6535 = vadd.f32 %v6405, %v6491
    %v6536 = vadd.f32 %v6406, %v6494
    %v6537 = vadd.f32 %v6407, %v6499
    %v6538 = vadd.f32 %v6408, %v6502
    %v6539 = vadd.f32 %v6409, %v6507
    %v6540 = vadd.f32 %v6410, %v6510
    %v6541 = vadd.f32 %v6411, %v6515
    %v6542 = vadd.f32 %v6412, %v6518
    %v6543 = vadd.f32 %v6413, %v6523
    %v6544 = vadd.f32 %v6414, %v6526
    %v6545 = vld [vmem:[%s10] sm:$0x1]
    %v6547 = vlaneseq
    %v6548 = vshrl.u32 %v6547, 7
    %v6549 = vsub.s32 0, %v6548
    %v6550 = vrot.slane %v6545, %v6549
    %v6552 = vadd.f32 %v6529, %v6550
    %v6553 = vadd.f32 %v6530, %v6550
    %v6554 = vadd.f32 %v6531, %v6550
    %v6555 = vadd.f32 %v6532, %v6550
    %v6556 = vadd.f32 %v6533, %v6550
    %v6557 = vadd.f32 %v6534, %v6550
    %v6558 = vadd.f32 %v6535, %v6550
    %v6559 = vadd.f32 %v6536, %v6550
    %v6560 = vadd.f32 %v6537, %v6550
    %v6561 = vadd.f32 %v6538, %v6550
    %v6562 = vadd.f32 %v6539, %v6550
    %v6563 = vadd.f32 %v6540, %v6550
    %v6564 = vadd.f32 %v6541, %v6550
    %v6565 = vadd.f32 %v6542, %v6550
    %v6566 = vadd.f32 %v6543, %v6550
    %v6567 = vadd.f32 %v6544, %v6550
    %v6568 = vsel %vm2340, %v6552, 0.0
    %v6569 = vsel %vm2340, %v6553, 0.0
    %v6570 = vadd.f32 %v6568, %v6569
    %v6571 = vsel %vm2340, %v6554, 0.0
    %v6572 = vadd.f32 %v6570, %v6571
    %v6573 = vsel %vm2340, %v6555, 0.0
    %v6574 = vadd.f32 %v6572, %v6573
    %v6575 = vsel %vm2340, %v6556, 0.0
    %v6576 = vadd.f32 %v6574, %v6575
    %v6577 = vsel %vm2340, %v6557, 0.0
    %v6578 = vadd.f32 %v6576, %v6577
    %v6579 = vsel %vm2340, %v6558, 0.0
    %v6580 = vadd.f32 %v6578, %v6579
    %v6581 = vsel %vm2340, %v6559, 0.0
    %v6582 = vadd.f32 %v6580, %v6581
    %v6583 = vsel %vm2340, %v6560, 0.0
    %v6584 = vadd.f32 %v6582, %v6583
    %v6585 = vsel %vm2340, %v6561, 0.0
    %v6586 = vadd.f32 %v6584, %v6585
    %v6587 = vsel %vm2340, %v6562, 0.0
    %v6588 = vadd.f32 %v6586, %v6587
    %v6589 = vsel %vm2340, %v6563, 0.0
    %v6590 = vadd.f32 %v6588, %v6589
    %v6591 = vsel %vm2340, %v6564, 0.0
    %v6592 = vadd.f32 %v6590, %v6591
    %v6593 = vsel %vm2340, %v6565, 0.0
    %v6594 = vadd.f32 %v6592, %v6593
    %v6595 = vsel %vm2340, %v6566, 0.0
    %v6596 = vadd.f32 %v6594, %v6595
    %v6597 = vsel %vm2340, %v6567, 0.0
    %v6598 = vadd.f32 %v6596, %v6597
    %v6599 = vrot.slane %v6598, 4
    %v6600 = vadd.f32 %v6598, %v6599
    %v6601 = vrot.slane %v6600, 2
    %v6602 = vadd.f32 %v6600, %v6601
    %v6603 = vrot.slane %v6602, 1
    %v6604 = vadd.f32 %v6602, %v6603
    %v6605 = vmul.f32 %v6604, %v550
    %v6606 = vsub.f32 %v6552, %v6605
    %v6607 = vsub.f32 %v6553, %v6605
    %v6608 = vsub.f32 %v6554, %v6605
    %v6609 = vsub.f32 %v6555, %v6605
    %v6610 = vsub.f32 %v6556, %v6605
    %v6611 = vsub.f32 %v6557, %v6605
    %v6612 = vsub.f32 %v6558, %v6605
    %v6613 = vsub.f32 %v6559, %v6605
    %v6614 = vsub.f32 %v6560, %v6605
    %v6615 = vsub.f32 %v6561, %v6605
    %v6616 = vsub.f32 %v6562, %v6605
    %v6617 = vsub.f32 %v6563, %v6605
    %v6618 = vsub.f32 %v6564, %v6605
    %v6619 = vsub.f32 %v6565, %v6605
    %v6620 = vsub.f32 %v6566, %v6605
    %v6621 = vsub.f32 %v6567, %v6605
    %v6622 = vmul.f32 %v6606, %v6606
    %v6623 = vmul.f32 %v6607, %v6607
    %v6624 = vmul.f32 %v6608, %v6608
    %v6625 = vmul.f32 %v6609, %v6609
    %v6626 = vmul.f32 %v6610, %v6610
    %v6627 = vmul.f32 %v6611, %v6611
    %v6628 = vmul.f32 %v6612, %v6612
    %v6629 = vmul.f32 %v6613, %v6613
    %v6630 = vmul.f32 %v6614, %v6614
    %v6631 = vmul.f32 %v6615, %v6615
    %v6632 = vmul.f32 %v6616, %v6616
    %v6633 = vmul.f32 %v6617, %v6617
    %v6634 = vmul.f32 %v6618, %v6618
    %v6635 = vmul.f32 %v6619, %v6619
    %v6636 = vmul.f32 %v6620, %v6620
    %v6637 = vmul.f32 %v6621, %v6621
    %v6638 = vsel %vm2340, %v6622, 0.0
    %v6639 = vsel %vm2340, %v6623, 0.0
    %v6640 = vadd.f32 %v6638, %v6639
    %v6641 = vsel %vm2340, %v6624, 0.0
    %v6642 = vadd.f32 %v6640, %v6641
    %v6643 = vsel %vm2340, %v6625, 0.0
    %v6644 = vadd.f32 %v6642, %v6643
    %v6645 = vsel %vm2340, %v6626, 0.0
    %v6646 = vadd.f32 %v6644, %v6645
    %v6647 = vsel %vm2340, %v6627, 0.0
    %v6648 = vadd.f32 %v6646, %v6647
    %v6649 = vsel %vm2340, %v6628, 0.0
    %v6650 = vadd.f32 %v6648, %v6649
    %v6651 = vsel %vm2340, %v6629, 0.0
    %v6652 = vadd.f32 %v6650, %v6651
    %v6653 = vsel %vm2340, %v6630, 0.0
    %v6654 = vadd.f32 %v6652, %v6653
    %v6655 = vsel %vm2340, %v6631, 0.0
    %v6656 = vadd.f32 %v6654, %v6655
    %v6657 = vsel %vm2340, %v6632, 0.0
    %v6658 = vadd.f32 %v6656, %v6657
    %v6659 = vsel %vm2340, %v6633, 0.0
    %v6660 = vadd.f32 %v6658, %v6659
    %v6661 = vsel %vm2340, %v6634, 0.0
    %v6662 = vadd.f32 %v6660, %v6661
    %v6663 = vsel %vm2340, %v6635, 0.0
    %v6664 = vadd.f32 %v6662, %v6663
    %v6665 = vsel %vm2340, %v6636, 0.0
    %v6666 = vadd.f32 %v6664, %v6665
    %v6667 = vsel %vm2340, %v6637, 0.0
    %v6668 = vadd.f32 %v6666, %v6667
    %v6669 = vrot.slane %v6668, 4
    %v6670 = vadd.f32 %v6668, %v6669
    %v6671 = vrot.slane %v6670, 2
    %v6672 = vadd.f32 %v6670, %v6671
    %v6673 = vrot.slane %v6672, 1
    %v6674 = vadd.f32 %v6672, %v6673
    %v6675 = vmul.f32 %v6674, %v550
    %v6676 = vadd.f32 %v6675, 1e-05
    %v6677 = vrsqrt.pop %v6676
    %v6678 = vmul.f32 %v6606, %v6677
    %v6679 = vmul.f32 %v6607, %v6677
    %v6680 = vmul.f32 %v6608, %v6677
    %v6681 = vmul.f32 %v6609, %v6677
    %v6682 = vmul.f32 %v6610, %v6677
    %v6683 = vmul.f32 %v6611, %v6677
    %v6684 = vmul.f32 %v6612, %v6677
    %v6685 = vmul.f32 %v6613, %v6677
    %v6686 = vmul.f32 %v6614, %v6677
    %v6687 = vmul.f32 %v6615, %v6677
    %v6688 = vmul.f32 %v6616, %v6677
    %v6689 = vmul.f32 %v6617, %v6677
    %v6690 = vmul.f32 %v6618, %v6677
    %v6691 = vmul.f32 %v6619, %v6677
    %v6692 = vmul.f32 %v6620, %v6677
    %v6693 = vmul.f32 %v6621, %v6677
    %6694 = vst.msk [vmem:[#allocation2] sm:$0xff] %vm2340, %v6678
    %6695 = vst.msk [vmem:[#allocation2 + $0x8] sm:$0xff] %vm2340, %v6679
    %6696 = vst.msk [vmem:[#allocation2 + $0x10] sm:$0xff] %vm2340, %v6680
    %6697 = vst.msk [vmem:[#allocation2 + $0x18] sm:$0xff] %vm2340, %v6681
    %6698 = vst.msk [vmem:[#allocation2 + $0x20] sm:$0xff] %vm2340, %v6682
    %6699 = vst.msk [vmem:[#allocation2 + $0x28] sm:$0xff] %vm2340, %v6683
    %6700 = vst.msk [vmem:[#allocation2 + $0x30] sm:$0xff] %vm2340, %v6684
    %6701 = vst.msk [vmem:[#allocation2 + $0x38] sm:$0xff] %vm2340, %v6685
    %6702 = vst.msk [vmem:[#allocation2 + $0x40] sm:$0xff] %vm2340, %v6686
    %6703 = vst.msk [vmem:[#allocation2 + $0x48] sm:$0xff] %vm2340, %v6687
    %6704 = vst.msk [vmem:[#allocation2 + $0x50] sm:$0xff] %vm2340, %v6688
    %6705 = vst.msk [vmem:[#allocation2 + $0x58] sm:$0xff] %vm2340, %v6689
    %6706 = vst.msk [vmem:[#allocation2 + $0x60] sm:$0xff] %vm2340, %v6690
    %6707 = vst.msk [vmem:[#allocation2 + $0x68] sm:$0xff] %vm2340, %v6691
    %6708 = vst.msk [vmem:[#allocation2 + $0x70] sm:$0xff] %vm2340, %v6692
    %6709 = vst.msk [vmem:[#allocation2 + $0x78] sm:$0xff] %vm2340, %v6693
    // Predicated region
    $region46: #{dense_down_block_mobile.1} parent=1 // pred_check
      _
    $region47: #{dense_down_block_mobile.1} parent=1 // pred_check_branch
      %6711 = sbr.rel (0) target = $region49
    $region48: #{dense_down_block_mobile.1} parent=1 // pred_region
      %s6713 = ssub.s32 2048, 2048
      %6714 = vsyncadd [#allocation3], %s6713
      %s6715 = sshll.u32 [#allocation2], 4
      %s6716 = int_to_ptr.vmem [resolvable:$true] %s6715
      %6721 = dma.vmem_to_hbm [thread:$0]  %s6716, 2048, %s11, [#allocation3], 128, 128, 8
    $region49: #{dense_down_block_mobile.1} parent=1 // pred_fallthru
      _
    // Predicated region
    $region50: #{dense_down_block_mobile.1} parent=1 // pred_check
      _
    $region51: #{dense_down_block_mobile.1} parent=1 // pred_check_branch
      %6723 = sbr.rel (0) target = $region53
    $region52: #{dense_down_block_mobile.1} parent=1 // pred_region
      %6724 = dma.done [#allocation3], 2048
    $region53: #{dense_down_block_mobile.1} parent=1 // pred_fallthru
      _
    %6725 = vsyncpa [#allocation3], 1

</llo_original>
